<compile_context>
chip_gen: v7x
topology: tpu7x:2x2x1
jax: 0.10.0
libtpu: 0.0.40
codegen_flags: <defaults>
</compile_context>

<pallas_src>
import jax
import jax.numpy as jnp
from jax.experimental import pallas as pl
from jax.experimental.pallas import tpu as pltpu

# ---------------- module configuration (small synthetic shapes) ----------------
N_AGENTS = 4
N_ENEMIES = 3
N_PLAYERS = N_AGENTS + 1                      # n_agents + 1
STATE_COMPONENT = (6, 5, 4)                   # (player feat, enemy feat, ball feat)
HYPERNET_EMBED = 32
N_HEAD = 4
D_HEAD = HYPERNET_EMBED // N_HEAD
E2 = 2 * HYPERNET_EMBED                       # fused (two hypernets) embedding width = 64
NHG = 2 * N_HEAD                              # fused head count = 8

AGENT_FEATURES = STATE_COMPONENT[0] * N_PLAYERS            # 30
ENEMY_FEATURES = STATE_COMPONENT[1] * N_ENEMIES            # 15
STATE_DIM = AGENT_FEATURES + ENEMY_FEATURES + STATE_COMPONENT[2]   # 49
N_TOKENS = N_PLAYERS + N_ENEMIES + 1                       # 9

FEAT_EXT = sum(STATE_COMPONENT) + 3           # 15 feature cols + 3 type-indicator cols = 18

# ---- vslab row layout (single (104, 64) vector slab) ----
MASK_OFF = 0                                  # (NHG*N_TOKENS, 64) attention head-block mask
WTOK_OFF = MASK_OFF + NHG * N_TOKENS          # 72: (18, 64) extended token-embedding weight
B_OFF = WTOK_OFF + FEAT_EXT                   # 90: 11 fused biases
MLO_ROW = B_OFF + 11                          # 101: lane mask for hypernet-1 half
MHI_ROW = MLO_ROW + 1                         # 102: lane mask for hypernet-2 half
SEEDQ_ROW = MHI_ROW + 1                       # 103: precomputed pooled bias-generator query
VSLAB_ROWS = SEEDQ_ROW + 1                    # 104

# wmats rows (block-diagonal over the two hypernets, stored (in,out)):
#   0 ca_Wq  1 ca_Wk  2 ca_Wv  3 ca_Wo  4 wm_W1  5 wm_W2  6 bm_W1  7 bm_W2
#   8 wg_Wq  9 wg_Wk  10 bg_Wk


def _round_up(x, m):
    return (x + m - 1) // m * m


def spectra_mixer_kernel(q_ref, tok_ref, wmats_ref, vslab_ref, out_ref):
    tb = q_ref.shape[0]
    T = N_TOKENS

    wmats = wmats_ref[...]                               # (11, 64, 64)
    vslab = vslab_ref[...]                               # (104, 64)
    hmask = vslab[MASK_OFF:MASK_OFF + NHG * T, :]        # (72, 64) head-block mask
    mlo = vslab[MLO_ROW]                                 # (64,)  lanes of hypernet 1
    mhi = vslab[MHI_ROW]                                 # (64,)  lanes of hypernet 2
    seedq = vslab[SEEDQ_ROW]                             # (64,)  pooled bias-gen query

    def lin(x2d, wi, bi):
        # fused (block-diagonal) linear layer on flattened rows
        return jnp.dot(x2d, wmats[wi], preferred_element_type=jnp.float32) + vslab[B_OFF + bi]

    # ---- token embedding: one block-structured matmul, biases folded via indicator cols ----
    emb = jnp.dot(tok_ref[...], vslab[WTOK_OFF:WTOK_OFF + FEAT_EXT, :],
                  preferred_element_type=jnp.float32)    # (tb*9, 64)

    # ---- fused cross attention (both hypernets => 8 heads packed on the lane axis) ----
    q3 = lin(emb, 0, 0).reshape(tb, T, E2)               # (tb, 9, 64)
    k3 = lin(emb, 1, 1).reshape(tb, T, E2)
    v3 = lin(emb, 2, 2).reshape(tb, T, E2)

    # Head-extended keys/values: row h*T + k holds key/value token k masked to head h's
    # 8 lanes.  One batched einsum then yields all heads' scores / outputs at once.
    k_ext = jnp.concatenate([k3] * NHG, axis=1) * hmask               # (tb, 72, 64)
    v_ext = jnp.concatenate([v3] * NHG, axis=1) * hmask               # (tb, 72, 64)
    # Augment values with the block mask so per-head softmax denominators come out of the
    # same matmul (output lanes 64..127 hold sum_k p[h,k] replicated over head h's lanes).
    v_aug = jnp.concatenate(
        [v_ext, jnp.broadcast_to(hmask, (tb, NHG * T, E2))], axis=-1)  # (tb, 72, 128)

    scale = 1.0 / (D_HEAD ** 0.5)
    s = jnp.einsum('bqe,bke->bqk', q3, k_ext,
                   preferred_element_type=jnp.float32) * scale         # (tb, 9, 72)
    # Row-global max: softmax is invariant to any per-(b,q) shift, and exp args stay <= 0.
    s = s - jnp.max(s, axis=-1, keepdims=True)
    p = jnp.exp(s)                                                      # (tb, 9, 72)
    o = jnp.einsum('bqk,bke->bqe', p, v_aug,
                   preferred_element_type=jnp.float32)                  # (tb, 9, 128)
    attn = o[..., :E2] / jnp.maximum(o[..., E2:], 1e-30)                # normalized heads
    x = lin(attn.reshape(tb * T, E2), 3, 3)                             # (tb*9, 64)

    # ---- weight / bias MLPs (Linear -> ReLU -> Linear), fused over both hypernets ----
    wm = lin(jnp.maximum(lin(x, 4, 4), 0.0), 5, 5)
    bm = lin(jnp.maximum(lin(x, 6, 6), 0.0), 7, 7)

    # agent rows are token rows 1..4 of each batch element (row 0 is the extra player)
    wx = (x + wm).reshape(tb, T, E2)[:, 1:1 + N_AGENTS, :].reshape(tb * N_AGENTS, E2)
    bx = (x + bm).reshape(tb, T, E2)[:, 1:1 + N_AGENTS, :].reshape(tb * N_AGENTS, E2)

    # ---- weight generator: head-summed QK scores collapse to one half-embed contraction
    #      per hypernet; both halves fused into a single batched einsum via masked keys ----
    gscale = 1.0 / (N_HEAD * (D_HEAD ** 0.5))
    wq_p = lin(wx, 8, 8).reshape(tb, N_AGENTS, E2)
    wk_p = lin(wx, 9, 9).reshape(tb, N_AGENTS, E2)
    wk_ext = jnp.concatenate([wk_p * mlo, wk_p * mhi], axis=1)          # (tb, 8, 64)
    sw = jnp.einsum('bqe,bke->bqk', wq_p, wk_ext,
                    preferred_element_type=jnp.float32) * gscale        # (tb, 4, 8)
    w1 = jnp.abs(sw[..., :N_AGENTS])                                    # (tb, 4, 4)
    w2 = jnp.abs(sw[..., N_AGENTS:])                                    # (tb, 4, 4)

    # ---- bias generator: k=1 pooled query precomputed in the wrapper ----
    bk_p = lin(bx, 10, 10).reshape(tb, N_AGENTS, E2)
    prod = bk_p * seedq                                                 # (tb, 4, 64)
    b1 = jnp.sum(prod * mlo, axis=-1) * gscale                          # (tb, 4)
    b2 = jnp.sum(prod * mhi, axis=-1) * gscale                          # (tb, 4)

    # ---- mixing (tiny 4x4 per-row matmuls done on the VPU, no batched MXU calls) ----
    qv = q_ref[...]                                                     # (tb, 4)
    h1 = b1
    for a in range(N_AGENTS):
        h1 = h1 + qv[:, a:a + 1] * w1[:, a, :]
    h1 = jnp.where(h1 > 0, h1, jnp.exp(jnp.minimum(h1, 0.0)) - 1.0)     # ELU(alpha=1)
    h2 = b2
    for c in range(N_AGENTS):
        h2 = h2 + h1[:, c:c + 1] * w2[:, c, :]
    out_ref[...] = h2                                                   # (tb, 4); summed in wrapper


def _pack_params(params1, params2):
    """Fuse the two ST_HyperNet parameter sets into two kernel slabs."""
    aW1, eW1, bW1, W1, B1, seed1 = params1
    aW2, eW2, bW2, W2, B2, seed2 = params2
    sc0, sc1, sc2 = STATE_COMPONENT

    def block_diag(A, B):
        top = jnp.concatenate([A, jnp.zeros_like(A)], axis=1)
        bot = jnp.concatenate([jnp.zeros_like(B), B], axis=1)
        return jnp.concatenate([top, bot], axis=0)

    def lane_cat(a, b):
        return jnp.concatenate([a, b], axis=-1)

    mat_ids = [0, 1, 2, 3, 4, 5, 6, 7, 8, 9, 11]     # Wst indices (bg_Wq folded into seed query)
    wmats = jnp.stack([block_diag(W1[i], W2[i]) for i in mat_ids], axis=0)   # (11, 64, 64)

    # attention head-block mask: row h*T+k covers head h's 8 lanes
    row_h = jnp.arange(NHG * N_TOKENS) // N_TOKENS
    col_h = jnp.arange(E2) // D_HEAD
    hmask = (row_h[:, None] == col_h[None, :]).astype(jnp.float32)           # (72, 64)

    # extended token-embedding weight (18, 64): feature rows + indicator rows (= biases)
    wtok = jnp.zeros((FEAT_EXT, E2), jnp.float32)
    wtok = wtok.at[0:sc0].set(lane_cat(aW1, aW2))
    wtok = wtok.at[sc0:sc0 + sc1].set(lane_cat(eW1, eW2))
    wtok = wtok.at[sc0 + sc1:sc0 + sc1 + sc2].set(lane_cat(bW1, bW2))
    wtok = wtok.at[15].set(lane_cat(B1[0], B2[0]))   # agent embedding bias
    wtok = wtok.at[16].set(lane_cat(B1[1], B2[1]))   # enemy embedding bias
    wtok = wtok.at[17].set(lane_cat(B1[2], B2[2]))   # ball  embedding bias

    bias_ids = [3, 4, 5, 6, 7, 8, 9, 10, 11, 12, 14]
    brows = jnp.stack([lane_cat(B1[j], B2[j]) for j in bias_ids], axis=0)    # (11, 64)

    # half-embedding lane masks (hypernet 1 / hypernet 2)
    mlo = (jnp.arange(E2) < HYPERNET_EMBED).astype(jnp.float32)[None, :]     # (1, 64)
    mhi = 1.0 - mlo

    # pooled bias-generator query is input independent: precompute seed @ bg_Wq + bg_bq
    sq1 = seed1 @ W1[10] + B1[13]
    sq2 = seed2 @ W2[10] + B2[13]
    seedq = lane_cat(sq1, sq2)                                               # (1, 64)

    vslab = jnp.concatenate([hmask, wtok, brows, mlo, mhi, seedq], axis=0)   # (104, 64)
    return wmats, vslab


def spectra_mixer(qvals, states, params1, params2):
    """qvals: (b, t, n_agents), states: (b, t, STATE_DIM) -> (b, t, 1)."""
    b, t, na = qvals.shape
    assert na == N_AGENTS
    bs = b * t
    sc0, sc1, sc2 = STATE_COMPONENT

    q2 = qvals.reshape(bs, na).astype(jnp.float32)
    s2 = states.reshape(bs, -1).astype(jnp.float32)
    agent_state = s2[:, :AGENT_FEATURES].reshape(bs, N_PLAYERS, sc0)
    enemy_state = s2[:, AGENT_FEATURES:AGENT_FEATURES + ENEMY_FEATURES].reshape(bs, N_ENEMIES, sc1)
    ball_state = s2[:, AGENT_FEATURES + ENEMY_FEATURES:].reshape(bs, 1, sc2)

    # batch tiling: 8-aligned row tiles, batch dim sharded "parallel" across cores
    tb = min(64, _round_up(bs, 8))
    bs_pad = _round_up(bs, tb)

    # activation slabs (layout plumbing stays in plain JAX)
    q_pad = jnp.zeros((bs_pad, N_AGENTS), jnp.float32).at[:bs].set(q2)
    tok = jnp.zeros((bs_pad, N_TOKENS, FEAT_EXT), jnp.float32)
    tok = tok.at[:bs, 0:N_PLAYERS, 0:sc0].set(agent_state)
    tok = tok.at[:bs, N_PLAYERS:N_PLAYERS + N_ENEMIES, sc0:sc0 + sc1].set(enemy_state)
    tok = tok.at[:bs, N_PLAYERS + N_ENEMIES, sc0 + sc1:sc0 + sc1 + sc2].set(ball_state[:, 0])
    tok = tok.at[:bs, 0:N_PLAYERS, 15].set(1.0)
    tok = tok.at[:bs, N_PLAYERS:N_PLAYERS + N_ENEMIES, 16].set(1.0)
    tok = tok.at[:bs, N_PLAYERS + N_ENEMIES, 17].set(1.0)
    tok2d = tok.reshape(bs_pad * N_TOKENS, FEAT_EXT)     # pre-flattened: no in-kernel relayout

    wmats, vslab = _pack_params(params1, params2)        # 2 param DMAs instead of 12+

    # advisory cost estimate (per padded batch row)
    per_row_flops = (
        2 * N_TOKENS * FEAT_EXT * E2                       # token embedding
        + 8 * (2 * N_TOKENS * E2 * E2)                     # q/k/v/o + two 2-layer MLPs
        + 2 * N_TOKENS * (NHG * N_TOKENS) * E2             # fused attention scores
        + 2 * N_TOKENS * (NHG * N_TOKENS) * (2 * E2)       # fused attention output + denom
        + 3 * (2 * N_AGENTS * E2 * E2)                     # generator projections
        + 2 * N_AGENTS * (2 * N_AGENTS) * E2               # fused weight-gen scores
        + 2 * N_AGENTS * E2                                # bias-gen scores
        + 4 * N_AGENTS * N_AGENTS)                         # mixing
    cost = pl.CostEstimate(
        flops=int(bs_pad * per_row_flops),
        transcendentals=int(bs_pad * (N_TOKENS * NHG * N_TOKENS + N_AGENTS)),
        bytes_accessed=int(4 * (q_pad.size + tok2d.size + wmats.size + vslab.size
                                + bs_pad * N_AGENTS)),
    )

    grid = (bs_pad // tb,)
    out = pl.pallas_call(
        spectra_mixer_kernel,
        out_shape=jax.ShapeDtypeStruct((bs_pad, N_AGENTS), jnp.float32),
        grid_spec=pltpu.PrefetchScalarGridSpec(
            num_scalar_prefetch=0,
            grid=grid,
            in_specs=[
                pl.BlockSpec((tb, N_AGENTS), lambda i: (i, 0)),
                pl.BlockSpec((tb * N_TOKENS, FEAT_EXT), lambda i: (i, 0)),
                pl.BlockSpec((11, E2, E2), lambda i: (0, 0, 0)),
                pl.BlockSpec((VSLAB_ROWS, E2), lambda i: (0, 0)),
            ],
            out_specs=pl.BlockSpec((tb, N_AGENTS), lambda i: (i, 0)),
        ),
        compiler_params=pltpu.CompilerParams(
            dimension_semantics=("parallel",),
            vmem_limit_bytes=32 * 1024 * 1024,
        ),
        cost_estimate=cost,
    )(q_pad, tok2d, wmats, vslab)

    # final per-row sum over agents done in plain JAX (tiny)
    return jnp.sum(out[:bs], axis=-1, keepdims=True).reshape(b, t, 1)


def init_hypernet_params(key):
    """Deterministic synthetic parameters for one ST_HyperNet (same layout as before)."""
    sc0, sc1, sc2 = STATE_COMPONENT
    E = HYPERNET_EMBED
    ks = jax.random.split(key, 6)

    def u(k, shape, fan_in):
        bound = 1.0 / (fan_in ** 0.5)
        return jax.random.uniform(k, shape, jnp.float32, -bound, bound)

    aW = u(ks[0], (sc0, E), sc0)          # agent_embedding weight (in, out)
    eW = u(ks[1], (sc1, E), sc1)          # enemy_embedding weight
    bW = u(ks[2], (sc2, E), sc2)          # ball_embedding weight
    Wst = u(ks[3], (12, E, E), E)         # stacked (E,E) linear weights
    Bst = u(ks[4], (15, E), E)            # stacked biases
    seed = u(ks[5], (1, E), E)            # learnable pooling seed query (k=1)
    return (aW, eW, bW, Wst, Bst, seed)


if __name__ == "__main__":
    key = jax.random.PRNGKey(0)
    kq, kst, k1, k2 = jax.random.split(key, 4)
    b, t = 2, 4
    qvals = jax.random.normal(kq, (b, t, N_AGENTS), jnp.float32)
    states = jax.random.normal(kst, (b, t, STATE_DIM), jnp.float32)
    params1 = init_hypernet_params(k1)
    params2 = init_hypernet_params(k2)

    mixer = jax.jit(spectra_mixer)
    out = jax.block_until_ready(mixer(qvals, states, params1, params2))
    assert out.shape == (b, t, 1)
    assert bool(jnp.all(jnp.isfinite(out)))
    print("KERNEL_OK")
</pallas_src>

<mosaic_0001>
module attributes {stable_mosaic.version = 11 : i64} {
  func.func @spectra_mixer_kernel(%arg0: i32, %arg1: memref<8x4xf32, #tpu.memory_space<vmem>>, %arg2: memref<72x18xf32, #tpu.memory_space<vmem>>, %arg3: memref<11x64x64xf32, #tpu.memory_space<vmem>>, %arg4: memref<104x64xf32, #tpu.memory_space<vmem>>, %arg5: memref<8x4xf32, #tpu.memory_space<vmem>>) attributes {dimension_semantics = [#tpu.dimension_semantics<parallel>], iteration_bounds = array<i64: 1>, scalar_prefetch = 0 : i64, scratch_operands = 0 : i64, tpu.core_type = #tpu.core_type<tc>, window_params = [{transform_indices = @transform_0, window_bounds = array<i64: 8, 4>}, {transform_indices = @transform_1, window_bounds = array<i64: 72, 18>}, {pipeline_mode = #tpu.pipeline_mode<synchronous>, transform_indices = @transform_2, window_bounds = array<i64: 11, 64, 64>}, {pipeline_mode = #tpu.pipeline_mode<synchronous>, transform_indices = @transform_3, window_bounds = array<i64: 104, 64>}, {transform_indices = @transform_4, window_bounds = array<i64: 8, 4>}]} {
    %c0 = arith.constant 0 : index
    %c0_0 = arith.constant 0 : index
    %c0_1 = arith.constant 0 : index
    %0 = vector.load %arg3[%c0, %c0_0, %c0_1] : memref<11x64x64xf32, #tpu.memory_space<vmem>>, vector<11x64x64xf32>
    %c0_2 = arith.constant 0 : index
    %c0_3 = arith.constant 0 : index
    %1 = vector.load %arg4[%c0_2, %c0_3] : memref<104x64xf32, #tpu.memory_space<vmem>>, vector<104x64xf32>
    %2 = vector.extract_strided_slice %1 {offsets = [0, 0], sizes = [72, 64], strides = [1, 1]} : vector<104x64xf32> to vector<72x64xf32>
    %3 = vector.extract_strided_slice %1 {offsets = [101, 0], sizes = [1, 64], strides = [1, 1]} : vector<104x64xf32> to vector<1x64xf32>
    %4 = vector.shape_cast %3 : vector<1x64xf32> to vector<64xf32>
    %5 = vector.extract_strided_slice %1 {offsets = [102, 0], sizes = [1, 64], strides = [1, 1]} : vector<104x64xf32> to vector<1x64xf32>
    %6 = vector.shape_cast %5 : vector<1x64xf32> to vector<64xf32>
    %7 = vector.extract_strided_slice %1 {offsets = [103, 0], sizes = [1, 64], strides = [1, 1]} : vector<104x64xf32> to vector<1x64xf32>
    %8 = vector.shape_cast %7 : vector<1x64xf32> to vector<64xf32>
    %c0_4 = arith.constant 0 : index
    %c0_5 = arith.constant 0 : index
    %9 = vector.load %arg2[%c0_4, %c0_5] : memref<72x18xf32, #tpu.memory_space<vmem>>, vector<72x18xf32>
    %10 = vector.extract_strided_slice %1 {offsets = [72, 0], sizes = [18, 64], strides = [1, 1]} : vector<104x64xf32> to vector<18x64xf32>
    %cst = arith.constant dense<0.000000e+00> : vector<72x64xf32>
    %11 = tpu.matmul %9, %10, %cst {dimension_numbers = #tpu.dot_dimension_numbers<[1], [0], [0], [1], [0, 0, 1, 1], [], []>} : vector<72x18xf32>, vector<18x64xf32>, vector<72x64xf32> -> vector<72x64xf32>
    %12 = vector.extract_strided_slice %0 {offsets = [0, 0, 0], sizes = [1, 64, 64], strides = [1, 1, 1]} : vector<11x64x64xf32> to vector<1x64x64xf32>
    %13 = vector.shape_cast %12 : vector<1x64x64xf32> to vector<64x64xf32>
    %cst_6 = arith.constant dense<0.000000e+00> : vector<72x64xf32>
    %14 = tpu.matmul %11, %13, %cst_6 {dimension_numbers = #tpu.dot_dimension_numbers<[1], [0], [0], [1], [0, 0, 1, 1], [], []>} : vector<72x64xf32>, vector<64x64xf32>, vector<72x64xf32> -> vector<72x64xf32>
    %15 = vector.extract_strided_slice %1 {offsets = [90, 0], sizes = [1, 64], strides = [1, 1]} : vector<104x64xf32> to vector<1x64xf32>
    %16 = vector.shape_cast %15 : vector<1x64xf32> to vector<64xf32>
    %17 = vector.shape_cast %16 : vector<64xf32> to vector<1x64xf32>
    %18 = vector.broadcast %17 : vector<1x64xf32> to vector<72x64xf32>
    %19 = arith.addf %14, %18 : vector<72x64xf32>
    %20 = vector.shape_cast %19 : vector<72x64xf32> to vector<8x9x64xf32>
    %21 = vector.extract_strided_slice %0 {offsets = [1, 0, 0], sizes = [1, 64, 64], strides = [1, 1, 1]} : vector<11x64x64xf32> to vector<1x64x64xf32>
    %22 = vector.shape_cast %21 : vector<1x64x64xf32> to vector<64x64xf32>
    %cst_7 = arith.constant dense<0.000000e+00> : vector<72x64xf32>
    %23 = tpu.matmul %11, %22, %cst_7 {dimension_numbers = #tpu.dot_dimension_numbers<[1], [0], [0], [1], [0, 0, 1, 1], [], []>} : vector<72x64xf32>, vector<64x64xf32>, vector<72x64xf32> -> vector<72x64xf32>
    %24 = vector.extract_strided_slice %1 {offsets = [91, 0], sizes = [1, 64], strides = [1, 1]} : vector<104x64xf32> to vector<1x64xf32>
    %25 = vector.shape_cast %24 : vector<1x64xf32> to vector<64xf32>
    %26 = vector.shape_cast %25 : vector<64xf32> to vector<1x64xf32>
    %27 = vector.broadcast %26 : vector<1x64xf32> to vector<72x64xf32>
    %28 = arith.addf %23, %27 : vector<72x64xf32>
    %29 = vector.shape_cast %28 : vector<72x64xf32> to vector<8x9x64xf32>
    %30 = vector.extract_strided_slice %0 {offsets = [2, 0, 0], sizes = [1, 64, 64], strides = [1, 1, 1]} : vector<11x64x64xf32> to vector<1x64x64xf32>
    %31 = vector.shape_cast %30 : vector<1x64x64xf32> to vector<64x64xf32>
    %cst_8 = arith.constant dense<0.000000e+00> : vector<72x64xf32>
    %32 = tpu.matmul %11, %31, %cst_8 {dimension_numbers = #tpu.dot_dimension_numbers<[1], [0], [0], [1], [0, 0, 1, 1], [], []>} : vector<72x64xf32>, vector<64x64xf32>, vector<72x64xf32> -> vector<72x64xf32>
    %33 = vector.extract_strided_slice %1 {offsets = [92, 0], sizes = [1, 64], strides = [1, 1]} : vector<104x64xf32> to vector<1x64xf32>
    %34 = vector.shape_cast %33 : vector<1x64xf32> to vector<64xf32>
    %35 = vector.shape_cast %34 : vector<64xf32> to vector<1x64xf32>
    %36 = vector.broadcast %35 : vector<1x64xf32> to vector<72x64xf32>
    %37 = arith.addf %32, %36 : vector<72x64xf32>
    %38 = vector.shape_cast %37 : vector<72x64xf32> to vector<8x9x64xf32>
    %39 = tpu.concatenate %29, %29, %29, %29, %29, %29, %29, %29 in 1 : vector<8x9x64xf32>, vector<8x9x64xf32>, vector<8x9x64xf32>, vector<8x9x64xf32>, vector<8x9x64xf32>, vector<8x9x64xf32>, vector<8x9x64xf32>, vector<8x9x64xf32> -> vector<8x72x64xf32>
    %40 = vector.shape_cast %2 : vector<72x64xf32> to vector<1x72x64xf32>
    %41 = vector.broadcast %40 : vector<1x72x64xf32> to vector<8x72x64xf32>
    %42 = arith.mulf %39, %41 : vector<8x72x64xf32>
    %43 = tpu.concatenate %38, %38, %38, %38, %38, %38, %38, %38 in 1 : vector<8x9x64xf32>, vector<8x9x64xf32>, vector<8x9x64xf32>, vector<8x9x64xf32>, vector<8x9x64xf32>, vector<8x9x64xf32>, vector<8x9x64xf32>, vector<8x9x64xf32> -> vector<8x72x64xf32>
    %44 = vector.shape_cast %2 : vector<72x64xf32> to vector<1x72x64xf32>
    %45 = vector.broadcast %44 : vector<1x72x64xf32> to vector<8x72x64xf32>
    %46 = arith.mulf %43, %45 : vector<8x72x64xf32>
    %47 = vector.shape_cast %2 : vector<72x64xf32> to vector<1x72x64xf32>
    %48 = vector.broadcast %47 : vector<1x72x64xf32> to vector<8x72x64xf32>
    %49 = tpu.concatenate %46, %48 in 2 : vector<8x72x64xf32>, vector<8x72x64xf32> -> vector<8x72x128xf32>
    "tpu.trace_start"() <{level = 10 : i32, message = "bqe,bke->bqk"}> : () -> ()
    %cst_9 = arith.constant dense<0.000000e+00> : vector<8x9x72xf32>
    %50 = tpu.matmul %20, %42, %cst_9 {dimension_numbers = #tpu.dot_dimension_numbers<[2], [2], [1], [1], [0, 0, 0, 1, 1, 1], [0], [0]>} : vector<8x9x64xf32>, vector<8x72x64xf32>, vector<8x9x72xf32> -> vector<8x9x72xf32>
    "tpu.trace_stop"() : () -> ()
    %cst_10 = arith.constant 0.353553385 : f32
    %51 = vector.broadcast %cst_10 : f32 to vector<8x9x72xf32>
    %52 = arith.mulf %50, %51 : vector<8x9x72xf32>
    %cst_11 = arith.constant dense<0xFF800000> : vector<8x9xf32>
    %53 = vector.multi_reduction <maximumf>, %52, %cst_11 [2] : vector<8x9x72xf32> to vector<8x9xf32>
    %54 = vector.shape_cast %53 : vector<8x9xf32> to vector<8x9x1xf32>
    %55 = vector.broadcast %54 : vector<8x9x1xf32> to vector<8x9x72xf32>
    %56 = arith.subf %52, %55 : vector<8x9x72xf32>
    %57 = math.exp %56 : vector<8x9x72xf32>
    "tpu.trace_start"() <{level = 10 : i32, message = "bqk,bke->bqe"}> : () -> ()
    %cst_12 = arith.constant dense<0.000000e+00> : vector<8x9x128xf32>
    %58 = tpu.matmul %57, %49, %cst_12 {dimension_numbers = #tpu.dot_dimension_numbers<[2], [1], [1], [2], [0, 0, 0, 1, 1, 2], [0], [0]>} : vector<8x9x72xf32>, vector<8x72x128xf32>, vector<8x9x128xf32> -> vector<8x9x128xf32>
    "tpu.trace_stop"() : () -> ()
    %59 = vector.extract_strided_slice %58 {offsets = [0, 0, 0], sizes = [8, 9, 64], strides = [1, 1, 1]} : vector<8x9x128xf32> to vector<8x9x64xf32>
    %60 = vector.extract_strided_slice %58 {offsets = [0, 0, 64], sizes = [8, 9, 64], strides = [1, 1, 1]} : vector<8x9x128xf32> to vector<8x9x64xf32>
    %cst_13 = arith.constant 1.000000e-30 : f32
    %61 = vector.broadcast %cst_13 : f32 to vector<8x9x64xf32>
    %62 = arith.maximumf %60, %61 : vector<8x9x64xf32>
    %63 = arith.divf %59, %62 : vector<8x9x64xf32>
    %64 = vector.shape_cast %63 : vector<8x9x64xf32> to vector<72x64xf32>
    %65 = vector.extract_strided_slice %0 {offsets = [3, 0, 0], sizes = [1, 64, 64], strides = [1, 1, 1]} : vector<11x64x64xf32> to vector<1x64x64xf32>
    %66 = vector.shape_cast %65 : vector<1x64x64xf32> to vector<64x64xf32>
    %cst_14 = arith.constant dense<0.000000e+00> : vector<72x64xf32>
    %67 = tpu.matmul %64, %66, %cst_14 {dimension_numbers = #tpu.dot_dimension_numbers<[1], [0], [0], [1], [0, 0, 1, 1], [], []>} : vector<72x64xf32>, vector<64x64xf32>, vector<72x64xf32> -> vector<72x64xf32>
    %68 = vector.extract_strided_slice %1 {offsets = [93, 0], sizes = [1, 64], strides = [1, 1]} : vector<104x64xf32> to vector<1x64xf32>
    %69 = vector.shape_cast %68 : vector<1x64xf32> to vector<64xf32>
    %70 = vector.shape_cast %69 : vector<64xf32> to vector<1x64xf32>
    %71 = vector.broadcast %70 : vector<1x64xf32> to vector<72x64xf32>
    %72 = arith.addf %67, %71 : vector<72x64xf32>
    %73 = vector.extract_strided_slice %0 {offsets = [4, 0, 0], sizes = [1, 64, 64], strides = [1, 1, 1]} : vector<11x64x64xf32> to vector<1x64x64xf32>
    %74 = vector.shape_cast %73 : vector<1x64x64xf32> to vector<64x64xf32>
    %cst_15 = arith.constant dense<0.000000e+00> : vector<72x64xf32>
    %75 = tpu.matmul %72, %74, %cst_15 {dimension_numbers = #tpu.dot_dimension_numbers<[1], [0], [0], [1], [0, 0, 1, 1], [], []>} : vector<72x64xf32>, vector<64x64xf32>, vector<72x64xf32> -> vector<72x64xf32>
    %76 = vector.extract_strided_slice %1 {offsets = [94, 0], sizes = [1, 64], strides = [1, 1]} : vector<104x64xf32> to vector<1x64xf32>
    %77 = vector.shape_cast %76 : vector<1x64xf32> to vector<64xf32>
    %78 = vector.shape_cast %77 : vector<64xf32> to vector<1x64xf32>
    %79 = vector.broadcast %78 : vector<1x64xf32> to vector<72x64xf32>
    %80 = arith.addf %75, %79 : vector<72x64xf32>
    %cst_16 = arith.constant 0.000000e+00 : f32
    %81 = vector.broadcast %cst_16 : f32 to vector<72x64xf32>
    %82 = arith.maximumf %80, %81 : vector<72x64xf32>
    %83 = vector.extract_strided_slice %0 {offsets = [5, 0, 0], sizes = [1, 64, 64], strides = [1, 1, 1]} : vector<11x64x64xf32> to vector<1x64x64xf32>
    %84 = vector.shape_cast %83 : vector<1x64x64xf32> to vector<64x64xf32>
    %cst_17 = arith.constant dense<0.000000e+00> : vector<72x64xf32>
    %85 = tpu.matmul %82, %84, %cst_17 {dimension_numbers = #tpu.dot_dimension_numbers<[1], [0], [0], [1], [0, 0, 1, 1], [], []>} : vector<72x64xf32>, vector<64x64xf32>, vector<72x64xf32> -> vector<72x64xf32>
    %86 = vector.extract_strided_slice %1 {offsets = [95, 0], sizes = [1, 64], strides = [1, 1]} : vector<104x64xf32> to vector<1x64xf32>
    %87 = vector.shape_cast %86 : vector<1x64xf32> to vector<64xf32>
    %88 = vector.shape_cast %87 : vector<64xf32> to vector<1x64xf32>
    %89 = vector.broadcast %88 : vector<1x64xf32> to vector<72x64xf32>
    %90 = arith.addf %85, %89 : vector<72x64xf32>
    %91 = vector.extract_strided_slice %0 {offsets = [6, 0, 0], sizes = [1, 64, 64], strides = [1, 1, 1]} : vector<11x64x64xf32> to vector<1x64x64xf32>
    %92 = vector.shape_cast %91 : vector<1x64x64xf32> to vector<64x64xf32>
    %cst_18 = arith.constant dense<0.000000e+00> : vector<72x64xf32>
    %93 = tpu.matmul %72, %92, %cst_18 {dimension_numbers = #tpu.dot_dimension_numbers<[1], [0], [0], [1], [0, 0, 1, 1], [], []>} : vector<72x64xf32>, vector<64x64xf32>, vector<72x64xf32> -> vector<72x64xf32>
    %94 = vector.extract_strided_slice %1 {offsets = [96, 0], sizes = [1, 64], strides = [1, 1]} : vector<104x64xf32> to vector<1x64xf32>
    %95 = vector.shape_cast %94 : vector<1x64xf32> to vector<64xf32>
    %96 = vector.shape_cast %95 : vector<64xf32> to vector<1x64xf32>
    %97 = vector.broadcast %96 : vector<1x64xf32> to vector<72x64xf32>
    %98 = arith.addf %93, %97 : vector<72x64xf32>
    %cst_19 = arith.constant 0.000000e+00 : f32
    %99 = vector.broadcast %cst_19 : f32 to vector<72x64xf32>
    %100 = arith.maximumf %98, %99 : vector<72x64xf32>
    %101 = vector.extract_strided_slice %0 {offsets = [7, 0, 0], sizes = [1, 64, 64], strides = [1, 1, 1]} : vector<11x64x64xf32> to vector<1x64x64xf32>
    %102 = vector.shape_cast %101 : vector<1x64x64xf32> to vector<64x64xf32>
    %cst_20 = arith.constant dense<0.000000e+00> : vector<72x64xf32>
    %103 = tpu.matmul %100, %102, %cst_20 {dimension_numbers = #tpu.dot_dimension_numbers<[1], [0], [0], [1], [0, 0, 1, 1], [], []>} : vector<72x64xf32>, vector<64x64xf32>, vector<72x64xf32> -> vector<72x64xf32>
    %104 = vector.extract_strided_slice %1 {offsets = [97, 0], sizes = [1, 64], strides = [1, 1]} : vector<104x64xf32> to vector<1x64xf32>
    %105 = vector.shape_cast %104 : vector<1x64xf32> to vector<64xf32>
    %106 = vector.shape_cast %105 : vector<64xf32> to vector<1x64xf32>
    %107 = vector.broadcast %106 : vector<1x64xf32> to vector<72x64xf32>
    %108 = arith.addf %103, %107 : vector<72x64xf32>
    %109 = arith.addf %72, %90 : vector<72x64xf32>
    %110 = vector.shape_cast %109 : vector<72x64xf32> to vector<8x9x64xf32>
    %111 = vector.extract_strided_slice %110 {offsets = [0, 1, 0], sizes = [8, 4, 64], strides = [1, 1, 1]} : vector<8x9x64xf32> to vector<8x4x64xf32>
    %112 = vector.shape_cast %111 : vector<8x4x64xf32> to vector<32x64xf32>
    %113 = arith.addf %72, %108 : vector<72x64xf32>
    %114 = vector.shape_cast %113 : vector<72x64xf32> to vector<8x9x64xf32>
    %115 = vector.extract_strided_slice %114 {offsets = [0, 1, 0], sizes = [8, 4, 64], strides = [1, 1, 1]} : vector<8x9x64xf32> to vector<8x4x64xf32>
    %116 = vector.shape_cast %115 : vector<8x4x64xf32> to vector<32x64xf32>
    %117 = vector.extract_strided_slice %0 {offsets = [8, 0, 0], sizes = [1, 64, 64], strides = [1, 1, 1]} : vector<11x64x64xf32> to vector<1x64x64xf32>
    %118 = vector.shape_cast %117 : vector<1x64x64xf32> to vector<64x64xf32>
    %cst_21 = arith.constant dense<0.000000e+00> : vector<32x64xf32>
    %119 = tpu.matmul %112, %118, %cst_21 {dimension_numbers = #tpu.dot_dimension_numbers<[1], [0], [0], [1], [0, 0, 1, 1], [], []>} : vector<32x64xf32>, vector<64x64xf32>, vector<32x64xf32> -> vector<32x64xf32>
    %120 = vector.extract_strided_slice %1 {offsets = [98, 0], sizes = [1, 64], strides = [1, 1]} : vector<104x64xf32> to vector<1x64xf32>
    %121 = vector.shape_cast %120 : vector<1x64xf32> to vector<64xf32>
    %122 = vector.shape_cast %121 : vector<64xf32> to vector<1x64xf32>
    %123 = vector.broadcast %122 : vector<1x64xf32> to vector<32x64xf32>
    %124 = arith.addf %119, %123 : vector<32x64xf32>
    %125 = vector.shape_cast %124 : vector<32x64xf32> to vector<8x4x64xf32>
    %126 = vector.extract_strided_slice %0 {offsets = [9, 0, 0], sizes = [1, 64, 64], strides = [1, 1, 1]} : vector<11x64x64xf32> to vector<1x64x64xf32>
    %127 = vector.shape_cast %126 : vector<1x64x64xf32> to vector<64x64xf32>
    %cst_22 = arith.constant dense<0.000000e+00> : vector<32x64xf32>
    %128 = tpu.matmul %112, %127, %cst_22 {dimension_numbers = #tpu.dot_dimension_numbers<[1], [0], [0], [1], [0, 0, 1, 1], [], []>} : vector<32x64xf32>, vector<64x64xf32>, vector<32x64xf32> -> vector<32x64xf32>
    %129 = vector.extract_strided_slice %1 {offsets = [99, 0], sizes = [1, 64], strides = [1, 1]} : vector<104x64xf32> to vector<1x64xf32>
    %130 = vector.shape_cast %129 : vector<1x64xf32> to vector<64xf32>
    %131 = vector.shape_cast %130 : vector<64xf32> to vector<1x64xf32>
    %132 = vector.broadcast %131 : vector<1x64xf32> to vector<32x64xf32>
    %133 = arith.addf %128, %132 : vector<32x64xf32>
    %134 = vector.shape_cast %133 : vector<32x64xf32> to vector<8x4x64xf32>
    %135 = vector.shape_cast %4 : vector<64xf32> to vector<1x1x64xf32>
    %136 = vector.broadcast %135 : vector<1x1x64xf32> to vector<8x4x64xf32>
    %137 = arith.mulf %134, %136 : vector<8x4x64xf32>
    %138 = vector.shape_cast %6 : vector<64xf32> to vector<1x1x64xf32>
    %139 = vector.broadcast %138 : vector<1x1x64xf32> to vector<8x4x64xf32>
    %140 = arith.mulf %134, %139 : vector<8x4x64xf32>
    %141 = tpu.concatenate %137, %140 in 1 : vector<8x4x64xf32>, vector<8x4x64xf32> -> vector<8x8x64xf32>
    "tpu.trace_start"() <{level = 10 : i32, message = "bqe,bke->bqk"}> : () -> ()
    %cst_23 = arith.constant dense<0.000000e+00> : vector<8x4x8xf32>
    %142 = tpu.matmul %125, %141, %cst_23 {dimension_numbers = #tpu.dot_dimension_numbers<[2], [2], [1], [1], [0, 0, 0, 1, 1, 1], [0], [0]>} : vector<8x4x64xf32>, vector<8x8x64xf32>, vector<8x4x8xf32> -> vector<8x4x8xf32>
    "tpu.trace_stop"() : () -> ()
    %cst_24 = arith.constant 0.0883883461 : f32
    %143 = vector.broadcast %cst_24 : f32 to vector<8x4x8xf32>
    %144 = arith.mulf %142, %143 : vector<8x4x8xf32>
    %145 = vector.extract_strided_slice %144 {offsets = [0, 0, 0], sizes = [8, 4, 4], strides = [1, 1, 1]} : vector<8x4x8xf32> to vector<8x4x4xf32>
    %146 = math.absf %145 : vector<8x4x4xf32>
    %147 = vector.extract_strided_slice %144 {offsets = [0, 0, 4], sizes = [8, 4, 4], strides = [1, 1, 1]} : vector<8x4x8xf32> to vector<8x4x4xf32>
    %148 = math.absf %147 : vector<8x4x4xf32>
    %149 = vector.extract_strided_slice %0 {offsets = [10, 0, 0], sizes = [1, 64, 64], strides = [1, 1, 1]} : vector<11x64x64xf32> to vector<1x64x64xf32>
    %150 = vector.shape_cast %149 : vector<1x64x64xf32> to vector<64x64xf32>
    %cst_25 = arith.constant dense<0.000000e+00> : vector<32x64xf32>
    %151 = tpu.matmul %116, %150, %cst_25 {dimension_numbers = #tpu.dot_dimension_numbers<[1], [0], [0], [1], [0, 0, 1, 1], [], []>} : vector<32x64xf32>, vector<64x64xf32>, vector<32x64xf32> -> vector<32x64xf32>
    %152 = vector.extract_strided_slice %1 {offsets = [100, 0], sizes = [1, 64], strides = [1, 1]} : vector<104x64xf32> to vector<1x64xf32>
    %153 = vector.shape_cast %152 : vector<1x64xf32> to vector<64xf32>
    %154 = vector.shape_cast %153 : vector<64xf32> to vector<1x64xf32>
    %155 = vector.broadcast %154 : vector<1x64xf32> to vector<32x64xf32>
    %156 = arith.addf %151, %155 : vector<32x64xf32>
    %157 = vector.shape_cast %156 : vector<32x64xf32> to vector<8x4x64xf32>
    %158 = vector.shape_cast %8 : vector<64xf32> to vector<1x1x64xf32>
    %159 = vector.broadcast %158 : vector<1x1x64xf32> to vector<8x4x64xf32>
    %160 = arith.mulf %157, %159 : vector<8x4x64xf32>
    %161 = vector.shape_cast %4 : vector<64xf32> to vector<1x1x64xf32>
    %162 = vector.broadcast %161 : vector<1x1x64xf32> to vector<8x4x64xf32>
    %163 = arith.mulf %160, %162 : vector<8x4x64xf32>
    %cst_26 = arith.constant dense<0.000000e+00> : vector<8x4xf32>
    %164 = vector.multi_reduction <add>, %163, %cst_26 [2] : vector<8x4x64xf32> to vector<8x4xf32>
    %cst_27 = arith.constant 0.0883883461 : f32
    %165 = vector.broadcast %cst_27 : f32 to vector<8x4xf32>
    %166 = arith.mulf %164, %165 : vector<8x4xf32>
    %167 = vector.shape_cast %6 : vector<64xf32> to vector<1x1x64xf32>
    %168 = vector.broadcast %167 : vector<1x1x64xf32> to vector<8x4x64xf32>
    %169 = arith.mulf %160, %168 : vector<8x4x64xf32>
    %cst_28 = arith.constant dense<0.000000e+00> : vector<8x4xf32>
    %170 = vector.multi_reduction <add>, %169, %cst_28 [2] : vector<8x4x64xf32> to vector<8x4xf32>
    %cst_29 = arith.constant 0.0883883461 : f32
    %171 = vector.broadcast %cst_29 : f32 to vector<8x4xf32>
    %172 = arith.mulf %170, %171 : vector<8x4xf32>
    %c0_30 = arith.constant 0 : index
    %c0_31 = arith.constant 0 : index
    %173 = vector.load %arg1[%c0_30, %c0_31] : memref<8x4xf32, #tpu.memory_space<vmem>>, vector<8x4xf32>
    %174 = vector.extract_strided_slice %173 {offsets = [0, 0], sizes = [8, 1], strides = [1, 1]} : vector<8x4xf32> to vector<8x1xf32>
    %175 = vector.extract_strided_slice %146 {offsets = [0, 0, 0], sizes = [8, 1, 4], strides = [1, 1, 1]} : vector<8x4x4xf32> to vector<8x1x4xf32>
    %176 = vector.shape_cast %175 : vector<8x1x4xf32> to vector<8x4xf32>
    %177 = vector.broadcast %174 : vector<8x1xf32> to vector<8x4xf32>
    %178 = arith.mulf %177, %176 : vector<8x4xf32>
    %179 = arith.addf %166, %178 : vector<8x4xf32>
    %180 = vector.extract_strided_slice %173 {offsets = [0, 1], sizes = [8, 1], strides = [1, 1]} : vector<8x4xf32> to vector<8x1xf32>
    %181 = vector.extract_strided_slice %146 {offsets = [0, 1, 0], sizes = [8, 1, 4], strides = [1, 1, 1]} : vector<8x4x4xf32> to vector<8x1x4xf32>
    %182 = vector.shape_cast %181 : vector<8x1x4xf32> to vector<8x4xf32>
    %183 = vector.broadcast %180 : vector<8x1xf32> to vector<8x4xf32>
    %184 = arith.mulf %183, %182 : vector<8x4xf32>
    %185 = arith.addf %179, %184 : vector<8x4xf32>
    %186 = vector.extract_strided_slice %173 {offsets = [0, 2], sizes = [8, 1], strides = [1, 1]} : vector<8x4xf32> to vector<8x1xf32>
    %187 = vector.extract_strided_slice %146 {offsets = [0, 2, 0], sizes = [8, 1, 4], strides = [1, 1, 1]} : vector<8x4x4xf32> to vector<8x1x4xf32>
    %188 = vector.shape_cast %187 : vector<8x1x4xf32> to vector<8x4xf32>
    %189 = vector.broadcast %186 : vector<8x1xf32> to vector<8x4xf32>
    %190 = arith.mulf %189, %188 : vector<8x4xf32>
    %191 = arith.addf %185, %190 : vector<8x4xf32>
    %192 = vector.extract_strided_slice %173 {offsets = [0, 3], sizes = [8, 1], strides = [1, 1]} : vector<8x4xf32> to vector<8x1xf32>
    %193 = vector.extract_strided_slice %146 {offsets = [0, 3, 0], sizes = [8, 1, 4], strides = [1, 1, 1]} : vector<8x4x4xf32> to vector<8x1x4xf32>
    %194 = vector.shape_cast %193 : vector<8x1x4xf32> to vector<8x4xf32>
    %195 = vector.broadcast %192 : vector<8x1xf32> to vector<8x4xf32>
    %196 = arith.mulf %195, %194 : vector<8x4xf32>
    %197 = arith.addf %191, %196 : vector<8x4xf32>
    %cst_32 = arith.constant 0.000000e+00 : f32
    %198 = vector.broadcast %cst_32 : f32 to vector<8x4xf32>
    %199 = arith.cmpf ogt, %197, %198 : vector<8x4xf32>
    %cst_33 = arith.constant 0.000000e+00 : f32
    %200 = vector.broadcast %cst_33 : f32 to vector<8x4xf32>
    %201 = arith.minimumf %197, %200 : vector<8x4xf32>
    %202 = math.exp %201 : vector<8x4xf32>
    %cst_34 = arith.constant 1.000000e+00 : f32
    %203 = vector.broadcast %cst_34 : f32 to vector<8x4xf32>
    %204 = arith.subf %202, %203 : vector<8x4xf32>
    %205 = arith.select %199, %197, %204 : vector<8x4xi1>, vector<8x4xf32>
    %206 = vector.extract_strided_slice %205 {offsets = [0, 0], sizes = [8, 1], strides = [1, 1]} : vector<8x4xf32> to vector<8x1xf32>
    %207 = vector.extract_strided_slice %148 {offsets = [0, 0, 0], sizes = [8, 1, 4], strides = [1, 1, 1]} : vector<8x4x4xf32> to vector<8x1x4xf32>
    %208 = vector.shape_cast %207 : vector<8x1x4xf32> to vector<8x4xf32>
    %209 = vector.broadcast %206 : vector<8x1xf32> to vector<8x4xf32>
    %210 = arith.mulf %209, %208 : vector<8x4xf32>
    %211 = arith.addf %172, %210 : vector<8x4xf32>
    %212 = vector.extract_strided_slice %205 {offsets = [0, 1], sizes = [8, 1], strides = [1, 1]} : vector<8x4xf32> to vector<8x1xf32>
    %213 = vector.extract_strided_slice %148 {offsets = [0, 1, 0], sizes = [8, 1, 4], strides = [1, 1, 1]} : vector<8x4x4xf32> to vector<8x1x4xf32>
    %214 = vector.shape_cast %213 : vector<8x1x4xf32> to vector<8x4xf32>
    %215 = vector.broadcast %212 : vector<8x1xf32> to vector<8x4xf32>
    %216 = arith.mulf %215, %214 : vector<8x4xf32>
    %217 = arith.addf %211, %216 : vector<8x4xf32>
    %218 = vector.extract_strided_slice %205 {offsets = [0, 2], sizes = [8, 1], strides = [1, 1]} : vector<8x4xf32> to vector<8x1xf32>
    %219 = vector.extract_strided_slice %148 {offsets = [0, 2, 0], sizes = [8, 1, 4], strides = [1, 1, 1]} : vector<8x4x4xf32> to vector<8x1x4xf32>
    %220 = vector.shape_cast %219 : vector<8x1x4xf32> to vector<8x4xf32>
    %221 = vector.broadcast %218 : vector<8x1xf32> to vector<8x4xf32>
    %222 = arith.mulf %221, %220 : vector<8x4xf32>
    %223 = arith.addf %217, %222 : vector<8x4xf32>
    %224 = vector.extract_strided_slice %205 {offsets = [0, 3], sizes = [8, 1], strides = [1, 1]} : vector<8x4xf32> to vector<8x1xf32>
    %225 = vector.extract_strided_slice %148 {offsets = [0, 3, 0], sizes = [8, 1, 4], strides = [1, 1, 1]} : vector<8x4x4xf32> to vector<8x1x4xf32>
    %226 = vector.shape_cast %225 : vector<8x1x4xf32> to vector<8x4xf32>
    %227 = vector.broadcast %224 : vector<8x1xf32> to vector<8x4xf32>
    %228 = arith.mulf %227, %226 : vector<8x4xf32>
    %229 = arith.addf %223, %228 : vector<8x4xf32>
    %c0_35 = arith.constant 0 : index
    %c0_36 = arith.constant 0 : index
    %230 = vector.load %arg5[%c0_35, %c0_36] : memref<8x4xf32, #tpu.memory_space<vmem>>, vector<8x4xf32>
    tpu.vector_store %arg5[%c0_35, %c0_36], %229 {strides = array<i32>} : memref<8x4xf32, #tpu.memory_space<vmem>>, vector<8x4xf32>,
    return
  }
  func.func @transform_0(%arg0: i32) -> (i32, i32) {
    %c0_i32 = arith.constant 0 : i32
    %c0_i32_0 = arith.constant 0 : i32
    return %arg0, %c0_i32 : i32, i32
  }
  func.func @transform_1(%arg0: i32) -> (i32, i32) {
    %c0_i32 = arith.constant 0 : i32
    %c0_i32_0 = arith.constant 0 : i32
    return %arg0, %c0_i32 : i32, i32
  }
  func.func @transform_2(%arg0: i32) -> (i32, i32, i32) {
    %c0_i32 = arith.constant 0 : i32
    %c0_i32_0 = arith.constant 0 : i32
    %c0_i32_1 = arith.constant 0 : i32
    %c0_i32_2 = arith.constant 0 : i32
    return %c0_i32, %c0_i32_0, %c0_i32_1 : i32, i32, i32
  }
  func.func @transform_3(%arg0: i32) -> (i32, i32) {
    %c0_i32 = arith.constant 0 : i32
    %c0_i32_0 = arith.constant 0 : i32
    %c0_i32_1 = arith.constant 0 : i32
    return %c0_i32, %c0_i32_0 : i32, i32
  }
  func.func @transform_4(%arg0: i32) -> (i32, i32) {
    %c0_i32 = arith.constant 0 : i32
    %c0_i32_0 = arith.constant 0 : i32
    return %arg0, %c0_i32 : i32, i32
  }
}

</mosaic_0001>

<llo_original>
// kernel: spectra_mixer.1
$region0: #{spectra_mixer.1}
  #allocation0 [shape = 'u32[]', space=smem, size = 0x4, offset = 0x4, fixed_abs, tag = 'smem constant byte address 0x4 - core index']
  #allocation1 [shape = 'u32[144,128]{1,0:T(1,128)}', space=vmem, size = 0x12000, scoped, tag = 'internal scratch']
  %s0 = inlined_call_operand.vmem [shape: f32[8,4], index: 0, kind: input, shape index: {}]
  %s1 = inlined_call_operand.vmem [shape: f32[72,18], index: 1, kind: input, shape index: {}]
  %s2 = inlined_call_operand.vmem [shape: f32[11,64,64], index: 2, kind: input, shape index: {}]
  %s3 = inlined_call_operand.vmem [shape: f32[104,64], index: 3, kind: input, shape index: {}]
  %s4 = inlined_call_operand.vmem [shape: f32[8,4], index: 4, kind: output, shape index: {}]
  %s5 = sld [smem:[#allocation0]]
  $region26: #{spectra_mixer.1} parent=0
    _
  %s7 = ssub.s32 1, %s5
  %s8 = scalar_select 0, %s7, %s5
  // Predicated region
  $region2: #{spectra_mixer.1} parent=0 // pred_check
    _
  $region3: #{spectra_mixer.1} parent=0 // pred_check_branch
    %10 = sbr.rel (0) target = $region5
  $region4: #{spectra_mixer.1} parent=0 // pred_region
    _
  $region5: #{spectra_mixer.1} parent=0 // pred_fallthru
    _
  // Predicated region
  $region6: #{spectra_mixer.1} parent=0 // pred_check
    _
  $region7: #{spectra_mixer.1} parent=0 // pred_check_branch
    %12 = sbr.rel (0) target = $region9
  $region8: #{spectra_mixer.1} parent=0 // pred_region
    _
  $region9: #{spectra_mixer.1} parent=0 // pred_fallthru
    _
  // Predicated region
  $region10: #{spectra_mixer.1} parent=0 // pred_check
    _
  $region11: #{spectra_mixer.1} parent=0 // pred_check_branch
    %14 = sbr.rel (0) target = $region13
  $region12: #{spectra_mixer.1} parent=0 // pred_region
    _
  $region13: #{spectra_mixer.1} parent=0 // pred_fallthru
    _
  // Predicated region
  $region14: #{spectra_mixer.1} parent=0 // pred_check
    _
  $region15: #{spectra_mixer.1} parent=0 // pred_check_branch
    %16 = sbr.rel (0) target = $region17
  $region16: #{spectra_mixer.1} parent=0 // pred_region
    _
  $region17: #{spectra_mixer.1} parent=0 // pred_fallthru
    _
  %v17 = vld [vmem:[%s2] sm:$0xff]
  %v18 = vld [vmem:[%s2 + $0x8] sm:$0xff]
  %v19 = vld [vmem:[%s2 + $0x10] sm:$0xff]
  %v20 = vld [vmem:[%s2 + $0x18] sm:$0xff]
  %v21 = vld [vmem:[%s2 + $0x20] sm:$0xff]
  %v22 = vld [vmem:[%s2 + $0x28] sm:$0xff]
  %v23 = vld [vmem:[%s2 + $0x30] sm:$0xff]
  %v24 = vld [vmem:[%s2 + $0x38] sm:$0xff]
  %v25 = vld [vmem:[%s2 + $0x40] sm:$0xff]
  %v26 = vld [vmem:[%s2 + $0x48] sm:$0xff]
  %v27 = vld [vmem:[%s2 + $0x50] sm:$0xff]
  %v28 = vld [vmem:[%s2 + $0x58] sm:$0xff]
  %v29 = vld [vmem:[%s2 + $0x60] sm:$0xff]
  %v30 = vld [vmem:[%s2 + $0x68] sm:$0xff]
  %v31 = vld [vmem:[%s2 + $0x70] sm:$0xff]
  %v32 = vld [vmem:[%s2 + $0x78] sm:$0xff]
  %v33 = vld [vmem:[%s2 + $0x80] sm:$0xff]
  %v34 = vld [vmem:[%s2 + $0x88] sm:$0xff]
  %v35 = vld [vmem:[%s2 + $0x90] sm:$0xff]
  %v36 = vld [vmem:[%s2 + $0x98] sm:$0xff]
  %v37 = vld [vmem:[%s2 + $0xa0] sm:$0xff]
  %v38 = vld [vmem:[%s2 + $0xa8] sm:$0xff]
  %v39 = vld [vmem:[%s2 + $0xb0] sm:$0xff]
  %v40 = vld [vmem:[%s2 + $0xb8] sm:$0xff]
  %v41 = vld [vmem:[%s2 + $0xc0] sm:$0xff]
  %v42 = vld [vmem:[%s2 + $0xc8] sm:$0xff]
  %v43 = vld [vmem:[%s2 + $0xd0] sm:$0xff]
  %v44 = vld [vmem:[%s2 + $0xd8] sm:$0xff]
  %v45 = vld [vmem:[%s2 + $0xe0] sm:$0xff]
  %v46 = vld [vmem:[%s2 + $0xe8] sm:$0xff]
  %v47 = vld [vmem:[%s2 + $0xf0] sm:$0xff]
  %v48 = vld [vmem:[%s2 + $0xf8] sm:$0xff]
  %v49 = vld [vmem:[%s2 + $0x100] sm:$0xff]
  %v50 = vld [vmem:[%s2 + $0x108] sm:$0xff]
  %v51 = vld [vmem:[%s2 + $0x110] sm:$0xff]
  %v52 = vld [vmem:[%s2 + $0x118] sm:$0xff]
  %v53 = vld [vmem:[%s2 + $0x120] sm:$0xff]
  %v54 = vld [vmem:[%s2 + $0x128] sm:$0xff]
  %v55 = vld [vmem:[%s2 + $0x130] sm:$0xff]
  %v56 = vld [vmem:[%s2 + $0x138] sm:$0xff]
  %v57 = vld [vmem:[%s2 + $0x140] sm:$0xff]
  %v58 = vld [vmem:[%s2 + $0x148] sm:$0xff]
  %v59 = vld [vmem:[%s2 + $0x150] sm:$0xff]
  %v60 = vld [vmem:[%s2 + $0x158] sm:$0xff]
  %v61 = vld [vmem:[%s2 + $0x160] sm:$0xff]
  %v62 = vld [vmem:[%s2 + $0x168] sm:$0xff]
  %v63 = vld [vmem:[%s2 + $0x170] sm:$0xff]
  %v64 = vld [vmem:[%s2 + $0x178] sm:$0xff]
  %v65 = vld [vmem:[%s2 + $0x180] sm:$0xff]
  %v66 = vld [vmem:[%s2 + $0x188] sm:$0xff]
  %v67 = vld [vmem:[%s2 + $0x190] sm:$0xff]
  %v68 = vld [vmem:[%s2 + $0x198] sm:$0xff]
  %v69 = vld [vmem:[%s2 + $0x1a0] sm:$0xff]
  %v70 = vld [vmem:[%s2 + $0x1a8] sm:$0xff]
  %v71 = vld [vmem:[%s2 + $0x1b0] sm:$0xff]
  %v72 = vld [vmem:[%s2 + $0x1b8] sm:$0xff]
  %v73 = vld [vmem:[%s2 + $0x1c0] sm:$0xff]
  %v74 = vld [vmem:[%s2 + $0x1c8] sm:$0xff]
  %v75 = vld [vmem:[%s2 + $0x1d0] sm:$0xff]
  %v76 = vld [vmem:[%s2 + $0x1d8] sm:$0xff]
  %v77 = vld [vmem:[%s2 + $0x1e0] sm:$0xff]
  %v78 = vld [vmem:[%s2 + $0x1e8] sm:$0xff]
  %v79 = vld [vmem:[%s2 + $0x1f0] sm:$0xff]
  %v80 = vld [vmem:[%s2 + $0x1f8] sm:$0xff]
  %v81 = vld [vmem:[%s2 + $0x200] sm:$0xff]
  %v82 = vld [vmem:[%s2 + $0x208] sm:$0xff]
  %v83 = vld [vmem:[%s2 + $0x210] sm:$0xff]
  %v84 = vld [vmem:[%s2 + $0x218] sm:$0xff]
  %v85 = vld [vmem:[%s2 + $0x220] sm:$0xff]
  %v86 = vld [vmem:[%s2 + $0x228] sm:$0xff]
  %v87 = vld [vmem:[%s2 + $0x230] sm:$0xff]
  %v88 = vld [vmem:[%s2 + $0x238] sm:$0xff]
  %v89 = vld [vmem:[%s2 + $0x240] sm:$0xff]
  %v90 = vld [vmem:[%s2 + $0x248] sm:$0xff]
  %v91 = vld [vmem:[%s2 + $0x250] sm:$0xff]
  %v92 = vld [vmem:[%s2 + $0x258] sm:$0xff]
  %v93 = vld [vmem:[%s2 + $0x260] sm:$0xff]
  %v94 = vld [vmem:[%s2 + $0x268] sm:$0xff]
  %v95 = vld [vmem:[%s2 + $0x270] sm:$0xff]
  %v96 = vld [vmem:[%s2 + $0x278] sm:$0xff]
  %v97 = vld [vmem:[%s2 + $0x280] sm:$0xff]
  %v98 = vld [vmem:[%s2 + $0x288] sm:$0xff]
  %v99 = vld [vmem:[%s2 + $0x290] sm:$0xff]
  %v100 = vld [vmem:[%s2 + $0x298] sm:$0xff]
  %v101 = vld [vmem:[%s2 + $0x2a0] sm:$0xff]
  %v102 = vld [vmem:[%s2 + $0x2a8] sm:$0xff]
  %v103 = vld [vmem:[%s2 + $0x2b0] sm:$0xff]
  %v104 = vld [vmem:[%s2 + $0x2b8] sm:$0xff]
  %v105 = vld [vmem:[%s3] sm:$0xff]
  %v106 = vld [vmem:[%s3 + $0x8] sm:$0xff]
  %v107 = vld [vmem:[%s3 + $0x10] sm:$0xff]
  %v108 = vld [vmem:[%s3 + $0x18] sm:$0xff]
  %v109 = vld [vmem:[%s3 + $0x20] sm:$0xff]
  %v110 = vld [vmem:[%s3 + $0x28] sm:$0xff]
  %v111 = vld [vmem:[%s3 + $0x30] sm:$0xff]
  %v112 = vld [vmem:[%s3 + $0x38] sm:$0xff]
  %v113 = vld [vmem:[%s3 + $0x40] sm:$0xff]
  %v114 = vld [vmem:[%s3 + $0x48] sm:$0xff]
  %v115 = vld [vmem:[%s3 + $0x50] sm:$0xff]
  %v116 = vld [vmem:[%s3 + $0x58] sm:$0xff]
  %v117 = vld [vmem:[%s3 + $0x60] sm:$0xff]
  %v118 = vld [vmem:[%s1] sm:$0xff]
  %v119 = vld [vmem:[%s1 + $0x8] sm:$0xff]
  %v120 = vld [vmem:[%s1 + $0x10] sm:$0xff]
  %v121 = vld [vmem:[%s1 + $0x18] sm:$0xff]
  %v122 = vld [vmem:[%s1 + $0x20] sm:$0xff]
  %v123 = vld [vmem:[%s1 + $0x28] sm:$0xff]
  %v124 = vld [vmem:[%s1 + $0x30] sm:$0xff]
  %v125 = vld [vmem:[%s1 + $0x38] sm:$0xff]
  %v126 = vld [vmem:[%s1 + $0x40] sm:$0xff]
  %vm127 = vcmask 146432
  %v129 = vsel %vm127, %v118, 0
  %v132 = vsel %vm127, %v119, 0
  %v135 = vsel %vm127, %v120, 0
  %v138 = vsel %vm127, %v121, 0
  %v141 = vsel %vm127, %v122, 0
  %v144 = vsel %vm127, %v123, 0
  %v147 = vsel %vm127, %v124, 0
  %v150 = vsel %vm127, %v125, 0
  %v153 = vsel %vm127, %v126, 0
  %vm155 = vcmask 1041408
  %v157 = vsel %vm155, %v116, 0
  %159 = vmatprep.subr.mxu0 0.0
  %160 = vmatpush1.msra.mxu0 %v114
  %161 = vmatprep.subr.mxu0 0.0
  %162 = vmatpush1.msra.mxu0 %v115
  %163 = vmatprep.subr.mxu0 0.0
  %164 = vmatpush1.msra.mxu0 %v157
  %165 = vmatprep.subr.mxu0 0.0
  %166 = vmatpush1.msra.mxu0 0.0
  %167 = vmatprep.subr.mxu0 0.0
  %168 = vmatpush1.msra.mxu0 0.0
  %169 = vmatprep.subr.mxu0 0.0
  %170 = vmatpush1.msra.mxu0 0.0
  %171 = vmatprep.subr.mxu0 0.0
  %172 = vmatpush1.msra.mxu0 0.0
  %173 = vmatprep.subr.mxu0 0.0
  %174 = vmatpush1.msra.mxu0 0.0
  %175 = vmatprep.subr.mxu0 0.0
  %176 = vmatpush1.msra.mxu0 0.0
  %177 = vmatprep.subr.mxu0 0.0
  %178 = vmatpush1.msra.mxu0 0.0
  %179 = vmatprep.subr.mxu0 0.0
  %180 = vmatpush1.msra.mxu0 0.0
  %181 = vmatprep.subr.mxu0 0.0
  %182 = vmatpush1.msra.mxu0 0.0
  %183 = vmatprep.subr.mxu0 0.0
  %184 = vmatpush1.msra.mxu0 0.0
  %185 = vmatprep.subr.mxu0 0.0
  %186 = vmatpush1.msra.mxu0 0.0
  %187 = vmatprep.subr.mxu0 0.0
  %188 = vmatpush1.msra.mxu0 0.0
  %189 = vmatprep.subr.mxu0 0.0
  %190 = vmatpush1.msra.mxu0 0.0
  %191 = vmatprep.subr.mxu0 0.0
  %192 = vmatpush1.msra.mxu0 0.0
  %193 = vmatprep.subr.mxu0 0.0
  %194 = vmatpush1.msra.mxu0 0.0
  %195 = vmatprep.subr.mxu0 0.0
  %196 = vmatpush1.msra.mxu0 0.0
  %197 = vmatprep.subr.mxu0 0.0
  %198 = vmatpush1.msra.mxu0 0.0
  %199 = vmatprep.subr.mxu0 0.0
  %200 = vmatpush1.msra.mxu0 0.0
  %201 = vmatprep.subr.mxu0 0.0
  %202 = vmatpush1.msra.mxu0 0.0
  %203 = vmatprep.subr.mxu0 0.0
  %204 = vmatpush1.msra.mxu0 0.0
  %205 = vmatprep.subr.mxu0 0.0
  %206 = vmatpush1.msra.mxu0 0.0
  %207 = vmatprep.subr.mxu0 0.0
  %208 = vmatpush1.msra.mxu0 0.0
  %209 = vmatprep.subr.mxu0 0.0
  %210 = vmatpush1.msra.mxu0 0.0
  %211 = vmatprep.subr.mxu0 0.0
  %212 = vmatpush1.msra.mxu0 0.0
  %213 = vmatprep.subr.mxu0 0.0
  %214 = vmatpush1.msra.mxu0 0.0
  %215 = vmatprep.subr.mxu0 0.0
  %216 = vmatpush1.msra.mxu0 0.0
  %217 = vmatprep.subr.mxu0 0.0
  %218 = vmatpush1.msra.mxu0 0.0
  %219 = vmatprep.subr.mxu0 0.0
  %220 = vmatpush1.msra.mxu0 0.0
  %221 = vmatprep.subr.mxu0 0.0
  %222 = vmatpush1.msra.mxu0 0.0
  %223 = vmatprep.mubr.f32.mxu0 0.0
  %224 = vmatmul.mubr.f32.gmra.mrb[0].mxu0 %v129
  %v225 = vpop.f32.mrb[0].mxu0
  %v226 = vadd.f32 0.0, %v225
  %v227 = vpop.f32.mrb[0].mxu0
  %228 = vmatprep.mubr.f32.mxu0 0.0
  %229 = vmatmul.mubr.f32.gmra.mrb[0].mxu0 %v132
  %v230 = vpop.f32.mrb[0].mxu0
  %v231 = vadd.f32 0.0, %v230
  %v232 = vpop.f32.mrb[0].mxu0
  %233 = vmatprep.mubr.f32.mxu0 0.0
  %234 = vmatmul.mubr.f32.gmra.mrb[0].mxu0 %v135
  %v235 = vpop.f32.mrb[0].mxu0
  %v236 = vadd.f32 0.0, %v235
  %v237 = vpop.f32.mrb[0].mxu0
  %238 = vmatprep.mubr.f32.mxu0 0.0
  %239 = vmatmul.mubr.f32.gmra.mrb[0].mxu0 %v138
  %v240 = vpop.f32.mrb[0].mxu0
  %v241 = vadd.f32 0.0, %v240
  %v242 = vpop.f32.mrb[0].mxu0
  %243 = vmatprep.mubr.f32.mxu0 0.0
  %244 = vmatmul.mubr.f32.gmra.mrb[0].mxu0 %v141
  %v245 = vpop.f32.mrb[0].mxu0
  %v246 = vadd.f32 0.0, %v245
  %v247 = vpop.f32.mrb[0].mxu0
  %248 = vmatprep.mubr.f32.mxu0 0.0
  %249 = vmatmul.mubr.f32.gmra.mrb[0].mxu0 %v144
  %v250 = vpop.f32.mrb[0].mxu0
  %v251 = vadd.f32 0.0, %v250
  %v252 = vpop.f32.mrb[0].mxu0
  %253 = vmatprep.mubr.f32.mxu0 0.0
  %254 = vmatmul.mubr.f32.gmra.mrb[0].mxu0 %v147
  %v255 = vpop.f32.mrb[0].mxu0
  %v256 = vadd.f32 0.0, %v255
  %v257 = vpop.f32.mrb[0].mxu0
  %258 = vmatprep.mubr.f32.mxu0 0.0
  %259 = vmatmul.mubr.f32.gmra.mrb[0].mxu0 %v150
  %v260 = vpop.f32.mrb[0].mxu0
  %v261 = vadd.f32 0.0, %v260
  %v262 = vpop.f32.mrb[0].mxu0
  %263 = vmatprep.mubr.f32.mxu0 0.0
  %264 = vmatmul.mubr.f32.gmra.mrb[0].mxu0 %v153
  %v265 = vpop.f32.mrb[0].mxu0
  %v266 = vadd.f32 0.0, %v265
  %v267 = vpop.f32.mrb[0].mxu0
  %268 = vdwg.mxu0
  %v269 = vlaneseq
  %v270 = vshrl.u32 %v269, 7
  %v271 = vsub.s32 2, %v270
  %v272 = vrot.slane %v116, %v271
  %vm273 = vcmask 523264
  %v275 = vsel %vm273, %v226, 0
  %v278 = vsel %vm273, %v231, 0
  %v281 = vsel %vm273, %v236, 0
  %v284 = vsel %vm273, %v241, 0
  %v287 = vsel %vm273, %v246, 0
  %v290 = vsel %vm273, %v251, 0
  %v293 = vsel %vm273, %v256, 0
  %v296 = vsel %vm273, %v261, 0
  %v299 = vsel %vm273, %v266, 0
  %301 = vmatprep.subr.mxu0 0.0
  %302 = vmatpush1.msra.mxu0 %v17
  %303 = vmatprep.subr.mxu0 0.0
  %304 = vmatpush1.msra.mxu0 %v18
  %305 = vmatprep.subr.mxu0 0.0
  %306 = vmatpush1.msra.mxu0 %v19
  %307 = vmatprep.subr.mxu0 0.0
  %308 = vmatpush1.msra.mxu0 %v20
  %309 = vmatprep.subr.mxu0 0.0
  %310 = vmatpush1.msra.mxu0 %v21
  %311 = vmatprep.subr.mxu0 0.0
  %312 = vmatpush1.msra.mxu0 %v22
  %313 = vmatprep.subr.mxu0 0.0
  %314 = vmatpush1.msra.mxu0 %v23
  %315 = vmatprep.subr.mxu0 0.0
  %316 = vmatpush1.msra.mxu0 %v24
  %317 = vmatprep.subr.mxu0 0.0
  %318 = vmatpush1.msra.mxu0 0.0
  %319 = vmatprep.subr.mxu0 0.0
  %320 = vmatpush1.msra.mxu0 0.0
  %321 = vmatprep.subr.mxu0 0.0
  %322 = vmatpush1.msra.mxu0 0.0
  %323 = vmatprep.subr.mxu0 0.0
  %324 = vmatpush1.msra.mxu0 0.0
  %325 = vmatprep.subr.mxu0 0.0
  %326 = vmatpush1.msra.mxu0 0.0
  %327 = vmatprep.subr.mxu0 0.0
  %328 = vmatpush1.msra.mxu0 0.0
  %329 = vmatprep.subr.mxu0 0.0
  %330 = vmatpush1.msra.mxu0 0.0
  %331 = vmatprep.subr.mxu0 0.0
  %332 = vmatpush1.msra.mxu0 0.0
  %333 = vmatprep.subr.mxu0 0.0
  %334 = vmatpush1.msra.mxu0 0.0
  %335 = vmatprep.subr.mxu0 0.0
  %336 = vmatpush1.msra.mxu0 0.0
  %337 = vmatprep.subr.mxu0 0.0
  %338 = vmatpush1.msra.mxu0 0.0
  %339 = vmatprep.subr.mxu0 0.0
  %340 = vmatpush1.msra.mxu0 0.0
  %341 = vmatprep.subr.mxu0 0.0
  %342 = vmatpush1.msra.mxu0 0.0
  %343 = vmatprep.subr.mxu0 0.0
  %344 = vmatpush1.msra.mxu0 0.0
  %345 = vmatprep.subr.mxu0 0.0
  %346 = vmatpush1.msra.mxu0 0.0
  %347 = vmatprep.subr.mxu0 0.0
  %348 = vmatpush1.msra.mxu0 0.0
  %349 = vmatprep.subr.mxu0 0.0
  %350 = vmatpush1.msra.mxu0 0.0
  %351 = vmatprep.subr.mxu0 0.0
  %352 = vmatpush1.msra.mxu0 0.0
  %353 = vmatprep.subr.mxu0 0.0
  %354 = vmatpush1.msra.mxu0 0.0
  %355 = vmatprep.subr.mxu0 0.0
  %356 = vmatpush1.msra.mxu0 0.0
  %357 = vmatprep.subr.mxu0 0.0
  %358 = vmatpush1.msra.mxu0 0.0
  %359 = vmatprep.subr.mxu0 0.0
  %360 = vmatpush1.msra.mxu0 0.0
  %361 = vmatprep.subr.mxu0 0.0
  %362 = vmatpush1.msra.mxu0 0.0
  %363 = vmatprep.subr.mxu0 0.0
  %364 = vmatpush1.msra.mxu0 0.0
  %365 = vmatprep.mubr.f32.mxu0 0.0
  %366 = vmatmul.mubr.f32.gmra.mrb[0].mxu0 %v275
  %v367 = vpop.f32.mrb[0].mxu0
  %v368 = vadd.f32 %v272, %v367
  %v369 = vpop.f32.mrb[0].mxu0
  %370 = vmatprep.mubr.f32.mxu0 0.0
  %371 = vmatmul.mubr.f32.gmra.mrb[0].mxu0 %v278
  %v372 = vpop.f32.mrb[0].mxu0
  %v373 = vadd.f32 %v272, %v372
  %v374 = vpop.f32.mrb[0].mxu0
  %375 = vmatprep.mubr.f32.mxu0 0.0
  %376 = vmatmul.mubr.f32.gmra.mrb[0].mxu0 %v281
  %v377 = vpop.f32.mrb[0].mxu0
  %v378 = vadd.f32 %v272, %v377
  %v379 = vpop.f32.mrb[0].mxu0
  %380 = vmatprep.mubr.f32.mxu0 0.0
  %381 = vmatmul.mubr.f32.gmra.mrb[0].mxu0 %v284
  %v382 = vpop.f32.mrb[0].mxu0
  %v383 = vadd.f32 %v272, %v382
  %v384 = vpop.f32.mrb[0].mxu0
  %385 = vmatprep.mubr.f32.mxu0 0.0
  %386 = vmatmul.mubr.f32.gmra.mrb[0].mxu0 %v287
  %v387 = vpop.f32.mrb[0].mxu0
  %v388 = vadd.f32 %v272, %v387
  %v389 = vpop.f32.mrb[0].mxu0
  %390 = vmatprep.mubr.f32.mxu0 0.0
  %391 = vmatmul.mubr.f32.gmra.mrb[0].mxu0 %v290
  %v392 = vpop.f32.mrb[0].mxu0
  %v393 = vadd.f32 %v272, %v392
  %v394 = vpop.f32.mrb[0].mxu0
  %395 = vmatprep.mubr.f32.mxu0 0.0
  %396 = vmatmul.mubr.f32.gmra.mrb[0].mxu0 %v293
  %v397 = vpop.f32.mrb[0].mxu0
  %v398 = vadd.f32 %v272, %v397
  %v399 = vpop.f32.mrb[0].mxu0
  %400 = vmatprep.mubr.f32.mxu0 0.0
  %401 = vmatmul.mubr.f32.gmra.mrb[0].mxu0 %v296
  %v402 = vpop.f32.mrb[0].mxu0
  %v403 = vadd.f32 %v272, %v402
  %v404 = vpop.f32.mrb[0].mxu0
  %405 = vmatprep.mubr.f32.mxu0 0.0
  %406 = vmatmul.mubr.f32.gmra.mrb[0].mxu0 %v299
  %v407 = vpop.f32.mrb[0].mxu0
  %v408 = vadd.f32 %v272, %v407
  %v409 = vpop.f32.mrb[0].mxu0
  %410 = vdwg.mxu0
  %v420 = vcombine.high %v368, %v368
  %v422 = vunpack.c.l.s4 1966171168
  %v423 = vunpack.c.0.s8 %v422
  %v424 = vlaneseq
  %v425 = vshrl.u32 %v424, 7
  %v426 = vsub.s32 %v423, %v425
  %v427 = vrot.slane %v368, %v426
  %v429 = vunpack.c.l.s4 1966171168
  %v430 = vunpack.c.0.s8 %v429
  %v431 = vlaneseq
  %v432 = vshrl.u32 %v431, 7
  %v433 = vsub.s32 %v430, %v432
  %v434 = vrot.slane %v420, %v433
  %v435 = vcombine.high %v427, %v427
  %v436 = vcombine.high %v434, %v434
  %v438 = vunpack.c.l.s4 1966171168
  %v439 = vunpack.c.0.s8 %v438
  %v440 = vlaneseq
  %v441 = vshrl.u32 %v440, 7
  %v442 = vsub.s32 %v439, %v441
  %v443 = vrot.slane %v427, %v442
  %v445 = vunpack.c.l.s4 1966171168
  %v446 = vunpack.c.0.s8 %v445
  %v447 = vlaneseq
  %v448 = vshrl.u32 %v447, 7
  %v449 = vsub.s32 %v446, %v448
  %v450 = vrot.slane %v434, %v449
  %v452 = vunpack.c.l.s4 1966171168
  %v453 = vunpack.c.0.s8 %v452
  %v454 = vlaneseq
  %v455 = vshrl.u32 %v454, 7
  %v456 = vsub.s32 %v453, %v455
  %v457 = vrot.slane %v435, %v456
  %v459 = vunpack.c.l.s4 1966171168
  %v460 = vunpack.c.0.s8 %v459
  %v461 = vlaneseq
  %v462 = vshrl.u32 %v461, 7
  %v463 = vsub.s32 %v460, %v462
  %v464 = vrot.slane %v436, %v463
  %v465 = vcombine.high %v443, %v443
  %v466 = vcombine.high %v450, %v450
  %v467 = vcombine.high %v457, %v457
  %v468 = vcombine.high %v464, %v464
  %v469 = vcombine.high %v373, %v373
  %v471 = vunpack.c.l.s4 1966171168
  %v472 = vunpack.c.0.s8 %v471
  %v473 = vlaneseq
  %v474 = vshrl.u32 %v473, 7
  %v475 = vsub.s32 %v472, %v474
  %v476 = vrot.slane %v373, %v475
  %v478 = vunpack.c.l.s4 1966171168
  %v479 = vunpack.c.0.s8 %v478
  %v480 = vlaneseq
  %v481 = vshrl.u32 %v480, 7
  %v482 = vsub.s32 %v479, %v481
  %v483 = vrot.slane %v469, %v482
  %v484 = vcombine.high %v476, %v476
  %v485 = vcombine.high %v483, %v483
  %v487 = vunpack.c.l.s4 1966171168
  %v488 = vunpack.c.0.s8 %v487
  %v489 = vlaneseq
  %v490 = vshrl.u32 %v489, 7
  %v491 = vsub.s32 %v488, %v490
  %v492 = vrot.slane %v476, %v491
  %v494 = vunpack.c.l.s4 1966171168
  %v495 = vunpack.c.0.s8 %v494
  %v496 = vlaneseq
  %v497 = vshrl.u32 %v496, 7
  %v498 = vsub.s32 %v495, %v497
  %v499 = vrot.slane %v483, %v498
  %v501 = vunpack.c.l.s4 1966171168
  %v502 = vunpack.c.0.s8 %v501
  %v503 = vlaneseq
  %v504 = vshrl.u32 %v503, 7
  %v505 = vsub.s32 %v502, %v504
  %v506 = vrot.slane %v484, %v505
  %v508 = vunpack.c.l.s4 1966171168
  %v509 = vunpack.c.0.s8 %v508
  %v510 = vlaneseq
  %v511 = vshrl.u32 %v510, 7
  %v512 = vsub.s32 %v509, %v511
  %v513 = vrot.slane %v485, %v512
  %v514 = vcombine.high %v492, %v492
  %v515 = vcombine.high %v499, %v499
  %v516 = vcombine.high %v506, %v506
  %v517 = vcombine.high %v513, %v513
  %v518 = vcombine.high %v378, %v378
  %v520 = vunpack.c.l.s4 1966171168
  %v521 = vunpack.c.0.s8 %v520
  %v522 = vlaneseq
  %v523 = vshrl.u32 %v522, 7
  %v524 = vsub.s32 %v521, %v523
  %v525 = vrot.slane %v378, %v524
  %v527 = vunpack.c.l.s4 1966171168
  %v528 = vunpack.c.0.s8 %v527
  %v529 = vlaneseq
  %v530 = vshrl.u32 %v529, 7
  %v531 = vsub.s32 %v528, %v530
  %v532 = vrot.slane %v518, %v531
  %v533 = vcombine.high %v525, %v525
  %v534 = vcombine.high %v532, %v532
  %v536 = vunpack.c.l.s4 1966171168
  %v537 = vunpack.c.0.s8 %v536
  %v538 = vlaneseq
  %v539 = vshrl.u32 %v538, 7
  %v540 = vsub.s32 %v537, %v539
  %v541 = vrot.slane %v525, %v540
  %v543 = vunpack.c.l.s4 1966171168
  %v544 = vunpack.c.0.s8 %v543
  %v545 = vlaneseq
  %v546 = vshrl.u32 %v545, 7
  %v547 = vsub.s32 %v544, %v546
  %v548 = vrot.slane %v532, %v547
  %v550 = vunpack.c.l.s4 1966171168
  %v551 = vunpack.c.0.s8 %v550
  %v552 = vlaneseq
  %v553 = vshrl.u32 %v552, 7
  %v554 = vsub.s32 %v551, %v553
  %v555 = vrot.slane %v533, %v554
  %v557 = vunpack.c.l.s4 1966171168
  %v558 = vunpack.c.0.s8 %v557
  %v559 = vlaneseq
  %v560 = vshrl.u32 %v559, 7
  %v561 = vsub.s32 %v558, %v560
  %v562 = vrot.slane %v534, %v561
  %v563 = vcombine.high %v541, %v541
  %v564 = vcombine.high %v548, %v548
  %v565 = vcombine.high %v555, %v555
  %v566 = vcombine.high %v562, %v562
  %v567 = vcombine.high %v383, %v383
  %v569 = vunpack.c.l.s4 1966171168
  %v570 = vunpack.c.0.s8 %v569
  %v571 = vlaneseq
  %v572 = vshrl.u32 %v571, 7
  %v573 = vsub.s32 %v570, %v572
  %v574 = vrot.slane %v383, %v573
  %v576 = vunpack.c.l.s4 1966171168
  %v577 = vunpack.c.0.s8 %v576
  %v578 = vlaneseq
  %v579 = vshrl.u32 %v578, 7
  %v580 = vsub.s32 %v577, %v579
  %v581 = vrot.slane %v567, %v580
  %v582 = vcombine.high %v574, %v574
  %v583 = vcombine.high %v581, %v581
  %v585 = vunpack.c.l.s4 1966171168
  %v586 = vunpack.c.0.s8 %v585
  %v587 = vlaneseq
  %v588 = vshrl.u32 %v587, 7
  %v589 = vsub.s32 %v586, %v588
  %v590 = vrot.slane %v574, %v589
  %v592 = vunpack.c.l.s4 1966171168
  %v593 = vunpack.c.0.s8 %v592
  %v594 = vlaneseq
  %v595 = vshrl.u32 %v594, 7
  %v596 = vsub.s32 %v593, %v595
  %v597 = vrot.slane %v581, %v596
  %v599 = vunpack.c.l.s4 1966171168
  %v600 = vunpack.c.0.s8 %v599
  %v601 = vlaneseq
  %v602 = vshrl.u32 %v601, 7
  %v603 = vsub.s32 %v600, %v602
  %v604 = vrot.slane %v582, %v603
  %v606 = vunpack.c.l.s4 1966171168
  %v607 = vunpack.c.0.s8 %v606
  %v608 = vlaneseq
  %v609 = vshrl.u32 %v608, 7
  %v610 = vsub.s32 %v607, %v609
  %v611 = vrot.slane %v583, %v610
  %v612 = vcombine.high %v590, %v590
  %v613 = vcombine.high %v597, %v597
  %v614 = vcombine.high %v604, %v604
  %v615 = vcombine.high %v611, %v611
  %v616 = vcombine.high %v388, %v388
  %v618 = vunpack.c.l.s4 1966171168
  %v619 = vunpack.c.0.s8 %v618
  %v620 = vlaneseq
  %v621 = vshrl.u32 %v620, 7
  %v622 = vsub.s32 %v619, %v621
  %v623 = vrot.slane %v388, %v622
  %v625 = vunpack.c.l.s4 1966171168
  %v626 = vunpack.c.0.s8 %v625
  %v627 = vlaneseq
  %v628 = vshrl.u32 %v627, 7
  %v629 = vsub.s32 %v626, %v628
  %v630 = vrot.slane %v616, %v629
  %v631 = vcombine.high %v623, %v623
  %v632 = vcombine.high %v630, %v630
  %v634 = vunpack.c.l.s4 1966171168
  %v635 = vunpack.c.0.s8 %v634
  %v636 = vlaneseq
  %v637 = vshrl.u32 %v636, 7
  %v638 = vsub.s32 %v635, %v637
  %v639 = vrot.slane %v623, %v638
  %v641 = vunpack.c.l.s4 1966171168
  %v642 = vunpack.c.0.s8 %v641
  %v643 = vlaneseq
  %v644 = vshrl.u32 %v643, 7
  %v645 = vsub.s32 %v642, %v644
  %v646 = vrot.slane %v630, %v645
  %v648 = vunpack.c.l.s4 1966171168
  %v649 = vunpack.c.0.s8 %v648
  %v650 = vlaneseq
  %v651 = vshrl.u32 %v650, 7
  %v652 = vsub.s32 %v649, %v651
  %v653 = vrot.slane %v631, %v652
  %v655 = vunpack.c.l.s4 1966171168
  %v656 = vunpack.c.0.s8 %v655
  %v657 = vlaneseq
  %v658 = vshrl.u32 %v657, 7
  %v659 = vsub.s32 %v656, %v658
  %v660 = vrot.slane %v632, %v659
  %v661 = vcombine.high %v639, %v639
  %v662 = vcombine.high %v646, %v646
  %v663 = vcombine.high %v653, %v653
  %v664 = vcombine.high %v660, %v660
  %v665 = vcombine.high %v393, %v393
  %v667 = vunpack.c.l.s4 1966171168
  %v668 = vunpack.c.0.s8 %v667
  %v669 = vlaneseq
  %v670 = vshrl.u32 %v669, 7
  %v671 = vsub.s32 %v668, %v670
  %v672 = vrot.slane %v393, %v671
  %v674 = vunpack.c.l.s4 1966171168
  %v675 = vunpack.c.0.s8 %v674
  %v676 = vlaneseq
  %v677 = vshrl.u32 %v676, 7
  %v678 = vsub.s32 %v675, %v677
  %v679 = vrot.slane %v665, %v678
  %v680 = vcombine.high %v672, %v672
  %v681 = vcombine.high %v679, %v679
  %v683 = vunpack.c.l.s4 1966171168
  %v684 = vunpack.c.0.s8 %v683
  %v685 = vlaneseq
  %v686 = vshrl.u32 %v685, 7
  %v687 = vsub.s32 %v684, %v686
  %v688 = vrot.slane %v672, %v687
  %v690 = vunpack.c.l.s4 1966171168
  %v691 = vunpack.c.0.s8 %v690
  %v692 = vlaneseq
  %v693 = vshrl.u32 %v692, 7
  %v694 = vsub.s32 %v691, %v693
  %v695 = vrot.slane %v679, %v694
  %v697 = vunpack.c.l.s4 1966171168
  %v698 = vunpack.c.0.s8 %v697
  %v699 = vlaneseq
  %v700 = vshrl.u32 %v699, 7
  %v701 = vsub.s32 %v698, %v700
  %v702 = vrot.slane %v680, %v701
  %v704 = vunpack.c.l.s4 1966171168
  %v705 = vunpack.c.0.s8 %v704
  %v706 = vlaneseq
  %v707 = vshrl.u32 %v706, 7
  %v708 = vsub.s32 %v705, %v707
  %v709 = vrot.slane %v681, %v708
  %v710 = vcombine.high %v688, %v688
  %v711 = vcombine.high %v695, %v695
  %v712 = vcombine.high %v702, %v702
  %v713 = vcombine.high %v709, %v709
  %v714 = vcombine.high %v398, %v398
  %v716 = vunpack.c.l.s4 1966171168
  %v717 = vunpack.c.0.s8 %v716
  %v718 = vlaneseq
  %v719 = vshrl.u32 %v718, 7
  %v720 = vsub.s32 %v717, %v719
  %v721 = vrot.slane %v398, %v720
  %v723 = vunpack.c.l.s4 1966171168
  %v724 = vunpack.c.0.s8 %v723
  %v725 = vlaneseq
  %v726 = vshrl.u32 %v725, 7
  %v727 = vsub.s32 %v724, %v726
  %v728 = vrot.slane %v714, %v727
  %v729 = vcombine.high %v721, %v721
  %v730 = vcombine.high %v728, %v728
  %v732 = vunpack.c.l.s4 1966171168
  %v733 = vunpack.c.0.s8 %v732
  %v734 = vlaneseq
  %v735 = vshrl.u32 %v734, 7
  %v736 = vsub.s32 %v733, %v735
  %v737 = vrot.slane %v721, %v736
  %v739 = vunpack.c.l.s4 1966171168
  %v740 = vunpack.c.0.s8 %v739
  %v741 = vlaneseq
  %v742 = vshrl.u32 %v741, 7
  %v743 = vsub.s32 %v740, %v742
  %v744 = vrot.slane %v728, %v743
  %v746 = vunpack.c.l.s4 1966171168
  %v747 = vunpack.c.0.s8 %v746
  %v748 = vlaneseq
  %v749 = vshrl.u32 %v748, 7
  %v750 = vsub.s32 %v747, %v749
  %v751 = vrot.slane %v729, %v750
  %v753 = vunpack.c.l.s4 1966171168
  %v754 = vunpack.c.0.s8 %v753
  %v755 = vlaneseq
  %v756 = vshrl.u32 %v755, 7
  %v757 = vsub.s32 %v754, %v756
  %v758 = vrot.slane %v730, %v757
  %v759 = vcombine.high %v737, %v737
  %v760 = vcombine.high %v744, %v744
  %v761 = vcombine.high %v751, %v751
  %v762 = vcombine.high %v758, %v758
  %v763 = vcombine.high %v403, %v403
  %v765 = vunpack.c.l.s4 1966171168
  %v766 = vunpack.c.0.s8 %v765
  %v767 = vlaneseq
  %v768 = vshrl.u32 %v767, 7
  %v769 = vsub.s32 %v766, %v768
  %v770 = vrot.slane %v403, %v769
  %v772 = vunpack.c.l.s4 1966171168
  %v773 = vunpack.c.0.s8 %v772
  %v774 = vlaneseq
  %v775 = vshrl.u32 %v774, 7
  %v776 = vsub.s32 %v773, %v775
  %v777 = vrot.slane %v763, %v776
  %v778 = vcombine.high %v770, %v770
  %v779 = vcombine.high %v777, %v777
  %v781 = vunpack.c.l.s4 1966171168
  %v782 = vunpack.c.0.s8 %v781
  %v783 = vlaneseq
  %v784 = vshrl.u32 %v783, 7
  %v785 = vsub.s32 %v782, %v784
  %v786 = vrot.slane %v770, %v785
  %v788 = vunpack.c.l.s4 1966171168
  %v789 = vunpack.c.0.s8 %v788
  %v790 = vlaneseq
  %v791 = vshrl.u32 %v790, 7
  %v792 = vsub.s32 %v789, %v791
  %v793 = vrot.slane %v777, %v792
  %v795 = vunpack.c.l.s4 1966171168
  %v796 = vunpack.c.0.s8 %v795
  %v797 = vlaneseq
  %v798 = vshrl.u32 %v797, 7
  %v799 = vsub.s32 %v796, %v798
  %v800 = vrot.slane %v778, %v799
  %v802 = vunpack.c.l.s4 1966171168
  %v803 = vunpack.c.0.s8 %v802
  %v804 = vlaneseq
  %v805 = vshrl.u32 %v804, 7
  %v806 = vsub.s32 %v803, %v805
  %v807 = vrot.slane %v779, %v806
  %v808 = vcombine.high %v786, %v786
  %v809 = vcombine.high %v793, %v793
  %v810 = vcombine.high %v800, %v800
  %v811 = vcombine.high %v807, %v807
  %v812 = vcombine.high %v408, %v408
  %v814 = vunpack.c.l.s4 1966171168
  %v815 = vunpack.c.0.s8 %v814
  %v816 = vlaneseq
  %v817 = vshrl.u32 %v816, 7
  %v818 = vsub.s32 %v815, %v817
  %v819 = vrot.slane %v408, %v818
  %v821 = vunpack.c.l.s4 1966171168
  %v822 = vunpack.c.0.s8 %v821
  %v823 = vlaneseq
  %v824 = vshrl.u32 %v823, 7
  %v825 = vsub.s32 %v822, %v824
  %v826 = vrot.slane %v812, %v825
  %v827 = vcombine.high %v819, %v819
  %v828 = vcombine.high %v826, %v826
  %v830 = vunpack.c.l.s4 1966171168
  %v831 = vunpack.c.0.s8 %v830
  %v832 = vlaneseq
  %v833 = vshrl.u32 %v832, 7
  %v834 = vsub.s32 %v831, %v833
  %v835 = vrot.slane %v819, %v834
  %v837 = vunpack.c.l.s4 1966171168
  %v838 = vunpack.c.0.s8 %v837
  %v839 = vlaneseq
  %v840 = vshrl.u32 %v839, 7
  %v841 = vsub.s32 %v838, %v840
  %v842 = vrot.slane %v826, %v841
  %v844 = vunpack.c.l.s4 1966171168
  %v845 = vunpack.c.0.s8 %v844
  %v846 = vlaneseq
  %v847 = vshrl.u32 %v846, 7
  %v848 = vsub.s32 %v845, %v847
  %v849 = vrot.slane %v827, %v848
  %v851 = vunpack.c.l.s4 1966171168
  %v852 = vunpack.c.0.s8 %v851
  %v853 = vlaneseq
  %v854 = vshrl.u32 %v853, 7
  %v855 = vsub.s32 %v852, %v854
  %v856 = vrot.slane %v828, %v855
  %v857 = vcombine.high %v835, %v835
  %v858 = vcombine.high %v842, %v842
  %v859 = vcombine.high %v849, %v849
  %v860 = vcombine.high %v856, %v856
  %v861 = vlaneseq
  %v862 = vshrl.u32 %v861, 7
  %v863 = vsub.s32 3, %v862
  %v864 = vrot.slane %v116, %v863
  %865 = vmatprep.subr.mxu0 0.0
  %866 = vmatpush1.msra.mxu0 %v25
  %867 = vmatprep.subr.mxu0 0.0
  %868 = vmatpush1.msra.mxu0 %v26
  %869 = vmatprep.subr.mxu0 0.0
  %870 = vmatpush1.msra.mxu0 %v27
  %871 = vmatprep.subr.mxu0 0.0
  %872 = vmatpush1.msra.mxu0 %v28
  %873 = vmatprep.subr.mxu0 0.0
  %874 = vmatpush1.msra.mxu0 %v29
  %875 = vmatprep.subr.mxu0 0.0
  %876 = vmatpush1.msra.mxu0 %v30
  %877 = vmatprep.subr.mxu0 0.0
  %878 = vmatpush1.msra.mxu0 %v31
  %879 = vmatprep.subr.mxu0 0.0
  %880 = vmatpush1.msra.mxu0 %v32
  %881 = vmatprep.subr.mxu0 0.0
  %882 = vmatpush1.msra.mxu0 0.0
  %883 = vmatprep.subr.mxu0 0.0
  %884 = vmatpush1.msra.mxu0 0.0
  %885 = vmatprep.subr.mxu0 0.0
  %886 = vmatpush1.msra.mxu0 0.0
  %887 = vmatprep.subr.mxu0 0.0
  %888 = vmatpush1.msra.mxu0 0.0
  %889 = vmatprep.subr.mxu0 0.0
  %890 = vmatpush1.msra.mxu0 0.0
  %891 = vmatprep.subr.mxu0 0.0
  %892 = vmatpush1.msra.mxu0 0.0
  %893 = vmatprep.subr.mxu0 0.0
  %894 = vmatpush1.msra.mxu0 0.0
  %895 = vmatprep.subr.mxu0 0.0
  %896 = vmatpush1.msra.mxu0 0.0
  %897 = vmatprep.subr.mxu0 0.0
  %898 = vmatpush1.msra.mxu0 0.0
  %899 = vmatprep.subr.mxu0 0.0
  %900 = vmatpush1.msra.mxu0 0.0
  %901 = vmatprep.subr.mxu0 0.0
  %902 = vmatpush1.msra.mxu0 0.0
  %903 = vmatprep.subr.mxu0 0.0
  %904 = vmatpush1.msra.mxu0 0.0
  %905 = vmatprep.subr.mxu0 0.0
  %906 = vmatpush1.msra.mxu0 0.0
  %907 = vmatprep.subr.mxu0 0.0
  %908 = vmatpush1.msra.mxu0 0.0
  %909 = vmatprep.subr.mxu0 0.0
  %910 = vmatpush1.msra.mxu0 0.0
  %911 = vmatprep.subr.mxu0 0.0
  %912 = vmatpush1.msra.mxu0 0.0
  %913 = vmatprep.subr.mxu0 0.0
  %914 = vmatpush1.msra.mxu0 0.0
  %915 = vmatprep.subr.mxu0 0.0
  %916 = vmatpush1.msra.mxu0 0.0
  %917 = vmatprep.subr.mxu0 0.0
  %918 = vmatpush1.msra.mxu0 0.0
  %919 = vmatprep.subr.mxu0 0.0
  %920 = vmatpush1.msra.mxu0 0.0
  %921 = vmatprep.subr.mxu0 0.0
  %922 = vmatpush1.msra.mxu0 0.0
  %923 = vmatprep.subr.mxu0 0.0
  %924 = vmatpush1.msra.mxu0 0.0
  %925 = vmatprep.subr.mxu0 0.0
  %926 = vmatpush1.msra.mxu0 0.0
  %927 = vmatprep.subr.mxu0 0.0
  %928 = vmatpush1.msra.mxu0 0.0
  %929 = vmatprep.mubr.f32.mxu0 0.0
  %930 = vmatmul.mubr.f32.gmra.mrb[0].mxu0 %v275
  %v931 = vpop.f32.mrb[0].mxu0
  %v932 = vadd.f32 %v864, %v931
  %v933 = vpop.f32.mrb[0].mxu0
  %934 = vmatprep.mubr.f32.mxu0 0.0
  %935 = vmatmul.mubr.f32.gmra.mrb[0].mxu0 %v278
  %v936 = vpop.f32.mrb[0].mxu0
  %v937 = vadd.f32 %v864, %v936
  %v938 = vpop.f32.mrb[0].mxu0
  %939 = vmatprep.mubr.f32.mxu0 0.0
  %940 = vmatmul.mubr.f32.gmra.mrb[0].mxu0 %v281
  %v941 = vpop.f32.mrb[0].mxu0
  %v942 = vadd.f32 %v864, %v941
  %v943 = vpop.f32.mrb[0].mxu0
  %944 = vmatprep.mubr.f32.mxu0 0.0
  %945 = vmatmul.mubr.f32.gmra.mrb[0].mxu0 %v284
  %v946 = vpop.f32.mrb[0].mxu0
  %v947 = vadd.f32 %v864, %v946
  %v948 = vpop.f32.mrb[0].mxu0
  %949 = vmatprep.mubr.f32.mxu0 0.0
  %950 = vmatmul.mubr.f32.gmra.mrb[0].mxu0 %v287
  %v951 = vpop.f32.mrb[0].mxu0
  %v952 = vadd.f32 %v864, %v951
  %v953 = vpop.f32.mrb[0].mxu0
  %954 = vmatprep.mubr.f32.mxu0 0.0
  %955 = vmatmul.mubr.f32.gmra.mrb[0].mxu0 %v290
  %v956 = vpop.f32.mrb[0].mxu0
  %v957 = vadd.f32 %v864, %v956
  %v958 = vpop.f32.mrb[0].mxu0
  %959 = vmatprep.mubr.f32.mxu0 0.0
  %960 = vmatmul.mubr.f32.gmra.mrb[0].mxu0 %v293
  %v961 = vpop.f32.mrb[0].mxu0
  %v962 = vadd.f32 %v864, %v961
  %v963 = vpop.f32.mrb[0].mxu0
  %964 = vmatprep.mubr.f32.mxu0 0.0
  %965 = vmatmul.mubr.f32.gmra.mrb[0].mxu0 %v296
  %v966 = vpop.f32.mrb[0].mxu0
  %v967 = vadd.f32 %v864, %v966
  %v968 = vpop.f32.mrb[0].mxu0
  %969 = vmatprep.mubr.f32.mxu0 0.0
  %970 = vmatmul.mubr.f32.gmra.mrb[0].mxu0 %v299
  %v971 = vpop.f32.mrb[0].mxu0
  %v972 = vadd.f32 %v864, %v971
  %v973 = vpop.f32.mrb[0].mxu0
  %974 = vdwg.mxu0
  %v984 = vcombine.high %v932, %v932
  %v986 = vunpack.c.l.s4 1966171168
  %v987 = vunpack.c.0.s8 %v986
  %v988 = vlaneseq
  %v989 = vshrl.u32 %v988, 7
  %v990 = vsub.s32 %v987, %v989
  %v991 = vrot.slane %v932, %v990
  %v993 = vunpack.c.l.s4 1966171168
  %v994 = vunpack.c.0.s8 %v993
  %v995 = vlaneseq
  %v996 = vshrl.u32 %v995, 7
  %v997 = vsub.s32 %v994, %v996
  %v998 = vrot.slane %v984, %v997
  %v999 = vcombine.high %v991, %v991
  %v1000 = vcombine.high %v998, %v998
  %v1002 = vunpack.c.l.s4 1966171168
  %v1003 = vunpack.c.0.s8 %v1002
  %v1004 = vlaneseq
  %v1005 = vshrl.u32 %v1004, 7
  %v1006 = vsub.s32 %v1003, %v1005
  %v1007 = vrot.slane %v991, %v1006
  %v1009 = vunpack.c.l.s4 1966171168
  %v1010 = vunpack.c.0.s8 %v1009
  %v1011 = vlaneseq
  %v1012 = vshrl.u32 %v1011, 7
  %v1013 = vsub.s32 %v1010, %v1012
  %v1014 = vrot.slane %v998, %v1013
  %v1016 = vunpack.c.l.s4 1966171168
  %v1017 = vunpack.c.0.s8 %v1016
  %v1018 = vlaneseq
  %v1019 = vshrl.u32 %v1018, 7
  %v1020 = vsub.s32 %v1017, %v1019
  %v1021 = vrot.slane %v999, %v1020
  %v1023 = vunpack.c.l.s4 1966171168
  %v1024 = vunpack.c.0.s8 %v1023
  %v1025 = vlaneseq
  %v1026 = vshrl.u32 %v1025, 7
  %v1027 = vsub.s32 %v1024, %v1026
  %v1028 = vrot.slane %v1000, %v1027
  %v1029 = vcombine.high %v1007, %v1007
  %v1030 = vcombine.high %v1014, %v1014
  %v1031 = vcombine.high %v1021, %v1021
  %v1032 = vcombine.high %v1028, %v1028
  %v1033 = vcombine.high %v937, %v937
  %v1035 = vunpack.c.l.s4 1966171168
  %v1036 = vunpack.c.0.s8 %v1035
  %v1037 = vlaneseq
  %v1038 = vshrl.u32 %v1037, 7
  %v1039 = vsub.s32 %v1036, %v1038
  %v1040 = vrot.slane %v937, %v1039
  %v1042 = vunpack.c.l.s4 1966171168
  %v1043 = vunpack.c.0.s8 %v1042
  %v1044 = vlaneseq
  %v1045 = vshrl.u32 %v1044, 7
  %v1046 = vsub.s32 %v1043, %v1045
  %v1047 = vrot.slane %v1033, %v1046
  %v1048 = vcombine.high %v1040, %v1040
  %v1049 = vcombine.high %v1047, %v1047
  %v1051 = vunpack.c.l.s4 1966171168
  %v1052 = vunpack.c.0.s8 %v1051
  %v1053 = vlaneseq
  %v1054 = vshrl.u32 %v1053, 7
  %v1055 = vsub.s32 %v1052, %v1054
  %v1056 = vrot.slane %v1040, %v1055
  %v1058 = vunpack.c.l.s4 1966171168
  %v1059 = vunpack.c.0.s8 %v1058
  %v1060 = vlaneseq
  %v1061 = vshrl.u32 %v1060, 7
  %v1062 = vsub.s32 %v1059, %v1061
  %v1063 = vrot.slane %v1047, %v1062
  %v1065 = vunpack.c.l.s4 1966171168
  %v1066 = vunpack.c.0.s8 %v1065
  %v1067 = vlaneseq
  %v1068 = vshrl.u32 %v1067, 7
  %v1069 = vsub.s32 %v1066, %v1068
  %v1070 = vrot.slane %v1048, %v1069
  %v1072 = vunpack.c.l.s4 1966171168
  %v1073 = vunpack.c.0.s8 %v1072
  %v1074 = vlaneseq
  %v1075 = vshrl.u32 %v1074, 7
  %v1076 = vsub.s32 %v1073, %v1075
  %v1077 = vrot.slane %v1049, %v1076
  %v1078 = vcombine.high %v1056, %v1056
  %v1079 = vcombine.high %v1063, %v1063
  %v1080 = vcombine.high %v1070, %v1070
  %v1081 = vcombine.high %v1077, %v1077
  %v1082 = vcombine.high %v942, %v942
  %v1084 = vunpack.c.l.s4 1966171168
  %v1085 = vunpack.c.0.s8 %v1084
  %v1086 = vlaneseq
  %v1087 = vshrl.u32 %v1086, 7
  %v1088 = vsub.s32 %v1085, %v1087
  %v1089 = vrot.slane %v942, %v1088
  %v1091 = vunpack.c.l.s4 1966171168
  %v1092 = vunpack.c.0.s8 %v1091
  %v1093 = vlaneseq
  %v1094 = vshrl.u32 %v1093, 7
  %v1095 = vsub.s32 %v1092, %v1094
  %v1096 = vrot.slane %v1082, %v1095
  %v1097 = vcombine.high %v1089, %v1089
  %v1098 = vcombine.high %v1096, %v1096
  %v1100 = vunpack.c.l.s4 1966171168
  %v1101 = vunpack.c.0.s8 %v1100
  %v1102 = vlaneseq
  %v1103 = vshrl.u32 %v1102, 7
  %v1104 = vsub.s32 %v1101, %v1103
  %v1105 = vrot.slane %v1089, %v1104
  %v1107 = vunpack.c.l.s4 1966171168
  %v1108 = vunpack.c.0.s8 %v1107
  %v1109 = vlaneseq
  %v1110 = vshrl.u32 %v1109, 7
  %v1111 = vsub.s32 %v1108, %v1110
  %v1112 = vrot.slane %v1096, %v1111
  %v1114 = vunpack.c.l.s4 1966171168
  %v1115 = vunpack.c.0.s8 %v1114
  %v1116 = vlaneseq
  %v1117 = vshrl.u32 %v1116, 7
  %v1118 = vsub.s32 %v1115, %v1117
  %v1119 = vrot.slane %v1097, %v1118
  %v1121 = vunpack.c.l.s4 1966171168
  %v1122 = vunpack.c.0.s8 %v1121
  %v1123 = vlaneseq
  %v1124 = vshrl.u32 %v1123, 7
  %v1125 = vsub.s32 %v1122, %v1124
  %v1126 = vrot.slane %v1098, %v1125
  %v1127 = vcombine.high %v1105, %v1105
  %v1128 = vcombine.high %v1112, %v1112
  %v1129 = vcombine.high %v1119, %v1119
  %v1130 = vcombine.high %v1126, %v1126
  %v1131 = vcombine.high %v947, %v947
  %v1133 = vunpack.c.l.s4 1966171168
  %v1134 = vunpack.c.0.s8 %v1133
  %v1135 = vlaneseq
  %v1136 = vshrl.u32 %v1135, 7
  %v1137 = vsub.s32 %v1134, %v1136
  %v1138 = vrot.slane %v947, %v1137
  %v1140 = vunpack.c.l.s4 1966171168
  %v1141 = vunpack.c.0.s8 %v1140
  %v1142 = vlaneseq
  %v1143 = vshrl.u32 %v1142, 7
  %v1144 = vsub.s32 %v1141, %v1143
  %v1145 = vrot.slane %v1131, %v1144
  %v1146 = vcombine.high %v1138, %v1138
  %v1147 = vcombine.high %v1145, %v1145
  %v1149 = vunpack.c.l.s4 1966171168
  %v1150 = vunpack.c.0.s8 %v1149
  %v1151 = vlaneseq
  %v1152 = vshrl.u32 %v1151, 7
  %v1153 = vsub.s32 %v1150, %v1152
  %v1154 = vrot.slane %v1138, %v1153
  %v1156 = vunpack.c.l.s4 1966171168
  %v1157 = vunpack.c.0.s8 %v1156
  %v1158 = vlaneseq
  %v1159 = vshrl.u32 %v1158, 7
  %v1160 = vsub.s32 %v1157, %v1159
  %v1161 = vrot.slane %v1145, %v1160
  %v1163 = vunpack.c.l.s4 1966171168
  %v1164 = vunpack.c.0.s8 %v1163
  %v1165 = vlaneseq
  %v1166 = vshrl.u32 %v1165, 7
  %v1167 = vsub.s32 %v1164, %v1166
  %v1168 = vrot.slane %v1146, %v1167
  %v1170 = vunpack.c.l.s4 1966171168
  %v1171 = vunpack.c.0.s8 %v1170
  %v1172 = vlaneseq
  %v1173 = vshrl.u32 %v1172, 7
  %v1174 = vsub.s32 %v1171, %v1173
  %v1175 = vrot.slane %v1147, %v1174
  %v1176 = vcombine.high %v1154, %v1154
  %v1177 = vcombine.high %v1161, %v1161
  %v1178 = vcombine.high %v1168, %v1168
  %v1179 = vcombine.high %v1175, %v1175
  %v1180 = vcombine.high %v952, %v952
  %v1182 = vunpack.c.l.s4 1966171168
  %v1183 = vunpack.c.0.s8 %v1182
  %v1184 = vlaneseq
  %v1185 = vshrl.u32 %v1184, 7
  %v1186 = vsub.s32 %v1183, %v1185
  %v1187 = vrot.slane %v952, %v1186
  %v1189 = vunpack.c.l.s4 1966171168
  %v1190 = vunpack.c.0.s8 %v1189
  %v1191 = vlaneseq
  %v1192 = vshrl.u32 %v1191, 7
  %v1193 = vsub.s32 %v1190, %v1192
  %v1194 = vrot.slane %v1180, %v1193
  %v1195 = vcombine.high %v1187, %v1187
  %v1196 = vcombine.high %v1194, %v1194
  %v1198 = vunpack.c.l.s4 1966171168
  %v1199 = vunpack.c.0.s8 %v1198
  %v1200 = vlaneseq
  %v1201 = vshrl.u32 %v1200, 7
  %v1202 = vsub.s32 %v1199, %v1201
  %v1203 = vrot.slane %v1187, %v1202
  %v1205 = vunpack.c.l.s4 1966171168
  %v1206 = vunpack.c.0.s8 %v1205
  %v1207 = vlaneseq
  %v1208 = vshrl.u32 %v1207, 7
  %v1209 = vsub.s32 %v1206, %v1208
  %v1210 = vrot.slane %v1194, %v1209
  %v1212 = vunpack.c.l.s4 1966171168
  %v1213 = vunpack.c.0.s8 %v1212
  %v1214 = vlaneseq
  %v1215 = vshrl.u32 %v1214, 7
  %v1216 = vsub.s32 %v1213, %v1215
  %v1217 = vrot.slane %v1195, %v1216
  %v1219 = vunpack.c.l.s4 1966171168
  %v1220 = vunpack.c.0.s8 %v1219
  %v1221 = vlaneseq
  %v1222 = vshrl.u32 %v1221, 7
  %v1223 = vsub.s32 %v1220, %v1222
  %v1224 = vrot.slane %v1196, %v1223
  %v1225 = vcombine.high %v1203, %v1203
  %v1226 = vcombine.high %v1210, %v1210
  %v1227 = vcombine.high %v1217, %v1217
  %v1228 = vcombine.high %v1224, %v1224
  %v1229 = vcombine.high %v957, %v957
  %v1231 = vunpack.c.l.s4 1966171168
  %v1232 = vunpack.c.0.s8 %v1231
  %v1233 = vlaneseq
  %v1234 = vshrl.u32 %v1233, 7
  %v1235 = vsub.s32 %v1232, %v1234
  %v1236 = vrot.slane %v957, %v1235
  %v1238 = vunpack.c.l.s4 1966171168
  %v1239 = vunpack.c.0.s8 %v1238
  %v1240 = vlaneseq
  %v1241 = vshrl.u32 %v1240, 7
  %v1242 = vsub.s32 %v1239, %v1241
  %v1243 = vrot.slane %v1229, %v1242
  %v1244 = vcombine.high %v1236, %v1236
  %v1245 = vcombine.high %v1243, %v1243
  %v1247 = vunpack.c.l.s4 1966171168
  %v1248 = vunpack.c.0.s8 %v1247
  %v1249 = vlaneseq
  %v1250 = vshrl.u32 %v1249, 7
  %v1251 = vsub.s32 %v1248, %v1250
  %v1252 = vrot.slane %v1236, %v1251
  %v1254 = vunpack.c.l.s4 1966171168
  %v1255 = vunpack.c.0.s8 %v1254
  %v1256 = vlaneseq
  %v1257 = vshrl.u32 %v1256, 7
  %v1258 = vsub.s32 %v1255, %v1257
  %v1259 = vrot.slane %v1243, %v1258
  %v1261 = vunpack.c.l.s4 1966171168
  %v1262 = vunpack.c.0.s8 %v1261
  %v1263 = vlaneseq
  %v1264 = vshrl.u32 %v1263, 7
  %v1265 = vsub.s32 %v1262, %v1264
  %v1266 = vrot.slane %v1244, %v1265
  %v1268 = vunpack.c.l.s4 1966171168
  %v1269 = vunpack.c.0.s8 %v1268
  %v1270 = vlaneseq
  %v1271 = vshrl.u32 %v1270, 7
  %v1272 = vsub.s32 %v1269, %v1271
  %v1273 = vrot.slane %v1245, %v1272
  %v1274 = vcombine.high %v1252, %v1252
  %v1275 = vcombine.high %v1259, %v1259
  %v1276 = vcombine.high %v1266, %v1266
  %v1277 = vcombine.high %v1273, %v1273
  %v1278 = vcombine.high %v962, %v962
  %v1280 = vunpack.c.l.s4 1966171168
  %v1281 = vunpack.c.0.s8 %v1280
  %v1282 = vlaneseq
  %v1283 = vshrl.u32 %v1282, 7
  %v1284 = vsub.s32 %v1281, %v1283
  %v1285 = vrot.slane %v962, %v1284
  %v1287 = vunpack.c.l.s4 1966171168
  %v1288 = vunpack.c.0.s8 %v1287
  %v1289 = vlaneseq
  %v1290 = vshrl.u32 %v1289, 7
  %v1291 = vsub.s32 %v1288, %v1290
  %v1292 = vrot.slane %v1278, %v1291
  %v1293 = vcombine.high %v1285, %v1285
  %v1294 = vcombine.high %v1292, %v1292
  %v1296 = vunpack.c.l.s4 1966171168
  %v1297 = vunpack.c.0.s8 %v1296
  %v1298 = vlaneseq
  %v1299 = vshrl.u32 %v1298, 7
  %v1300 = vsub.s32 %v1297, %v1299
  %v1301 = vrot.slane %v1285, %v1300
  %v1303 = vunpack.c.l.s4 1966171168
  %v1304 = vunpack.c.0.s8 %v1303
  %v1305 = vlaneseq
  %v1306 = vshrl.u32 %v1305, 7
  %v1307 = vsub.s32 %v1304, %v1306
  %v1308 = vrot.slane %v1292, %v1307
  %v1310 = vunpack.c.l.s4 1966171168
  %v1311 = vunpack.c.0.s8 %v1310
  %v1312 = vlaneseq
  %v1313 = vshrl.u32 %v1312, 7
  %v1314 = vsub.s32 %v1311, %v1313
  %v1315 = vrot.slane %v1293, %v1314
  %v1317 = vunpack.c.l.s4 1966171168
  %v1318 = vunpack.c.0.s8 %v1317
  %v1319 = vlaneseq
  %v1320 = vshrl.u32 %v1319, 7
  %v1321 = vsub.s32 %v1318, %v1320
  %v1322 = vrot.slane %v1294, %v1321
  %v1323 = vcombine.high %v1301, %v1301
  %v1324 = vcombine.high %v1308, %v1308
  %v1325 = vcombine.high %v1315, %v1315
  %v1326 = vcombine.high %v1322, %v1322
  %v1327 = vcombine.high %v967, %v967
  %v1329 = vunpack.c.l.s4 1966171168
  %v1330 = vunpack.c.0.s8 %v1329
  %v1331 = vlaneseq
  %v1332 = vshrl.u32 %v1331, 7
  %v1333 = vsub.s32 %v1330, %v1332
  %v1334 = vrot.slane %v967, %v1333
  %v1336 = vunpack.c.l.s4 1966171168
  %v1337 = vunpack.c.0.s8 %v1336
  %v1338 = vlaneseq
  %v1339 = vshrl.u32 %v1338, 7
  %v1340 = vsub.s32 %v1337, %v1339
  %v1341 = vrot.slane %v1327, %v1340
  %v1342 = vcombine.high %v1334, %v1334
  %v1343 = vcombine.high %v1341, %v1341
  %v1345 = vunpack.c.l.s4 1966171168
  %v1346 = vunpack.c.0.s8 %v1345
  %v1347 = vlaneseq
  %v1348 = vshrl.u32 %v1347, 7
  %v1349 = vsub.s32 %v1346, %v1348
  %v1350 = vrot.slane %v1334, %v1349
  %v1352 = vunpack.c.l.s4 1966171168
  %v1353 = vunpack.c.0.s8 %v1352
  %v1354 = vlaneseq
  %v1355 = vshrl.u32 %v1354, 7
  %v1356 = vsub.s32 %v1353, %v1355
  %v1357 = vrot.slane %v1341, %v1356
  %v1359 = vunpack.c.l.s4 1966171168
  %v1360 = vunpack.c.0.s8 %v1359
  %v1361 = vlaneseq
  %v1362 = vshrl.u32 %v1361, 7
  %v1363 = vsub.s32 %v1360, %v1362
  %v1364 = vrot.slane %v1342, %v1363
  %v1366 = vunpack.c.l.s4 1966171168
  %v1367 = vunpack.c.0.s8 %v1366
  %v1368 = vlaneseq
  %v1369 = vshrl.u32 %v1368, 7
  %v1370 = vsub.s32 %v1367, %v1369
  %v1371 = vrot.slane %v1343, %v1370
  %v1372 = vcombine.high %v1350, %v1350
  %v1373 = vcombine.high %v1357, %v1357
  %v1374 = vcombine.high %v1364, %v1364
  %v1375 = vcombine.high %v1371, %v1371
  %v1376 = vcombine.high %v972, %v972
  %v1378 = vunpack.c.l.s4 1966171168
  %v1379 = vunpack.c.0.s8 %v1378
  %v1380 = vlaneseq
  %v1381 = vshrl.u32 %v1380, 7
  %v1382 = vsub.s32 %v1379, %v1381
  %v1383 = vrot.slane %v972, %v1382
  %v1385 = vunpack.c.l.s4 1966171168
  %v1386 = vunpack.c.0.s8 %v1385
  %v1387 = vlaneseq
  %v1388 = vshrl.u32 %v1387, 7
  %v1389 = vsub.s32 %v1386, %v1388
  %v1390 = vrot.slane %v1376, %v1389
  %v1391 = vcombine.high %v1383, %v1383
  %v1392 = vcombine.high %v1390, %v1390
  %v1394 = vunpack.c.l.s4 1966171168
  %v1395 = vunpack.c.0.s8 %v1394
  %v1396 = vlaneseq
  %v1397 = vshrl.u32 %v1396, 7
  %v1398 = vsub.s32 %v1395, %v1397
  %v1399 = vrot.slane %v1383, %v1398
  %v1401 = vunpack.c.l.s4 1966171168
  %v1402 = vunpack.c.0.s8 %v1401
  %v1403 = vlaneseq
  %v1404 = vshrl.u32 %v1403, 7
  %v1405 = vsub.s32 %v1402, %v1404
  %v1406 = vrot.slane %v1390, %v1405
  %v1408 = vunpack.c.l.s4 1966171168
  %v1409 = vunpack.c.0.s8 %v1408
  %v1410 = vlaneseq
  %v1411 = vshrl.u32 %v1410, 7
  %v1412 = vsub.s32 %v1409, %v1411
  %v1413 = vrot.slane %v1391, %v1412
  %v1415 = vunpack.c.l.s4 1966171168
  %v1416 = vunpack.c.0.s8 %v1415
  %v1417 = vlaneseq
  %v1418 = vshrl.u32 %v1417, 7
  %v1419 = vsub.s32 %v1416, %v1418
  %v1420 = vrot.slane %v1392, %v1419
  %v1421 = vcombine.high %v1399, %v1399
  %v1422 = vcombine.high %v1406, %v1406
  %v1423 = vcombine.high %v1413, %v1413
  %v1424 = vcombine.high %v1420, %v1420
  %v1425 = vlaneseq
  %v1426 = vshrl.u32 %v1425, 7
  %v1427 = vsub.s32 4, %v1426
  %v1428 = vrot.slane %v116, %v1427
  %1429 = vmatprep.subr.mxu0 0.0
  %1430 = vmatpush1.msra.mxu0 %v33
  %1431 = vmatprep.subr.mxu0 0.0
  %1432 = vmatpush1.msra.mxu0 %v34
  %1433 = vmatprep.subr.mxu0 0.0
  %1434 = vmatpush1.msra.mxu0 %v35
  %1435 = vmatprep.subr.mxu0 0.0
  %1436 = vmatpush1.msra.mxu0 %v36
  %1437 = vmatprep.subr.mxu0 0.0
  %1438 = vmatpush1.msra.mxu0 %v37
  %1439 = vmatprep.subr.mxu0 0.0
  %1440 = vmatpush1.msra.mxu0 %v38
  %1441 = vmatprep.subr.mxu0 0.0
  %1442 = vmatpush1.msra.mxu0 %v39
  %1443 = vmatprep.subr.mxu0 0.0
  %1444 = vmatpush1.msra.mxu0 %v40
  %1445 = vmatprep.subr.mxu0 0.0
  %1446 = vmatpush1.msra.mxu0 0.0
  %1447 = vmatprep.subr.mxu0 0.0
  %1448 = vmatpush1.msra.mxu0 0.0
  %1449 = vmatprep.subr.mxu0 0.0
  %1450 = vmatpush1.msra.mxu0 0.0
  %1451 = vmatprep.subr.mxu0 0.0
  %1452 = vmatpush1.msra.mxu0 0.0
  %1453 = vmatprep.subr.mxu0 0.0
  %1454 = vmatpush1.msra.mxu0 0.0
  %1455 = vmatprep.subr.mxu0 0.0
  %1456 = vmatpush1.msra.mxu0 0.0
  %1457 = vmatprep.subr.mxu0 0.0
  %1458 = vmatpush1.msra.mxu0 0.0
  %1459 = vmatprep.subr.mxu0 0.0
  %1460 = vmatpush1.msra.mxu0 0.0
  %1461 = vmatprep.subr.mxu0 0.0
  %1462 = vmatpush1.msra.mxu0 0.0
  %1463 = vmatprep.subr.mxu0 0.0
  %1464 = vmatpush1.msra.mxu0 0.0
  %1465 = vmatprep.subr.mxu0 0.0
  %1466 = vmatpush1.msra.mxu0 0.0
  %1467 = vmatprep.subr.mxu0 0.0
  %1468 = vmatpush1.msra.mxu0 0.0
  %1469 = vmatprep.subr.mxu0 0.0
  %1470 = vmatpush1.msra.mxu0 0.0
  %1471 = vmatprep.subr.mxu0 0.0
  %1472 = vmatpush1.msra.mxu0 0.0
  %1473 = vmatprep.subr.mxu0 0.0
  %1474 = vmatpush1.msra.mxu0 0.0
  %1475 = vmatprep.subr.mxu0 0.0
  %1476 = vmatpush1.msra.mxu0 0.0
  %1477 = vmatprep.subr.mxu0 0.0
  %1478 = vmatpush1.msra.mxu0 0.0
  %1479 = vmatprep.subr.mxu0 0.0
  %1480 = vmatpush1.msra.mxu0 0.0
  %1481 = vmatprep.subr.mxu0 0.0
  %1482 = vmatpush1.msra.mxu0 0.0
  %1483 = vmatprep.subr.mxu0 0.0
  %1484 = vmatpush1.msra.mxu0 0.0
  %1485 = vmatprep.subr.mxu0 0.0
  %1486 = vmatpush1.msra.mxu0 0.0
  %1487 = vmatprep.subr.mxu0 0.0
  %1488 = vmatpush1.msra.mxu0 0.0
  %1489 = vmatprep.subr.mxu0 0.0
  %1490 = vmatpush1.msra.mxu0 0.0
  %1491 = vmatprep.subr.mxu0 0.0
  %1492 = vmatpush1.msra.mxu0 0.0
  %1493 = vmatprep.mubr.f32.mxu0 0.0
  %1494 = vmatmul.mubr.f32.gmra.mrb[0].mxu0 %v275
  %v1495 = vpop.f32.mrb[0].mxu0
  %v1496 = vadd.f32 %v1428, %v1495
  %v1497 = vpop.f32.mrb[0].mxu0
  %1498 = vmatprep.mubr.f32.mxu0 0.0
  %1499 = vmatmul.mubr.f32.gmra.mrb[0].mxu0 %v278
  %v1500 = vpop.f32.mrb[0].mxu0
  %v1501 = vadd.f32 %v1428, %v1500
  %v1502 = vpop.f32.mrb[0].mxu0
  %1503 = vmatprep.mubr.f32.mxu0 0.0
  %1504 = vmatmul.mubr.f32.gmra.mrb[0].mxu0 %v281
  %v1505 = vpop.f32.mrb[0].mxu0
  %v1506 = vadd.f32 %v1428, %v1505
  %v1507 = vpop.f32.mrb[0].mxu0
  %1508 = vmatprep.mubr.f32.mxu0 0.0
  %1509 = vmatmul.mubr.f32.gmra.mrb[0].mxu0 %v284
  %v1510 = vpop.f32.mrb[0].mxu0
  %v1511 = vadd.f32 %v1428, %v1510
  %v1512 = vpop.f32.mrb[0].mxu0
  %1513 = vmatprep.mubr.f32.mxu0 0.0
  %1514 = vmatmul.mubr.f32.gmra.mrb[0].mxu0 %v287
  %v1515 = vpop.f32.mrb[0].mxu0
  %v1516 = vadd.f32 %v1428, %v1515
  %v1517 = vpop.f32.mrb[0].mxu0
  %1518 = vmatprep.mubr.f32.mxu0 0.0
  %1519 = vmatmul.mubr.f32.gmra.mrb[0].mxu0 %v290
  %v1520 = vpop.f32.mrb[0].mxu0
  %v1521 = vadd.f32 %v1428, %v1520
  %v1522 = vpop.f32.mrb[0].mxu0
  %1523 = vmatprep.mubr.f32.mxu0 0.0
  %1524 = vmatmul.mubr.f32.gmra.mrb[0].mxu0 %v293
  %v1525 = vpop.f32.mrb[0].mxu0
  %v1526 = vadd.f32 %v1428, %v1525
  %v1527 = vpop.f32.mrb[0].mxu0
  %1528 = vmatprep.mubr.f32.mxu0 0.0
  %1529 = vmatmul.mubr.f32.gmra.mrb[0].mxu0 %v296
  %v1530 = vpop.f32.mrb[0].mxu0
  %v1531 = vadd.f32 %v1428, %v1530
  %v1532 = vpop.f32.mrb[0].mxu0
  %1533 = vmatprep.mubr.f32.mxu0 0.0
  %1534 = vmatmul.mubr.f32.gmra.mrb[0].mxu0 %v299
  %v1535 = vpop.f32.mrb[0].mxu0
  %v1536 = vadd.f32 %v1428, %v1535
  %v1537 = vpop.f32.mrb[0].mxu0
  %1538 = vdwg.mxu0
  %v1548 = vcombine.high %v1496, %v1496
  %v1550 = vunpack.c.l.s4 1966171168
  %v1551 = vunpack.c.0.s8 %v1550
  %v1552 = vlaneseq
  %v1553 = vshrl.u32 %v1552, 7
  %v1554 = vsub.s32 %v1551, %v1553
  %v1555 = vrot.slane %v1496, %v1554
  %v1557 = vunpack.c.l.s4 1966171168
  %v1558 = vunpack.c.0.s8 %v1557
  %v1559 = vlaneseq
  %v1560 = vshrl.u32 %v1559, 7
  %v1561 = vsub.s32 %v1558, %v1560
  %v1562 = vrot.slane %v1548, %v1561
  %v1563 = vcombine.high %v1555, %v1555
  %v1564 = vcombine.high %v1562, %v1562
  %v1566 = vunpack.c.l.s4 1966171168
  %v1567 = vunpack.c.0.s8 %v1566
  %v1568 = vlaneseq
  %v1569 = vshrl.u32 %v1568, 7
  %v1570 = vsub.s32 %v1567, %v1569
  %v1571 = vrot.slane %v1555, %v1570
  %v1573 = vunpack.c.l.s4 1966171168
  %v1574 = vunpack.c.0.s8 %v1573
  %v1575 = vlaneseq
  %v1576 = vshrl.u32 %v1575, 7
  %v1577 = vsub.s32 %v1574, %v1576
  %v1578 = vrot.slane %v1562, %v1577
  %v1580 = vunpack.c.l.s4 1966171168
  %v1581 = vunpack.c.0.s8 %v1580
  %v1582 = vlaneseq
  %v1583 = vshrl.u32 %v1582, 7
  %v1584 = vsub.s32 %v1581, %v1583
  %v1585 = vrot.slane %v1563, %v1584
  %v1587 = vunpack.c.l.s4 1966171168
  %v1588 = vunpack.c.0.s8 %v1587
  %v1589 = vlaneseq
  %v1590 = vshrl.u32 %v1589, 7
  %v1591 = vsub.s32 %v1588, %v1590
  %v1592 = vrot.slane %v1564, %v1591
  %v1593 = vcombine.high %v1571, %v1571
  %v1594 = vcombine.high %v1578, %v1578
  %v1595 = vcombine.high %v1585, %v1585
  %v1596 = vcombine.high %v1592, %v1592
  %v1597 = vcombine.high %v1501, %v1501
  %v1599 = vunpack.c.l.s4 1966171168
  %v1600 = vunpack.c.0.s8 %v1599
  %v1601 = vlaneseq
  %v1602 = vshrl.u32 %v1601, 7
  %v1603 = vsub.s32 %v1600, %v1602
  %v1604 = vrot.slane %v1501, %v1603
  %v1606 = vunpack.c.l.s4 1966171168
  %v1607 = vunpack.c.0.s8 %v1606
  %v1608 = vlaneseq
  %v1609 = vshrl.u32 %v1608, 7
  %v1610 = vsub.s32 %v1607, %v1609
  %v1611 = vrot.slane %v1597, %v1610
  %v1612 = vcombine.high %v1604, %v1604
  %v1613 = vcombine.high %v1611, %v1611
  %v1615 = vunpack.c.l.s4 1966171168
  %v1616 = vunpack.c.0.s8 %v1615
  %v1617 = vlaneseq
  %v1618 = vshrl.u32 %v1617, 7
  %v1619 = vsub.s32 %v1616, %v1618
  %v1620 = vrot.slane %v1604, %v1619
  %v1622 = vunpack.c.l.s4 1966171168
  %v1623 = vunpack.c.0.s8 %v1622
  %v1624 = vlaneseq
  %v1625 = vshrl.u32 %v1624, 7
  %v1626 = vsub.s32 %v1623, %v1625
  %v1627 = vrot.slane %v1611, %v1626
  %v1629 = vunpack.c.l.s4 1966171168
  %v1630 = vunpack.c.0.s8 %v1629
  %v1631 = vlaneseq
  %v1632 = vshrl.u32 %v1631, 7
  %v1633 = vsub.s32 %v1630, %v1632
  %v1634 = vrot.slane %v1612, %v1633
  %v1636 = vunpack.c.l.s4 1966171168
  %v1637 = vunpack.c.0.s8 %v1636
  %v1638 = vlaneseq
  %v1639 = vshrl.u32 %v1638, 7
  %v1640 = vsub.s32 %v1637, %v1639
  %v1641 = vrot.slane %v1613, %v1640
  %v1642 = vcombine.high %v1620, %v1620
  %v1643 = vcombine.high %v1627, %v1627
  %v1644 = vcombine.high %v1634, %v1634
  %v1645 = vcombine.high %v1641, %v1641
  %v1646 = vcombine.high %v1506, %v1506
  %v1648 = vunpack.c.l.s4 1966171168
  %v1649 = vunpack.c.0.s8 %v1648
  %v1650 = vlaneseq
  %v1651 = vshrl.u32 %v1650, 7
  %v1652 = vsub.s32 %v1649, %v1651
  %v1653 = vrot.slane %v1506, %v1652
  %v1655 = vunpack.c.l.s4 1966171168
  %v1656 = vunpack.c.0.s8 %v1655
  %v1657 = vlaneseq
  %v1658 = vshrl.u32 %v1657, 7
  %v1659 = vsub.s32 %v1656, %v1658
  %v1660 = vrot.slane %v1646, %v1659
  %v1661 = vcombine.high %v1653, %v1653
  %v1662 = vcombine.high %v1660, %v1660
  %v1664 = vunpack.c.l.s4 1966171168
  %v1665 = vunpack.c.0.s8 %v1664
  %v1666 = vlaneseq
  %v1667 = vshrl.u32 %v1666, 7
  %v1668 = vsub.s32 %v1665, %v1667
  %v1669 = vrot.slane %v1653, %v1668
  %v1671 = vunpack.c.l.s4 1966171168
  %v1672 = vunpack.c.0.s8 %v1671
  %v1673 = vlaneseq
  %v1674 = vshrl.u32 %v1673, 7
  %v1675 = vsub.s32 %v1672, %v1674
  %v1676 = vrot.slane %v1660, %v1675
  %v1678 = vunpack.c.l.s4 1966171168
  %v1679 = vunpack.c.0.s8 %v1678
  %v1680 = vlaneseq
  %v1681 = vshrl.u32 %v1680, 7
  %v1682 = vsub.s32 %v1679, %v1681
  %v1683 = vrot.slane %v1661, %v1682
  %v1685 = vunpack.c.l.s4 1966171168
  %v1686 = vunpack.c.0.s8 %v1685
  %v1687 = vlaneseq
  %v1688 = vshrl.u32 %v1687, 7
  %v1689 = vsub.s32 %v1686, %v1688
  %v1690 = vrot.slane %v1662, %v1689
  %v1691 = vcombine.high %v1669, %v1669
  %v1692 = vcombine.high %v1676, %v1676
  %v1693 = vcombine.high %v1683, %v1683
  %v1694 = vcombine.high %v1690, %v1690
  %v1695 = vcombine.high %v1511, %v1511
  %v1697 = vunpack.c.l.s4 1966171168
  %v1698 = vunpack.c.0.s8 %v1697
  %v1699 = vlaneseq
  %v1700 = vshrl.u32 %v1699, 7
  %v1701 = vsub.s32 %v1698, %v1700
  %v1702 = vrot.slane %v1511, %v1701
  %v1704 = vunpack.c.l.s4 1966171168
  %v1705 = vunpack.c.0.s8 %v1704
  %v1706 = vlaneseq
  %v1707 = vshrl.u32 %v1706, 7
  %v1708 = vsub.s32 %v1705, %v1707
  %v1709 = vrot.slane %v1695, %v1708
  %v1710 = vcombine.high %v1702, %v1702
  %v1711 = vcombine.high %v1709, %v1709
  %v1713 = vunpack.c.l.s4 1966171168
  %v1714 = vunpack.c.0.s8 %v1713
  %v1715 = vlaneseq
  %v1716 = vshrl.u32 %v1715, 7
  %v1717 = vsub.s32 %v1714, %v1716
  %v1718 = vrot.slane %v1702, %v1717
  %v1720 = vunpack.c.l.s4 1966171168
  %v1721 = vunpack.c.0.s8 %v1720
  %v1722 = vlaneseq
  %v1723 = vshrl.u32 %v1722, 7
  %v1724 = vsub.s32 %v1721, %v1723
  %v1725 = vrot.slane %v1709, %v1724
  %v1727 = vunpack.c.l.s4 1966171168
  %v1728 = vunpack.c.0.s8 %v1727
  %v1729 = vlaneseq
  %v1730 = vshrl.u32 %v1729, 7
  %v1731 = vsub.s32 %v1728, %v1730
  %v1732 = vrot.slane %v1710, %v1731
  %v1734 = vunpack.c.l.s4 1966171168
  %v1735 = vunpack.c.0.s8 %v1734
  %v1736 = vlaneseq
  %v1737 = vshrl.u32 %v1736, 7
  %v1738 = vsub.s32 %v1735, %v1737
  %v1739 = vrot.slane %v1711, %v1738
  %v1740 = vcombine.high %v1718, %v1718
  %v1741 = vcombine.high %v1725, %v1725
  %v1742 = vcombine.high %v1732, %v1732
  %v1743 = vcombine.high %v1739, %v1739
  %v1744 = vcombine.high %v1516, %v1516
  %v1746 = vunpack.c.l.s4 1966171168
  %v1747 = vunpack.c.0.s8 %v1746
  %v1748 = vlaneseq
  %v1749 = vshrl.u32 %v1748, 7
  %v1750 = vsub.s32 %v1747, %v1749
  %v1751 = vrot.slane %v1516, %v1750
  %v1753 = vunpack.c.l.s4 1966171168
  %v1754 = vunpack.c.0.s8 %v1753
  %v1755 = vlaneseq
  %v1756 = vshrl.u32 %v1755, 7
  %v1757 = vsub.s32 %v1754, %v1756
  %v1758 = vrot.slane %v1744, %v1757
  %v1759 = vcombine.high %v1751, %v1751
  %v1760 = vcombine.high %v1758, %v1758
  %v1762 = vunpack.c.l.s4 1966171168
  %v1763 = vunpack.c.0.s8 %v1762
  %v1764 = vlaneseq
  %v1765 = vshrl.u32 %v1764, 7
  %v1766 = vsub.s32 %v1763, %v1765
  %v1767 = vrot.slane %v1751, %v1766
  %v1769 = vunpack.c.l.s4 1966171168
  %v1770 = vunpack.c.0.s8 %v1769
  %v1771 = vlaneseq
  %v1772 = vshrl.u32 %v1771, 7
  %v1773 = vsub.s32 %v1770, %v1772
  %v1774 = vrot.slane %v1758, %v1773
  %v1776 = vunpack.c.l.s4 1966171168
  %v1777 = vunpack.c.0.s8 %v1776
  %v1778 = vlaneseq
  %v1779 = vshrl.u32 %v1778, 7
  %v1780 = vsub.s32 %v1777, %v1779
  %v1781 = vrot.slane %v1759, %v1780
  %v1783 = vunpack.c.l.s4 1966171168
  %v1784 = vunpack.c.0.s8 %v1783
  %v1785 = vlaneseq
  %v1786 = vshrl.u32 %v1785, 7
  %v1787 = vsub.s32 %v1784, %v1786
  %v1788 = vrot.slane %v1760, %v1787
  %v1789 = vcombine.high %v1767, %v1767
  %v1790 = vcombine.high %v1774, %v1774
  %v1791 = vcombine.high %v1781, %v1781
  %v1792 = vcombine.high %v1788, %v1788
  %v1793 = vcombine.high %v1521, %v1521
  %v1795 = vunpack.c.l.s4 1966171168
  %v1796 = vunpack.c.0.s8 %v1795
  %v1797 = vlaneseq
  %v1798 = vshrl.u32 %v1797, 7
  %v1799 = vsub.s32 %v1796, %v1798
  %v1800 = vrot.slane %v1521, %v1799
  %v1802 = vunpack.c.l.s4 1966171168
  %v1803 = vunpack.c.0.s8 %v1802
  %v1804 = vlaneseq
  %v1805 = vshrl.u32 %v1804, 7
  %v1806 = vsub.s32 %v1803, %v1805
  %v1807 = vrot.slane %v1793, %v1806
  %v1808 = vcombine.high %v1800, %v1800
  %v1809 = vcombine.high %v1807, %v1807
  %v1811 = vunpack.c.l.s4 1966171168
  %v1812 = vunpack.c.0.s8 %v1811
  %v1813 = vlaneseq
  %v1814 = vshrl.u32 %v1813, 7
  %v1815 = vsub.s32 %v1812, %v1814
  %v1816 = vrot.slane %v1800, %v1815
  %v1818 = vunpack.c.l.s4 1966171168
  %v1819 = vunpack.c.0.s8 %v1818
  %v1820 = vlaneseq
  %v1821 = vshrl.u32 %v1820, 7
  %v1822 = vsub.s32 %v1819, %v1821
  %v1823 = vrot.slane %v1807, %v1822
  %v1825 = vunpack.c.l.s4 1966171168
  %v1826 = vunpack.c.0.s8 %v1825
  %v1827 = vlaneseq
  %v1828 = vshrl.u32 %v1827, 7
  %v1829 = vsub.s32 %v1826, %v1828
  %v1830 = vrot.slane %v1808, %v1829
  %v1832 = vunpack.c.l.s4 1966171168
  %v1833 = vunpack.c.0.s8 %v1832
  %v1834 = vlaneseq
  %v1835 = vshrl.u32 %v1834, 7
  %v1836 = vsub.s32 %v1833, %v1835
  %v1837 = vrot.slane %v1809, %v1836
  %v1838 = vcombine.high %v1816, %v1816
  %v1839 = vcombine.high %v1823, %v1823
  %v1840 = vcombine.high %v1830, %v1830
  %v1841 = vcombine.high %v1837, %v1837
  %v1842 = vcombine.high %v1526, %v1526
  %v1844 = vunpack.c.l.s4 1966171168
  %v1845 = vunpack.c.0.s8 %v1844
  %v1846 = vlaneseq
  %v1847 = vshrl.u32 %v1846, 7
  %v1848 = vsub.s32 %v1845, %v1847
  %v1849 = vrot.slane %v1526, %v1848
  %v1851 = vunpack.c.l.s4 1966171168
  %v1852 = vunpack.c.0.s8 %v1851
  %v1853 = vlaneseq
  %v1854 = vshrl.u32 %v1853, 7
  %v1855 = vsub.s32 %v1852, %v1854
  %v1856 = vrot.slane %v1842, %v1855
  %v1857 = vcombine.high %v1849, %v1849
  %v1858 = vcombine.high %v1856, %v1856
  %v1860 = vunpack.c.l.s4 1966171168
  %v1861 = vunpack.c.0.s8 %v1860
  %v1862 = vlaneseq
  %v1863 = vshrl.u32 %v1862, 7
  %v1864 = vsub.s32 %v1861, %v1863
  %v1865 = vrot.slane %v1849, %v1864
  %v1867 = vunpack.c.l.s4 1966171168
  %v1868 = vunpack.c.0.s8 %v1867
  %v1869 = vlaneseq
  %v1870 = vshrl.u32 %v1869, 7
  %v1871 = vsub.s32 %v1868, %v1870
  %v1872 = vrot.slane %v1856, %v1871
  %v1874 = vunpack.c.l.s4 1966171168
  %v1875 = vunpack.c.0.s8 %v1874
  %v1876 = vlaneseq
  %v1877 = vshrl.u32 %v1876, 7
  %v1878 = vsub.s32 %v1875, %v1877
  %v1879 = vrot.slane %v1857, %v1878
  %v1881 = vunpack.c.l.s4 1966171168
  %v1882 = vunpack.c.0.s8 %v1881
  %v1883 = vlaneseq
  %v1884 = vshrl.u32 %v1883, 7
  %v1885 = vsub.s32 %v1882, %v1884
  %v1886 = vrot.slane %v1858, %v1885
  %v1887 = vcombine.high %v1865, %v1865
  %v1888 = vcombine.high %v1872, %v1872
  %v1889 = vcombine.high %v1879, %v1879
  %v1890 = vcombine.high %v1886, %v1886
  %v1891 = vcombine.high %v1531, %v1531
  %v1893 = vunpack.c.l.s4 1966171168
  %v1894 = vunpack.c.0.s8 %v1893
  %v1895 = vlaneseq
  %v1896 = vshrl.u32 %v1895, 7
  %v1897 = vsub.s32 %v1894, %v1896
  %v1898 = vrot.slane %v1531, %v1897
  %v1900 = vunpack.c.l.s4 1966171168
  %v1901 = vunpack.c.0.s8 %v1900
  %v1902 = vlaneseq
  %v1903 = vshrl.u32 %v1902, 7
  %v1904 = vsub.s32 %v1901, %v1903
  %v1905 = vrot.slane %v1891, %v1904
  %v1906 = vcombine.high %v1898, %v1898
  %v1907 = vcombine.high %v1905, %v1905
  %v1909 = vunpack.c.l.s4 1966171168
  %v1910 = vunpack.c.0.s8 %v1909
  %v1911 = vlaneseq
  %v1912 = vshrl.u32 %v1911, 7
  %v1913 = vsub.s32 %v1910, %v1912
  %v1914 = vrot.slane %v1898, %v1913
  %v1916 = vunpack.c.l.s4 1966171168
  %v1917 = vunpack.c.0.s8 %v1916
  %v1918 = vlaneseq
  %v1919 = vshrl.u32 %v1918, 7
  %v1920 = vsub.s32 %v1917, %v1919
  %v1921 = vrot.slane %v1905, %v1920
  %v1923 = vunpack.c.l.s4 1966171168
  %v1924 = vunpack.c.0.s8 %v1923
  %v1925 = vlaneseq
  %v1926 = vshrl.u32 %v1925, 7
  %v1927 = vsub.s32 %v1924, %v1926
  %v1928 = vrot.slane %v1906, %v1927
  %v1930 = vunpack.c.l.s4 1966171168
  %v1931 = vunpack.c.0.s8 %v1930
  %v1932 = vlaneseq
  %v1933 = vshrl.u32 %v1932, 7
  %v1934 = vsub.s32 %v1931, %v1933
  %v1935 = vrot.slane %v1907, %v1934
  %v1936 = vcombine.high %v1914, %v1914
  %v1937 = vcombine.high %v1921, %v1921
  %v1938 = vcombine.high %v1928, %v1928
  %v1939 = vcombine.high %v1935, %v1935
  %v1940 = vcombine.high %v1536, %v1536
  %v1942 = vunpack.c.l.s4 1966171168
  %v1943 = vunpack.c.0.s8 %v1942
  %v1944 = vlaneseq
  %v1945 = vshrl.u32 %v1944, 7
  %v1946 = vsub.s32 %v1943, %v1945
  %v1947 = vrot.slane %v1536, %v1946
  %v1949 = vunpack.c.l.s4 1966171168
  %v1950 = vunpack.c.0.s8 %v1949
  %v1951 = vlaneseq
  %v1952 = vshrl.u32 %v1951, 7
  %v1953 = vsub.s32 %v1950, %v1952
  %v1954 = vrot.slane %v1940, %v1953
  %v1955 = vcombine.high %v1947, %v1947
  %v1956 = vcombine.high %v1954, %v1954
  %v1958 = vunpack.c.l.s4 1966171168
  %v1959 = vunpack.c.0.s8 %v1958
  %v1960 = vlaneseq
  %v1961 = vshrl.u32 %v1960, 7
  %v1962 = vsub.s32 %v1959, %v1961
  %v1963 = vrot.slane %v1947, %v1962
  %v1965 = vunpack.c.l.s4 1966171168
  %v1966 = vunpack.c.0.s8 %v1965
  %v1967 = vlaneseq
  %v1968 = vshrl.u32 %v1967, 7
  %v1969 = vsub.s32 %v1966, %v1968
  %v1970 = vrot.slane %v1954, %v1969
  %v1972 = vunpack.c.l.s4 1966171168
  %v1973 = vunpack.c.0.s8 %v1972
  %v1974 = vlaneseq
  %v1975 = vshrl.u32 %v1974, 7
  %v1976 = vsub.s32 %v1973, %v1975
  %v1977 = vrot.slane %v1955, %v1976
  %v1979 = vunpack.c.l.s4 1966171168
  %v1980 = vunpack.c.0.s8 %v1979
  %v1981 = vlaneseq
  %v1982 = vshrl.u32 %v1981, 7
  %v1983 = vsub.s32 %v1980, %v1982
  %v1984 = vrot.slane %v1956, %v1983
  %v1985 = vcombine.high %v1963, %v1963
  %v1986 = vcombine.high %v1970, %v1970
  %v1987 = vcombine.high %v1977, %v1977
  %v1988 = vcombine.high %v1984, %v1984
  %v1989 = vcombine.low %v1007, %v1021
  %v1990 = vcombine.low %v1029, %v1031
  %v1991 = vcombine.low %v1014, %v1028
  %v1992 = vcombine.low %v1030, %v1032
  %v1994 = vunpack.c.l.s4 1966171168
  %v1995 = vunpack.c.0.s8 %v1994
  %v1996 = vlaneseq
  %v1997 = vshrl.u32 %v1996, 7
  %v1998 = vsub.s32 %v1995, %v1997
  %v1999 = vrot.slane %v1989, %v1998
  %v2001 = vunpack.c.l.s4 1966171168
  %v2002 = vunpack.c.0.s8 %v2001
  %v2003 = vlaneseq
  %v2004 = vshrl.u32 %v2003, 7
  %v2005 = vsub.s32 %v2002, %v2004
  %v2006 = vrot.slane %v1990, %v2005
  %v2008 = vunpack.c.l.s4 1966171168
  %v2009 = vunpack.c.0.s8 %v2008
  %v2010 = vlaneseq
  %v2011 = vshrl.u32 %v2010, 7
  %v2012 = vsub.s32 %v2009, %v2011
  %v2013 = vrot.slane %v1991, %v2012
  %v2015 = vunpack.c.l.s4 1966171168
  %v2016 = vunpack.c.0.s8 %v2015
  %v2017 = vlaneseq
  %v2018 = vshrl.u32 %v2017, 7
  %v2019 = vsub.s32 %v2016, %v2018
  %v2020 = vrot.slane %v1992, %v2019
  %v2021 = vcombine.low %v1999, %v2006
  %v2022 = vcombine.low %v2013, %v2020
  %v2024 = vunpack.c.l.s4 1966171168
  %v2025 = vunpack.c.0.s8 %v2024
  %v2026 = vlaneseq
  %v2027 = vshrl.u32 %v2026, 7
  %v2028 = vsub.s32 %v2025, %v2027
  %v2029 = vrot.slane %v2021, %v2028
  %v2031 = vunpack.c.l.s4 1966171168
  %v2032 = vunpack.c.0.s8 %v2031
  %v2033 = vlaneseq
  %v2034 = vshrl.u32 %v2033, 7
  %v2035 = vsub.s32 %v2032, %v2034
  %v2036 = vrot.slane %v2022, %v2035
  %v2037 = vcombine.low %v2029, %v2036
  %v2039 = vunpack.c.l.s4 1966171168
  %v2040 = vunpack.c.0.s8 %v2039
  %v2041 = vlaneseq
  %v2042 = vshrl.u32 %v2041, 7
  %v2043 = vsub.s32 %v2040, %v2042
  %v2044 = vrot.slane %v1056, %v2043
  %v2046 = vunpack.c.l.s4 1966171168
  %v2047 = vunpack.c.0.s8 %v2046
  %v2048 = vlaneseq
  %v2049 = vshrl.u32 %v2048, 7
  %v2050 = vsub.s32 %v2047, %v2049
  %v2051 = vrot.slane %v2044, %v2050
  %v2052 = vcombine.low %v1070, %v1078
  %v2053 = vcombine.low %v1080, %v1063
  %v2054 = vcombine.low %v1077, %v1079
  %v2055 = vcombine.low %v1081, %v1105
  %v2057 = vunpack.c.l.s4 1966171168
  %v2058 = vunpack.c.0.s8 %v2057
  %v2059 = vlaneseq
  %v2060 = vshrl.u32 %v2059, 7
  %v2061 = vsub.s32 %v2058, %v2060
  %v2062 = vrot.slane %v2052, %v2061
  %v2064 = vunpack.c.l.s4 1966171168
  %v2065 = vunpack.c.0.s8 %v2064
  %v2066 = vlaneseq
  %v2067 = vshrl.u32 %v2066, 7
  %v2068 = vsub.s32 %v2065, %v2067
  %v2069 = vrot.slane %v2053, %v2068
  %v2071 = vunpack.c.l.s4 1966171168
  %v2072 = vunpack.c.0.s8 %v2071
  %v2073 = vlaneseq
  %v2074 = vshrl.u32 %v2073, 7
  %v2075 = vsub.s32 %v2072, %v2074
  %v2076 = vrot.slane %v2054, %v2075
  %v2078 = vunpack.c.l.s4 1966171168
  %v2079 = vunpack.c.0.s8 %v2078
  %v2080 = vlaneseq
  %v2081 = vshrl.u32 %v2080, 7
  %v2082 = vsub.s32 %v2079, %v2081
  %v2083 = vrot.slane %v2055, %v2082
  %v2084 = vcombine.low %v2062, %v2069
  %v2085 = vcombine.low %v2076, %v2083
  %v2087 = vunpack.c.l.s4 1966171168
  %v2088 = vunpack.c.0.s8 %v2087
  %v2089 = vlaneseq
  %v2090 = vshrl.u32 %v2089, 7
  %v2091 = vsub.s32 %v2088, %v2090
  %v2092 = vrot.slane %v2084, %v2091
  %v2094 = vunpack.c.l.s4 1966171168
  %v2095 = vunpack.c.0.s8 %v2094
  %v2096 = vlaneseq
  %v2097 = vshrl.u32 %v2096, 7
  %v2098 = vsub.s32 %v2095, %v2097
  %v2099 = vrot.slane %v2085, %v2098
  %v2100 = vcombine.low %v2092, %v2099
  %v2102 = vunpack.c.l.s4 1966171168
  %v2103 = vunpack.c.0.s8 %v2102
  %v2104 = vlaneseq
  %v2105 = vshrl.u32 %v2104, 7
  %v2106 = vsub.s32 %v2103, %v2105
  %v2107 = vrot.slane %v1119, %v2106
  %v2109 = vunpack.c.l.s4 1966171168
  %v2110 = vunpack.c.0.s8 %v2109
  %v2111 = vlaneseq
  %v2112 = vshrl.u32 %v2111, 7
  %v2113 = vsub.s32 %v2110, %v2112
  %v2114 = vrot.slane %v2107, %v2113
  %v2115 = vcombine.low %v1127, %v1129
  %v2116 = vcombine.low %v1112, %v1126
  %v2117 = vcombine.low %v1128, %v1130
  %v2118 = vcombine.low %v1154, %v1168
  %v2120 = vunpack.c.l.s4 1966171168
  %v2121 = vunpack.c.0.s8 %v2120
  %v2122 = vlaneseq
  %v2123 = vshrl.u32 %v2122, 7
  %v2124 = vsub.s32 %v2121, %v2123
  %v2125 = vrot.slane %v2115, %v2124
  %v2127 = vunpack.c.l.s4 1966171168
  %v2128 = vunpack.c.0.s8 %v2127
  %v2129 = vlaneseq
  %v2130 = vshrl.u32 %v2129, 7
  %v2131 = vsub.s32 %v2128, %v2130
  %v2132 = vrot.slane %v2116, %v2131
  %v2134 = vunpack.c.l.s4 1966171168
  %v2135 = vunpack.c.0.s8 %v2134
  %v2136 = vlaneseq
  %v2137 = vshrl.u32 %v2136, 7
  %v2138 = vsub.s32 %v2135, %v2137
  %v2139 = vrot.slane %v2117, %v2138
  %v2141 = vunpack.c.l.s4 1966171168
  %v2142 = vunpack.c.0.s8 %v2141
  %v2143 = vlaneseq
  %v2144 = vshrl.u32 %v2143, 7
  %v2145 = vsub.s32 %v2142, %v2144
  %v2146 = vrot.slane %v2118, %v2145
  %v2147 = vcombine.low %v2125, %v2132
  %v2148 = vcombine.low %v2139, %v2146
  %v2150 = vunpack.c.l.s4 1966171168
  %v2151 = vunpack.c.0.s8 %v2150
  %v2152 = vlaneseq
  %v2153 = vshrl.u32 %v2152, 7
  %v2154 = vsub.s32 %v2151, %v2153
  %v2155 = vrot.slane %v2147, %v2154
  %v2157 = vunpack.c.l.s4 1966171168
  %v2158 = vunpack.c.0.s8 %v2157
  %v2159 = vlaneseq
  %v2160 = vshrl.u32 %v2159, 7
  %v2161 = vsub.s32 %v2158, %v2160
  %v2162 = vrot.slane %v2148, %v2161
  %v2163 = vcombine.low %v2155, %v2162
  %v2165 = vunpack.c.l.s4 1966171168
  %v2166 = vunpack.c.0.s8 %v2165
  %v2167 = vlaneseq
  %v2168 = vshrl.u32 %v2167, 7
  %v2169 = vsub.s32 %v2166, %v2168
  %v2170 = vrot.slane %v1176, %v2169
  %v2172 = vunpack.c.l.s4 1966171168
  %v2173 = vunpack.c.0.s8 %v2172
  %v2174 = vlaneseq
  %v2175 = vshrl.u32 %v2174, 7
  %v2176 = vsub.s32 %v2173, %v2175
  %v2177 = vrot.slane %v2170, %v2176
  %v2178 = vcombine.low %v1178, %v1161
  %v2179 = vcombine.low %v1175, %v1177
  %v2180 = vcombine.low %v1179, %v1203
  %v2181 = vcombine.low %v1217, %v1225
  %v2183 = vunpack.c.l.s4 1966171168
  %v2184 = vunpack.c.0.s8 %v2183
  %v2185 = vlaneseq
  %v2186 = vshrl.u32 %v2185, 7
  %v2187 = vsub.s32 %v2184, %v2186
  %v2188 = vrot.slane %v2178, %v2187
  %v2190 = vunpack.c.l.s4 1966171168
  %v2191 = vunpack.c.0.s8 %v2190
  %v2192 = vlaneseq
  %v2193 = vshrl.u32 %v2192, 7
  %v2194 = vsub.s32 %v2191, %v2193
  %v2195 = vrot.slane %v2179, %v2194
  %v2197 = vunpack.c.l.s4 1966171168
  %v2198 = vunpack.c.0.s8 %v2197
  %v2199 = vlaneseq
  %v2200 = vshrl.u32 %v2199, 7
  %v2201 = vsub.s32 %v2198, %v2200
  %v2202 = vrot.slane %v2180, %v2201
  %v2204 = vunpack.c.l.s4 1966171168
  %v2205 = vunpack.c.0.s8 %v2204
  %v2206 = vlaneseq
  %v2207 = vshrl.u32 %v2206, 7
  %v2208 = vsub.s32 %v2205, %v2207
  %v2209 = vrot.slane %v2181, %v2208
  %v2210 = vcombine.low %v2188, %v2195
  %v2211 = vcombine.low %v2202, %v2209
  %v2213 = vunpack.c.l.s4 1966171168
  %v2214 = vunpack.c.0.s8 %v2213
  %v2215 = vlaneseq
  %v2216 = vshrl.u32 %v2215, 7
  %v2217 = vsub.s32 %v2214, %v2216
  %v2218 = vrot.slane %v2210, %v2217
  %v2220 = vunpack.c.l.s4 1966171168
  %v2221 = vunpack.c.0.s8 %v2220
  %v2222 = vlaneseq
  %v2223 = vshrl.u32 %v2222, 7
  %v2224 = vsub.s32 %v2221, %v2223
  %v2225 = vrot.slane %v2211, %v2224
  %v2226 = vcombine.low %v2218, %v2225
  %v2228 = vunpack.c.l.s4 1966171168
  %v2229 = vunpack.c.0.s8 %v2228
  %v2230 = vlaneseq
  %v2231 = vshrl.u32 %v2230, 7
  %v2232 = vsub.s32 %v2229, %v2231
  %v2233 = vrot.slane %v1227, %v2232
  %v2235 = vunpack.c.l.s4 1966171168
  %v2236 = vunpack.c.0.s8 %v2235
  %v2237 = vlaneseq
  %v2238 = vshrl.u32 %v2237, 7
  %v2239 = vsub.s32 %v2236, %v2238
  %v2240 = vrot.slane %v2233, %v2239
  %v2241 = vcombine.low %v1210, %v1224
  %v2242 = vcombine.low %v1226, %v1228
  %v2243 = vcombine.low %v1252, %v1266
  %v2244 = vcombine.low %v1274, %v1276
  %v2246 = vunpack.c.l.s4 1966171168
  %v2247 = vunpack.c.0.s8 %v2246
  %v2248 = vlaneseq
  %v2249 = vshrl.u32 %v2248, 7
  %v2250 = vsub.s32 %v2247, %v2249
  %v2251 = vrot.slane %v2241, %v2250
  %v2253 = vunpack.c.l.s4 1966171168
  %v2254 = vunpack.c.0.s8 %v2253
  %v2255 = vlaneseq
  %v2256 = vshrl.u32 %v2255, 7
  %v2257 = vsub.s32 %v2254, %v2256
  %v2258 = vrot.slane %v2242, %v2257
  %v2260 = vunpack.c.l.s4 1966171168
  %v2261 = vunpack.c.0.s8 %v2260
  %v2262 = vlaneseq
  %v2263 = vshrl.u32 %v2262, 7
  %v2264 = vsub.s32 %v2261, %v2263
  %v2265 = vrot.slane %v2243, %v2264
  %v2267 = vunpack.c.l.s4 1966171168
  %v2268 = vunpack.c.0.s8 %v2267
  %v2269 = vlaneseq
  %v2270 = vshrl.u32 %v2269, 7
  %v2271 = vsub.s32 %v2268, %v2270
  %v2272 = vrot.slane %v2244, %v2271
  %v2273 = vcombine.low %v2251, %v2258
  %v2274 = vcombine.low %v2265, %v2272
  %v2276 = vunpack.c.l.s4 1966171168
  %v2277 = vunpack.c.0.s8 %v2276
  %v2278 = vlaneseq
  %v2279 = vshrl.u32 %v2278, 7
  %v2280 = vsub.s32 %v2277, %v2279
  %v2281 = vrot.slane %v2273, %v2280
  %v2283 = vunpack.c.l.s4 1966171168
  %v2284 = vunpack.c.0.s8 %v2283
  %v2285 = vlaneseq
  %v2286 = vshrl.u32 %v2285, 7
  %v2287 = vsub.s32 %v2284, %v2286
  %v2288 = vrot.slane %v2274, %v2287
  %v2289 = vcombine.low %v2281, %v2288
  %v2291 = vunpack.c.l.s4 1966171168
  %v2292 = vunpack.c.0.s8 %v2291
  %v2293 = vlaneseq
  %v2294 = vshrl.u32 %v2293, 7
  %v2295 = vsub.s32 %v2292, %v2294
  %v2296 = vrot.slane %v1259, %v2295
  %v2298 = vunpack.c.l.s4 1966171168
  %v2299 = vunpack.c.0.s8 %v2298
  %v2300 = vlaneseq
  %v2301 = vshrl.u32 %v2300, 7
  %v2302 = vsub.s32 %v2299, %v2301
  %v2303 = vrot.slane %v2296, %v2302
  %v2304 = vcombine.low %v1273, %v1275
  %v2305 = vcombine.low %v1277, %v1301
  %v2306 = vcombine.low %v1315, %v1323
  %v2307 = vcombine.low %v1325, %v1308
  %v2309 = vunpack.c.l.s4 1966171168
  %v2310 = vunpack.c.0.s8 %v2309
  %v2311 = vlaneseq
  %v2312 = vshrl.u32 %v2311, 7
  %v2313 = vsub.s32 %v2310, %v2312
  %v2314 = vrot.slane %v2304, %v2313
  %v2316 = vunpack.c.l.s4 1966171168
  %v2317 = vunpack.c.0.s8 %v2316
  %v2318 = vlaneseq
  %v2319 = vshrl.u32 %v2318, 7
  %v2320 = vsub.s32 %v2317, %v2319
  %v2321 = vrot.slane %v2305, %v2320
  %v2323 = vunpack.c.l.s4 1966171168
  %v2324 = vunpack.c.0.s8 %v2323
  %v2325 = vlaneseq
  %v2326 = vshrl.u32 %v2325, 7
  %v2327 = vsub.s32 %v2324, %v2326
  %v2328 = vrot.slane %v2306, %v2327
  %v2330 = vunpack.c.l.s4 1966171168
  %v2331 = vunpack.c.0.s8 %v2330
  %v2332 = vlaneseq
  %v2333 = vshrl.u32 %v2332, 7
  %v2334 = vsub.s32 %v2331, %v2333
  %v2335 = vrot.slane %v2307, %v2334
  %v2336 = vcombine.low %v2314, %v2321
  %v2337 = vcombine.low %v2328, %v2335
  %v2339 = vunpack.c.l.s4 1966171168
  %v2340 = vunpack.c.0.s8 %v2339
  %v2341 = vlaneseq
  %v2342 = vshrl.u32 %v2341, 7
  %v2343 = vsub.s32 %v2340, %v2342
  %v2344 = vrot.slane %v2336, %v2343
  %v2346 = vunpack.c.l.s4 1966171168
  %v2347 = vunpack.c.0.s8 %v2346
  %v2348 = vlaneseq
  %v2349 = vshrl.u32 %v2348, 7
  %v2350 = vsub.s32 %v2347, %v2349
  %v2351 = vrot.slane %v2337, %v2350
  %v2352 = vcombine.low %v2344, %v2351
  %v2354 = vunpack.c.l.s4 1966171168
  %v2355 = vunpack.c.0.s8 %v2354
  %v2356 = vlaneseq
  %v2357 = vshrl.u32 %v2356, 7
  %v2358 = vsub.s32 %v2355, %v2357
  %v2359 = vrot.slane %v1322, %v2358
  %v2361 = vunpack.c.l.s4 1966171168
  %v2362 = vunpack.c.0.s8 %v2361
  %v2363 = vlaneseq
  %v2364 = vshrl.u32 %v2363, 7
  %v2365 = vsub.s32 %v2362, %v2364
  %v2366 = vrot.slane %v2359, %v2365
  %v2367 = vcombine.low %v1324, %v1326
  %v2368 = vcombine.low %v1350, %v1364
  %v2369 = vcombine.low %v1372, %v1374
  %v2370 = vcombine.low %v1357, %v1371
  %v2372 = vunpack.c.l.s4 1966171168
  %v2373 = vunpack.c.0.s8 %v2372
  %v2374 = vlaneseq
  %v2375 = vshrl.u32 %v2374, 7
  %v2376 = vsub.s32 %v2373, %v2375
  %v2377 = vrot.slane %v2367, %v2376
  %v2379 = vunpack.c.l.s4 1966171168
  %v2380 = vunpack.c.0.s8 %v2379
  %v2381 = vlaneseq
  %v2382 = vshrl.u32 %v2381, 7
  %v2383 = vsub.s32 %v2380, %v2382
  %v2384 = vrot.slane %v2368, %v2383
  %v2386 = vunpack.c.l.s4 1966171168
  %v2387 = vunpack.c.0.s8 %v2386
  %v2388 = vlaneseq
  %v2389 = vshrl.u32 %v2388, 7
  %v2390 = vsub.s32 %v2387, %v2389
  %v2391 = vrot.slane %v2369, %v2390
  %v2393 = vunpack.c.l.s4 1966171168
  %v2394 = vunpack.c.0.s8 %v2393
  %v2395 = vlaneseq
  %v2396 = vshrl.u32 %v2395, 7
  %v2397 = vsub.s32 %v2394, %v2396
  %v2398 = vrot.slane %v2370, %v2397
  %v2399 = vcombine.low %v2377, %v2384
  %v2400 = vcombine.low %v2391, %v2398
  %v2402 = vunpack.c.l.s4 1966171168
  %v2403 = vunpack.c.0.s8 %v2402
  %v2404 = vlaneseq
  %v2405 = vshrl.u32 %v2404, 7
  %v2406 = vsub.s32 %v2403, %v2405
  %v2407 = vrot.slane %v2399, %v2406
  %v2409 = vunpack.c.l.s4 1966171168
  %v2410 = vunpack.c.0.s8 %v2409
  %v2411 = vlaneseq
  %v2412 = vshrl.u32 %v2411, 7
  %v2413 = vsub.s32 %v2410, %v2412
  %v2414 = vrot.slane %v2400, %v2413
  %v2415 = vcombine.low %v2407, %v2414
  %v2417 = vunpack.c.l.s4 1966171168
  %v2418 = vunpack.c.0.s8 %v2417
  %v2419 = vlaneseq
  %v2420 = vshrl.u32 %v2419, 7
  %v2421 = vsub.s32 %v2418, %v2420
  %v2422 = vrot.slane %v1373, %v2421
  %v2424 = vunpack.c.l.s4 1966171168
  %v2425 = vunpack.c.0.s8 %v2424
  %v2426 = vlaneseq
  %v2427 = vshrl.u32 %v2426, 7
  %v2428 = vsub.s32 %v2425, %v2427
  %v2429 = vrot.slane %v2422, %v2428
  %v2430 = vcombine.low %v1375, %v1399
  %v2431 = vcombine.low %v1413, %v1421
  %v2432 = vcombine.low %v1423, %v1406
  %v2433 = vcombine.low %v1420, %v1422
  %v2435 = vunpack.c.l.s4 1966171168
  %v2436 = vunpack.c.0.s8 %v2435
  %v2437 = vlaneseq
  %v2438 = vshrl.u32 %v2437, 7
  %v2439 = vsub.s32 %v2436, %v2438
  %v2440 = vrot.slane %v2430, %v2439
  %v2442 = vunpack.c.l.s4 1966171168
  %v2443 = vunpack.c.0.s8 %v2442
  %v2444 = vlaneseq
  %v2445 = vshrl.u32 %v2444, 7
  %v2446 = vsub.s32 %v2443, %v2445
  %v2447 = vrot.slane %v2431, %v2446
  %v2449 = vunpack.c.l.s4 1966171168
  %v2450 = vunpack.c.0.s8 %v2449
  %v2451 = vlaneseq
  %v2452 = vshrl.u32 %v2451, 7
  %v2453 = vsub.s32 %v2450, %v2452
  %v2454 = vrot.slane %v2432, %v2453
  %v2456 = vunpack.c.l.s4 1966171168
  %v2457 = vunpack.c.0.s8 %v2456
  %v2458 = vlaneseq
  %v2459 = vshrl.u32 %v2458, 7
  %v2460 = vsub.s32 %v2457, %v2459
  %v2461 = vrot.slane %v2433, %v2460
  %v2462 = vcombine.low %v2440, %v2447
  %v2463 = vcombine.low %v2454, %v2461
  %v2465 = vunpack.c.l.s4 1966171168
  %v2466 = vunpack.c.0.s8 %v2465
  %v2467 = vlaneseq
  %v2468 = vshrl.u32 %v2467, 7
  %v2469 = vsub.s32 %v2466, %v2468
  %v2470 = vrot.slane %v2462, %v2469
  %v2472 = vunpack.c.l.s4 1966171168
  %v2473 = vunpack.c.0.s8 %v2472
  %v2474 = vlaneseq
  %v2475 = vshrl.u32 %v2474, 7
  %v2476 = vsub.s32 %v2473, %v2475
  %v2477 = vrot.slane %v2463, %v2476
  %v2478 = vcombine.low %v2470, %v2477
  %v2480 = vunpack.c.l.s4 1966171168
  %v2481 = vunpack.c.0.s8 %v2480
  %v2482 = vlaneseq
  %v2483 = vshrl.u32 %v2482, 7
  %v2484 = vsub.s32 %v2481, %v2483
  %v2485 = vrot.slane %v1424, %v2484
  %v2487 = vunpack.c.l.s4 1966171168
  %v2488 = vunpack.c.0.s8 %v2487
  %v2489 = vlaneseq
  %v2490 = vshrl.u32 %v2489, 7
  %v2491 = vsub.s32 %v2488, %v2490
  %v2492 = vrot.slane %v2485, %v2491
  %v2509 = vcombine.low %v1007, %v1007
  %v2510 = vcombine.low %v1021, %v1029
  %v2511 = vcombine.low %v1031, %v1014
  %v2512 = vcombine.low %v1028, %v1030
  %v2514 = vunpack.c.l.s4 1966171168
  %v2515 = vunpack.c.0.s8 %v2514
  %v2516 = vlaneseq
  %v2517 = vshrl.u32 %v2516, 7
  %v2518 = vsub.s32 %v2515, %v2517
  %v2519 = vrot.slane %v2509, %v2518
  %v2521 = vunpack.c.l.s4 1966171168
  %v2522 = vunpack.c.0.s8 %v2521
  %v2523 = vlaneseq
  %v2524 = vshrl.u32 %v2523, 7
  %v2525 = vsub.s32 %v2522, %v2524
  %v2526 = vrot.slane %v2510, %v2525
  %v2528 = vunpack.c.l.s4 1966171168
  %v2529 = vunpack.c.0.s8 %v2528
  %v2530 = vlaneseq
  %v2531 = vshrl.u32 %v2530, 7
  %v2532 = vsub.s32 %v2529, %v2531
  %v2533 = vrot.slane %v2511, %v2532
  %v2535 = vunpack.c.l.s4 1966171168
  %v2536 = vunpack.c.0.s8 %v2535
  %v2537 = vlaneseq
  %v2538 = vshrl.u32 %v2537, 7
  %v2539 = vsub.s32 %v2536, %v2538
  %v2540 = vrot.slane %v2512, %v2539
  %v2541 = vcombine.low %v2519, %v2526
  %v2542 = vcombine.low %v2533, %v2540
  %v2544 = vunpack.c.l.s4 1966171168
  %v2545 = vunpack.c.0.s8 %v2544
  %v2546 = vlaneseq
  %v2547 = vshrl.u32 %v2546, 7
  %v2548 = vsub.s32 %v2545, %v2547
  %v2549 = vrot.slane %v2541, %v2548
  %v2551 = vunpack.c.l.s4 1966171168
  %v2552 = vunpack.c.0.s8 %v2551
  %v2553 = vlaneseq
  %v2554 = vshrl.u32 %v2553, 7
  %v2555 = vsub.s32 %v2552, %v2554
  %v2556 = vrot.slane %v2542, %v2555
  %v2557 = vcombine.low %v2549, %v2556
  %v2558 = vcombine.low %v1032, %v1056
  %v2560 = vunpack.c.l.s4 1966171168
  %v2561 = vunpack.c.0.s8 %v2560
  %v2562 = vlaneseq
  %v2563 = vshrl.u32 %v2562, 7
  %v2564 = vsub.s32 %v2561, %v2563
  %v2565 = vrot.slane %v2558, %v2564
  %v2567 = vunpack.c.l.s4 1966171168
  %v2568 = vunpack.c.0.s8 %v2567
  %v2569 = vlaneseq
  %v2570 = vshrl.u32 %v2569, 7
  %v2571 = vsub.s32 %v2568, %v2570
  %v2572 = vrot.slane %v2565, %v2571
  %v2573 = vcombine.low %v1070, %v1070
  %v2574 = vcombine.low %v1078, %v1080
  %v2575 = vcombine.low %v1063, %v1077
  %v2576 = vcombine.low %v1079, %v1081
  %v2578 = vunpack.c.l.s4 1966171168
  %v2579 = vunpack.c.0.s8 %v2578
  %v2580 = vlaneseq
  %v2581 = vshrl.u32 %v2580, 7
  %v2582 = vsub.s32 %v2579, %v2581
  %v2583 = vrot.slane %v2573, %v2582
  %v2585 = vunpack.c.l.s4 1966171168
  %v2586 = vunpack.c.0.s8 %v2585
  %v2587 = vlaneseq
  %v2588 = vshrl.u32 %v2587, 7
  %v2589 = vsub.s32 %v2586, %v2588
  %v2590 = vrot.slane %v2574, %v2589
  %v2592 = vunpack.c.l.s4 1966171168
  %v2593 = vunpack.c.0.s8 %v2592
  %v2594 = vlaneseq
  %v2595 = vshrl.u32 %v2594, 7
  %v2596 = vsub.s32 %v2593, %v2595
  %v2597 = vrot.slane %v2575, %v2596
  %v2599 = vunpack.c.l.s4 1966171168
  %v2600 = vunpack.c.0.s8 %v2599
  %v2601 = vlaneseq
  %v2602 = vshrl.u32 %v2601, 7
  %v2603 = vsub.s32 %v2600, %v2602
  %v2604 = vrot.slane %v2576, %v2603
  %v2605 = vcombine.low %v2583, %v2590
  %v2606 = vcombine.low %v2597, %v2604
  %v2608 = vunpack.c.l.s4 1966171168
  %v2609 = vunpack.c.0.s8 %v2608
  %v2610 = vlaneseq
  %v2611 = vshrl.u32 %v2610, 7
  %v2612 = vsub.s32 %v2609, %v2611
  %v2613 = vrot.slane %v2605, %v2612
  %v2615 = vunpack.c.l.s4 1966171168
  %v2616 = vunpack.c.0.s8 %v2615
  %v2617 = vlaneseq
  %v2618 = vshrl.u32 %v2617, 7
  %v2619 = vsub.s32 %v2616, %v2618
  %v2620 = vrot.slane %v2606, %v2619
  %v2621 = vcombine.low %v2613, %v2620
  %v2622 = vcombine.low %v1105, %v1119
  %v2624 = vunpack.c.l.s4 1966171168
  %v2625 = vunpack.c.0.s8 %v2624
  %v2626 = vlaneseq
  %v2627 = vshrl.u32 %v2626, 7
  %v2628 = vsub.s32 %v2625, %v2627
  %v2629 = vrot.slane %v2622, %v2628
  %v2631 = vunpack.c.l.s4 1966171168
  %v2632 = vunpack.c.0.s8 %v2631
  %v2633 = vlaneseq
  %v2634 = vshrl.u32 %v2633, 7
  %v2635 = vsub.s32 %v2632, %v2634
  %v2636 = vrot.slane %v2629, %v2635
  %v2637 = vcombine.low %v1127, %v1127
  %v2638 = vcombine.low %v1129, %v1112
  %v2639 = vcombine.low %v1126, %v1128
  %v2640 = vcombine.low %v1130, %v1154
  %v2642 = vunpack.c.l.s4 1966171168
  %v2643 = vunpack.c.0.s8 %v2642
  %v2644 = vlaneseq
  %v2645 = vshrl.u32 %v2644, 7
  %v2646 = vsub.s32 %v2643, %v2645
  %v2647 = vrot.slane %v2637, %v2646
  %v2649 = vunpack.c.l.s4 1966171168
  %v2650 = vunpack.c.0.s8 %v2649
  %v2651 = vlaneseq
  %v2652 = vshrl.u32 %v2651, 7
  %v2653 = vsub.s32 %v2650, %v2652
  %v2654 = vrot.slane %v2638, %v2653
  %v2656 = vunpack.c.l.s4 1966171168
  %v2657 = vunpack.c.0.s8 %v2656
  %v2658 = vlaneseq
  %v2659 = vshrl.u32 %v2658, 7
  %v2660 = vsub.s32 %v2657, %v2659
  %v2661 = vrot.slane %v2639, %v2660
  %v2663 = vunpack.c.l.s4 1966171168
  %v2664 = vunpack.c.0.s8 %v2663
  %v2665 = vlaneseq
  %v2666 = vshrl.u32 %v2665, 7
  %v2667 = vsub.s32 %v2664, %v2666
  %v2668 = vrot.slane %v2640, %v2667
  %v2669 = vcombine.low %v2647, %v2654
  %v2670 = vcombine.low %v2661, %v2668
  %v2672 = vunpack.c.l.s4 1966171168
  %v2673 = vunpack.c.0.s8 %v2672
  %v2674 = vlaneseq
  %v2675 = vshrl.u32 %v2674, 7
  %v2676 = vsub.s32 %v2673, %v2675
  %v2677 = vrot.slane %v2669, %v2676
  %v2679 = vunpack.c.l.s4 1966171168
  %v2680 = vunpack.c.0.s8 %v2679
  %v2681 = vlaneseq
  %v2682 = vshrl.u32 %v2681, 7
  %v2683 = vsub.s32 %v2680, %v2682
  %v2684 = vrot.slane %v2670, %v2683
  %v2685 = vcombine.low %v2677, %v2684
  %v2686 = vcombine.low %v1168, %v1176
  %v2688 = vunpack.c.l.s4 1966171168
  %v2689 = vunpack.c.0.s8 %v2688
  %v2690 = vlaneseq
  %v2691 = vshrl.u32 %v2690, 7
  %v2692 = vsub.s32 %v2689, %v2691
  %v2693 = vrot.slane %v2686, %v2692
  %v2695 = vunpack.c.l.s4 1966171168
  %v2696 = vunpack.c.0.s8 %v2695
  %v2697 = vlaneseq
  %v2698 = vshrl.u32 %v2697, 7
  %v2699 = vsub.s32 %v2696, %v2698
  %v2700 = vrot.slane %v2693, %v2699
  %v2701 = vcombine.low %v1178, %v1178
  %v2702 = vcombine.low %v1161, %v1175
  %v2703 = vcombine.low %v1177, %v1179
  %v2704 = vcombine.low %v1203, %v1217
  %v2706 = vunpack.c.l.s4 1966171168
  %v2707 = vunpack.c.0.s8 %v2706
  %v2708 = vlaneseq
  %v2709 = vshrl.u32 %v2708, 7
  %v2710 = vsub.s32 %v2707, %v2709
  %v2711 = vrot.slane %v2701, %v2710
  %v2713 = vunpack.c.l.s4 1966171168
  %v2714 = vunpack.c.0.s8 %v2713
  %v2715 = vlaneseq
  %v2716 = vshrl.u32 %v2715, 7
  %v2717 = vsub.s32 %v2714, %v2716
  %v2718 = vrot.slane %v2702, %v2717
  %v2720 = vunpack.c.l.s4 1966171168
  %v2721 = vunpack.c.0.s8 %v2720
  %v2722 = vlaneseq
  %v2723 = vshrl.u32 %v2722, 7
  %v2724 = vsub.s32 %v2721, %v2723
  %v2725 = vrot.slane %v2703, %v2724
  %v2727 = vunpack.c.l.s4 1966171168
  %v2728 = vunpack.c.0.s8 %v2727
  %v2729 = vlaneseq
  %v2730 = vshrl.u32 %v2729, 7
  %v2731 = vsub.s32 %v2728, %v2730
  %v2732 = vrot.slane %v2704, %v2731
  %v2733 = vcombine.low %v2711, %v2718
  %v2734 = vcombine.low %v2725, %v2732
  %v2736 = vunpack.c.l.s4 1966171168
  %v2737 = vunpack.c.0.s8 %v2736
  %v2738 = vlaneseq
  %v2739 = vshrl.u32 %v2738, 7
  %v2740 = vsub.s32 %v2737, %v2739
  %v2741 = vrot.slane %v2733, %v2740
  %v2743 = vunpack.c.l.s4 1966171168
  %v2744 = vunpack.c.0.s8 %v2743
  %v2745 = vlaneseq
  %v2746 = vshrl.u32 %v2745, 7
  %v2747 = vsub.s32 %v2744, %v2746
  %v2748 = vrot.slane %v2734, %v2747
  %v2749 = vcombine.low %v2741, %v2748
  %v2750 = vcombine.low %v1225, %v1227
  %v2752 = vunpack.c.l.s4 1966171168
  %v2753 = vunpack.c.0.s8 %v2752
  %v2754 = vlaneseq
  %v2755 = vshrl.u32 %v2754, 7
  %v2756 = vsub.s32 %v2753, %v2755
  %v2757 = vrot.slane %v2750, %v2756
  %v2759 = vunpack.c.l.s4 1966171168
  %v2760 = vunpack.c.0.s8 %v2759
  %v2761 = vlaneseq
  %v2762 = vshrl.u32 %v2761, 7
  %v2763 = vsub.s32 %v2760, %v2762
  %v2764 = vrot.slane %v2757, %v2763
  %v2765 = vcombine.low %v1210, %v1210
  %v2766 = vcombine.low %v1224, %v1226
  %v2767 = vcombine.low %v1228, %v1252
  %v2768 = vcombine.low %v1266, %v1274
  %v2770 = vunpack.c.l.s4 1966171168
  %v2771 = vunpack.c.0.s8 %v2770
  %v2772 = vlaneseq
  %v2773 = vshrl.u32 %v2772, 7
  %v2774 = vsub.s32 %v2771, %v2773
  %v2775 = vrot.slane %v2765, %v2774
  %v2777 = vunpack.c.l.s4 1966171168
  %v2778 = vunpack.c.0.s8 %v2777
  %v2779 = vlaneseq
  %v2780 = vshrl.u32 %v2779, 7
  %v2781 = vsub.s32 %v2778, %v2780
  %v2782 = vrot.slane %v2766, %v2781
  %v2784 = vunpack.c.l.s4 1966171168
  %v2785 = vunpack.c.0.s8 %v2784
  %v2786 = vlaneseq
  %v2787 = vshrl.u32 %v2786, 7
  %v2788 = vsub.s32 %v2785, %v2787
  %v2789 = vrot.slane %v2767, %v2788
  %v2791 = vunpack.c.l.s4 1966171168
  %v2792 = vunpack.c.0.s8 %v2791
  %v2793 = vlaneseq
  %v2794 = vshrl.u32 %v2793, 7
  %v2795 = vsub.s32 %v2792, %v2794
  %v2796 = vrot.slane %v2768, %v2795
  %v2797 = vcombine.low %v2775, %v2782
  %v2798 = vcombine.low %v2789, %v2796
  %v2800 = vunpack.c.l.s4 1966171168
  %v2801 = vunpack.c.0.s8 %v2800
  %v2802 = vlaneseq
  %v2803 = vshrl.u32 %v2802, 7
  %v2804 = vsub.s32 %v2801, %v2803
  %v2805 = vrot.slane %v2797, %v2804
  %v2807 = vunpack.c.l.s4 1966171168
  %v2808 = vunpack.c.0.s8 %v2807
  %v2809 = vlaneseq
  %v2810 = vshrl.u32 %v2809, 7
  %v2811 = vsub.s32 %v2808, %v2810
  %v2812 = vrot.slane %v2798, %v2811
  %v2813 = vcombine.low %v2805, %v2812
  %v2814 = vcombine.low %v1276, %v1259
  %v2816 = vunpack.c.l.s4 1966171168
  %v2817 = vunpack.c.0.s8 %v2816
  %v2818 = vlaneseq
  %v2819 = vshrl.u32 %v2818, 7
  %v2820 = vsub.s32 %v2817, %v2819
  %v2821 = vrot.slane %v2814, %v2820
  %v2823 = vunpack.c.l.s4 1966171168
  %v2824 = vunpack.c.0.s8 %v2823
  %v2825 = vlaneseq
  %v2826 = vshrl.u32 %v2825, 7
  %v2827 = vsub.s32 %v2824, %v2826
  %v2828 = vrot.slane %v2821, %v2827
  %v2829 = vcombine.low %v1273, %v1273
  %v2830 = vcombine.low %v1275, %v1277
  %v2831 = vcombine.low %v1301, %v1315
  %v2832 = vcombine.low %v1323, %v1325
  %v2834 = vunpack.c.l.s4 1966171168
  %v2835 = vunpack.c.0.s8 %v2834
  %v2836 = vlaneseq
  %v2837 = vshrl.u32 %v2836, 7
  %v2838 = vsub.s32 %v2835, %v2837
  %v2839 = vrot.slane %v2829, %v2838
  %v2841 = vunpack.c.l.s4 1966171168
  %v2842 = vunpack.c.0.s8 %v2841
  %v2843 = vlaneseq
  %v2844 = vshrl.u32 %v2843, 7
  %v2845 = vsub.s32 %v2842, %v2844
  %v2846 = vrot.slane %v2830, %v2845
  %v2848 = vunpack.c.l.s4 1966171168
  %v2849 = vunpack.c.0.s8 %v2848
  %v2850 = vlaneseq
  %v2851 = vshrl.u32 %v2850, 7
  %v2852 = vsub.s32 %v2849, %v2851
  %v2853 = vrot.slane %v2831, %v2852
  %v2855 = vunpack.c.l.s4 1966171168
  %v2856 = vunpack.c.0.s8 %v2855
  %v2857 = vlaneseq
  %v2858 = vshrl.u32 %v2857, 7
  %v2859 = vsub.s32 %v2856, %v2858
  %v2860 = vrot.slane %v2832, %v2859
  %v2861 = vcombine.low %v2839, %v2846
  %v2862 = vcombine.low %v2853, %v2860
  %v2864 = vunpack.c.l.s4 1966171168
  %v2865 = vunpack.c.0.s8 %v2864
  %v2866 = vlaneseq
  %v2867 = vshrl.u32 %v2866, 7
  %v2868 = vsub.s32 %v2865, %v2867
  %v2869 = vrot.slane %v2861, %v2868
  %v2871 = vunpack.c.l.s4 1966171168
  %v2872 = vunpack.c.0.s8 %v2871
  %v2873 = vlaneseq
  %v2874 = vshrl.u32 %v2873, 7
  %v2875 = vsub.s32 %v2872, %v2874
  %v2876 = vrot.slane %v2862, %v2875
  %v2877 = vcombine.low %v2869, %v2876
  %v2878 = vcombine.low %v1308, %v1322
  %v2880 = vunpack.c.l.s4 1966171168
  %v2881 = vunpack.c.0.s8 %v2880
  %v2882 = vlaneseq
  %v2883 = vshrl.u32 %v2882, 7
  %v2884 = vsub.s32 %v2881, %v2883
  %v2885 = vrot.slane %v2878, %v2884
  %v2887 = vunpack.c.l.s4 1966171168
  %v2888 = vunpack.c.0.s8 %v2887
  %v2889 = vlaneseq
  %v2890 = vshrl.u32 %v2889, 7
  %v2891 = vsub.s32 %v2888, %v2890
  %v2892 = vrot.slane %v2885, %v2891
  %v2893 = vcombine.low %v1324, %v1324
  %v2894 = vcombine.low %v1326, %v1350
  %v2895 = vcombine.low %v1364, %v1372
  %v2896 = vcombine.low %v1374, %v1357
  %v2898 = vunpack.c.l.s4 1966171168
  %v2899 = vunpack.c.0.s8 %v2898
  %v2900 = vlaneseq
  %v2901 = vshrl.u32 %v2900, 7
  %v2902 = vsub.s32 %v2899, %v2901
  %v2903 = vrot.slane %v2893, %v2902
  %v2905 = vunpack.c.l.s4 1966171168
  %v2906 = vunpack.c.0.s8 %v2905
  %v2907 = vlaneseq
  %v2908 = vshrl.u32 %v2907, 7
  %v2909 = vsub.s32 %v2906, %v2908
  %v2910 = vrot.slane %v2894, %v2909
  %v2912 = vunpack.c.l.s4 1966171168
  %v2913 = vunpack.c.0.s8 %v2912
  %v2914 = vlaneseq
  %v2915 = vshrl.u32 %v2914, 7
  %v2916 = vsub.s32 %v2913, %v2915
  %v2917 = vrot.slane %v2895, %v2916
  %v2919 = vunpack.c.l.s4 1966171168
  %v2920 = vunpack.c.0.s8 %v2919
  %v2921 = vlaneseq
  %v2922 = vshrl.u32 %v2921, 7
  %v2923 = vsub.s32 %v2920, %v2922
  %v2924 = vrot.slane %v2896, %v2923
  %v2925 = vcombine.low %v2903, %v2910
  %v2926 = vcombine.low %v2917, %v2924
  %v2928 = vunpack.c.l.s4 1966171168
  %v2929 = vunpack.c.0.s8 %v2928
  %v2930 = vlaneseq
  %v2931 = vshrl.u32 %v2930, 7
  %v2932 = vsub.s32 %v2929, %v2931
  %v2933 = vrot.slane %v2925, %v2932
  %v2935 = vunpack.c.l.s4 1966171168
  %v2936 = vunpack.c.0.s8 %v2935
  %v2937 = vlaneseq
  %v2938 = vshrl.u32 %v2937, 7
  %v2939 = vsub.s32 %v2936, %v2938
  %v2940 = vrot.slane %v2926, %v2939
  %v2941 = vcombine.low %v2933, %v2940
  %v2942 = vcombine.low %v1371, %v1373
  %v2944 = vunpack.c.l.s4 1966171168
  %v2945 = vunpack.c.0.s8 %v2944
  %v2946 = vlaneseq
  %v2947 = vshrl.u32 %v2946, 7
  %v2948 = vsub.s32 %v2945, %v2947
  %v2949 = vrot.slane %v2942, %v2948
  %v2951 = vunpack.c.l.s4 1966171168
  %v2952 = vunpack.c.0.s8 %v2951
  %v2953 = vlaneseq
  %v2954 = vshrl.u32 %v2953, 7
  %v2955 = vsub.s32 %v2952, %v2954
  %v2956 = vrot.slane %v2949, %v2955
  %v2957 = vcombine.low %v1375, %v1375
  %v2958 = vcombine.low %v1399, %v1413
  %v2959 = vcombine.low %v1421, %v1423
  %v2960 = vcombine.low %v1406, %v1420
  %v2962 = vunpack.c.l.s4 1966171168
  %v2963 = vunpack.c.0.s8 %v2962
  %v2964 = vlaneseq
  %v2965 = vshrl.u32 %v2964, 7
  %v2966 = vsub.s32 %v2963, %v2965
  %v2967 = vrot.slane %v2957, %v2966
  %v2969 = vunpack.c.l.s4 1966171168
  %v2970 = vunpack.c.0.s8 %v2969
  %v2971 = vlaneseq
  %v2972 = vshrl.u32 %v2971, 7
  %v2973 = vsub.s32 %v2970, %v2972
  %v2974 = vrot.slane %v2958, %v2973
  %v2976 = vunpack.c.l.s4 1966171168
  %v2977 = vunpack.c.0.s8 %v2976
  %v2978 = vlaneseq
  %v2979 = vshrl.u32 %v2978, 7
  %v2980 = vsub.s32 %v2977, %v2979
  %v2981 = vrot.slane %v2959, %v2980
  %v2983 = vunpack.c.l.s4 1966171168
  %v2984 = vunpack.c.0.s8 %v2983
  %v2985 = vlaneseq
  %v2986 = vshrl.u32 %v2985, 7
  %v2987 = vsub.s32 %v2984, %v2986
  %v2988 = vrot.slane %v2960, %v2987
  %v2989 = vcombine.low %v2967, %v2974
  %v2990 = vcombine.low %v2981, %v2988
  %v2992 = vunpack.c.l.s4 1966171168
  %v2993 = vunpack.c.0.s8 %v2992
  %v2994 = vlaneseq
  %v2995 = vshrl.u32 %v2994, 7
  %v2996 = vsub.s32 %v2993, %v2995
  %v2997 = vrot.slane %v2989, %v2996
  %v2999 = vunpack.c.l.s4 1966171168
  %v3000 = vunpack.c.0.s8 %v2999
  %v3001 = vlaneseq
  %v3002 = vshrl.u32 %v3001, 7
  %v3003 = vsub.s32 %v3000, %v3002
  %v3004 = vrot.slane %v2990, %v3003
  %v3005 = vcombine.low %v2997, %v3004
  %v3006 = vcombine.low %v1422, %v1424
  %v3008 = vunpack.c.l.s4 1966171168
  %v3009 = vunpack.c.0.s8 %v3008
  %v3010 = vlaneseq
  %v3011 = vshrl.u32 %v3010, 7
  %v3012 = vsub.s32 %v3009, %v3011
  %v3013 = vrot.slane %v3006, %v3012
  %v3015 = vunpack.c.l.s4 1966171168
  %v3016 = vunpack.c.0.s8 %v3015
  %v3017 = vlaneseq
  %v3018 = vshrl.u32 %v3017, 7
  %v3019 = vsub.s32 %v3016, %v3018
  %v3020 = vrot.slane %v3013, %v3019
  %v3037 = vcombine.low %v1999, %v1999
  %v3038 = vcombine.low %v2006, %v2013
  %v3040 = vunpack.c.l.s4 1966171168
  %v3041 = vunpack.c.0.s8 %v3040
  %v3042 = vlaneseq
  %v3043 = vshrl.u32 %v3042, 7
  %v3044 = vsub.s32 %v3041, %v3043
  %v3045 = vrot.slane %v3037, %v3044
  %v3047 = vunpack.c.l.s4 1966171168
  %v3048 = vunpack.c.0.s8 %v3047
  %v3049 = vlaneseq
  %v3050 = vshrl.u32 %v3049, 7
  %v3051 = vsub.s32 %v3048, %v3050
  %v3052 = vrot.slane %v3038, %v3051
  %v3053 = vcombine.low %v3045, %v3052
  %v3054 = vcombine.low %v2020, %v2044
  %v3056 = vunpack.c.l.s4 1966171168
  %v3057 = vunpack.c.0.s8 %v3056
  %v3058 = vlaneseq
  %v3059 = vshrl.u32 %v3058, 7
  %v3060 = vsub.s32 %v3057, %v3059
  %v3061 = vrot.slane %v3054, %v3060
  %v3062 = vcombine.low %v2062, %v2062
  %v3063 = vcombine.low %v2069, %v2076
  %v3065 = vunpack.c.l.s4 1966171168
  %v3066 = vunpack.c.0.s8 %v3065
  %v3067 = vlaneseq
  %v3068 = vshrl.u32 %v3067, 7
  %v3069 = vsub.s32 %v3066, %v3068
  %v3070 = vrot.slane %v3062, %v3069
  %v3072 = vunpack.c.l.s4 1966171168
  %v3073 = vunpack.c.0.s8 %v3072
  %v3074 = vlaneseq
  %v3075 = vshrl.u32 %v3074, 7
  %v3076 = vsub.s32 %v3073, %v3075
  %v3077 = vrot.slane %v3063, %v3076
  %v3078 = vcombine.low %v3070, %v3077
  %v3079 = vcombine.low %v2083, %v2107
  %v3081 = vunpack.c.l.s4 1966171168
  %v3082 = vunpack.c.0.s8 %v3081
  %v3083 = vlaneseq
  %v3084 = vshrl.u32 %v3083, 7
  %v3085 = vsub.s32 %v3082, %v3084
  %v3086 = vrot.slane %v3079, %v3085
  %v3087 = vcombine.low %v2125, %v2125
  %v3088 = vcombine.low %v2132, %v2139
  %v3090 = vunpack.c.l.s4 1966171168
  %v3091 = vunpack.c.0.s8 %v3090
  %v3092 = vlaneseq
  %v3093 = vshrl.u32 %v3092, 7
  %v3094 = vsub.s32 %v3091, %v3093
  %v3095 = vrot.slane %v3087, %v3094
  %v3097 = vunpack.c.l.s4 1966171168
  %v3098 = vunpack.c.0.s8 %v3097
  %v3099 = vlaneseq
  %v3100 = vshrl.u32 %v3099, 7
  %v3101 = vsub.s32 %v3098, %v3100
  %v3102 = vrot.slane %v3088, %v3101
  %v3103 = vcombine.low %v3095, %v3102
  %v3104 = vcombine.low %v2146, %v2170
  %v3106 = vunpack.c.l.s4 1966171168
  %v3107 = vunpack.c.0.s8 %v3106
  %v3108 = vlaneseq
  %v3109 = vshrl.u32 %v3108, 7
  %v3110 = vsub.s32 %v3107, %v3109
  %v3111 = vrot.slane %v3104, %v3110
  %v3112 = vcombine.low %v2188, %v2188
  %v3113 = vcombine.low %v2195, %v2202
  %v3115 = vunpack.c.l.s4 1966171168
  %v3116 = vunpack.c.0.s8 %v3115
  %v3117 = vlaneseq
  %v3118 = vshrl.u32 %v3117, 7
  %v3119 = vsub.s32 %v3116, %v3118
  %v3120 = vrot.slane %v3112, %v3119
  %v3122 = vunpack.c.l.s4 1966171168
  %v3123 = vunpack.c.0.s8 %v3122
  %v3124 = vlaneseq
  %v3125 = vshrl.u32 %v3124, 7
  %v3126 = vsub.s32 %v3123, %v3125
  %v3127 = vrot.slane %v3113, %v3126
  %v3128 = vcombine.low %v3120, %v3127
  %v3129 = vcombine.low %v2209, %v2233
  %v3131 = vunpack.c.l.s4 1966171168
  %v3132 = vunpack.c.0.s8 %v3131
  %v3133 = vlaneseq
  %v3134 = vshrl.u32 %v3133, 7
  %v3135 = vsub.s32 %v3132, %v3134
  %v3136 = vrot.slane %v3129, %v3135
  %v3137 = vcombine.low %v2251, %v2251
  %v3138 = vcombine.low %v2258, %v2265
  %v3140 = vunpack.c.l.s4 1966171168
  %v3141 = vunpack.c.0.s8 %v3140
  %v3142 = vlaneseq
  %v3143 = vshrl.u32 %v3142, 7
  %v3144 = vsub.s32 %v3141, %v3143
  %v3145 = vrot.slane %v3137, %v3144
  %v3147 = vunpack.c.l.s4 1966171168
  %v3148 = vunpack.c.0.s8 %v3147
  %v3149 = vlaneseq
  %v3150 = vshrl.u32 %v3149, 7
  %v3151 = vsub.s32 %v3148, %v3150
  %v3152 = vrot.slane %v3138, %v3151
  %v3153 = vcombine.low %v3145, %v3152
  %v3154 = vcombine.low %v2272, %v2296
  %v3156 = vunpack.c.l.s4 1966171168
  %v3157 = vunpack.c.0.s8 %v3156
  %v3158 = vlaneseq
  %v3159 = vshrl.u32 %v3158, 7
  %v3160 = vsub.s32 %v3157, %v3159
  %v3161 = vrot.slane %v3154, %v3160
  %v3162 = vcombine.low %v2314, %v2314
  %v3163 = vcombine.low %v2321, %v2328
  %v3165 = vunpack.c.l.s4 1966171168
  %v3166 = vunpack.c.0.s8 %v3165
  %v3167 = vlaneseq
  %v3168 = vshrl.u32 %v3167, 7
  %v3169 = vsub.s32 %v3166, %v3168
  %v3170 = vrot.slane %v3162, %v3169
  %v3172 = vunpack.c.l.s4 1966171168
  %v3173 = vunpack.c.0.s8 %v3172
  %v3174 = vlaneseq
  %v3175 = vshrl.u32 %v3174, 7
  %v3176 = vsub.s32 %v3173, %v3175
  %v3177 = vrot.slane %v3163, %v3176
  %v3178 = vcombine.low %v3170, %v3177
  %v3179 = vcombine.low %v2335, %v2359
  %v3181 = vunpack.c.l.s4 1966171168
  %v3182 = vunpack.c.0.s8 %v3181
  %v3183 = vlaneseq
  %v3184 = vshrl.u32 %v3183, 7
  %v3185 = vsub.s32 %v3182, %v3184
  %v3186 = vrot.slane %v3179, %v3185
  %v3187 = vcombine.low %v2377, %v2377
  %v3188 = vcombine.low %v2384, %v2391
  %v3190 = vunpack.c.l.s4 1966171168
  %v3191 = vunpack.c.0.s8 %v3190
  %v3192 = vlaneseq
  %v3193 = vshrl.u32 %v3192, 7
  %v3194 = vsub.s32 %v3191, %v3193
  %v3195 = vrot.slane %v3187, %v3194
  %v3197 = vunpack.c.l.s4 1966171168
  %v3198 = vunpack.c.0.s8 %v3197
  %v3199 = vlaneseq
  %v3200 = vshrl.u32 %v3199, 7
  %v3201 = vsub.s32 %v3198, %v3200
  %v3202 = vrot.slane %v3188, %v3201
  %v3203 = vcombine.low %v3195, %v3202
  %v3204 = vcombine.low %v2398, %v2422
  %v3206 = vunpack.c.l.s4 1966171168
  %v3207 = vunpack.c.0.s8 %v3206
  %v3208 = vlaneseq
  %v3209 = vshrl.u32 %v3208, 7
  %v3210 = vsub.s32 %v3207, %v3209
  %v3211 = vrot.slane %v3204, %v3210
  %v3212 = vcombine.low %v2440, %v2440
  %v3213 = vcombine.low %v2447, %v2454
  %v3215 = vunpack.c.l.s4 1966171168
  %v3216 = vunpack.c.0.s8 %v3215
  %v3217 = vlaneseq
  %v3218 = vshrl.u32 %v3217, 7
  %v3219 = vsub.s32 %v3216, %v3218
  %v3220 = vrot.slane %v3212, %v3219
  %v3222 = vunpack.c.l.s4 1966171168
  %v3223 = vunpack.c.0.s8 %v3222
  %v3224 = vlaneseq
  %v3225 = vshrl.u32 %v3224, 7
  %v3226 = vsub.s32 %v3223, %v3225
  %v3227 = vrot.slane %v3213, %v3226
  %v3228 = vcombine.low %v3220, %v3227
  %v3229 = vcombine.low %v2461, %v2485
  %v3231 = vunpack.c.l.s4 1966171168
  %v3232 = vunpack.c.0.s8 %v3231
  %v3233 = vlaneseq
  %v3234 = vshrl.u32 %v3233, 7
  %v3235 = vsub.s32 %v3232, %v3234
  %v3236 = vrot.slane %v3229, %v3235
  %v3253 = vcombine.low %v2519, %v2519
  %v3254 = vcombine.low %v2526, %v2533
  %v3256 = vunpack.c.l.s4 1966171168
  %v3257 = vunpack.c.0.s8 %v3256
  %v3258 = vlaneseq
  %v3259 = vshrl.u32 %v3258, 7
  %v3260 = vsub.s32 %v3257, %v3259
  %v3261 = vrot.slane %v3253, %v3260
  %v3263 = vunpack.c.l.s4 1966171168
  %v3264 = vunpack.c.0.s8 %v3263
  %v3265 = vlaneseq
  %v3266 = vshrl.u32 %v3265, 7
  %v3267 = vsub.s32 %v3264, %v3266
  %v3268 = vrot.slane %v3254, %v3267
  %v3269 = vcombine.low %v3261, %v3268
  %v3270 = vcombine.low %v2540, %v2565
  %v3272 = vunpack.c.l.s4 1966171168
  %v3273 = vunpack.c.0.s8 %v3272
  %v3274 = vlaneseq
  %v3275 = vshrl.u32 %v3274, 7
  %v3276 = vsub.s32 %v3273, %v3275
  %v3277 = vrot.slane %v3270, %v3276
  %v3278 = vcombine.low %v2583, %v2583
  %v3279 = vcombine.low %v2590, %v2597
  %v3281 = vunpack.c.l.s4 1966171168
  %v3282 = vunpack.c.0.s8 %v3281
  %v3283 = vlaneseq
  %v3284 = vshrl.u32 %v3283, 7
  %v3285 = vsub.s32 %v3282, %v3284
  %v3286 = vrot.slane %v3278, %v3285
  %v3288 = vunpack.c.l.s4 1966171168
  %v3289 = vunpack.c.0.s8 %v3288
  %v3290 = vlaneseq
  %v3291 = vshrl.u32 %v3290, 7
  %v3292 = vsub.s32 %v3289, %v3291
  %v3293 = vrot.slane %v3279, %v3292
  %v3294 = vcombine.low %v3286, %v3293
  %v3295 = vcombine.low %v2604, %v2629
  %v3297 = vunpack.c.l.s4 1966171168
  %v3298 = vunpack.c.0.s8 %v3297
  %v3299 = vlaneseq
  %v3300 = vshrl.u32 %v3299, 7
  %v3301 = vsub.s32 %v3298, %v3300
  %v3302 = vrot.slane %v3295, %v3301
  %v3303 = vcombine.low %v2647, %v2647
  %v3304 = vcombine.low %v2654, %v2661
  %v3306 = vunpack.c.l.s4 1966171168
  %v3307 = vunpack.c.0.s8 %v3306
  %v3308 = vlaneseq
  %v3309 = vshrl.u32 %v3308, 7
  %v3310 = vsub.s32 %v3307, %v3309
  %v3311 = vrot.slane %v3303, %v3310
  %v3313 = vunpack.c.l.s4 1966171168
  %v3314 = vunpack.c.0.s8 %v3313
  %v3315 = vlaneseq
  %v3316 = vshrl.u32 %v3315, 7
  %v3317 = vsub.s32 %v3314, %v3316
  %v3318 = vrot.slane %v3304, %v3317
  %v3319 = vcombine.low %v3311, %v3318
  %v3320 = vcombine.low %v2668, %v2693
  %v3322 = vunpack.c.l.s4 1966171168
  %v3323 = vunpack.c.0.s8 %v3322
  %v3324 = vlaneseq
  %v3325 = vshrl.u32 %v3324, 7
  %v3326 = vsub.s32 %v3323, %v3325
  %v3327 = vrot.slane %v3320, %v3326
  %v3328 = vcombine.low %v2711, %v2711
  %v3329 = vcombine.low %v2718, %v2725
  %v3331 = vunpack.c.l.s4 1966171168
  %v3332 = vunpack.c.0.s8 %v3331
  %v3333 = vlaneseq
  %v3334 = vshrl.u32 %v3333, 7
  %v3335 = vsub.s32 %v3332, %v3334
  %v3336 = vrot.slane %v3328, %v3335
  %v3338 = vunpack.c.l.s4 1966171168
  %v3339 = vunpack.c.0.s8 %v3338
  %v3340 = vlaneseq
  %v3341 = vshrl.u32 %v3340, 7
  %v3342 = vsub.s32 %v3339, %v3341
  %v3343 = vrot.slane %v3329, %v3342
  %v3344 = vcombine.low %v3336, %v3343
  %v3345 = vcombine.low %v2732, %v2757
  %v3347 = vunpack.c.l.s4 1966171168
  %v3348 = vunpack.c.0.s8 %v3347
  %v3349 = vlaneseq
  %v3350 = vshrl.u32 %v3349, 7
  %v3351 = vsub.s32 %v3348, %v3350
  %v3352 = vrot.slane %v3345, %v3351
  %v3353 = vcombine.low %v2775, %v2775
  %v3354 = vcombine.low %v2782, %v2789
  %v3356 = vunpack.c.l.s4 1966171168
  %v3357 = vunpack.c.0.s8 %v3356
  %v3358 = vlaneseq
  %v3359 = vshrl.u32 %v3358, 7
  %v3360 = vsub.s32 %v3357, %v3359
  %v3361 = vrot.slane %v3353, %v3360
  %v3363 = vunpack.c.l.s4 1966171168
  %v3364 = vunpack.c.0.s8 %v3363
  %v3365 = vlaneseq
  %v3366 = vshrl.u32 %v3365, 7
  %v3367 = vsub.s32 %v3364, %v3366
  %v3368 = vrot.slane %v3354, %v3367
  %v3369 = vcombine.low %v3361, %v3368
  %v3370 = vcombine.low %v2796, %v2821
  %v3372 = vunpack.c.l.s4 1966171168
  %v3373 = vunpack.c.0.s8 %v3372
  %v3374 = vlaneseq
  %v3375 = vshrl.u32 %v3374, 7
  %v3376 = vsub.s32 %v3373, %v3375
  %v3377 = vrot.slane %v3370, %v3376
  %v3378 = vcombine.low %v2839, %v2839
  %v3379 = vcombine.low %v2846, %v2853
  %v3381 = vunpack.c.l.s4 1966171168
  %v3382 = vunpack.c.0.s8 %v3381
  %v3383 = vlaneseq
  %v3384 = vshrl.u32 %v3383, 7
  %v3385 = vsub.s32 %v3382, %v3384
  %v3386 = vrot.slane %v3378, %v3385
  %v3388 = vunpack.c.l.s4 1966171168
  %v3389 = vunpack.c.0.s8 %v3388
  %v3390 = vlaneseq
  %v3391 = vshrl.u32 %v3390, 7
  %v3392 = vsub.s32 %v3389, %v3391
  %v3393 = vrot.slane %v3379, %v3392
  %v3394 = vcombine.low %v3386, %v3393
  %v3395 = vcombine.low %v2860, %v2885
  %v3397 = vunpack.c.l.s4 1966171168
  %v3398 = vunpack.c.0.s8 %v3397
  %v3399 = vlaneseq
  %v3400 = vshrl.u32 %v3399, 7
  %v3401 = vsub.s32 %v3398, %v3400
  %v3402 = vrot.slane %v3395, %v3401
  %v3403 = vcombine.low %v2903, %v2903
  %v3404 = vcombine.low %v2910, %v2917
  %v3406 = vunpack.c.l.s4 1966171168
  %v3407 = vunpack.c.0.s8 %v3406
  %v3408 = vlaneseq
  %v3409 = vshrl.u32 %v3408, 7
  %v3410 = vsub.s32 %v3407, %v3409
  %v3411 = vrot.slane %v3403, %v3410
  %v3413 = vunpack.c.l.s4 1966171168
  %v3414 = vunpack.c.0.s8 %v3413
  %v3415 = vlaneseq
  %v3416 = vshrl.u32 %v3415, 7
  %v3417 = vsub.s32 %v3414, %v3416
  %v3418 = vrot.slane %v3404, %v3417
  %v3419 = vcombine.low %v3411, %v3418
  %v3420 = vcombine.low %v2924, %v2949
  %v3422 = vunpack.c.l.s4 1966171168
  %v3423 = vunpack.c.0.s8 %v3422
  %v3424 = vlaneseq
  %v3425 = vshrl.u32 %v3424, 7
  %v3426 = vsub.s32 %v3423, %v3425
  %v3427 = vrot.slane %v3420, %v3426
  %v3428 = vcombine.low %v2967, %v2967
  %v3429 = vcombine.low %v2974, %v2981
  %v3431 = vunpack.c.l.s4 1966171168
  %v3432 = vunpack.c.0.s8 %v3431
  %v3433 = vlaneseq
  %v3434 = vshrl.u32 %v3433, 7
  %v3435 = vsub.s32 %v3432, %v3434
  %v3436 = vrot.slane %v3428, %v3435
  %v3438 = vunpack.c.l.s4 1966171168
  %v3439 = vunpack.c.0.s8 %v3438
  %v3440 = vlaneseq
  %v3441 = vshrl.u32 %v3440, 7
  %v3442 = vsub.s32 %v3439, %v3441
  %v3443 = vrot.slane %v3429, %v3442
  %v3444 = vcombine.low %v3436, %v3443
  %v3445 = vcombine.low %v2988, %v3013
  %v3447 = vunpack.c.l.s4 1966171168
  %v3448 = vunpack.c.0.s8 %v3447
  %v3449 = vlaneseq
  %v3450 = vshrl.u32 %v3449, 7
  %v3451 = vsub.s32 %v3448, %v3450
  %v3452 = vrot.slane %v3445, %v3451
  %v3469 = vcombine.low %v2029, %v2029
  %v3470 = vcombine.low %v2036, %v2051
  %v3471 = vcombine.low %v2092, %v2092
  %v3472 = vcombine.low %v2099, %v2114
  %v3473 = vcombine.low %v2155, %v2155
  %v3474 = vcombine.low %v2162, %v2177
  %v3475 = vcombine.low %v2218, %v2218
  %v3476 = vcombine.low %v2225, %v2240
  %v3477 = vcombine.low %v2281, %v2281
  %v3478 = vcombine.low %v2288, %v2303
  %v3479 = vcombine.low %v2344, %v2344
  %v3480 = vcombine.low %v2351, %v2366
  %v3481 = vcombine.low %v2407, %v2407
  %v3482 = vcombine.low %v2414, %v2429
  %v3483 = vcombine.low %v2470, %v2470
  %v3484 = vcombine.low %v2477, %v2492
  %v3501 = vcombine.low %v2549, %v2549
  %v3502 = vcombine.low %v2556, %v2572
  %v3503 = vcombine.low %v2613, %v2613
  %v3504 = vcombine.low %v2620, %v2636
  %v3505 = vcombine.low %v2677, %v2677
  %v3506 = vcombine.low %v2684, %v2700
  %v3507 = vcombine.low %v2741, %v2741
  %v3508 = vcombine.low %v2748, %v2764
  %v3509 = vcombine.low %v2805, %v2805
  %v3510 = vcombine.low %v2812, %v2828
  %v3511 = vcombine.low %v2869, %v2869
  %v3512 = vcombine.low %v2876, %v2892
  %v3513 = vcombine.low %v2933, %v2933
  %v3514 = vcombine.low %v2940, %v2956
  %v3515 = vcombine.low %v2997, %v2997
  %v3516 = vcombine.low %v3004, %v3020
  %v3533 = vcombine.low %v3045, %v3045
  %v3534 = vcombine.low %v3052, %v3061
  %v3535 = vcombine.low %v3070, %v3070
  %v3536 = vcombine.low %v3077, %v3086
  %v3537 = vcombine.low %v3095, %v3095
  %v3538 = vcombine.low %v3102, %v3111
  %v3539 = vcombine.low %v3120, %v3120
  %v3540 = vcombine.low %v3127, %v3136
  %v3541 = vcombine.low %v3145, %v3145
  %v3542 = vcombine.low %v3152, %v3161
  %v3543 = vcombine.low %v3170, %v3170
  %v3544 = vcombine.low %v3177, %v3186
  %v3545 = vcombine.low %v3195, %v3195
  %v3546 = vcombine.low %v3202, %v3211
  %v3547 = vcombine.low %v3220, %v3220
  %v3548 = vcombine.low %v3227, %v3236
  %v3565 = vcombine.low %v3261, %v3261
  %v3566 = vcombine.low %v3268, %v3277
  %v3567 = vcombine.low %v3286, %v3286
  %v3568 = vcombine.low %v3293, %v3302
  %v3569 = vcombine.low %v3311, %v3311
  %v3570 = vcombine.low %v3318, %v3327
  %v3571 = vcombine.low %v3336, %v3336
  %v3572 = vcombine.low %v3343, %v3352
  %v3573 = vcombine.low %v3361, %v3361
  %v3574 = vcombine.low %v3368, %v3377
  %v3575 = vcombine.low %v3386, %v3386
  %v3576 = vcombine.low %v3393, %v3402
  %v3577 = vcombine.low %v3411, %v3411
  %v3578 = vcombine.low %v3418, %v3427
  %v3579 = vcombine.low %v3436, %v3436
  %v3580 = vcombine.low %v3443, %v3452
  %vm3597 = vcmask 1040384
  %v3598 = vsel %vm3597, %v2051, %v2557
  %v3599 = vsel %vm3597, %v2114, %v2621
  %v3600 = vsel %vm3597, %v2177, %v2685
  %v3601 = vsel %vm3597, %v2240, %v2749
  %v3602 = vsel %vm3597, %v2303, %v2813
  %v3603 = vsel %vm3597, %v2366, %v2877
  %v3604 = vsel %vm3597, %v2429, %v2941
  %v3605 = vsel %vm3597, %v2492, %v3005
  %v3606 = vsel %vm155, %v2572, %v3053
  %v3607 = vsel %vm155, %v2636, %v3078
  %v3608 = vsel %vm155, %v2700, %v3103
  %v3609 = vsel %vm155, %v2764, %v3128
  %v3610 = vsel %vm155, %v2828, %v3153
  %v3611 = vsel %vm155, %v2892, %v3178
  %v3612 = vsel %vm155, %v2956, %v3203
  %v3613 = vsel %vm155, %v3020, %v3228
  %vm3614 = vcmask 1042432
  %v3615 = vsel %vm3614, %v3061, %v3269
  %v3616 = vsel %vm3614, %v3086, %v3294
  %v3617 = vsel %vm3614, %v3111, %v3319
  %v3618 = vsel %vm3614, %v3136, %v3344
  %v3619 = vsel %vm3614, %v3161, %v3369
  %v3620 = vsel %vm3614, %v3186, %v3394
  %v3621 = vsel %vm3614, %v3211, %v3419
  %v3622 = vsel %vm3614, %v3236, %v3444
  %vm3623 = vcmask 1043456
  %v3624 = vsel %vm3623, %v3277, %v3469
  %v3625 = vsel %vm3623, %v3302, %v3471
  %v3626 = vsel %vm3623, %v3327, %v3473
  %v3627 = vsel %vm3623, %v3352, %v3475
  %v3628 = vsel %vm3623, %v3377, %v3477
  %v3629 = vsel %vm3623, %v3402, %v3479
  %v3630 = vsel %vm3623, %v3427, %v3481
  %v3631 = vsel %vm3623, %v3452, %v3483
  %vm3632 = vcmask 1044480
  %v3633 = vsel %vm3632, %v3470, %v3501
  %v3634 = vsel %vm3632, %v3472, %v3503
  %v3635 = vsel %vm3632, %v3474, %v3505
  %v3636 = vsel %vm3632, %v3476, %v3507
  %v3637 = vsel %vm3632, %v3478, %v3509
  %v3638 = vsel %vm3632, %v3480, %v3511
  %v3639 = vsel %vm3632, %v3482, %v3513
  %v3640 = vsel %vm3632, %v3484, %v3515
  %vm3641 = vcmask 1045504
  %v3642 = vsel %vm3641, %v3502, %v3533
  %v3643 = vsel %vm3641, %v3504, %v3535
  %v3644 = vsel %vm3641, %v3506, %v3537
  %v3645 = vsel %vm3641, %v3508, %v3539
  %v3646 = vsel %vm3641, %v3510, %v3541
  %v3647 = vsel %vm3641, %v3512, %v3543
  %v3648 = vsel %vm3641, %v3514, %v3545
  %v3649 = vsel %vm3641, %v3516, %v3547
  %vm3650 = vcmask 1046528
  %v3651 = vsel %vm3650, %v3534, %v3565
  %v3652 = vsel %vm3650, %v3536, %v3567
  %v3653 = vsel %vm3650, %v3538, %v3569
  %v3654 = vsel %vm3650, %v3540, %v3571
  %v3655 = vsel %vm3650, %v3542, %v3573
  %v3656 = vsel %vm3650, %v3544, %v3575
  %v3657 = vsel %vm3650, %v3546, %v3577
  %v3658 = vsel %vm3650, %v3548, %v3579
  %v3659 = vmul.f32 %v2037, %v105
  %v3660 = vmul.f32 %v3598, %v106
  %v3661 = vmul.f32 %v3606, %v107
  %v3662 = vmul.f32 %v3615, %v108
  %v3663 = vmul.f32 %v3624, %v109
  %v3664 = vmul.f32 %v3633, %v110
  %v3665 = vmul.f32 %v3642, %v111
  %v3666 = vmul.f32 %v3651, %v112
  %v3667 = vmul.f32 %v3566, %v113
  %v3668 = vmul.f32 %v2100, %v105
  %v3669 = vmul.f32 %v3599, %v106
  %v3670 = vmul.f32 %v3607, %v107
  %v3671 = vmul.f32 %v3616, %v108
  %v3672 = vmul.f32 %v3625, %v109
  %v3673 = vmul.f32 %v3634, %v110
  %v3674 = vmul.f32 %v3643, %v111
  %v3675 = vmul.f32 %v3652, %v112
  %v3676 = vmul.f32 %v3568, %v113
  %v3677 = vmul.f32 %v2163, %v105
  %v3678 = vmul.f32 %v3600, %v106
  %v3679 = vmul.f32 %v3608, %v107
  %v3680 = vmul.f32 %v3617, %v108
  %v3681 = vmul.f32 %v3626, %v109
  %v3682 = vmul.f32 %v3635, %v110
  %v3683 = vmul.f32 %v3644, %v111
  %v3684 = vmul.f32 %v3653, %v112
  %v3685 = vmul.f32 %v3570, %v113
  %v3686 = vmul.f32 %v2226, %v105
  %v3687 = vmul.f32 %v3601, %v106
  %v3688 = vmul.f32 %v3609, %v107
  %v3689 = vmul.f32 %v3618, %v108
  %v3690 = vmul.f32 %v3627, %v109
  %v3691 = vmul.f32 %v3636, %v110
  %v3692 = vmul.f32 %v3645, %v111
  %v3693 = vmul.f32 %v3654, %v112
  %v3694 = vmul.f32 %v3572, %v113
  %v3695 = vmul.f32 %v2289, %v105
  %v3696 = vmul.f32 %v3602, %v106
  %v3697 = vmul.f32 %v3610, %v107
  %v3698 = vmul.f32 %v3619, %v108
  %v3699 = vmul.f32 %v3628, %v109
  %v3700 = vmul.f32 %v3637, %v110
  %v3701 = vmul.f32 %v3646, %v111
  %v3702 = vmul.f32 %v3655, %v112
  %v3703 = vmul.f32 %v3574, %v113
  %v3704 = vmul.f32 %v2352, %v105
  %v3705 = vmul.f32 %v3603, %v106
  %v3706 = vmul.f32 %v3611, %v107
  %v3707 = vmul.f32 %v3620, %v108
  %v3708 = vmul.f32 %v3629, %v109
  %v3709 = vmul.f32 %v3638, %v110
  %v3710 = vmul.f32 %v3647, %v111
  %v3711 = vmul.f32 %v3656, %v112
  %v3712 = vmul.f32 %v3576, %v113
  %v3713 = vmul.f32 %v2415, %v105
  %v3714 = vmul.f32 %v3604, %v106
  %v3715 = vmul.f32 %v3612, %v107
  %v3716 = vmul.f32 %v3621, %v108
  %v3717 = vmul.f32 %v3630, %v109
  %v3718 = vmul.f32 %v3639, %v110
  %v3719 = vmul.f32 %v3648, %v111
  %v3720 = vmul.f32 %v3657, %v112
  %v3721 = vmul.f32 %v3578, %v113
  %v3722 = vmul.f32 %v2478, %v105
  %v3723 = vmul.f32 %v3605, %v106
  %v3724 = vmul.f32 %v3613, %v107
  %v3725 = vmul.f32 %v3622, %v108
  %v3726 = vmul.f32 %v3631, %v109
  %v3727 = vmul.f32 %v3640, %v110
  %v3728 = vmul.f32 %v3649, %v111
  %v3729 = vmul.f32 %v3658, %v112
  %v3730 = vmul.f32 %v3580, %v113
  %v3731 = vcombine.low %v1571, %v1585
  %v3732 = vcombine.low %v1593, %v1595
  %v3733 = vcombine.low %v1578, %v1592
  %v3734 = vcombine.low %v1594, %v1596
  %v3736 = vunpack.c.l.s4 1966171168
  %v3737 = vunpack.c.0.s8 %v3736
  %v3738 = vlaneseq
  %v3739 = vshrl.u32 %v3738, 7
  %v3740 = vsub.s32 %v3737, %v3739
  %v3741 = vrot.slane %v3731, %v3740
  %v3743 = vunpack.c.l.s4 1966171168
  %v3744 = vunpack.c.0.s8 %v3743
  %v3745 = vlaneseq
  %v3746 = vshrl.u32 %v3745, 7
  %v3747 = vsub.s32 %v3744, %v3746
  %v3748 = vrot.slane %v3732, %v3747
  %v3750 = vunpack.c.l.s4 1966171168
  %v3751 = vunpack.c.0.s8 %v3750
  %v3752 = vlaneseq
  %v3753 = vshrl.u32 %v3752, 7
  %v3754 = vsub.s32 %v3751, %v3753
  %v3755 = vrot.slane %v3733, %v3754
  %v3757 = vunpack.c.l.s4 1966171168
  %v3758 = vunpack.c.0.s8 %v3757
  %v3759 = vlaneseq
  %v3760 = vshrl.u32 %v3759, 7
  %v3761 = vsub.s32 %v3758, %v3760
  %v3762 = vrot.slane %v3734, %v3761
  %v3763 = vcombine.low %v3741, %v3748
  %v3764 = vcombine.low %v3755, %v3762
  %v3766 = vunpack.c.l.s4 1966171168
  %v3767 = vunpack.c.0.s8 %v3766
  %v3768 = vlaneseq
  %v3769 = vshrl.u32 %v3768, 7
  %v3770 = vsub.s32 %v3767, %v3769
  %v3771 = vrot.slane %v3763, %v3770
  %v3773 = vunpack.c.l.s4 1966171168
  %v3774 = vunpack.c.0.s8 %v3773
  %v3775 = vlaneseq
  %v3776 = vshrl.u32 %v3775, 7
  %v3777 = vsub.s32 %v3774, %v3776
  %v3778 = vrot.slane %v3764, %v3777
  %v3779 = vcombine.low %v3771, %v3778
  %v3781 = vunpack.c.l.s4 1966171168
  %v3782 = vunpack.c.0.s8 %v3781
  %v3783 = vlaneseq
  %v3784 = vshrl.u32 %v3783, 7
  %v3785 = vsub.s32 %v3782, %v3784
  %v3786 = vrot.slane %v1620, %v3785
  %v3788 = vunpack.c.l.s4 1966171168
  %v3789 = vunpack.c.0.s8 %v3788
  %v3790 = vlaneseq
  %v3791 = vshrl.u32 %v3790, 7
  %v3792 = vsub.s32 %v3789, %v3791
  %v3793 = vrot.slane %v3786, %v3792
  %v3794 = vcombine.low %v1634, %v1642
  %v3795 = vcombine.low %v1644, %v1627
  %v3796 = vcombine.low %v1641, %v1643
  %v3797 = vcombine.low %v1645, %v1669
  %v3799 = vunpack.c.l.s4 1966171168
  %v3800 = vunpack.c.0.s8 %v3799
  %v3801 = vlaneseq
  %v3802 = vshrl.u32 %v3801, 7
  %v3803 = vsub.s32 %v3800, %v3802
  %v3804 = vrot.slane %v3794, %v3803
  %v3806 = vunpack.c.l.s4 1966171168
  %v3807 = vunpack.c.0.s8 %v3806
  %v3808 = vlaneseq
  %v3809 = vshrl.u32 %v3808, 7
  %v3810 = vsub.s32 %v3807, %v3809
  %v3811 = vrot.slane %v3795, %v3810
  %v3813 = vunpack.c.l.s4 1966171168
  %v3814 = vunpack.c.0.s8 %v3813
  %v3815 = vlaneseq
  %v3816 = vshrl.u32 %v3815, 7
  %v3817 = vsub.s32 %v3814, %v3816
  %v3818 = vrot.slane %v3796, %v3817
  %v3820 = vunpack.c.l.s4 1966171168
  %v3821 = vunpack.c.0.s8 %v3820
  %v3822 = vlaneseq
  %v3823 = vshrl.u32 %v3822, 7
  %v3824 = vsub.s32 %v3821, %v3823
  %v3825 = vrot.slane %v3797, %v3824
  %v3826 = vcombine.low %v3804, %v3811
  %v3827 = vcombine.low %v3818, %v3825
  %v3829 = vunpack.c.l.s4 1966171168
  %v3830 = vunpack.c.0.s8 %v3829
  %v3831 = vlaneseq
  %v3832 = vshrl.u32 %v3831, 7
  %v3833 = vsub.s32 %v3830, %v3832
  %v3834 = vrot.slane %v3826, %v3833
  %v3836 = vunpack.c.l.s4 1966171168
  %v3837 = vunpack.c.0.s8 %v3836
  %v3838 = vlaneseq
  %v3839 = vshrl.u32 %v3838, 7
  %v3840 = vsub.s32 %v3837, %v3839
  %v3841 = vrot.slane %v3827, %v3840
  %v3842 = vcombine.low %v3834, %v3841
  %v3844 = vunpack.c.l.s4 1966171168
  %v3845 = vunpack.c.0.s8 %v3844
  %v3846 = vlaneseq
  %v3847 = vshrl.u32 %v3846, 7
  %v3848 = vsub.s32 %v3845, %v3847
  %v3849 = vrot.slane %v1683, %v3848
  %v3851 = vunpack.c.l.s4 1966171168
  %v3852 = vunpack.c.0.s8 %v3851
  %v3853 = vlaneseq
  %v3854 = vshrl.u32 %v3853, 7
  %v3855 = vsub.s32 %v3852, %v3854
  %v3856 = vrot.slane %v3849, %v3855
  %v3857 = vcombine.low %v1691, %v1693
  %v3858 = vcombine.low %v1676, %v1690
  %v3859 = vcombine.low %v1692, %v1694
  %v3860 = vcombine.low %v1718, %v1732
  %v3862 = vunpack.c.l.s4 1966171168
  %v3863 = vunpack.c.0.s8 %v3862
  %v3864 = vlaneseq
  %v3865 = vshrl.u32 %v3864, 7
  %v3866 = vsub.s32 %v3863, %v3865
  %v3867 = vrot.slane %v3857, %v3866
  %v3869 = vunpack.c.l.s4 1966171168
  %v3870 = vunpack.c.0.s8 %v3869
  %v3871 = vlaneseq
  %v3872 = vshrl.u32 %v3871, 7
  %v3873 = vsub.s32 %v3870, %v3872
  %v3874 = vrot.slane %v3858, %v3873
  %v3876 = vunpack.c.l.s4 1966171168
  %v3877 = vunpack.c.0.s8 %v3876
  %v3878 = vlaneseq
  %v3879 = vshrl.u32 %v3878, 7
  %v3880 = vsub.s32 %v3877, %v3879
  %v3881 = vrot.slane %v3859, %v3880
  %v3883 = vunpack.c.l.s4 1966171168
  %v3884 = vunpack.c.0.s8 %v3883
  %v3885 = vlaneseq
  %v3886 = vshrl.u32 %v3885, 7
  %v3887 = vsub.s32 %v3884, %v3886
  %v3888 = vrot.slane %v3860, %v3887
  %v3889 = vcombine.low %v3867, %v3874
  %v3890 = vcombine.low %v3881, %v3888
  %v3892 = vunpack.c.l.s4 1966171168
  %v3893 = vunpack.c.0.s8 %v3892
  %v3894 = vlaneseq
  %v3895 = vshrl.u32 %v3894, 7
  %v3896 = vsub.s32 %v3893, %v3895
  %v3897 = vrot.slane %v3889, %v3896
  %v3899 = vunpack.c.l.s4 1966171168
  %v3900 = vunpack.c.0.s8 %v3899
  %v3901 = vlaneseq
  %v3902 = vshrl.u32 %v3901, 7
  %v3903 = vsub.s32 %v3900, %v3902
  %v3904 = vrot.slane %v3890, %v3903
  %v3905 = vcombine.low %v3897, %v3904
  %v3907 = vunpack.c.l.s4 1966171168
  %v3908 = vunpack.c.0.s8 %v3907
  %v3909 = vlaneseq
  %v3910 = vshrl.u32 %v3909, 7
  %v3911 = vsub.s32 %v3908, %v3910
  %v3912 = vrot.slane %v1740, %v3911
  %v3914 = vunpack.c.l.s4 1966171168
  %v3915 = vunpack.c.0.s8 %v3914
  %v3916 = vlaneseq
  %v3917 = vshrl.u32 %v3916, 7
  %v3918 = vsub.s32 %v3915, %v3917
  %v3919 = vrot.slane %v3912, %v3918
  %v3920 = vcombine.low %v1742, %v1725
  %v3921 = vcombine.low %v1739, %v1741
  %v3922 = vcombine.low %v1743, %v1767
  %v3923 = vcombine.low %v1781, %v1789
  %v3925 = vunpack.c.l.s4 1966171168
  %v3926 = vunpack.c.0.s8 %v3925
  %v3927 = vlaneseq
  %v3928 = vshrl.u32 %v3927, 7
  %v3929 = vsub.s32 %v3926, %v3928
  %v3930 = vrot.slane %v3920, %v3929
  %v3932 = vunpack.c.l.s4 1966171168
  %v3933 = vunpack.c.0.s8 %v3932
  %v3934 = vlaneseq
  %v3935 = vshrl.u32 %v3934, 7
  %v3936 = vsub.s32 %v3933, %v3935
  %v3937 = vrot.slane %v3921, %v3936
  %v3939 = vunpack.c.l.s4 1966171168
  %v3940 = vunpack.c.0.s8 %v3939
  %v3941 = vlaneseq
  %v3942 = vshrl.u32 %v3941, 7
  %v3943 = vsub.s32 %v3940, %v3942
  %v3944 = vrot.slane %v3922, %v3943
  %v3946 = vunpack.c.l.s4 1966171168
  %v3947 = vunpack.c.0.s8 %v3946
  %v3948 = vlaneseq
  %v3949 = vshrl.u32 %v3948, 7
  %v3950 = vsub.s32 %v3947, %v3949
  %v3951 = vrot.slane %v3923, %v3950
  %v3952 = vcombine.low %v3930, %v3937
  %v3953 = vcombine.low %v3944, %v3951
  %v3955 = vunpack.c.l.s4 1966171168
  %v3956 = vunpack.c.0.s8 %v3955
  %v3957 = vlaneseq
  %v3958 = vshrl.u32 %v3957, 7
  %v3959 = vsub.s32 %v3956, %v3958
  %v3960 = vrot.slane %v3952, %v3959
  %v3962 = vunpack.c.l.s4 1966171168
  %v3963 = vunpack.c.0.s8 %v3962
  %v3964 = vlaneseq
  %v3965 = vshrl.u32 %v3964, 7
  %v3966 = vsub.s32 %v3963, %v3965
  %v3967 = vrot.slane %v3953, %v3966
  %v3968 = vcombine.low %v3960, %v3967
  %v3970 = vunpack.c.l.s4 1966171168
  %v3971 = vunpack.c.0.s8 %v3970
  %v3972 = vlaneseq
  %v3973 = vshrl.u32 %v3972, 7
  %v3974 = vsub.s32 %v3971, %v3973
  %v3975 = vrot.slane %v1791, %v3974
  %v3977 = vunpack.c.l.s4 1966171168
  %v3978 = vunpack.c.0.s8 %v3977
  %v3979 = vlaneseq
  %v3980 = vshrl.u32 %v3979, 7
  %v3981 = vsub.s32 %v3978, %v3980
  %v3982 = vrot.slane %v3975, %v3981
  %v3983 = vcombine.low %v1774, %v1788
  %v3984 = vcombine.low %v1790, %v1792
  %v3985 = vcombine.low %v1816, %v1830
  %v3986 = vcombine.low %v1838, %v1840
  %v3988 = vunpack.c.l.s4 1966171168
  %v3989 = vunpack.c.0.s8 %v3988
  %v3990 = vlaneseq
  %v3991 = vshrl.u32 %v3990, 7
  %v3992 = vsub.s32 %v3989, %v3991
  %v3993 = vrot.slane %v3983, %v3992
  %v3995 = vunpack.c.l.s4 1966171168
  %v3996 = vunpack.c.0.s8 %v3995
  %v3997 = vlaneseq
  %v3998 = vshrl.u32 %v3997, 7
  %v3999 = vsub.s32 %v3996, %v3998
  %v4000 = vrot.slane %v3984, %v3999
  %v4002 = vunpack.c.l.s4 1966171168
  %v4003 = vunpack.c.0.s8 %v4002
  %v4004 = vlaneseq
  %v4005 = vshrl.u32 %v4004, 7
  %v4006 = vsub.s32 %v4003, %v4005
  %v4007 = vrot.slane %v3985, %v4006
  %v4009 = vunpack.c.l.s4 1966171168
  %v4010 = vunpack.c.0.s8 %v4009
  %v4011 = vlaneseq
  %v4012 = vshrl.u32 %v4011, 7
  %v4013 = vsub.s32 %v4010, %v4012
  %v4014 = vrot.slane %v3986, %v4013
  %v4015 = vcombine.low %v3993, %v4000
  %v4016 = vcombine.low %v4007, %v4014
  %v4018 = vunpack.c.l.s4 1966171168
  %v4019 = vunpack.c.0.s8 %v4018
  %v4020 = vlaneseq
  %v4021 = vshrl.u32 %v4020, 7
  %v4022 = vsub.s32 %v4019, %v4021
  %v4023 = vrot.slane %v4015, %v4022
  %v4025 = vunpack.c.l.s4 1966171168
  %v4026 = vunpack.c.0.s8 %v4025
  %v4027 = vlaneseq
  %v4028 = vshrl.u32 %v4027, 7
  %v4029 = vsub.s32 %v4026, %v4028
  %v4030 = vrot.slane %v4016, %v4029
  %v4031 = vcombine.low %v4023, %v4030
  %v4033 = vunpack.c.l.s4 1966171168
  %v4034 = vunpack.c.0.s8 %v4033
  %v4035 = vlaneseq
  %v4036 = vshrl.u32 %v4035, 7
  %v4037 = vsub.s32 %v4034, %v4036
  %v4038 = vrot.slane %v1823, %v4037
  %v4040 = vunpack.c.l.s4 1966171168
  %v4041 = vunpack.c.0.s8 %v4040
  %v4042 = vlaneseq
  %v4043 = vshrl.u32 %v4042, 7
  %v4044 = vsub.s32 %v4041, %v4043
  %v4045 = vrot.slane %v4038, %v4044
  %v4046 = vcombine.low %v1837, %v1839
  %v4047 = vcombine.low %v1841, %v1865
  %v4048 = vcombine.low %v1879, %v1887
  %v4049 = vcombine.low %v1889, %v1872
  %v4051 = vunpack.c.l.s4 1966171168
  %v4052 = vunpack.c.0.s8 %v4051
  %v4053 = vlaneseq
  %v4054 = vshrl.u32 %v4053, 7
  %v4055 = vsub.s32 %v4052, %v4054
  %v4056 = vrot.slane %v4046, %v4055
  %v4058 = vunpack.c.l.s4 1966171168
  %v4059 = vunpack.c.0.s8 %v4058
  %v4060 = vlaneseq
  %v4061 = vshrl.u32 %v4060, 7
  %v4062 = vsub.s32 %v4059, %v4061
  %v4063 = vrot.slane %v4047, %v4062
  %v4065 = vunpack.c.l.s4 1966171168
  %v4066 = vunpack.c.0.s8 %v4065
  %v4067 = vlaneseq
  %v4068 = vshrl.u32 %v4067, 7
  %v4069 = vsub.s32 %v4066, %v4068
  %v4070 = vrot.slane %v4048, %v4069
  %v4072 = vunpack.c.l.s4 1966171168
  %v4073 = vunpack.c.0.s8 %v4072
  %v4074 = vlaneseq
  %v4075 = vshrl.u32 %v4074, 7
  %v4076 = vsub.s32 %v4073, %v4075
  %v4077 = vrot.slane %v4049, %v4076
  %v4078 = vcombine.low %v4056, %v4063
  %v4079 = vcombine.low %v4070, %v4077
  %v4081 = vunpack.c.l.s4 1966171168
  %v4082 = vunpack.c.0.s8 %v4081
  %v4083 = vlaneseq
  %v4084 = vshrl.u32 %v4083, 7
  %v4085 = vsub.s32 %v4082, %v4084
  %v4086 = vrot.slane %v4078, %v4085
  %v4088 = vunpack.c.l.s4 1966171168
  %v4089 = vunpack.c.0.s8 %v4088
  %v4090 = vlaneseq
  %v4091 = vshrl.u32 %v4090, 7
  %v4092 = vsub.s32 %v4089, %v4091
  %v4093 = vrot.slane %v4079, %v4092
  %v4094 = vcombine.low %v4086, %v4093
  %v4096 = vunpack.c.l.s4 1966171168
  %v4097 = vunpack.c.0.s8 %v4096
  %v4098 = vlaneseq
  %v4099 = vshrl.u32 %v4098, 7
  %v4100 = vsub.s32 %v4097, %v4099
  %v4101 = vrot.slane %v1886, %v4100
  %v4103 = vunpack.c.l.s4 1966171168
  %v4104 = vunpack.c.0.s8 %v4103
  %v4105 = vlaneseq
  %v4106 = vshrl.u32 %v4105, 7
  %v4107 = vsub.s32 %v4104, %v4106
  %v4108 = vrot.slane %v4101, %v4107
  %v4109 = vcombine.low %v1888, %v1890
  %v4110 = vcombine.low %v1914, %v1928
  %v4111 = vcombine.low %v1936, %v1938
  %v4112 = vcombine.low %v1921, %v1935
  %v4114 = vunpack.c.l.s4 1966171168
  %v4115 = vunpack.c.0.s8 %v4114
  %v4116 = vlaneseq
  %v4117 = vshrl.u32 %v4116, 7
  %v4118 = vsub.s32 %v4115, %v4117
  %v4119 = vrot.slane %v4109, %v4118
  %v4121 = vunpack.c.l.s4 1966171168
  %v4122 = vunpack.c.0.s8 %v4121
  %v4123 = vlaneseq
  %v4124 = vshrl.u32 %v4123, 7
  %v4125 = vsub.s32 %v4122, %v4124
  %v4126 = vrot.slane %v4110, %v4125
  %v4128 = vunpack.c.l.s4 1966171168
  %v4129 = vunpack.c.0.s8 %v4128
  %v4130 = vlaneseq
  %v4131 = vshrl.u32 %v4130, 7
  %v4132 = vsub.s32 %v4129, %v4131
  %v4133 = vrot.slane %v4111, %v4132
  %v4135 = vunpack.c.l.s4 1966171168
  %v4136 = vunpack.c.0.s8 %v4135
  %v4137 = vlaneseq
  %v4138 = vshrl.u32 %v4137, 7
  %v4139 = vsub.s32 %v4136, %v4138
  %v4140 = vrot.slane %v4112, %v4139
  %v4141 = vcombine.low %v4119, %v4126
  %v4142 = vcombine.low %v4133, %v4140
  %v4144 = vunpack.c.l.s4 1966171168
  %v4145 = vunpack.c.0.s8 %v4144
  %v4146 = vlaneseq
  %v4147 = vshrl.u32 %v4146, 7
  %v4148 = vsub.s32 %v4145, %v4147
  %v4149 = vrot.slane %v4141, %v4148
  %v4151 = vunpack.c.l.s4 1966171168
  %v4152 = vunpack.c.0.s8 %v4151
  %v4153 = vlaneseq
  %v4154 = vshrl.u32 %v4153, 7
  %v4155 = vsub.s32 %v4152, %v4154
  %v4156 = vrot.slane %v4142, %v4155
  %v4157 = vcombine.low %v4149, %v4156
  %v4159 = vunpack.c.l.s4 1966171168
  %v4160 = vunpack.c.0.s8 %v4159
  %v4161 = vlaneseq
  %v4162 = vshrl.u32 %v4161, 7
  %v4163 = vsub.s32 %v4160, %v4162
  %v4164 = vrot.slane %v1937, %v4163
  %v4166 = vunpack.c.l.s4 1966171168
  %v4167 = vunpack.c.0.s8 %v4166
  %v4168 = vlaneseq
  %v4169 = vshrl.u32 %v4168, 7
  %v4170 = vsub.s32 %v4167, %v4169
  %v4171 = vrot.slane %v4164, %v4170
  %v4172 = vcombine.low %v1939, %v1963
  %v4173 = vcombine.low %v1977, %v1985
  %v4174 = vcombine.low %v1987, %v1970
  %v4175 = vcombine.low %v1984, %v1986
  %v4177 = vunpack.c.l.s4 1966171168
  %v4178 = vunpack.c.0.s8 %v4177
  %v4179 = vlaneseq
  %v4180 = vshrl.u32 %v4179, 7
  %v4181 = vsub.s32 %v4178, %v4180
  %v4182 = vrot.slane %v4172, %v4181
  %v4184 = vunpack.c.l.s4 1966171168
  %v4185 = vunpack.c.0.s8 %v4184
  %v4186 = vlaneseq
  %v4187 = vshrl.u32 %v4186, 7
  %v4188 = vsub.s32 %v4185, %v4187
  %v4189 = vrot.slane %v4173, %v4188
  %v4191 = vunpack.c.l.s4 1966171168
  %v4192 = vunpack.c.0.s8 %v4191
  %v4193 = vlaneseq
  %v4194 = vshrl.u32 %v4193, 7
  %v4195 = vsub.s32 %v4192, %v4194
  %v4196 = vrot.slane %v4174, %v4195
  %v4198 = vunpack.c.l.s4 1966171168
  %v4199 = vunpack.c.0.s8 %v4198
  %v4200 = vlaneseq
  %v4201 = vshrl.u32 %v4200, 7
  %v4202 = vsub.s32 %v4199, %v4201
  %v4203 = vrot.slane %v4175, %v4202
  %v4204 = vcombine.low %v4182, %v4189
  %v4205 = vcombine.low %v4196, %v4203
  %v4207 = vunpack.c.l.s4 1966171168
  %v4208 = vunpack.c.0.s8 %v4207
  %v4209 = vlaneseq
  %v4210 = vshrl.u32 %v4209, 7
  %v4211 = vsub.s32 %v4208, %v4210
  %v4212 = vrot.slane %v4204, %v4211
  %v4214 = vunpack.c.l.s4 1966171168
  %v4215 = vunpack.c.0.s8 %v4214
  %v4216 = vlaneseq
  %v4217 = vshrl.u32 %v4216, 7
  %v4218 = vsub.s32 %v4215, %v4217
  %v4219 = vrot.slane %v4205, %v4218
  %v4220 = vcombine.low %v4212, %v4219
  %v4222 = vunpack.c.l.s4 1966171168
  %v4223 = vunpack.c.0.s8 %v4222
  %v4224 = vlaneseq
  %v4225 = vshrl.u32 %v4224, 7
  %v4226 = vsub.s32 %v4223, %v4225
  %v4227 = vrot.slane %v1988, %v4226
  %v4229 = vunpack.c.l.s4 1966171168
  %v4230 = vunpack.c.0.s8 %v4229
  %v4231 = vlaneseq
  %v4232 = vshrl.u32 %v4231, 7
  %v4233 = vsub.s32 %v4230, %v4232
  %v4234 = vrot.slane %v4227, %v4233
  %v4251 = vcombine.low %v1571, %v1571
  %v4252 = vcombine.low %v1585, %v1593
  %v4253 = vcombine.low %v1595, %v1578
  %v4254 = vcombine.low %v1592, %v1594
  %v4256 = vunpack.c.l.s4 1966171168
  %v4257 = vunpack.c.0.s8 %v4256
  %v4258 = vlaneseq
  %v4259 = vshrl.u32 %v4258, 7
  %v4260 = vsub.s32 %v4257, %v4259
  %v4261 = vrot.slane %v4251, %v4260
  %v4263 = vunpack.c.l.s4 1966171168
  %v4264 = vunpack.c.0.s8 %v4263
  %v4265 = vlaneseq
  %v4266 = vshrl.u32 %v4265, 7
  %v4267 = vsub.s32 %v4264, %v4266
  %v4268 = vrot.slane %v4252, %v4267
  %v4270 = vunpack.c.l.s4 1966171168
  %v4271 = vunpack.c.0.s8 %v4270
  %v4272 = vlaneseq
  %v4273 = vshrl.u32 %v4272, 7
  %v4274 = vsub.s32 %v4271, %v4273
  %v4275 = vrot.slane %v4253, %v4274
  %v4277 = vunpack.c.l.s4 1966171168
  %v4278 = vunpack.c.0.s8 %v4277
  %v4279 = vlaneseq
  %v4280 = vshrl.u32 %v4279, 7
  %v4281 = vsub.s32 %v4278, %v4280
  %v4282 = vrot.slane %v4254, %v4281
  %v4283 = vcombine.low %v4261, %v4268
  %v4284 = vcombine.low %v4275, %v4282
  %v4286 = vunpack.c.l.s4 1966171168
  %v4287 = vunpack.c.0.s8 %v4286
  %v4288 = vlaneseq
  %v4289 = vshrl.u32 %v4288, 7
  %v4290 = vsub.s32 %v4287, %v4289
  %v4291 = vrot.slane %v4283, %v4290
  %v4293 = vunpack.c.l.s4 1966171168
  %v4294 = vunpack.c.0.s8 %v4293
  %v4295 = vlaneseq
  %v4296 = vshrl.u32 %v4295, 7
  %v4297 = vsub.s32 %v4294, %v4296
  %v4298 = vrot.slane %v4284, %v4297
  %v4299 = vcombine.low %v4291, %v4298
  %v4300 = vcombine.low %v1596, %v1620
  %v4302 = vunpack.c.l.s4 1966171168
  %v4303 = vunpack.c.0.s8 %v4302
  %v4304 = vlaneseq
  %v4305 = vshrl.u32 %v4304, 7
  %v4306 = vsub.s32 %v4303, %v4305
  %v4307 = vrot.slane %v4300, %v4306
  %v4309 = vunpack.c.l.s4 1966171168
  %v4310 = vunpack.c.0.s8 %v4309
  %v4311 = vlaneseq
  %v4312 = vshrl.u32 %v4311, 7
  %v4313 = vsub.s32 %v4310, %v4312
  %v4314 = vrot.slane %v4307, %v4313
  %v4315 = vcombine.low %v1634, %v1634
  %v4316 = vcombine.low %v1642, %v1644
  %v4317 = vcombine.low %v1627, %v1641
  %v4318 = vcombine.low %v1643, %v1645
  %v4320 = vunpack.c.l.s4 1966171168
  %v4321 = vunpack.c.0.s8 %v4320
  %v4322 = vlaneseq
  %v4323 = vshrl.u32 %v4322, 7
  %v4324 = vsub.s32 %v4321, %v4323
  %v4325 = vrot.slane %v4315, %v4324
  %v4327 = vunpack.c.l.s4 1966171168
  %v4328 = vunpack.c.0.s8 %v4327
  %v4329 = vlaneseq
  %v4330 = vshrl.u32 %v4329, 7
  %v4331 = vsub.s32 %v4328, %v4330
  %v4332 = vrot.slane %v4316, %v4331
  %v4334 = vunpack.c.l.s4 1966171168
  %v4335 = vunpack.c.0.s8 %v4334
  %v4336 = vlaneseq
  %v4337 = vshrl.u32 %v4336, 7
  %v4338 = vsub.s32 %v4335, %v4337
  %v4339 = vrot.slane %v4317, %v4338
  %v4341 = vunpack.c.l.s4 1966171168
  %v4342 = vunpack.c.0.s8 %v4341
  %v4343 = vlaneseq
  %v4344 = vshrl.u32 %v4343, 7
  %v4345 = vsub.s32 %v4342, %v4344
  %v4346 = vrot.slane %v4318, %v4345
  %v4347 = vcombine.low %v4325, %v4332
  %v4348 = vcombine.low %v4339, %v4346
  %v4350 = vunpack.c.l.s4 1966171168
  %v4351 = vunpack.c.0.s8 %v4350
  %v4352 = vlaneseq
  %v4353 = vshrl.u32 %v4352, 7
  %v4354 = vsub.s32 %v4351, %v4353
  %v4355 = vrot.slane %v4347, %v4354
  %v4357 = vunpack.c.l.s4 1966171168
  %v4358 = vunpack.c.0.s8 %v4357
  %v4359 = vlaneseq
  %v4360 = vshrl.u32 %v4359, 7
  %v4361 = vsub.s32 %v4358, %v4360
  %v4362 = vrot.slane %v4348, %v4361
  %v4363 = vcombine.low %v4355, %v4362
  %v4364 = vcombine.low %v1669, %v1683
  %v4366 = vunpack.c.l.s4 1966171168
  %v4367 = vunpack.c.0.s8 %v4366
  %v4368 = vlaneseq
  %v4369 = vshrl.u32 %v4368, 7
  %v4370 = vsub.s32 %v4367, %v4369
  %v4371 = vrot.slane %v4364, %v4370
  %v4373 = vunpack.c.l.s4 1966171168
  %v4374 = vunpack.c.0.s8 %v4373
  %v4375 = vlaneseq
  %v4376 = vshrl.u32 %v4375, 7
  %v4377 = vsub.s32 %v4374, %v4376
  %v4378 = vrot.slane %v4371, %v4377
  %v4379 = vcombine.low %v1691, %v1691
  %v4380 = vcombine.low %v1693, %v1676
  %v4381 = vcombine.low %v1690, %v1692
  %v4382 = vcombine.low %v1694, %v1718
  %v4384 = vunpack.c.l.s4 1966171168
  %v4385 = vunpack.c.0.s8 %v4384
  %v4386 = vlaneseq
  %v4387 = vshrl.u32 %v4386, 7
  %v4388 = vsub.s32 %v4385, %v4387
  %v4389 = vrot.slane %v4379, %v4388
  %v4391 = vunpack.c.l.s4 1966171168
  %v4392 = vunpack.c.0.s8 %v4391
  %v4393 = vlaneseq
  %v4394 = vshrl.u32 %v4393, 7
  %v4395 = vsub.s32 %v4392, %v4394
  %v4396 = vrot.slane %v4380, %v4395
  %v4398 = vunpack.c.l.s4 1966171168
  %v4399 = vunpack.c.0.s8 %v4398
  %v4400 = vlaneseq
  %v4401 = vshrl.u32 %v4400, 7
  %v4402 = vsub.s32 %v4399, %v4401
  %v4403 = vrot.slane %v4381, %v4402
  %v4405 = vunpack.c.l.s4 1966171168
  %v4406 = vunpack.c.0.s8 %v4405
  %v4407 = vlaneseq
  %v4408 = vshrl.u32 %v4407, 7
  %v4409 = vsub.s32 %v4406, %v4408
  %v4410 = vrot.slane %v4382, %v4409
  %v4411 = vcombine.low %v4389, %v4396
  %v4412 = vcombine.low %v4403, %v4410
  %v4414 = vunpack.c.l.s4 1966171168
  %v4415 = vunpack.c.0.s8 %v4414
  %v4416 = vlaneseq
  %v4417 = vshrl.u32 %v4416, 7
  %v4418 = vsub.s32 %v4415, %v4417
  %v4419 = vrot.slane %v4411, %v4418
  %v4421 = vunpack.c.l.s4 1966171168
  %v4422 = vunpack.c.0.s8 %v4421
  %v4423 = vlaneseq
  %v4424 = vshrl.u32 %v4423, 7
  %v4425 = vsub.s32 %v4422, %v4424
  %v4426 = vrot.slane %v4412, %v4425
  %v4427 = vcombine.low %v4419, %v4426
  %v4428 = vcombine.low %v1732, %v1740
  %v4430 = vunpack.c.l.s4 1966171168
  %v4431 = vunpack.c.0.s8 %v4430
  %v4432 = vlaneseq
  %v4433 = vshrl.u32 %v4432, 7
  %v4434 = vsub.s32 %v4431, %v4433
  %v4435 = vrot.slane %v4428, %v4434
  %v4437 = vunpack.c.l.s4 1966171168
  %v4438 = vunpack.c.0.s8 %v4437
  %v4439 = vlaneseq
  %v4440 = vshrl.u32 %v4439, 7
  %v4441 = vsub.s32 %v4438, %v4440
  %v4442 = vrot.slane %v4435, %v4441
  %v4443 = vcombine.low %v1742, %v1742
  %v4444 = vcombine.low %v1725, %v1739
  %v4445 = vcombine.low %v1741, %v1743
  %v4446 = vcombine.low %v1767, %v1781
  %v4448 = vunpack.c.l.s4 1966171168
  %v4449 = vunpack.c.0.s8 %v4448
  %v4450 = vlaneseq
  %v4451 = vshrl.u32 %v4450, 7
  %v4452 = vsub.s32 %v4449, %v4451
  %v4453 = vrot.slane %v4443, %v4452
  %v4455 = vunpack.c.l.s4 1966171168
  %v4456 = vunpack.c.0.s8 %v4455
  %v4457 = vlaneseq
  %v4458 = vshrl.u32 %v4457, 7
  %v4459 = vsub.s32 %v4456, %v4458
  %v4460 = vrot.slane %v4444, %v4459
  %v4462 = vunpack.c.l.s4 1966171168
  %v4463 = vunpack.c.0.s8 %v4462
  %v4464 = vlaneseq
  %v4465 = vshrl.u32 %v4464, 7
  %v4466 = vsub.s32 %v4463, %v4465
  %v4467 = vrot.slane %v4445, %v4466
  %v4469 = vunpack.c.l.s4 1966171168
  %v4470 = vunpack.c.0.s8 %v4469
  %v4471 = vlaneseq
  %v4472 = vshrl.u32 %v4471, 7
  %v4473 = vsub.s32 %v4470, %v4472
  %v4474 = vrot.slane %v4446, %v4473
  %v4475 = vcombine.low %v4453, %v4460
  %v4476 = vcombine.low %v4467, %v4474
  %v4478 = vunpack.c.l.s4 1966171168
  %v4479 = vunpack.c.0.s8 %v4478
  %v4480 = vlaneseq
  %v4481 = vshrl.u32 %v4480, 7
  %v4482 = vsub.s32 %v4479, %v4481
  %v4483 = vrot.slane %v4475, %v4482
  %v4485 = vunpack.c.l.s4 1966171168
  %v4486 = vunpack.c.0.s8 %v4485
  %v4487 = vlaneseq
  %v4488 = vshrl.u32 %v4487, 7
  %v4489 = vsub.s32 %v4486, %v4488
  %v4490 = vrot.slane %v4476, %v4489
  %v4491 = vcombine.low %v4483, %v4490
  %v4492 = vcombine.low %v1789, %v1791
  %v4494 = vunpack.c.l.s4 1966171168
  %v4495 = vunpack.c.0.s8 %v4494
  %v4496 = vlaneseq
  %v4497 = vshrl.u32 %v4496, 7
  %v4498 = vsub.s32 %v4495, %v4497
  %v4499 = vrot.slane %v4492, %v4498
  %v4501 = vunpack.c.l.s4 1966171168
  %v4502 = vunpack.c.0.s8 %v4501
  %v4503 = vlaneseq
  %v4504 = vshrl.u32 %v4503, 7
  %v4505 = vsub.s32 %v4502, %v4504
  %v4506 = vrot.slane %v4499, %v4505
  %v4507 = vcombine.low %v1774, %v1774
  %v4508 = vcombine.low %v1788, %v1790
  %v4509 = vcombine.low %v1792, %v1816
  %v4510 = vcombine.low %v1830, %v1838
  %v4512 = vunpack.c.l.s4 1966171168
  %v4513 = vunpack.c.0.s8 %v4512
  %v4514 = vlaneseq
  %v4515 = vshrl.u32 %v4514, 7
  %v4516 = vsub.s32 %v4513, %v4515
  %v4517 = vrot.slane %v4507, %v4516
  %v4519 = vunpack.c.l.s4 1966171168
  %v4520 = vunpack.c.0.s8 %v4519
  %v4521 = vlaneseq
  %v4522 = vshrl.u32 %v4521, 7
  %v4523 = vsub.s32 %v4520, %v4522
  %v4524 = vrot.slane %v4508, %v4523
  %v4526 = vunpack.c.l.s4 1966171168
  %v4527 = vunpack.c.0.s8 %v4526
  %v4528 = vlaneseq
  %v4529 = vshrl.u32 %v4528, 7
  %v4530 = vsub.s32 %v4527, %v4529
  %v4531 = vrot.slane %v4509, %v4530
  %v4533 = vunpack.c.l.s4 1966171168
  %v4534 = vunpack.c.0.s8 %v4533
  %v4535 = vlaneseq
  %v4536 = vshrl.u32 %v4535, 7
  %v4537 = vsub.s32 %v4534, %v4536
  %v4538 = vrot.slane %v4510, %v4537
  %v4539 = vcombine.low %v4517, %v4524
  %v4540 = vcombine.low %v4531, %v4538
  %v4542 = vunpack.c.l.s4 1966171168
  %v4543 = vunpack.c.0.s8 %v4542
  %v4544 = vlaneseq
  %v4545 = vshrl.u32 %v4544, 7
  %v4546 = vsub.s32 %v4543, %v4545
  %v4547 = vrot.slane %v4539, %v4546
  %v4549 = vunpack.c.l.s4 1966171168
  %v4550 = vunpack.c.0.s8 %v4549
  %v4551 = vlaneseq
  %v4552 = vshrl.u32 %v4551, 7
  %v4553 = vsub.s32 %v4550, %v4552
  %v4554 = vrot.slane %v4540, %v4553
  %v4555 = vcombine.low %v4547, %v4554
  %v4556 = vcombine.low %v1840, %v1823
  %v4558 = vunpack.c.l.s4 1966171168
  %v4559 = vunpack.c.0.s8 %v4558
  %v4560 = vlaneseq
  %v4561 = vshrl.u32 %v4560, 7
  %v4562 = vsub.s32 %v4559, %v4561
  %v4563 = vrot.slane %v4556, %v4562
  %v4565 = vunpack.c.l.s4 1966171168
  %v4566 = vunpack.c.0.s8 %v4565
  %v4567 = vlaneseq
  %v4568 = vshrl.u32 %v4567, 7
  %v4569 = vsub.s32 %v4566, %v4568
  %v4570 = vrot.slane %v4563, %v4569
  %v4571 = vcombine.low %v1837, %v1837
  %v4572 = vcombine.low %v1839, %v1841
  %v4573 = vcombine.low %v1865, %v1879
  %v4574 = vcombine.low %v1887, %v1889
  %v4576 = vunpack.c.l.s4 1966171168
  %v4577 = vunpack.c.0.s8 %v4576
  %v4578 = vlaneseq
  %v4579 = vshrl.u32 %v4578, 7
  %v4580 = vsub.s32 %v4577, %v4579
  %v4581 = vrot.slane %v4571, %v4580
  %v4583 = vunpack.c.l.s4 1966171168
  %v4584 = vunpack.c.0.s8 %v4583
  %v4585 = vlaneseq
  %v4586 = vshrl.u32 %v4585, 7
  %v4587 = vsub.s32 %v4584, %v4586
  %v4588 = vrot.slane %v4572, %v4587
  %v4590 = vunpack.c.l.s4 1966171168
  %v4591 = vunpack.c.0.s8 %v4590
  %v4592 = vlaneseq
  %v4593 = vshrl.u32 %v4592, 7
  %v4594 = vsub.s32 %v4591, %v4593
  %v4595 = vrot.slane %v4573, %v4594
  %v4597 = vunpack.c.l.s4 1966171168
  %v4598 = vunpack.c.0.s8 %v4597
  %v4599 = vlaneseq
  %v4600 = vshrl.u32 %v4599, 7
  %v4601 = vsub.s32 %v4598, %v4600
  %v4602 = vrot.slane %v4574, %v4601
  %v4603 = vcombine.low %v4581, %v4588
  %v4604 = vcombine.low %v4595, %v4602
  %v4606 = vunpack.c.l.s4 1966171168
  %v4607 = vunpack.c.0.s8 %v4606
  %v4608 = vlaneseq
  %v4609 = vshrl.u32 %v4608, 7
  %v4610 = vsub.s32 %v4607, %v4609
  %v4611 = vrot.slane %v4603, %v4610
  %v4613 = vunpack.c.l.s4 1966171168
  %v4614 = vunpack.c.0.s8 %v4613
  %v4615 = vlaneseq
  %v4616 = vshrl.u32 %v4615, 7
  %v4617 = vsub.s32 %v4614, %v4616
  %v4618 = vrot.slane %v4604, %v4617
  %v4619 = vcombine.low %v4611, %v4618
  %v4620 = vcombine.low %v1872, %v1886
  %v4622 = vunpack.c.l.s4 1966171168
  %v4623 = vunpack.c.0.s8 %v4622
  %v4624 = vlaneseq
  %v4625 = vshrl.u32 %v4624, 7
  %v4626 = vsub.s32 %v4623, %v4625
  %v4627 = vrot.slane %v4620, %v4626
  %v4629 = vunpack.c.l.s4 1966171168
  %v4630 = vunpack.c.0.s8 %v4629
  %v4631 = vlaneseq
  %v4632 = vshrl.u32 %v4631, 7
  %v4633 = vsub.s32 %v4630, %v4632
  %v4634 = vrot.slane %v4627, %v4633
  %v4635 = vcombine.low %v1888, %v1888
  %v4636 = vcombine.low %v1890, %v1914
  %v4637 = vcombine.low %v1928, %v1936
  %v4638 = vcombine.low %v1938, %v1921
  %v4640 = vunpack.c.l.s4 1966171168
  %v4641 = vunpack.c.0.s8 %v4640
  %v4642 = vlaneseq
  %v4643 = vshrl.u32 %v4642, 7
  %v4644 = vsub.s32 %v4641, %v4643
  %v4645 = vrot.slane %v4635, %v4644
  %v4647 = vunpack.c.l.s4 1966171168
  %v4648 = vunpack.c.0.s8 %v4647
  %v4649 = vlaneseq
  %v4650 = vshrl.u32 %v4649, 7
  %v4651 = vsub.s32 %v4648, %v4650
  %v4652 = vrot.slane %v4636, %v4651
  %v4654 = vunpack.c.l.s4 1966171168
  %v4655 = vunpack.c.0.s8 %v4654
  %v4656 = vlaneseq
  %v4657 = vshrl.u32 %v4656, 7
  %v4658 = vsub.s32 %v4655, %v4657
  %v4659 = vrot.slane %v4637, %v4658
  %v4661 = vunpack.c.l.s4 1966171168
  %v4662 = vunpack.c.0.s8 %v4661
  %v4663 = vlaneseq
  %v4664 = vshrl.u32 %v4663, 7
  %v4665 = vsub.s32 %v4662, %v4664
  %v4666 = vrot.slane %v4638, %v4665
  %v4667 = vcombine.low %v4645, %v4652
  %v4668 = vcombine.low %v4659, %v4666
  %v4670 = vunpack.c.l.s4 1966171168
  %v4671 = vunpack.c.0.s8 %v4670
  %v4672 = vlaneseq
  %v4673 = vshrl.u32 %v4672, 7
  %v4674 = vsub.s32 %v4671, %v4673
  %v4675 = vrot.slane %v4667, %v4674
  %v4677 = vunpack.c.l.s4 1966171168
  %v4678 = vunpack.c.0.s8 %v4677
  %v4679 = vlaneseq
  %v4680 = vshrl.u32 %v4679, 7
  %v4681 = vsub.s32 %v4678, %v4680
  %v4682 = vrot.slane %v4668, %v4681
  %v4683 = vcombine.low %v4675, %v4682
  %v4684 = vcombine.low %v1935, %v1937
  %v4686 = vunpack.c.l.s4 1966171168
  %v4687 = vunpack.c.0.s8 %v4686
  %v4688 = vlaneseq
  %v4689 = vshrl.u32 %v4688, 7
  %v4690 = vsub.s32 %v4687, %v4689
  %v4691 = vrot.slane %v4684, %v4690
  %v4693 = vunpack.c.l.s4 1966171168
  %v4694 = vunpack.c.0.s8 %v4693
  %v4695 = vlaneseq
  %v4696 = vshrl.u32 %v4695, 7
  %v4697 = vsub.s32 %v4694, %v4696
  %v4698 = vrot.slane %v4691, %v4697
  %v4699 = vcombine.low %v1939, %v1939
  %v4700 = vcombine.low %v1963, %v1977
  %v4701 = vcombine.low %v1985, %v1987
  %v4702 = vcombine.low %v1970, %v1984
  %v4704 = vunpack.c.l.s4 1966171168
  %v4705 = vunpack.c.0.s8 %v4704
  %v4706 = vlaneseq
  %v4707 = vshrl.u32 %v4706, 7
  %v4708 = vsub.s32 %v4705, %v4707
  %v4709 = vrot.slane %v4699, %v4708
  %v4711 = vunpack.c.l.s4 1966171168
  %v4712 = vunpack.c.0.s8 %v4711
  %v4713 = vlaneseq
  %v4714 = vshrl.u32 %v4713, 7
  %v4715 = vsub.s32 %v4712, %v4714
  %v4716 = vrot.slane %v4700, %v4715
  %v4718 = vunpack.c.l.s4 1966171168
  %v4719 = vunpack.c.0.s8 %v4718
  %v4720 = vlaneseq
  %v4721 = vshrl.u32 %v4720, 7
  %v4722 = vsub.s32 %v4719, %v4721
  %v4723 = vrot.slane %v4701, %v4722
  %v4725 = vunpack.c.l.s4 1966171168
  %v4726 = vunpack.c.0.s8 %v4725
  %v4727 = vlaneseq
  %v4728 = vshrl.u32 %v4727, 7
  %v4729 = vsub.s32 %v4726, %v4728
  %v4730 = vrot.slane %v4702, %v4729
  %v4731 = vcombine.low %v4709, %v4716
  %v4732 = vcombine.low %v4723, %v4730
  %v4734 = vunpack.c.l.s4 1966171168
  %v4735 = vunpack.c.0.s8 %v4734
  %v4736 = vlaneseq
  %v4737 = vshrl.u32 %v4736, 7
  %v4738 = vsub.s32 %v4735, %v4737
  %v4739 = vrot.slane %v4731, %v4738
  %v4741 = vunpack.c.l.s4 1966171168
  %v4742 = vunpack.c.0.s8 %v4741
  %v4743 = vlaneseq
  %v4744 = vshrl.u32 %v4743, 7
  %v4745 = vsub.s32 %v4742, %v4744
  %v4746 = vrot.slane %v4732, %v4745
  %v4747 = vcombine.low %v4739, %v4746
  %v4748 = vcombine.low %v1986, %v1988
  %v4750 = vunpack.c.l.s4 1966171168
  %v4751 = vunpack.c.0.s8 %v4750
  %v4752 = vlaneseq
  %v4753 = vshrl.u32 %v4752, 7
  %v4754 = vsub.s32 %v4751, %v4753
  %v4755 = vrot.slane %v4748, %v4754
  %v4757 = vunpack.c.l.s4 1966171168
  %v4758 = vunpack.c.0.s8 %v4757
  %v4759 = vlaneseq
  %v4760 = vshrl.u32 %v4759, 7
  %v4761 = vsub.s32 %v4758, %v4760
  %v4762 = vrot.slane %v4755, %v4761
  %v4779 = vcombine.low %v3741, %v3741
  %v4780 = vcombine.low %v3748, %v3755
  %v4782 = vunpack.c.l.s4 1966171168
  %v4783 = vunpack.c.0.s8 %v4782
  %v4784 = vlaneseq
  %v4785 = vshrl.u32 %v4784, 7
  %v4786 = vsub.s32 %v4783, %v4785
  %v4787 = vrot.slane %v4779, %v4786
  %v4789 = vunpack.c.l.s4 1966171168
  %v4790 = vunpack.c.0.s8 %v4789
  %v4791 = vlaneseq
  %v4792 = vshrl.u32 %v4791, 7
  %v4793 = vsub.s32 %v4790, %v4792
  %v4794 = vrot.slane %v4780, %v4793
  %v4795 = vcombine.low %v4787, %v4794
  %v4796 = vcombine.low %v3762, %v3786
  %v4798 = vunpack.c.l.s4 1966171168
  %v4799 = vunpack.c.0.s8 %v4798
  %v4800 = vlaneseq
  %v4801 = vshrl.u32 %v4800, 7
  %v4802 = vsub.s32 %v4799, %v4801
  %v4803 = vrot.slane %v4796, %v4802
  %v4804 = vcombine.low %v3804, %v3804
  %v4805 = vcombine.low %v3811, %v3818
  %v4807 = vunpack.c.l.s4 1966171168
  %v4808 = vunpack.c.0.s8 %v4807
  %v4809 = vlaneseq
  %v4810 = vshrl.u32 %v4809, 7
  %v4811 = vsub.s32 %v4808, %v4810
  %v4812 = vrot.slane %v4804, %v4811
  %v4814 = vunpack.c.l.s4 1966171168
  %v4815 = vunpack.c.0.s8 %v4814
  %v4816 = vlaneseq
  %v4817 = vshrl.u32 %v4816, 7
  %v4818 = vsub.s32 %v4815, %v4817
  %v4819 = vrot.slane %v4805, %v4818
  %v4820 = vcombine.low %v4812, %v4819
  %v4821 = vcombine.low %v3825, %v3849
  %v4823 = vunpack.c.l.s4 1966171168
  %v4824 = vunpack.c.0.s8 %v4823
  %v4825 = vlaneseq
  %v4826 = vshrl.u32 %v4825, 7
  %v4827 = vsub.s32 %v4824, %v4826
  %v4828 = vrot.slane %v4821, %v4827
  %v4829 = vcombine.low %v3867, %v3867
  %v4830 = vcombine.low %v3874, %v3881
  %v4832 = vunpack.c.l.s4 1966171168
  %v4833 = vunpack.c.0.s8 %v4832
  %v4834 = vlaneseq
  %v4835 = vshrl.u32 %v4834, 7
  %v4836 = vsub.s32 %v4833, %v4835
  %v4837 = vrot.slane %v4829, %v4836
  %v4839 = vunpack.c.l.s4 1966171168
  %v4840 = vunpack.c.0.s8 %v4839
  %v4841 = vlaneseq
  %v4842 = vshrl.u32 %v4841, 7
  %v4843 = vsub.s32 %v4840, %v4842
  %v4844 = vrot.slane %v4830, %v4843
  %v4845 = vcombine.low %v4837, %v4844
  %v4846 = vcombine.low %v3888, %v3912
  %v4848 = vunpack.c.l.s4 1966171168
  %v4849 = vunpack.c.0.s8 %v4848
  %v4850 = vlaneseq
  %v4851 = vshrl.u32 %v4850, 7
  %v4852 = vsub.s32 %v4849, %v4851
  %v4853 = vrot.slane %v4846, %v4852
  %v4854 = vcombine.low %v3930, %v3930
  %v4855 = vcombine.low %v3937, %v3944
  %v4857 = vunpack.c.l.s4 1966171168
  %v4858 = vunpack.c.0.s8 %v4857
  %v4859 = vlaneseq
  %v4860 = vshrl.u32 %v4859, 7
  %v4861 = vsub.s32 %v4858, %v4860
  %v4862 = vrot.slane %v4854, %v4861
  %v4864 = vunpack.c.l.s4 1966171168
  %v4865 = vunpack.c.0.s8 %v4864
  %v4866 = vlaneseq
  %v4867 = vshrl.u32 %v4866, 7
  %v4868 = vsub.s32 %v4865, %v4867
  %v4869 = vrot.slane %v4855, %v4868
  %v4870 = vcombine.low %v4862, %v4869
  %v4871 = vcombine.low %v3951, %v3975
  %v4873 = vunpack.c.l.s4 1966171168
  %v4874 = vunpack.c.0.s8 %v4873
  %v4875 = vlaneseq
  %v4876 = vshrl.u32 %v4875, 7
  %v4877 = vsub.s32 %v4874, %v4876
  %v4878 = vrot.slane %v4871, %v4877
  %v4879 = vcombine.low %v3993, %v3993
  %v4880 = vcombine.low %v4000, %v4007
  %v4882 = vunpack.c.l.s4 1966171168
  %v4883 = vunpack.c.0.s8 %v4882
  %v4884 = vlaneseq
  %v4885 = vshrl.u32 %v4884, 7
  %v4886 = vsub.s32 %v4883, %v4885
  %v4887 = vrot.slane %v4879, %v4886
  %v4889 = vunpack.c.l.s4 1966171168
  %v4890 = vunpack.c.0.s8 %v4889
  %v4891 = vlaneseq
  %v4892 = vshrl.u32 %v4891, 7
  %v4893 = vsub.s32 %v4890, %v4892
  %v4894 = vrot.slane %v4880, %v4893
  %v4895 = vcombine.low %v4887, %v4894
  %v4896 = vcombine.low %v4014, %v4038
  %v4898 = vunpack.c.l.s4 1966171168
  %v4899 = vunpack.c.0.s8 %v4898
  %v4900 = vlaneseq
  %v4901 = vshrl.u32 %v4900, 7
  %v4902 = vsub.s32 %v4899, %v4901
  %v4903 = vrot.slane %v4896, %v4902
  %v4904 = vcombine.low %v4056, %v4056
  %v4905 = vcombine.low %v4063, %v4070
  %v4907 = vunpack.c.l.s4 1966171168
  %v4908 = vunpack.c.0.s8 %v4907
  %v4909 = vlaneseq
  %v4910 = vshrl.u32 %v4909, 7
  %v4911 = vsub.s32 %v4908, %v4910
  %v4912 = vrot.slane %v4904, %v4911
  %v4914 = vunpack.c.l.s4 1966171168
  %v4915 = vunpack.c.0.s8 %v4914
  %v4916 = vlaneseq
  %v4917 = vshrl.u32 %v4916, 7
  %v4918 = vsub.s32 %v4915, %v4917
  %v4919 = vrot.slane %v4905, %v4918
  %v4920 = vcombine.low %v4912, %v4919
  %v4921 = vcombine.low %v4077, %v4101
  %v4923 = vunpack.c.l.s4 1966171168
  %v4924 = vunpack.c.0.s8 %v4923
  %v4925 = vlaneseq
  %v4926 = vshrl.u32 %v4925, 7
  %v4927 = vsub.s32 %v4924, %v4926
  %v4928 = vrot.slane %v4921, %v4927
  %v4929 = vcombine.low %v4119, %v4119
  %v4930 = vcombine.low %v4126, %v4133
  %v4932 = vunpack.c.l.s4 1966171168
  %v4933 = vunpack.c.0.s8 %v4932
  %v4934 = vlaneseq
  %v4935 = vshrl.u32 %v4934, 7
  %v4936 = vsub.s32 %v4933, %v4935
  %v4937 = vrot.slane %v4929, %v4936
  %v4939 = vunpack.c.l.s4 1966171168
  %v4940 = vunpack.c.0.s8 %v4939
  %v4941 = vlaneseq
  %v4942 = vshrl.u32 %v4941, 7
  %v4943 = vsub.s32 %v4940, %v4942
  %v4944 = vrot.slane %v4930, %v4943
  %v4945 = vcombine.low %v4937, %v4944
  %v4946 = vcombine.low %v4140, %v4164
  %v4948 = vunpack.c.l.s4 1966171168
  %v4949 = vunpack.c.0.s8 %v4948
  %v4950 = vlaneseq
  %v4951 = vshrl.u32 %v4950, 7
  %v4952 = vsub.s32 %v4949, %v4951
  %v4953 = vrot.slane %v4946, %v4952
  %v4954 = vcombine.low %v4182, %v4182
  %v4955 = vcombine.low %v4189, %v4196
  %v4957 = vunpack.c.l.s4 1966171168
  %v4958 = vunpack.c.0.s8 %v4957
  %v4959 = vlaneseq
  %v4960 = vshrl.u32 %v4959, 7
  %v4961 = vsub.s32 %v4958, %v4960
  %v4962 = vrot.slane %v4954, %v4961
  %v4964 = vunpack.c.l.s4 1966171168
  %v4965 = vunpack.c.0.s8 %v4964
  %v4966 = vlaneseq
  %v4967 = vshrl.u32 %v4966, 7
  %v4968 = vsub.s32 %v4965, %v4967
  %v4969 = vrot.slane %v4955, %v4968
  %v4970 = vcombine.low %v4962, %v4969
  %v4971 = vcombine.low %v4203, %v4227
  %v4973 = vunpack.c.l.s4 1966171168
  %v4974 = vunpack.c.0.s8 %v4973
  %v4975 = vlaneseq
  %v4976 = vshrl.u32 %v4975, 7
  %v4977 = vsub.s32 %v4974, %v4976
  %v4978 = vrot.slane %v4971, %v4977
  %v4995 = vcombine.low %v4261, %v4261
  %v4996 = vcombine.low %v4268, %v4275
  %v4998 = vunpack.c.l.s4 1966171168
  %v4999 = vunpack.c.0.s8 %v4998
  %v5000 = vlaneseq
  %v5001 = vshrl.u32 %v5000, 7
  %v5002 = vsub.s32 %v4999, %v5001
  %v5003 = vrot.slane %v4995, %v5002
  %v5005 = vunpack.c.l.s4 1966171168
  %v5006 = vunpack.c.0.s8 %v5005
  %v5007 = vlaneseq
  %v5008 = vshrl.u32 %v5007, 7
  %v5009 = vsub.s32 %v5006, %v5008
  %v5010 = vrot.slane %v4996, %v5009
  %v5011 = vcombine.low %v5003, %v5010
  %v5012 = vcombine.low %v4282, %v4307
  %v5014 = vunpack.c.l.s4 1966171168
  %v5015 = vunpack.c.0.s8 %v5014
  %v5016 = vlaneseq
  %v5017 = vshrl.u32 %v5016, 7
  %v5018 = vsub.s32 %v5015, %v5017
  %v5019 = vrot.slane %v5012, %v5018
  %v5020 = vcombine.low %v4325, %v4325
  %v5021 = vcombine.low %v4332, %v4339
  %v5023 = vunpack.c.l.s4 1966171168
  %v5024 = vunpack.c.0.s8 %v5023
  %v5025 = vlaneseq
  %v5026 = vshrl.u32 %v5025, 7
  %v5027 = vsub.s32 %v5024, %v5026
  %v5028 = vrot.slane %v5020, %v5027
  %v5030 = vunpack.c.l.s4 1966171168
  %v5031 = vunpack.c.0.s8 %v5030
  %v5032 = vlaneseq
  %v5033 = vshrl.u32 %v5032, 7
  %v5034 = vsub.s32 %v5031, %v5033
  %v5035 = vrot.slane %v5021, %v5034
  %v5036 = vcombine.low %v5028, %v5035
  %v5037 = vcombine.low %v4346, %v4371
  %v5039 = vunpack.c.l.s4 1966171168
  %v5040 = vunpack.c.0.s8 %v5039
  %v5041 = vlaneseq
  %v5042 = vshrl.u32 %v5041, 7
  %v5043 = vsub.s32 %v5040, %v5042
  %v5044 = vrot.slane %v5037, %v5043
  %v5045 = vcombine.low %v4389, %v4389
  %v5046 = vcombine.low %v4396, %v4403
  %v5048 = vunpack.c.l.s4 1966171168
  %v5049 = vunpack.c.0.s8 %v5048
  %v5050 = vlaneseq
  %v5051 = vshrl.u32 %v5050, 7
  %v5052 = vsub.s32 %v5049, %v5051
  %v5053 = vrot.slane %v5045, %v5052
  %v5055 = vunpack.c.l.s4 1966171168
  %v5056 = vunpack.c.0.s8 %v5055
  %v5057 = vlaneseq
  %v5058 = vshrl.u32 %v5057, 7
  %v5059 = vsub.s32 %v5056, %v5058
  %v5060 = vrot.slane %v5046, %v5059
  %v5061 = vcombine.low %v5053, %v5060
  %v5062 = vcombine.low %v4410, %v4435
  %v5064 = vunpack.c.l.s4 1966171168
  %v5065 = vunpack.c.0.s8 %v5064
  %v5066 = vlaneseq
  %v5067 = vshrl.u32 %v5066, 7
  %v5068 = vsub.s32 %v5065, %v5067
  %v5069 = vrot.slane %v5062, %v5068
  %v5070 = vcombine.low %v4453, %v4453
  %v5071 = vcombine.low %v4460, %v4467
  %v5073 = vunpack.c.l.s4 1966171168
  %v5074 = vunpack.c.0.s8 %v5073
  %v5075 = vlaneseq
  %v5076 = vshrl.u32 %v5075, 7
  %v5077 = vsub.s32 %v5074, %v5076
  %v5078 = vrot.slane %v5070, %v5077
  %v5080 = vunpack.c.l.s4 1966171168
  %v5081 = vunpack.c.0.s8 %v5080
  %v5082 = vlaneseq
  %v5083 = vshrl.u32 %v5082, 7
  %v5084 = vsub.s32 %v5081, %v5083
  %v5085 = vrot.slane %v5071, %v5084
  %v5086 = vcombine.low %v5078, %v5085
  %v5087 = vcombine.low %v4474, %v4499
  %v5089 = vunpack.c.l.s4 1966171168
  %v5090 = vunpack.c.0.s8 %v5089
  %v5091 = vlaneseq
  %v5092 = vshrl.u32 %v5091, 7
  %v5093 = vsub.s32 %v5090, %v5092
  %v5094 = vrot.slane %v5087, %v5093
  %v5095 = vcombine.low %v4517, %v4517
  %v5096 = vcombine.low %v4524, %v4531
  %v5098 = vunpack.c.l.s4 1966171168
  %v5099 = vunpack.c.0.s8 %v5098
  %v5100 = vlaneseq
  %v5101 = vshrl.u32 %v5100, 7
  %v5102 = vsub.s32 %v5099, %v5101
  %v5103 = vrot.slane %v5095, %v5102
  %v5105 = vunpack.c.l.s4 1966171168
  %v5106 = vunpack.c.0.s8 %v5105
  %v5107 = vlaneseq
  %v5108 = vshrl.u32 %v5107, 7
  %v5109 = vsub.s32 %v5106, %v5108
  %v5110 = vrot.slane %v5096, %v5109
  %v5111 = vcombine.low %v5103, %v5110
  %v5112 = vcombine.low %v4538, %v4563
  %v5114 = vunpack.c.l.s4 1966171168
  %v5115 = vunpack.c.0.s8 %v5114
  %v5116 = vlaneseq
  %v5117 = vshrl.u32 %v5116, 7
  %v5118 = vsub.s32 %v5115, %v5117
  %v5119 = vrot.slane %v5112, %v5118
  %v5120 = vcombine.low %v4581, %v4581
  %v5121 = vcombine.low %v4588, %v4595
  %v5123 = vunpack.c.l.s4 1966171168
  %v5124 = vunpack.c.0.s8 %v5123
  %v5125 = vlaneseq
  %v5126 = vshrl.u32 %v5125, 7
  %v5127 = vsub.s32 %v5124, %v5126
  %v5128 = vrot.slane %v5120, %v5127
  %v5130 = vunpack.c.l.s4 1966171168
  %v5131 = vunpack.c.0.s8 %v5130
  %v5132 = vlaneseq
  %v5133 = vshrl.u32 %v5132, 7
  %v5134 = vsub.s32 %v5131, %v5133
  %v5135 = vrot.slane %v5121, %v5134
  %v5136 = vcombine.low %v5128, %v5135
  %v5137 = vcombine.low %v4602, %v4627
  %v5139 = vunpack.c.l.s4 1966171168
  %v5140 = vunpack.c.0.s8 %v5139
  %v5141 = vlaneseq
  %v5142 = vshrl.u32 %v5141, 7
  %v5143 = vsub.s32 %v5140, %v5142
  %v5144 = vrot.slane %v5137, %v5143
  %v5145 = vcombine.low %v4645, %v4645
  %v5146 = vcombine.low %v4652, %v4659
  %v5148 = vunpack.c.l.s4 1966171168
  %v5149 = vunpack.c.0.s8 %v5148
  %v5150 = vlaneseq
  %v5151 = vshrl.u32 %v5150, 7
  %v5152 = vsub.s32 %v5149, %v5151
  %v5153 = vrot.slane %v5145, %v5152
  %v5155 = vunpack.c.l.s4 1966171168
  %v5156 = vunpack.c.0.s8 %v5155
  %v5157 = vlaneseq
  %v5158 = vshrl.u32 %v5157, 7
  %v5159 = vsub.s32 %v5156, %v5158
  %v5160 = vrot.slane %v5146, %v5159
  %v5161 = vcombine.low %v5153, %v5160
  %v5162 = vcombine.low %v4666, %v4691
  %v5164 = vunpack.c.l.s4 1966171168
  %v5165 = vunpack.c.0.s8 %v5164
  %v5166 = vlaneseq
  %v5167 = vshrl.u32 %v5166, 7
  %v5168 = vsub.s32 %v5165, %v5167
  %v5169 = vrot.slane %v5162, %v5168
  %v5170 = vcombine.low %v4709, %v4709
  %v5171 = vcombine.low %v4716, %v4723
  %v5173 = vunpack.c.l.s4 1966171168
  %v5174 = vunpack.c.0.s8 %v5173
  %v5175 = vlaneseq
  %v5176 = vshrl.u32 %v5175, 7
  %v5177 = vsub.s32 %v5174, %v5176
  %v5178 = vrot.slane %v5170, %v5177
  %v5180 = vunpack.c.l.s4 1966171168
  %v5181 = vunpack.c.0.s8 %v5180
  %v5182 = vlaneseq
  %v5183 = vshrl.u32 %v5182, 7
  %v5184 = vsub.s32 %v5181, %v5183
  %v5185 = vrot.slane %v5171, %v5184
  %v5186 = vcombine.low %v5178, %v5185
  %v5187 = vcombine.low %v4730, %v4755
  %v5189 = vunpack.c.l.s4 1966171168
  %v5190 = vunpack.c.0.s8 %v5189
  %v5191 = vlaneseq
  %v5192 = vshrl.u32 %v5191, 7
  %v5193 = vsub.s32 %v5190, %v5192
  %v5194 = vrot.slane %v5187, %v5193
  %v5211 = vcombine.low %v3771, %v3771
  %v5212 = vcombine.low %v3778, %v3793
  %v5213 = vcombine.low %v3834, %v3834
  %v5214 = vcombine.low %v3841, %v3856
  %v5215 = vcombine.low %v3897, %v3897
  %v5216 = vcombine.low %v3904, %v3919
  %v5217 = vcombine.low %v3960, %v3960
  %v5218 = vcombine.low %v3967, %v3982
  %v5219 = vcombine.low %v4023, %v4023
  %v5220 = vcombine.low %v4030, %v4045
  %v5221 = vcombine.low %v4086, %v4086
  %v5222 = vcombine.low %v4093, %v4108
  %v5223 = vcombine.low %v4149, %v4149
  %v5224 = vcombine.low %v4156, %v4171
  %v5225 = vcombine.low %v4212, %v4212
  %v5226 = vcombine.low %v4219, %v4234
  %v5243 = vcombine.low %v4291, %v4291
  %v5244 = vcombine.low %v4298, %v4314
  %v5245 = vcombine.low %v4355, %v4355
  %v5246 = vcombine.low %v4362, %v4378
  %v5247 = vcombine.low %v4419, %v4419
  %v5248 = vcombine.low %v4426, %v4442
  %v5249 = vcombine.low %v4483, %v4483
  %v5250 = vcombine.low %v4490, %v4506
  %v5251 = vcombine.low %v4547, %v4547
  %v5252 = vcombine.low %v4554, %v4570
  %v5253 = vcombine.low %v4611, %v4611
  %v5254 = vcombine.low %v4618, %v4634
  %v5255 = vcombine.low %v4675, %v4675
  %v5256 = vcombine.low %v4682, %v4698
  %v5257 = vcombine.low %v4739, %v4739
  %v5258 = vcombine.low %v4746, %v4762
  %v5275 = vcombine.low %v4787, %v4787
  %v5276 = vcombine.low %v4794, %v4803
  %v5277 = vcombine.low %v4812, %v4812
  %v5278 = vcombine.low %v4819, %v4828
  %v5279 = vcombine.low %v4837, %v4837
  %v5280 = vcombine.low %v4844, %v4853
  %v5281 = vcombine.low %v4862, %v4862
  %v5282 = vcombine.low %v4869, %v4878
  %v5283 = vcombine.low %v4887, %v4887
  %v5284 = vcombine.low %v4894, %v4903
  %v5285 = vcombine.low %v4912, %v4912
  %v5286 = vcombine.low %v4919, %v4928
  %v5287 = vcombine.low %v4937, %v4937
  %v5288 = vcombine.low %v4944, %v4953
  %v5289 = vcombine.low %v4962, %v4962
  %v5290 = vcombine.low %v4969, %v4978
  %v5307 = vcombine.low %v5003, %v5003
  %v5308 = vcombine.low %v5010, %v5019
  %v5309 = vcombine.low %v5028, %v5028
  %v5310 = vcombine.low %v5035, %v5044
  %v5311 = vcombine.low %v5053, %v5053
  %v5312 = vcombine.low %v5060, %v5069
  %v5313 = vcombine.low %v5078, %v5078
  %v5314 = vcombine.low %v5085, %v5094
  %v5315 = vcombine.low %v5103, %v5103
  %v5316 = vcombine.low %v5110, %v5119
  %v5317 = vcombine.low %v5128, %v5128
  %v5318 = vcombine.low %v5135, %v5144
  %v5319 = vcombine.low %v5153, %v5153
  %v5320 = vcombine.low %v5160, %v5169
  %v5321 = vcombine.low %v5178, %v5178
  %v5322 = vcombine.low %v5185, %v5194
  %v5339 = vsel %vm3597, %v3793, %v4299
  %v5340 = vsel %vm3597, %v3856, %v4363
  %v5341 = vsel %vm3597, %v3919, %v4427
  %v5342 = vsel %vm3597, %v3982, %v4491
  %v5343 = vsel %vm3597, %v4045, %v4555
  %v5344 = vsel %vm3597, %v4108, %v4619
  %v5345 = vsel %vm3597, %v4171, %v4683
  %v5346 = vsel %vm3597, %v4234, %v4747
  %v5347 = vsel %vm155, %v4314, %v4795
  %v5348 = vsel %vm155, %v4378, %v4820
  %v5349 = vsel %vm155, %v4442, %v4845
  %v5350 = vsel %vm155, %v4506, %v4870
  %v5351 = vsel %vm155, %v4570, %v4895
  %v5352 = vsel %vm155, %v4634, %v4920
  %v5353 = vsel %vm155, %v4698, %v4945
  %v5354 = vsel %vm155, %v4762, %v4970
  %v5355 = vsel %vm3614, %v4803, %v5011
  %v5356 = vsel %vm3614, %v4828, %v5036
  %v5357 = vsel %vm3614, %v4853, %v5061
  %v5358 = vsel %vm3614, %v4878, %v5086
  %v5359 = vsel %vm3614, %v4903, %v5111
  %v5360 = vsel %vm3614, %v4928, %v5136
  %v5361 = vsel %vm3614, %v4953, %v5161
  %v5362 = vsel %vm3614, %v4978, %v5186
  %v5363 = vsel %vm3623, %v5019, %v5211
  %v5364 = vsel %vm3623, %v5044, %v5213
  %v5365 = vsel %vm3623, %v5069, %v5215
  %v5366 = vsel %vm3623, %v5094, %v5217
  %v5367 = vsel %vm3623, %v5119, %v5219
  %v5368 = vsel %vm3623, %v5144, %v5221
  %v5369 = vsel %vm3623, %v5169, %v5223
  %v5370 = vsel %vm3623, %v5194, %v5225
  %v5371 = vsel %vm3632, %v5212, %v5243
  %v5372 = vsel %vm3632, %v5214, %v5245
  %v5373 = vsel %vm3632, %v5216, %v5247
  %v5374 = vsel %vm3632, %v5218, %v5249
  %v5375 = vsel %vm3632, %v5220, %v5251
  %v5376 = vsel %vm3632, %v5222, %v5253
  %v5377 = vsel %vm3632, %v5224, %v5255
  %v5378 = vsel %vm3632, %v5226, %v5257
  %v5379 = vsel %vm3641, %v5244, %v5275
  %v5380 = vsel %vm3641, %v5246, %v5277
  %v5381 = vsel %vm3641, %v5248, %v5279
  %v5382 = vsel %vm3641, %v5250, %v5281
  %v5383 = vsel %vm3641, %v5252, %v5283
  %v5384 = vsel %vm3641, %v5254, %v5285
  %v5385 = vsel %vm3641, %v5256, %v5287
  %v5386 = vsel %vm3641, %v5258, %v5289
  %v5387 = vsel %vm3650, %v5276, %v5307
  %v5388 = vsel %vm3650, %v5278, %v5309
  %v5389 = vsel %vm3650, %v5280, %v5311
  %v5390 = vsel %vm3650, %v5282, %v5313
  %v5391 = vsel %vm3650, %v5284, %v5315
  %v5392 = vsel %vm3650, %v5286, %v5317
  %v5393 = vsel %vm3650, %v5288, %v5319
  %v5394 = vsel %vm3650, %v5290, %v5321
  %v5395 = vmul.f32 %v3779, %v105
  %v5396 = vmul.f32 %v5339, %v106
  %v5397 = vmul.f32 %v5347, %v107
  %v5398 = vmul.f32 %v5355, %v108
  %v5399 = vmul.f32 %v5363, %v109
  %v5400 = vmul.f32 %v5371, %v110
  %v5401 = vmul.f32 %v5379, %v111
  %v5402 = vmul.f32 %v5387, %v112
  %v5403 = vmul.f32 %v5308, %v113
  %v5404 = vmul.f32 %v3842, %v105
  %v5405 = vmul.f32 %v5340, %v106
  %v5406 = vmul.f32 %v5348, %v107
  %v5407 = vmul.f32 %v5356, %v108
  %v5408 = vmul.f32 %v5364, %v109
  %v5409 = vmul.f32 %v5372, %v110
  %v5410 = vmul.f32 %v5380, %v111
  %v5411 = vmul.f32 %v5388, %v112
  %v5412 = vmul.f32 %v5310, %v113
  %v5413 = vmul.f32 %v3905, %v105
  %v5414 = vmul.f32 %v5341, %v106
  %v5415 = vmul.f32 %v5349, %v107
  %v5416 = vmul.f32 %v5357, %v108
  %v5417 = vmul.f32 %v5365, %v109
  %v5418 = vmul.f32 %v5373, %v110
  %v5419 = vmul.f32 %v5381, %v111
  %v5420 = vmul.f32 %v5389, %v112
  %v5421 = vmul.f32 %v5312, %v113
  %v5422 = vmul.f32 %v3968, %v105
  %v5423 = vmul.f32 %v5342, %v106
  %v5424 = vmul.f32 %v5350, %v107
  %v5425 = vmul.f32 %v5358, %v108
  %v5426 = vmul.f32 %v5366, %v109
  %v5427 = vmul.f32 %v5374, %v110
  %v5428 = vmul.f32 %v5382, %v111
  %v5429 = vmul.f32 %v5390, %v112
  %v5430 = vmul.f32 %v5314, %v113
  %v5431 = vmul.f32 %v4031, %v105
  %v5432 = vmul.f32 %v5343, %v106
  %v5433 = vmul.f32 %v5351, %v107
  %v5434 = vmul.f32 %v5359, %v108
  %v5435 = vmul.f32 %v5367, %v109
  %v5436 = vmul.f32 %v5375, %v110
  %v5437 = vmul.f32 %v5383, %v111
  %v5438 = vmul.f32 %v5391, %v112
  %v5439 = vmul.f32 %v5316, %v113
  %v5440 = vmul.f32 %v4094, %v105
  %v5441 = vmul.f32 %v5344, %v106
  %v5442 = vmul.f32 %v5352, %v107
  %v5443 = vmul.f32 %v5360, %v108
  %v5444 = vmul.f32 %v5368, %v109
  %v5445 = vmul.f32 %v5376, %v110
  %v5446 = vmul.f32 %v5384, %v111
  %v5447 = vmul.f32 %v5392, %v112
  %v5448 = vmul.f32 %v5318, %v113
  %v5449 = vmul.f32 %v4157, %v105
  %v5450 = vmul.f32 %v5345, %v106
  %v5451 = vmul.f32 %v5353, %v107
  %v5452 = vmul.f32 %v5361, %v108
  %v5453 = vmul.f32 %v5369, %v109
  %v5454 = vmul.f32 %v5377, %v110
  %v5455 = vmul.f32 %v5385, %v111
  %v5456 = vmul.f32 %v5393, %v112
  %v5457 = vmul.f32 %v5320, %v113
  %v5458 = vmul.f32 %v4220, %v105
  %v5459 = vmul.f32 %v5346, %v106
  %v5460 = vmul.f32 %v5354, %v107
  %v5461 = vmul.f32 %v5362, %v108
  %v5462 = vmul.f32 %v5370, %v109
  %v5463 = vmul.f32 %v5378, %v110
  %v5464 = vmul.f32 %v5386, %v111
  %v5465 = vmul.f32 %v5394, %v112
  %v5466 = vmul.f32 %v5322, %v113
  %5476 = vrot.lane.b32.xlu0 %v105, 64
  %v5477 = vpop.permute.xlu0 %5476
  %5478 = vrot.lane.b32.xlu0 %v106, 64
  %v5479 = vpop.permute.xlu0 %5478
  %5480 = vrot.lane.b32.xlu0 %v107, 64
  %v5481 = vpop.permute.xlu0 %5480
  %5482 = vrot.lane.b32.xlu0 %v108, 64
  %v5483 = vpop.permute.xlu0 %5482
  %5484 = vrot.lane.b32.xlu0 %v109, 64
  %v5485 = vpop.permute.xlu0 %5484
  %5486 = vrot.lane.b32.xlu0 %v110, 64
  %v5487 = vpop.permute.xlu0 %5486
  %5488 = vrot.lane.b32.xlu0 %v111, 64
  %v5489 = vpop.permute.xlu0 %5488
  %5490 = vrot.lane.b32.xlu0 %v112, 64
  %v5491 = vpop.permute.xlu0 %5490
  %5492 = vrot.lane.b32.xlu0 %v113, 64
  %v5493 = vpop.permute.xlu0 %5492
  %v5503 = vsel %vm273, %v5395, %v5477
  %v5504 = vsel %vm273, %v5396, %v5479
  %v5505 = vsel %vm273, %v5397, %v5481
  %v5506 = vsel %vm273, %v5398, %v5483
  %v5507 = vsel %vm273, %v5399, %v5485
  %v5508 = vsel %vm273, %v5400, %v5487
  %v5509 = vsel %vm273, %v5401, %v5489
  %v5510 = vsel %vm273, %v5402, %v5491
  %v5511 = vsel %vm273, %v5403, %v5493
  %v5512 = vsel %vm273, %v5404, %v5477
  %v5513 = vsel %vm273, %v5405, %v5479
  %v5514 = vsel %vm273, %v5406, %v5481
  %v5515 = vsel %vm273, %v5407, %v5483
  %v5516 = vsel %vm273, %v5408, %v5485
  %v5517 = vsel %vm273, %v5409, %v5487
  %v5518 = vsel %vm273, %v5410, %v5489
  %v5519 = vsel %vm273, %v5411, %v5491
  %v5520 = vsel %vm273, %v5412, %v5493
  %v5521 = vsel %vm273, %v5413, %v5477
  %v5522 = vsel %vm273, %v5414, %v5479
  %v5523 = vsel %vm273, %v5415, %v5481
  %v5524 = vsel %vm273, %v5416, %v5483
  %v5525 = vsel %vm273, %v5417, %v5485
  %v5526 = vsel %vm273, %v5418, %v5487
  %v5527 = vsel %vm273, %v5419, %v5489
  %v5528 = vsel %vm273, %v5420, %v5491
  %v5529 = vsel %vm273, %v5421, %v5493
  %v5530 = vsel %vm273, %v5422, %v5477
  %v5531 = vsel %vm273, %v5423, %v5479
  %v5532 = vsel %vm273, %v5424, %v5481
  %v5533 = vsel %vm273, %v5425, %v5483
  %v5534 = vsel %vm273, %v5426, %v5485
  %v5535 = vsel %vm273, %v5427, %v5487
  %v5536 = vsel %vm273, %v5428, %v5489
  %v5537 = vsel %vm273, %v5429, %v5491
  %v5538 = vsel %vm273, %v5430, %v5493
  %v5539 = vsel %vm273, %v5431, %v5477
  %v5540 = vsel %vm273, %v5432, %v5479
  %v5541 = vsel %vm273, %v5433, %v5481
  %v5542 = vsel %vm273, %v5434, %v5483
  %v5543 = vsel %vm273, %v5435, %v5485
  %v5544 = vsel %vm273, %v5436, %v5487
  %v5545 = vsel %vm273, %v5437, %v5489
  %v5546 = vsel %vm273, %v5438, %v5491
  %v5547 = vsel %vm273, %v5439, %v5493
  %v5548 = vsel %vm273, %v5440, %v5477
  %v5549 = vsel %vm273, %v5441, %v5479
  %v5550 = vsel %vm273, %v5442, %v5481
  %v5551 = vsel %vm273, %v5443, %v5483
  %v5552 = vsel %vm273, %v5444, %v5485
  %v5553 = vsel %vm273, %v5445, %v5487
  %v5554 = vsel %vm273, %v5446, %v5489
  %v5555 = vsel %vm273, %v5447, %v5491
  %v5556 = vsel %vm273, %v5448, %v5493
  %v5557 = vsel %vm273, %v5449, %v5477
  %v5558 = vsel %vm273, %v5450, %v5479
  %v5559 = vsel %vm273, %v5451, %v5481
  %v5560 = vsel %vm273, %v5452, %v5483
  %v5561 = vsel %vm273, %v5453, %v5485
  %v5562 = vsel %vm273, %v5454, %v5487
  %v5563 = vsel %vm273, %v5455, %v5489
  %v5564 = vsel %vm273, %v5456, %v5491
  %v5565 = vsel %vm273, %v5457, %v5493
  %v5566 = vsel %vm273, %v5458, %v5477
  %v5567 = vsel %vm273, %v5459, %v5479
  %v5568 = vsel %vm273, %v5460, %v5481
  %v5569 = vsel %vm273, %v5461, %v5483
  %v5570 = vsel %vm273, %v5462, %v5485
  %v5571 = vsel %vm273, %v5463, %v5487
  %v5572 = vsel %vm273, %v5464, %v5489
  %v5573 = vsel %vm273, %v5465, %v5491
  %v5574 = vsel %vm273, %v5466, %v5493
  %v5575 = vcombine.low %v443, %v457
  %v5576 = vcombine.low %v465, %v467
  %v5577 = vcombine.low %v450, %v464
  %v5578 = vcombine.low %v466, %v468
  %v5580 = vunpack.c.l.s4 1966171168
  %v5581 = vunpack.c.0.s8 %v5580
  %v5582 = vlaneseq
  %v5583 = vshrl.u32 %v5582, 7
  %v5584 = vsub.s32 %v5581, %v5583
  %v5585 = vrot.slane %v5575, %v5584
  %v5587 = vunpack.c.l.s4 1966171168
  %v5588 = vunpack.c.0.s8 %v5587
  %v5589 = vlaneseq
  %v5590 = vshrl.u32 %v5589, 7
  %v5591 = vsub.s32 %v5588, %v5590
  %v5592 = vrot.slane %v5576, %v5591
  %v5594 = vunpack.c.l.s4 1966171168
  %v5595 = vunpack.c.0.s8 %v5594
  %v5596 = vlaneseq
  %v5597 = vshrl.u32 %v5596, 7
  %v5598 = vsub.s32 %v5595, %v5597
  %v5599 = vrot.slane %v5577, %v5598
  %v5601 = vunpack.c.l.s4 1966171168
  %v5602 = vunpack.c.0.s8 %v5601
  %v5603 = vlaneseq
  %v5604 = vshrl.u32 %v5603, 7
  %v5605 = vsub.s32 %v5602, %v5604
  %v5606 = vrot.slane %v5578, %v5605
  %v5607 = vcombine.low %v5585, %v5592
  %v5608 = vcombine.low %v5599, %v5606
  %v5610 = vunpack.c.l.s4 1966171168
  %v5611 = vunpack.c.0.s8 %v5610
  %v5612 = vlaneseq
  %v5613 = vshrl.u32 %v5612, 7
  %v5614 = vsub.s32 %v5611, %v5613
  %v5615 = vrot.slane %v5607, %v5614
  %v5617 = vunpack.c.l.s4 1966171168
  %v5618 = vunpack.c.0.s8 %v5617
  %v5619 = vlaneseq
  %v5620 = vshrl.u32 %v5619, 7
  %v5621 = vsub.s32 %v5618, %v5620
  %v5622 = vrot.slane %v5608, %v5621
  %v5623 = vcombine.low %v5615, %v5622
  %v5625 = vunpack.c.l.s4 1966171168
  %v5626 = vunpack.c.0.s8 %v5625
  %v5627 = vlaneseq
  %v5628 = vshrl.u32 %v5627, 7
  %v5629 = vsub.s32 %v5626, %v5628
  %v5630 = vrot.slane %v492, %v5629
  %v5632 = vunpack.c.l.s4 1966171168
  %v5633 = vunpack.c.0.s8 %v5632
  %v5634 = vlaneseq
  %v5635 = vshrl.u32 %v5634, 7
  %v5636 = vsub.s32 %v5633, %v5635
  %v5637 = vrot.slane %v5630, %v5636
  %v5638 = vsel %vm273, %v5623, 0
  %v5640 = vsel %vm273, %v5637, 0
  %v5643 = vsel %vm273, %v3659, 0
  %v5646 = vsel %vm273, %v3660, 0
  %v5649 = vsel %vm273, %v3661, 0
  %v5652 = vsel %vm273, %v3662, 0
  %v5655 = vsel %vm273, %v3663, 0
  %v5658 = vsel %vm273, %v3664, 0
  %v5661 = vsel %vm273, %v3665, 0
  %v5664 = vsel %vm273, %v3666, 0
  %v5667 = vsel %vm273, %v3667, 0
  %5669 = vmatprep.subr.mxu0 0.0
  %5670 = vmatpush1.xpose.msra.mxu0 %v5643
  %5671 = vmatprep.subr.mxu0 0.0
  %5672 = vmatpush1.xpose.msra.mxu0 %v5646
  %5673 = vmatprep.subr.mxu0 0.0
  %5674 = vmatpush1.xpose.msra.mxu0 %v5649
  %5675 = vmatprep.subr.mxu0 0.0
  %5676 = vmatpush1.xpose.msra.mxu0 %v5652
  %5677 = vmatprep.subr.mxu0 0.0
  %5678 = vmatpush1.xpose.msra.mxu0 %v5655
  %5679 = vmatprep.subr.mxu0 0.0
  %5680 = vmatpush1.xpose.msra.mxu0 %v5658
  %5681 = vmatprep.subr.mxu0 0.0
  %5682 = vmatpush1.xpose.msra.mxu0 %v5661
  %5683 = vmatprep.subr.mxu0 0.0
  %5684 = vmatpush1.xpose.msra.mxu0 %v5664
  %5685 = vmatprep.subr.mxu0 0.0
  %5686 = vmatpush1.xpose.msra.mxu0 %v5667
  %5687 = vmatprep.subr.mxu0 0.0
  %5688 = vmatpush1.xpose.msra.mxu0 0.0
  %5689 = vmatprep.subr.mxu0 0.0
  %5690 = vmatpush1.xpose.msra.mxu0 0.0
  %5691 = vmatprep.subr.mxu0 0.0
  %5692 = vmatpush1.xpose.msra.mxu0 0.0
  %5693 = vmatprep.subr.mxu0 0.0
  %5694 = vmatpush1.xpose.msra.mxu0 0.0
  %5695 = vmatprep.subr.mxu0 0.0
  %5696 = vmatpush1.xpose.msra.mxu0 0.0
  %5697 = vmatprep.subr.mxu0 0.0
  %5698 = vmatpush1.xpose.msra.mxu0 0.0
  %5699 = vmatprep.subr.mxu0 0.0
  %5700 = vmatpush1.xpose.msra.mxu0 0.0
  %5701 = vmatprep.subr.mxu0 0.0
  %5702 = vmatpush1.xpose.msra.mxu0 0.0
  %5703 = vmatprep.subr.mxu0 0.0
  %5704 = vmatpush1.xpose.msra.mxu0 0.0
  %5705 = vmatprep.subr.mxu0 0.0
  %5706 = vmatpush1.xpose.msra.mxu0 0.0
  %5707 = vmatprep.subr.mxu0 0.0
  %5708 = vmatpush1.xpose.msra.mxu0 0.0
  %5709 = vmatprep.subr.mxu0 0.0
  %5710 = vmatpush1.xpose.msra.mxu0 0.0
  %5711 = vmatprep.subr.mxu0 0.0
  %5712 = vmatpush1.xpose.msra.mxu0 0.0
  %5713 = vmatprep.subr.mxu0 0.0
  %5714 = vmatpush1.xpose.msra.mxu0 0.0
  %5715 = vmatprep.subr.mxu0 0.0
  %5716 = vmatpush1.xpose.msra.mxu0 0.0
  %5717 = vmatprep.subr.mxu0 0.0
  %5718 = vmatpush1.xpose.msra.mxu0 0.0
  %5719 = vmatprep.subr.mxu0 0.0
  %5720 = vmatpush1.xpose.msra.mxu0 0.0
  %5721 = vmatprep.subr.mxu0 0.0
  %5722 = vmatpush1.xpose.msra.mxu0 0.0
  %5723 = vmatprep.subr.mxu0 0.0
  %5724 = vmatpush1.xpose.msra.mxu0 0.0
  %5725 = vmatprep.subr.mxu0 0.0
  %5726 = vmatpush1.xpose.msra.mxu0 0.0
  %5727 = vmatprep.subr.mxu0 0.0
  %5728 = vmatpush1.xpose.msra.mxu0 0.0
  %5729 = vmatprep.subr.mxu0 0.0
  %5730 = vmatpush1.xpose.msra.mxu0 0.0
  %5731 = vmatprep.subr.mxu0 0.0
  %5732 = vmatpush1.xpose.msra.mxu0 0.0
  %5733 = vmatprep.mubr.f32.mxu0 0.0
  %5734 = vmatmul.mubr.f32.gmra.mrb[0].mxu0 %v5638
  %v5735 = vpop.f32.mrb[0].mxu0
  %v5736 = vadd.f32 0.0, %v5735
  %v5737 = vpop.f32.mrb[0].mxu0
  %5738 = vmatprep.mubr.f32.mxu0 0.0
  %5739 = vmatmul.mubr.f32.gmra.mrb[0].mxu0 %v5640
  %v5740 = vpop.f32.mrb[0].mxu0
  %v5741 = vadd.f32 0.0, %v5740
  %v5742 = vpop.f32.mrb[0].mxu0
  %5743 = vdwg.mxu0
  %v5744 = vcombine.low %v506, %v514
  %v5745 = vcombine.low %v516, %v499
  %v5746 = vcombine.low %v513, %v515
  %v5747 = vcombine.low %v517, %v541
  %v5749 = vunpack.c.l.s4 1966171168
  %v5750 = vunpack.c.0.s8 %v5749
  %v5751 = vlaneseq
  %v5752 = vshrl.u32 %v5751, 7
  %v5753 = vsub.s32 %v5750, %v5752
  %v5754 = vrot.slane %v5744, %v5753
  %v5756 = vunpack.c.l.s4 1966171168
  %v5757 = vunpack.c.0.s8 %v5756
  %v5758 = vlaneseq
  %v5759 = vshrl.u32 %v5758, 7
  %v5760 = vsub.s32 %v5757, %v5759
  %v5761 = vrot.slane %v5745, %v5760
  %v5763 = vunpack.c.l.s4 1966171168
  %v5764 = vunpack.c.0.s8 %v5763
  %v5765 = vlaneseq
  %v5766 = vshrl.u32 %v5765, 7
  %v5767 = vsub.s32 %v5764, %v5766
  %v5768 = vrot.slane %v5746, %v5767
  %v5770 = vunpack.c.l.s4 1966171168
  %v5771 = vunpack.c.0.s8 %v5770
  %v5772 = vlaneseq
  %v5773 = vshrl.u32 %v5772, 7
  %v5774 = vsub.s32 %v5771, %v5773
  %v5775 = vrot.slane %v5747, %v5774
  %v5776 = vcombine.low %v5754, %v5761
  %v5777 = vcombine.low %v5768, %v5775
  %v5779 = vunpack.c.l.s4 1966171168
  %v5780 = vunpack.c.0.s8 %v5779
  %v5781 = vlaneseq
  %v5782 = vshrl.u32 %v5781, 7
  %v5783 = vsub.s32 %v5780, %v5782
  %v5784 = vrot.slane %v5776, %v5783
  %v5786 = vunpack.c.l.s4 1966171168
  %v5787 = vunpack.c.0.s8 %v5786
  %v5788 = vlaneseq
  %v5789 = vshrl.u32 %v5788, 7
  %v5790 = vsub.s32 %v5787, %v5789
  %v5791 = vrot.slane %v5777, %v5790
  %v5792 = vcombine.low %v5784, %v5791
  %v5794 = vunpack.c.l.s4 1966171168
  %v5795 = vunpack.c.0.s8 %v5794
  %v5796 = vlaneseq
  %v5797 = vshrl.u32 %v5796, 7
  %v5798 = vsub.s32 %v5795, %v5797
  %v5799 = vrot.slane %v555, %v5798
  %v5801 = vunpack.c.l.s4 1966171168
  %v5802 = vunpack.c.0.s8 %v5801
  %v5803 = vlaneseq
  %v5804 = vshrl.u32 %v5803, 7
  %v5805 = vsub.s32 %v5802, %v5804
  %v5806 = vrot.slane %v5799, %v5805
  %v5807 = vsel %vm273, %v5792, 0
  %v5809 = vsel %vm273, %v5806, 0
  %v5812 = vsel %vm273, %v3668, 0
  %v5815 = vsel %vm273, %v3669, 0
  %v5818 = vsel %vm273, %v3670, 0
  %v5821 = vsel %vm273, %v3671, 0
  %v5824 = vsel %vm273, %v3672, 0
  %v5827 = vsel %vm273, %v3673, 0
  %v5830 = vsel %vm273, %v3674, 0
  %v5833 = vsel %vm273, %v3675, 0
  %v5836 = vsel %vm273, %v3676, 0
  %5838 = vmatprep.subr.mxu0 0.0
  %5839 = vmatpush1.xpose.msra.mxu0 %v5812
  %5840 = vmatprep.subr.mxu0 0.0
  %5841 = vmatpush1.xpose.msra.mxu0 %v5815
  %5842 = vmatprep.subr.mxu0 0.0
  %5843 = vmatpush1.xpose.msra.mxu0 %v5818
  %5844 = vmatprep.subr.mxu0 0.0
  %5845 = vmatpush1.xpose.msra.mxu0 %v5821
  %5846 = vmatprep.subr.mxu0 0.0
  %5847 = vmatpush1.xpose.msra.mxu0 %v5824
  %5848 = vmatprep.subr.mxu0 0.0
  %5849 = vmatpush1.xpose.msra.mxu0 %v5827
  %5850 = vmatprep.subr.mxu0 0.0
  %5851 = vmatpush1.xpose.msra.mxu0 %v5830
  %5852 = vmatprep.subr.mxu0 0.0
  %5853 = vmatpush1.xpose.msra.mxu0 %v5833
  %5854 = vmatprep.subr.mxu0 0.0
  %5855 = vmatpush1.xpose.msra.mxu0 %v5836
  %5856 = vmatprep.subr.mxu0 0.0
  %5857 = vmatpush1.xpose.msra.mxu0 0.0
  %5858 = vmatprep.subr.mxu0 0.0
  %5859 = vmatpush1.xpose.msra.mxu0 0.0
  %5860 = vmatprep.subr.mxu0 0.0
  %5861 = vmatpush1.xpose.msra.mxu0 0.0
  %5862 = vmatprep.subr.mxu0 0.0
  %5863 = vmatpush1.xpose.msra.mxu0 0.0
  %5864 = vmatprep.subr.mxu0 0.0
  %5865 = vmatpush1.xpose.msra.mxu0 0.0
  %5866 = vmatprep.subr.mxu0 0.0
  %5867 = vmatpush1.xpose.msra.mxu0 0.0
  %5868 = vmatprep.subr.mxu0 0.0
  %5869 = vmatpush1.xpose.msra.mxu0 0.0
  %5870 = vmatprep.subr.mxu0 0.0
  %5871 = vmatpush1.xpose.msra.mxu0 0.0
  %5872 = vmatprep.subr.mxu0 0.0
  %5873 = vmatpush1.xpose.msra.mxu0 0.0
  %5874 = vmatprep.subr.mxu0 0.0
  %5875 = vmatpush1.xpose.msra.mxu0 0.0
  %5876 = vmatprep.subr.mxu0 0.0
  %5877 = vmatpush1.xpose.msra.mxu0 0.0
  %5878 = vmatprep.subr.mxu0 0.0
  %5879 = vmatpush1.xpose.msra.mxu0 0.0
  %5880 = vmatprep.subr.mxu0 0.0
  %5881 = vmatpush1.xpose.msra.mxu0 0.0
  %5882 = vmatprep.subr.mxu0 0.0
  %5883 = vmatpush1.xpose.msra.mxu0 0.0
  %5884 = vmatprep.subr.mxu0 0.0
  %5885 = vmatpush1.xpose.msra.mxu0 0.0
  %5886 = vmatprep.subr.mxu0 0.0
  %5887 = vmatpush1.xpose.msra.mxu0 0.0
  %5888 = vmatprep.subr.mxu0 0.0
  %5889 = vmatpush1.xpose.msra.mxu0 0.0
  %5890 = vmatprep.subr.mxu0 0.0
  %5891 = vmatpush1.xpose.msra.mxu0 0.0
  %5892 = vmatprep.subr.mxu0 0.0
  %5893 = vmatpush1.xpose.msra.mxu0 0.0
  %5894 = vmatprep.subr.mxu0 0.0
  %5895 = vmatpush1.xpose.msra.mxu0 0.0
  %5896 = vmatprep.subr.mxu0 0.0
  %5897 = vmatpush1.xpose.msra.mxu0 0.0
  %5898 = vmatprep.subr.mxu0 0.0
  %5899 = vmatpush1.xpose.msra.mxu0 0.0
  %5900 = vmatprep.subr.mxu0 0.0
  %5901 = vmatpush1.xpose.msra.mxu0 0.0
  %5902 = vmatprep.mubr.f32.mxu0 0.0
  %5903 = vmatmul.mubr.f32.gmra.mrb[0].mxu0 %v5807
  %v5904 = vpop.f32.mrb[0].mxu0
  %v5905 = vadd.f32 0.0, %v5904
  %v5906 = vpop.f32.mrb[0].mxu0
  %5907 = vmatprep.mubr.f32.mxu0 0.0
  %5908 = vmatmul.mubr.f32.gmra.mrb[0].mxu0 %v5809
  %v5909 = vpop.f32.mrb[0].mxu0
  %v5910 = vadd.f32 0.0, %v5909
  %v5911 = vpop.f32.mrb[0].mxu0
  %5912 = vdwg.mxu0
  %v5913 = vcombine.low %v563, %v565
  %v5914 = vcombine.low %v548, %v562
  %v5915 = vcombine.low %v564, %v566
  %v5916 = vcombine.low %v590, %v604
  %v5918 = vunpack.c.l.s4 1966171168
  %v5919 = vunpack.c.0.s8 %v5918
  %v5920 = vlaneseq
  %v5921 = vshrl.u32 %v5920, 7
  %v5922 = vsub.s32 %v5919, %v5921
  %v5923 = vrot.slane %v5913, %v5922
  %v5925 = vunpack.c.l.s4 1966171168
  %v5926 = vunpack.c.0.s8 %v5925
  %v5927 = vlaneseq
  %v5928 = vshrl.u32 %v5927, 7
  %v5929 = vsub.s32 %v5926, %v5928
  %v5930 = vrot.slane %v5914, %v5929
  %v5932 = vunpack.c.l.s4 1966171168
  %v5933 = vunpack.c.0.s8 %v5932
  %v5934 = vlaneseq
  %v5935 = vshrl.u32 %v5934, 7
  %v5936 = vsub.s32 %v5933, %v5935
  %v5937 = vrot.slane %v5915, %v5936
  %v5939 = vunpack.c.l.s4 1966171168
  %v5940 = vunpack.c.0.s8 %v5939
  %v5941 = vlaneseq
  %v5942 = vshrl.u32 %v5941, 7
  %v5943 = vsub.s32 %v5940, %v5942
  %v5944 = vrot.slane %v5916, %v5943
  %v5945 = vcombine.low %v5923, %v5930
  %v5946 = vcombine.low %v5937, %v5944
  %v5948 = vunpack.c.l.s4 1966171168
  %v5949 = vunpack.c.0.s8 %v5948
  %v5950 = vlaneseq
  %v5951 = vshrl.u32 %v5950, 7
  %v5952 = vsub.s32 %v5949, %v5951
  %v5953 = vrot.slane %v5945, %v5952
  %v5955 = vunpack.c.l.s4 1966171168
  %v5956 = vunpack.c.0.s8 %v5955
  %v5957 = vlaneseq
  %v5958 = vshrl.u32 %v5957, 7
  %v5959 = vsub.s32 %v5956, %v5958
  %v5960 = vrot.slane %v5946, %v5959
  %v5961 = vcombine.low %v5953, %v5960
  %v5963 = vunpack.c.l.s4 1966171168
  %v5964 = vunpack.c.0.s8 %v5963
  %v5965 = vlaneseq
  %v5966 = vshrl.u32 %v5965, 7
  %v5967 = vsub.s32 %v5964, %v5966
  %v5968 = vrot.slane %v612, %v5967
  %v5970 = vunpack.c.l.s4 1966171168
  %v5971 = vunpack.c.0.s8 %v5970
  %v5972 = vlaneseq
  %v5973 = vshrl.u32 %v5972, 7
  %v5974 = vsub.s32 %v5971, %v5973
  %v5975 = vrot.slane %v5968, %v5974
  %v5976 = vsel %vm273, %v5961, 0
  %v5978 = vsel %vm273, %v5975, 0
  %v5981 = vsel %vm273, %v3677, 0
  %v5984 = vsel %vm273, %v3678, 0
  %v5987 = vsel %vm273, %v3679, 0
  %v5990 = vsel %vm273, %v3680, 0
  %v5993 = vsel %vm273, %v3681, 0
  %v5996 = vsel %vm273, %v3682, 0
  %v5999 = vsel %vm273, %v3683, 0
  %v6002 = vsel %vm273, %v3684, 0
  %v6005 = vsel %vm273, %v3685, 0
  %6007 = vmatprep.subr.mxu0 0.0
  %6008 = vmatpush1.xpose.msra.mxu0 %v5981
  %6009 = vmatprep.subr.mxu0 0.0
  %6010 = vmatpush1.xpose.msra.mxu0 %v5984
  %6011 = vmatprep.subr.mxu0 0.0
  %6012 = vmatpush1.xpose.msra.mxu0 %v5987
  %6013 = vmatprep.subr.mxu0 0.0
  %6014 = vmatpush1.xpose.msra.mxu0 %v5990
  %6015 = vmatprep.subr.mxu0 0.0
  %6016 = vmatpush1.xpose.msra.mxu0 %v5993
  %6017 = vmatprep.subr.mxu0 0.0
  %6018 = vmatpush1.xpose.msra.mxu0 %v5996
  %6019 = vmatprep.subr.mxu0 0.0
  %6020 = vmatpush1.xpose.msra.mxu0 %v5999
  %6021 = vmatprep.subr.mxu0 0.0
  %6022 = vmatpush1.xpose.msra.mxu0 %v6002
  %6023 = vmatprep.subr.mxu0 0.0
  %6024 = vmatpush1.xpose.msra.mxu0 %v6005
  %6025 = vmatprep.subr.mxu0 0.0
  %6026 = vmatpush1.xpose.msra.mxu0 0.0
  %6027 = vmatprep.subr.mxu0 0.0
  %6028 = vmatpush1.xpose.msra.mxu0 0.0
  %6029 = vmatprep.subr.mxu0 0.0
  %6030 = vmatpush1.xpose.msra.mxu0 0.0
  %6031 = vmatprep.subr.mxu0 0.0
  %6032 = vmatpush1.xpose.msra.mxu0 0.0
  %6033 = vmatprep.subr.mxu0 0.0
  %6034 = vmatpush1.xpose.msra.mxu0 0.0
  %6035 = vmatprep.subr.mxu0 0.0
  %6036 = vmatpush1.xpose.msra.mxu0 0.0
  %6037 = vmatprep.subr.mxu0 0.0
  %6038 = vmatpush1.xpose.msra.mxu0 0.0
  %6039 = vmatprep.subr.mxu0 0.0
  %6040 = vmatpush1.xpose.msra.mxu0 0.0
  %6041 = vmatprep.subr.mxu0 0.0
  %6042 = vmatpush1.xpose.msra.mxu0 0.0
  %6043 = vmatprep.subr.mxu0 0.0
  %6044 = vmatpush1.xpose.msra.mxu0 0.0
  %6045 = vmatprep.subr.mxu0 0.0
  %6046 = vmatpush1.xpose.msra.mxu0 0.0
  %6047 = vmatprep.subr.mxu0 0.0
  %6048 = vmatpush1.xpose.msra.mxu0 0.0
  %6049 = vmatprep.subr.mxu0 0.0
  %6050 = vmatpush1.xpose.msra.mxu0 0.0
  %6051 = vmatprep.subr.mxu0 0.0
  %6052 = vmatpush1.xpose.msra.mxu0 0.0
  %6053 = vmatprep.subr.mxu0 0.0
  %6054 = vmatpush1.xpose.msra.mxu0 0.0
  %6055 = vmatprep.subr.mxu0 0.0
  %6056 = vmatpush1.xpose.msra.mxu0 0.0
  %6057 = vmatprep.subr.mxu0 0.0
  %6058 = vmatpush1.xpose.msra.mxu0 0.0
  %6059 = vmatprep.subr.mxu0 0.0
  %6060 = vmatpush1.xpose.msra.mxu0 0.0
  %6061 = vmatprep.subr.mxu0 0.0
  %6062 = vmatpush1.xpose.msra.mxu0 0.0
  %6063 = vmatprep.subr.mxu0 0.0
  %6064 = vmatpush1.xpose.msra.mxu0 0.0
  %6065 = vmatprep.subr.mxu0 0.0
  %6066 = vmatpush1.xpose.msra.mxu0 0.0
  %6067 = vmatprep.subr.mxu0 0.0
  %6068 = vmatpush1.xpose.msra.mxu0 0.0
  %6069 = vmatprep.subr.mxu0 0.0
  %6070 = vmatpush1.xpose.msra.mxu0 0.0
  %6071 = vmatprep.mubr.f32.mxu0 0.0
  %6072 = vmatmul.mubr.f32.gmra.mrb[0].mxu0 %v5976
  %v6073 = vpop.f32.mrb[0].mxu0
  %v6074 = vadd.f32 0.0, %v6073
  %v6075 = vpop.f32.mrb[0].mxu0
  %6076 = vmatprep.mubr.f32.mxu0 0.0
  %6077 = vmatmul.mubr.f32.gmra.mrb[0].mxu0 %v5978
  %v6078 = vpop.f32.mrb[0].mxu0
  %v6079 = vadd.f32 0.0, %v6078
  %v6080 = vpop.f32.mrb[0].mxu0
  %6081 = vdwg.mxu0
  %v6082 = vcombine.low %v614, %v597
  %v6083 = vcombine.low %v611, %v613
  %v6084 = vcombine.low %v615, %v639
  %v6085 = vcombine.low %v653, %v661
  %v6087 = vunpack.c.l.s4 1966171168
  %v6088 = vunpack.c.0.s8 %v6087
  %v6089 = vlaneseq
  %v6090 = vshrl.u32 %v6089, 7
  %v6091 = vsub.s32 %v6088, %v6090
  %v6092 = vrot.slane %v6082, %v6091
  %v6094 = vunpack.c.l.s4 1966171168
  %v6095 = vunpack.c.0.s8 %v6094
  %v6096 = vlaneseq
  %v6097 = vshrl.u32 %v6096, 7
  %v6098 = vsub.s32 %v6095, %v6097
  %v6099 = vrot.slane %v6083, %v6098
  %v6101 = vunpack.c.l.s4 1966171168
  %v6102 = vunpack.c.0.s8 %v6101
  %v6103 = vlaneseq
  %v6104 = vshrl.u32 %v6103, 7
  %v6105 = vsub.s32 %v6102, %v6104
  %v6106 = vrot.slane %v6084, %v6105
  %v6108 = vunpack.c.l.s4 1966171168
  %v6109 = vunpack.c.0.s8 %v6108
  %v6110 = vlaneseq
  %v6111 = vshrl.u32 %v6110, 7
  %v6112 = vsub.s32 %v6109, %v6111
  %v6113 = vrot.slane %v6085, %v6112
  %v6114 = vcombine.low %v6092, %v6099
  %v6115 = vcombine.low %v6106, %v6113
  %v6117 = vunpack.c.l.s4 1966171168
  %v6118 = vunpack.c.0.s8 %v6117
  %v6119 = vlaneseq
  %v6120 = vshrl.u32 %v6119, 7
  %v6121 = vsub.s32 %v6118, %v6120
  %v6122 = vrot.slane %v6114, %v6121
  %v6124 = vunpack.c.l.s4 1966171168
  %v6125 = vunpack.c.0.s8 %v6124
  %v6126 = vlaneseq
  %v6127 = vshrl.u32 %v6126, 7
  %v6128 = vsub.s32 %v6125, %v6127
  %v6129 = vrot.slane %v6115, %v6128
  %v6130 = vcombine.low %v6122, %v6129
  %v6132 = vunpack.c.l.s4 1966171168
  %v6133 = vunpack.c.0.s8 %v6132
  %v6134 = vlaneseq
  %v6135 = vshrl.u32 %v6134, 7
  %v6136 = vsub.s32 %v6133, %v6135
  %v6137 = vrot.slane %v663, %v6136
  %v6139 = vunpack.c.l.s4 1966171168
  %v6140 = vunpack.c.0.s8 %v6139
  %v6141 = vlaneseq
  %v6142 = vshrl.u32 %v6141, 7
  %v6143 = vsub.s32 %v6140, %v6142
  %v6144 = vrot.slane %v6137, %v6143
  %v6145 = vsel %vm273, %v6130, 0
  %v6147 = vsel %vm273, %v6144, 0
  %v6150 = vsel %vm273, %v3686, 0
  %v6153 = vsel %vm273, %v3687, 0
  %v6156 = vsel %vm273, %v3688, 0
  %v6159 = vsel %vm273, %v3689, 0
  %v6162 = vsel %vm273, %v3690, 0
  %v6165 = vsel %vm273, %v3691, 0
  %v6168 = vsel %vm273, %v3692, 0
  %v6171 = vsel %vm273, %v3693, 0
  %v6174 = vsel %vm273, %v3694, 0
  %6176 = vmatprep.subr.mxu0 0.0
  %6177 = vmatpush1.xpose.msra.mxu0 %v6150
  %6178 = vmatprep.subr.mxu0 0.0
  %6179 = vmatpush1.xpose.msra.mxu0 %v6153
  %6180 = vmatprep.subr.mxu0 0.0
  %6181 = vmatpush1.xpose.msra.mxu0 %v6156
  %6182 = vmatprep.subr.mxu0 0.0
  %6183 = vmatpush1.xpose.msra.mxu0 %v6159
  %6184 = vmatprep.subr.mxu0 0.0
  %6185 = vmatpush1.xpose.msra.mxu0 %v6162
  %6186 = vmatprep.subr.mxu0 0.0
  %6187 = vmatpush1.xpose.msra.mxu0 %v6165
  %6188 = vmatprep.subr.mxu0 0.0
  %6189 = vmatpush1.xpose.msra.mxu0 %v6168
  %6190 = vmatprep.subr.mxu0 0.0
  %6191 = vmatpush1.xpose.msra.mxu0 %v6171
  %6192 = vmatprep.subr.mxu0 0.0
  %6193 = vmatpush1.xpose.msra.mxu0 %v6174
  %6194 = vmatprep.subr.mxu0 0.0
  %6195 = vmatpush1.xpose.msra.mxu0 0.0
  %6196 = vmatprep.subr.mxu0 0.0
  %6197 = vmatpush1.xpose.msra.mxu0 0.0
  %6198 = vmatprep.subr.mxu0 0.0
  %6199 = vmatpush1.xpose.msra.mxu0 0.0
  %6200 = vmatprep.subr.mxu0 0.0
  %6201 = vmatpush1.xpose.msra.mxu0 0.0
  %6202 = vmatprep.subr.mxu0 0.0
  %6203 = vmatpush1.xpose.msra.mxu0 0.0
  %6204 = vmatprep.subr.mxu0 0.0
  %6205 = vmatpush1.xpose.msra.mxu0 0.0
  %6206 = vmatprep.subr.mxu0 0.0
  %6207 = vmatpush1.xpose.msra.mxu0 0.0
  %6208 = vmatprep.subr.mxu0 0.0
  %6209 = vmatpush1.xpose.msra.mxu0 0.0
  %6210 = vmatprep.subr.mxu0 0.0
  %6211 = vmatpush1.xpose.msra.mxu0 0.0
  %6212 = vmatprep.subr.mxu0 0.0
  %6213 = vmatpush1.xpose.msra.mxu0 0.0
  %6214 = vmatprep.subr.mxu0 0.0
  %6215 = vmatpush1.xpose.msra.mxu0 0.0
  %6216 = vmatprep.subr.mxu0 0.0
  %6217 = vmatpush1.xpose.msra.mxu0 0.0
  %6218 = vmatprep.subr.mxu0 0.0
  %6219 = vmatpush1.xpose.msra.mxu0 0.0
  %6220 = vmatprep.subr.mxu0 0.0
  %6221 = vmatpush1.xpose.msra.mxu0 0.0
  %6222 = vmatprep.subr.mxu0 0.0
  %6223 = vmatpush1.xpose.msra.mxu0 0.0
  %6224 = vmatprep.subr.mxu0 0.0
  %6225 = vmatpush1.xpose.msra.mxu0 0.0
  %6226 = vmatprep.subr.mxu0 0.0
  %6227 = vmatpush1.xpose.msra.mxu0 0.0
  %6228 = vmatprep.subr.mxu0 0.0
  %6229 = vmatpush1.xpose.msra.mxu0 0.0
  %6230 = vmatprep.subr.mxu0 0.0
  %6231 = vmatpush1.xpose.msra.mxu0 0.0
  %6232 = vmatprep.subr.mxu0 0.0
  %6233 = vmatpush1.xpose.msra.mxu0 0.0
  %6234 = vmatprep.subr.mxu0 0.0
  %6235 = vmatpush1.xpose.msra.mxu0 0.0
  %6236 = vmatprep.subr.mxu0 0.0
  %6237 = vmatpush1.xpose.msra.mxu0 0.0
  %6238 = vmatprep.subr.mxu0 0.0
  %6239 = vmatpush1.xpose.msra.mxu0 0.0
  %6240 = vmatprep.mubr.f32.mxu0 0.0
  %6241 = vmatmul.mubr.f32.gmra.mrb[0].mxu0 %v6145
  %v6242 = vpop.f32.mrb[0].mxu0
  %v6243 = vadd.f32 0.0, %v6242
  %v6244 = vpop.f32.mrb[0].mxu0
  %6245 = vmatprep.mubr.f32.mxu0 0.0
  %6246 = vmatmul.mubr.f32.gmra.mrb[0].mxu0 %v6147
  %v6247 = vpop.f32.mrb[0].mxu0
  %v6248 = vadd.f32 0.0, %v6247
  %v6249 = vpop.f32.mrb[0].mxu0
  %6250 = vdwg.mxu0
  %v6251 = vcombine.low %v646, %v660
  %v6252 = vcombine.low %v662, %v664
  %v6253 = vcombine.low %v688, %v702
  %v6254 = vcombine.low %v710, %v712
  %v6256 = vunpack.c.l.s4 1966171168
  %v6257 = vunpack.c.0.s8 %v6256
  %v6258 = vlaneseq
  %v6259 = vshrl.u32 %v6258, 7
  %v6260 = vsub.s32 %v6257, %v6259
  %v6261 = vrot.slane %v6251, %v6260
  %v6263 = vunpack.c.l.s4 1966171168
  %v6264 = vunpack.c.0.s8 %v6263
  %v6265 = vlaneseq
  %v6266 = vshrl.u32 %v6265, 7
  %v6267 = vsub.s32 %v6264, %v6266
  %v6268 = vrot.slane %v6252, %v6267
  %v6270 = vunpack.c.l.s4 1966171168
  %v6271 = vunpack.c.0.s8 %v6270
  %v6272 = vlaneseq
  %v6273 = vshrl.u32 %v6272, 7
  %v6274 = vsub.s32 %v6271, %v6273
  %v6275 = vrot.slane %v6253, %v6274
  %v6277 = vunpack.c.l.s4 1966171168
  %v6278 = vunpack.c.0.s8 %v6277
  %v6279 = vlaneseq
  %v6280 = vshrl.u32 %v6279, 7
  %v6281 = vsub.s32 %v6278, %v6280
  %v6282 = vrot.slane %v6254, %v6281
  %v6283 = vcombine.low %v6261, %v6268
  %v6284 = vcombine.low %v6275, %v6282
  %v6286 = vunpack.c.l.s4 1966171168
  %v6287 = vunpack.c.0.s8 %v6286
  %v6288 = vlaneseq
  %v6289 = vshrl.u32 %v6288, 7
  %v6290 = vsub.s32 %v6287, %v6289
  %v6291 = vrot.slane %v6283, %v6290
  %v6293 = vunpack.c.l.s4 1966171168
  %v6294 = vunpack.c.0.s8 %v6293
  %v6295 = vlaneseq
  %v6296 = vshrl.u32 %v6295, 7
  %v6297 = vsub.s32 %v6294, %v6296
  %v6298 = vrot.slane %v6284, %v6297
  %v6299 = vcombine.low %v6291, %v6298
  %v6301 = vunpack.c.l.s4 1966171168
  %v6302 = vunpack.c.0.s8 %v6301
  %v6303 = vlaneseq
  %v6304 = vshrl.u32 %v6303, 7
  %v6305 = vsub.s32 %v6302, %v6304
  %v6306 = vrot.slane %v695, %v6305
  %v6308 = vunpack.c.l.s4 1966171168
  %v6309 = vunpack.c.0.s8 %v6308
  %v6310 = vlaneseq
  %v6311 = vshrl.u32 %v6310, 7
  %v6312 = vsub.s32 %v6309, %v6311
  %v6313 = vrot.slane %v6306, %v6312
  %v6314 = vsel %vm273, %v6299, 0
  %v6316 = vsel %vm273, %v6313, 0
  %v6319 = vsel %vm273, %v3695, 0
  %v6322 = vsel %vm273, %v3696, 0
  %v6325 = vsel %vm273, %v3697, 0
  %v6328 = vsel %vm273, %v3698, 0
  %v6331 = vsel %vm273, %v3699, 0
  %v6334 = vsel %vm273, %v3700, 0
  %v6337 = vsel %vm273, %v3701, 0
  %v6340 = vsel %vm273, %v3702, 0
  %v6343 = vsel %vm273, %v3703, 0
  %6345 = vmatprep.subr.mxu0 0.0
  %6346 = vmatpush1.xpose.msra.mxu0 %v6319
  %6347 = vmatprep.subr.mxu0 0.0
  %6348 = vmatpush1.xpose.msra.mxu0 %v6322
  %6349 = vmatprep.subr.mxu0 0.0
  %6350 = vmatpush1.xpose.msra.mxu0 %v6325
  %6351 = vmatprep.subr.mxu0 0.0
  %6352 = vmatpush1.xpose.msra.mxu0 %v6328
  %6353 = vmatprep.subr.mxu0 0.0
  %6354 = vmatpush1.xpose.msra.mxu0 %v6331
  %6355 = vmatprep.subr.mxu0 0.0
  %6356 = vmatpush1.xpose.msra.mxu0 %v6334
  %6357 = vmatprep.subr.mxu0 0.0
  %6358 = vmatpush1.xpose.msra.mxu0 %v6337
  %6359 = vmatprep.subr.mxu0 0.0
  %6360 = vmatpush1.xpose.msra.mxu0 %v6340
  %6361 = vmatprep.subr.mxu0 0.0
  %6362 = vmatpush1.xpose.msra.mxu0 %v6343
  %6363 = vmatprep.subr.mxu0 0.0
  %6364 = vmatpush1.xpose.msra.mxu0 0.0
  %6365 = vmatprep.subr.mxu0 0.0
  %6366 = vmatpush1.xpose.msra.mxu0 0.0
  %6367 = vmatprep.subr.mxu0 0.0
  %6368 = vmatpush1.xpose.msra.mxu0 0.0
  %6369 = vmatprep.subr.mxu0 0.0
  %6370 = vmatpush1.xpose.msra.mxu0 0.0
  %6371 = vmatprep.subr.mxu0 0.0
  %6372 = vmatpush1.xpose.msra.mxu0 0.0
  %6373 = vmatprep.subr.mxu0 0.0
  %6374 = vmatpush1.xpose.msra.mxu0 0.0
  %6375 = vmatprep.subr.mxu0 0.0
  %6376 = vmatpush1.xpose.msra.mxu0 0.0
  %6377 = vmatprep.subr.mxu0 0.0
  %6378 = vmatpush1.xpose.msra.mxu0 0.0
  %6379 = vmatprep.subr.mxu0 0.0
  %6380 = vmatpush1.xpose.msra.mxu0 0.0
  %6381 = vmatprep.subr.mxu0 0.0
  %6382 = vmatpush1.xpose.msra.mxu0 0.0
  %6383 = vmatprep.subr.mxu0 0.0
  %6384 = vmatpush1.xpose.msra.mxu0 0.0
  %6385 = vmatprep.subr.mxu0 0.0
  %6386 = vmatpush1.xpose.msra.mxu0 0.0
  %6387 = vmatprep.subr.mxu0 0.0
  %6388 = vmatpush1.xpose.msra.mxu0 0.0
  %6389 = vmatprep.subr.mxu0 0.0
  %6390 = vmatpush1.xpose.msra.mxu0 0.0
  %6391 = vmatprep.subr.mxu0 0.0
  %6392 = vmatpush1.xpose.msra.mxu0 0.0
  %6393 = vmatprep.subr.mxu0 0.0
  %6394 = vmatpush1.xpose.msra.mxu0 0.0
  %6395 = vmatprep.subr.mxu0 0.0
  %6396 = vmatpush1.xpose.msra.mxu0 0.0
  %6397 = vmatprep.subr.mxu0 0.0
  %6398 = vmatpush1.xpose.msra.mxu0 0.0
  %6399 = vmatprep.subr.mxu0 0.0
  %6400 = vmatpush1.xpose.msra.mxu0 0.0
  %6401 = vmatprep.subr.mxu0 0.0
  %6402 = vmatpush1.xpose.msra.mxu0 0.0
  %6403 = vmatprep.subr.mxu0 0.0
  %6404 = vmatpush1.xpose.msra.mxu0 0.0
  %6405 = vmatprep.subr.mxu0 0.0
  %6406 = vmatpush1.xpose.msra.mxu0 0.0
  %6407 = vmatprep.subr.mxu0 0.0
  %6408 = vmatpush1.xpose.msra.mxu0 0.0
  %6409 = vmatprep.mubr.f32.mxu0 0.0
  %6410 = vmatmul.mubr.f32.gmra.mrb[0].mxu0 %v6314
  %v6411 = vpop.f32.mrb[0].mxu0
  %v6412 = vadd.f32 0.0, %v6411
  %v6413 = vpop.f32.mrb[0].mxu0
  %6414 = vmatprep.mubr.f32.mxu0 0.0
  %6415 = vmatmul.mubr.f32.gmra.mrb[0].mxu0 %v6316
  %v6416 = vpop.f32.mrb[0].mxu0
  %v6417 = vadd.f32 0.0, %v6416
  %v6418 = vpop.f32.mrb[0].mxu0
  %6419 = vdwg.mxu0
  %v6420 = vcombine.low %v709, %v711
  %v6421 = vcombine.low %v713, %v737
  %v6422 = vcombine.low %v751, %v759
  %v6423 = vcombine.low %v761, %v744
  %v6425 = vunpack.c.l.s4 1966171168
  %v6426 = vunpack.c.0.s8 %v6425
  %v6427 = vlaneseq
  %v6428 = vshrl.u32 %v6427, 7
  %v6429 = vsub.s32 %v6426, %v6428
  %v6430 = vrot.slane %v6420, %v6429
  %v6432 = vunpack.c.l.s4 1966171168
  %v6433 = vunpack.c.0.s8 %v6432
  %v6434 = vlaneseq
  %v6435 = vshrl.u32 %v6434, 7
  %v6436 = vsub.s32 %v6433, %v6435
  %v6437 = vrot.slane %v6421, %v6436
  %v6439 = vunpack.c.l.s4 1966171168
  %v6440 = vunpack.c.0.s8 %v6439
  %v6441 = vlaneseq
  %v6442 = vshrl.u32 %v6441, 7
  %v6443 = vsub.s32 %v6440, %v6442
  %v6444 = vrot.slane %v6422, %v6443
  %v6446 = vunpack.c.l.s4 1966171168
  %v6447 = vunpack.c.0.s8 %v6446
  %v6448 = vlaneseq
  %v6449 = vshrl.u32 %v6448, 7
  %v6450 = vsub.s32 %v6447, %v6449
  %v6451 = vrot.slane %v6423, %v6450
  %v6452 = vcombine.low %v6430, %v6437
  %v6453 = vcombine.low %v6444, %v6451
  %v6455 = vunpack.c.l.s4 1966171168
  %v6456 = vunpack.c.0.s8 %v6455
  %v6457 = vlaneseq
  %v6458 = vshrl.u32 %v6457, 7
  %v6459 = vsub.s32 %v6456, %v6458
  %v6460 = vrot.slane %v6452, %v6459
  %v6462 = vunpack.c.l.s4 1966171168
  %v6463 = vunpack.c.0.s8 %v6462
  %v6464 = vlaneseq
  %v6465 = vshrl.u32 %v6464, 7
  %v6466 = vsub.s32 %v6463, %v6465
  %v6467 = vrot.slane %v6453, %v6466
  %v6468 = vcombine.low %v6460, %v6467
  %v6470 = vunpack.c.l.s4 1966171168
  %v6471 = vunpack.c.0.s8 %v6470
  %v6472 = vlaneseq
  %v6473 = vshrl.u32 %v6472, 7
  %v6474 = vsub.s32 %v6471, %v6473
  %v6475 = vrot.slane %v758, %v6474
  %v6477 = vunpack.c.l.s4 1966171168
  %v6478 = vunpack.c.0.s8 %v6477
  %v6479 = vlaneseq
  %v6480 = vshrl.u32 %v6479, 7
  %v6481 = vsub.s32 %v6478, %v6480
  %v6482 = vrot.slane %v6475, %v6481
  %v6483 = vsel %vm273, %v6468, 0
  %v6485 = vsel %vm273, %v6482, 0
  %v6488 = vsel %vm273, %v3704, 0
  %v6491 = vsel %vm273, %v3705, 0
  %v6494 = vsel %vm273, %v3706, 0
  %v6497 = vsel %vm273, %v3707, 0
  %v6500 = vsel %vm273, %v3708, 0
  %v6503 = vsel %vm273, %v3709, 0
  %v6506 = vsel %vm273, %v3710, 0
  %v6509 = vsel %vm273, %v3711, 0
  %v6512 = vsel %vm273, %v3712, 0
  %6514 = vmatprep.subr.mxu0 0.0
  %6515 = vmatpush1.xpose.msra.mxu0 %v6488
  %6516 = vmatprep.subr.mxu0 0.0
  %6517 = vmatpush1.xpose.msra.mxu0 %v6491
  %6518 = vmatprep.subr.mxu0 0.0
  %6519 = vmatpush1.xpose.msra.mxu0 %v6494
  %6520 = vmatprep.subr.mxu0 0.0
  %6521 = vmatpush1.xpose.msra.mxu0 %v6497
  %6522 = vmatprep.subr.mxu0 0.0
  %6523 = vmatpush1.xpose.msra.mxu0 %v6500
  %6524 = vmatprep.subr.mxu0 0.0
  %6525 = vmatpush1.xpose.msra.mxu0 %v6503
  %6526 = vmatprep.subr.mxu0 0.0
  %6527 = vmatpush1.xpose.msra.mxu0 %v6506
  %6528 = vmatprep.subr.mxu0 0.0
  %6529 = vmatpush1.xpose.msra.mxu0 %v6509
  %6530 = vmatprep.subr.mxu0 0.0
  %6531 = vmatpush1.xpose.msra.mxu0 %v6512
  %6532 = vmatprep.subr.mxu0 0.0
  %6533 = vmatpush1.xpose.msra.mxu0 0.0
  %6534 = vmatprep.subr.mxu0 0.0
  %6535 = vmatpush1.xpose.msra.mxu0 0.0
  %6536 = vmatprep.subr.mxu0 0.0
  %6537 = vmatpush1.xpose.msra.mxu0 0.0
  %6538 = vmatprep.subr.mxu0 0.0
  %6539 = vmatpush1.xpose.msra.mxu0 0.0
  %6540 = vmatprep.subr.mxu0 0.0
  %6541 = vmatpush1.xpose.msra.mxu0 0.0
  %6542 = vmatprep.subr.mxu0 0.0
  %6543 = vmatpush1.xpose.msra.mxu0 0.0
  %6544 = vmatprep.subr.mxu0 0.0
  %6545 = vmatpush1.xpose.msra.mxu0 0.0
  %6546 = vmatprep.subr.mxu0 0.0
  %6547 = vmatpush1.xpose.msra.mxu0 0.0
  %6548 = vmatprep.subr.mxu0 0.0
  %6549 = vmatpush1.xpose.msra.mxu0 0.0
  %6550 = vmatprep.subr.mxu0 0.0
  %6551 = vmatpush1.xpose.msra.mxu0 0.0
  %6552 = vmatprep.subr.mxu0 0.0
  %6553 = vmatpush1.xpose.msra.mxu0 0.0
  %6554 = vmatprep.subr.mxu0 0.0
  %6555 = vmatpush1.xpose.msra.mxu0 0.0
  %6556 = vmatprep.subr.mxu0 0.0
  %6557 = vmatpush1.xpose.msra.mxu0 0.0
  %6558 = vmatprep.subr.mxu0 0.0
  %6559 = vmatpush1.xpose.msra.mxu0 0.0
  %6560 = vmatprep.subr.mxu0 0.0
  %6561 = vmatpush1.xpose.msra.mxu0 0.0
  %6562 = vmatprep.subr.mxu0 0.0
  %6563 = vmatpush1.xpose.msra.mxu0 0.0
  %6564 = vmatprep.subr.mxu0 0.0
  %6565 = vmatpush1.xpose.msra.mxu0 0.0
  %6566 = vmatprep.subr.mxu0 0.0
  %6567 = vmatpush1.xpose.msra.mxu0 0.0
  %6568 = vmatprep.subr.mxu0 0.0
  %6569 = vmatpush1.xpose.msra.mxu0 0.0
  %6570 = vmatprep.subr.mxu0 0.0
  %6571 = vmatpush1.xpose.msra.mxu0 0.0
  %6572 = vmatprep.subr.mxu0 0.0
  %6573 = vmatpush1.xpose.msra.mxu0 0.0
  %6574 = vmatprep.subr.mxu0 0.0
  %6575 = vmatpush1.xpose.msra.mxu0 0.0
  %6576 = vmatprep.subr.mxu0 0.0
  %6577 = vmatpush1.xpose.msra.mxu0 0.0
  %6578 = vmatprep.mubr.f32.mxu0 0.0
  %6579 = vmatmul.mubr.f32.gmra.mrb[0].mxu0 %v6483
  %v6580 = vpop.f32.mrb[0].mxu0
  %v6581 = vadd.f32 0.0, %v6580
  %v6582 = vpop.f32.mrb[0].mxu0
  %6583 = vmatprep.mubr.f32.mxu0 0.0
  %6584 = vmatmul.mubr.f32.gmra.mrb[0].mxu0 %v6485
  %v6585 = vpop.f32.mrb[0].mxu0
  %v6586 = vadd.f32 0.0, %v6585
  %v6587 = vpop.f32.mrb[0].mxu0
  %6588 = vdwg.mxu0
  %v6589 = vcombine.low %v760, %v762
  %v6590 = vcombine.low %v786, %v800
  %v6591 = vcombine.low %v808, %v810
  %v6592 = vcombine.low %v793, %v807
  %v6594 = vunpack.c.l.s4 1966171168
  %v6595 = vunpack.c.0.s8 %v6594
  %v6596 = vlaneseq
  %v6597 = vshrl.u32 %v6596, 7
  %v6598 = vsub.s32 %v6595, %v6597
  %v6599 = vrot.slane %v6589, %v6598
  %v6601 = vunpack.c.l.s4 1966171168
  %v6602 = vunpack.c.0.s8 %v6601
  %v6603 = vlaneseq
  %v6604 = vshrl.u32 %v6603, 7
  %v6605 = vsub.s32 %v6602, %v6604
  %v6606 = vrot.slane %v6590, %v6605
  %v6608 = vunpack.c.l.s4 1966171168
  %v6609 = vunpack.c.0.s8 %v6608
  %v6610 = vlaneseq
  %v6611 = vshrl.u32 %v6610, 7
  %v6612 = vsub.s32 %v6609, %v6611
  %v6613 = vrot.slane %v6591, %v6612
  %v6615 = vunpack.c.l.s4 1966171168
  %v6616 = vunpack.c.0.s8 %v6615
  %v6617 = vlaneseq
  %v6618 = vshrl.u32 %v6617, 7
  %v6619 = vsub.s32 %v6616, %v6618
  %v6620 = vrot.slane %v6592, %v6619
  %v6621 = vcombine.low %v6599, %v6606
  %v6622 = vcombine.low %v6613, %v6620
  %v6624 = vunpack.c.l.s4 1966171168
  %v6625 = vunpack.c.0.s8 %v6624
  %v6626 = vlaneseq
  %v6627 = vshrl.u32 %v6626, 7
  %v6628 = vsub.s32 %v6625, %v6627
  %v6629 = vrot.slane %v6621, %v6628
  %v6631 = vunpack.c.l.s4 1966171168
  %v6632 = vunpack.c.0.s8 %v6631
  %v6633 = vlaneseq
  %v6634 = vshrl.u32 %v6633, 7
  %v6635 = vsub.s32 %v6632, %v6634
  %v6636 = vrot.slane %v6622, %v6635
  %v6637 = vcombine.low %v6629, %v6636
  %v6639 = vunpack.c.l.s4 1966171168
  %v6640 = vunpack.c.0.s8 %v6639
  %v6641 = vlaneseq
  %v6642 = vshrl.u32 %v6641, 7
  %v6643 = vsub.s32 %v6640, %v6642
  %v6644 = vrot.slane %v809, %v6643
  %v6646 = vunpack.c.l.s4 1966171168
  %v6647 = vunpack.c.0.s8 %v6646
  %v6648 = vlaneseq
  %v6649 = vshrl.u32 %v6648, 7
  %v6650 = vsub.s32 %v6647, %v6649
  %v6651 = vrot.slane %v6644, %v6650
  %v6652 = vsel %vm273, %v6637, 0
  %v6654 = vsel %vm273, %v6651, 0
  %v6657 = vsel %vm273, %v3713, 0
  %v6660 = vsel %vm273, %v3714, 0
  %v6663 = vsel %vm273, %v3715, 0
  %v6666 = vsel %vm273, %v3716, 0
  %v6669 = vsel %vm273, %v3717, 0
  %v6672 = vsel %vm273, %v3718, 0
  %v6675 = vsel %vm273, %v3719, 0
  %v6678 = vsel %vm273, %v3720, 0
  %v6681 = vsel %vm273, %v3721, 0
  %6683 = vmatprep.subr.mxu0 0.0
  %6684 = vmatpush1.xpose.msra.mxu0 %v6657
  %6685 = vmatprep.subr.mxu0 0.0
  %6686 = vmatpush1.xpose.msra.mxu0 %v6660
  %6687 = vmatprep.subr.mxu0 0.0
  %6688 = vmatpush1.xpose.msra.mxu0 %v6663
  %6689 = vmatprep.subr.mxu0 0.0
  %6690 = vmatpush1.xpose.msra.mxu0 %v6666
  %6691 = vmatprep.subr.mxu0 0.0
  %6692 = vmatpush1.xpose.msra.mxu0 %v6669
  %6693 = vmatprep.subr.mxu0 0.0
  %6694 = vmatpush1.xpose.msra.mxu0 %v6672
  %6695 = vmatprep.subr.mxu0 0.0
  %6696 = vmatpush1.xpose.msra.mxu0 %v6675
  %6697 = vmatprep.subr.mxu0 0.0
  %6698 = vmatpush1.xpose.msra.mxu0 %v6678
  %6699 = vmatprep.subr.mxu0 0.0
  %6700 = vmatpush1.xpose.msra.mxu0 %v6681
  %6701 = vmatprep.subr.mxu0 0.0
  %6702 = vmatpush1.xpose.msra.mxu0 0.0
  %6703 = vmatprep.subr.mxu0 0.0
  %6704 = vmatpush1.xpose.msra.mxu0 0.0
  %6705 = vmatprep.subr.mxu0 0.0
  %6706 = vmatpush1.xpose.msra.mxu0 0.0
  %6707 = vmatprep.subr.mxu0 0.0
  %6708 = vmatpush1.xpose.msra.mxu0 0.0
  %6709 = vmatprep.subr.mxu0 0.0
  %6710 = vmatpush1.xpose.msra.mxu0 0.0
  %6711 = vmatprep.subr.mxu0 0.0
  %6712 = vmatpush1.xpose.msra.mxu0 0.0
  %6713 = vmatprep.subr.mxu0 0.0
  %6714 = vmatpush1.xpose.msra.mxu0 0.0
  %6715 = vmatprep.subr.mxu0 0.0
  %6716 = vmatpush1.xpose.msra.mxu0 0.0
  %6717 = vmatprep.subr.mxu0 0.0
  %6718 = vmatpush1.xpose.msra.mxu0 0.0
  %6719 = vmatprep.subr.mxu0 0.0
  %6720 = vmatpush1.xpose.msra.mxu0 0.0
  %6721 = vmatprep.subr.mxu0 0.0
  %6722 = vmatpush1.xpose.msra.mxu0 0.0
  %6723 = vmatprep.subr.mxu0 0.0
  %6724 = vmatpush1.xpose.msra.mxu0 0.0
  %6725 = vmatprep.subr.mxu0 0.0
  %6726 = vmatpush1.xpose.msra.mxu0 0.0
  %6727 = vmatprep.subr.mxu0 0.0
  %6728 = vmatpush1.xpose.msra.mxu0 0.0
  %6729 = vmatprep.subr.mxu0 0.0
  %6730 = vmatpush1.xpose.msra.mxu0 0.0
  %6731 = vmatprep.subr.mxu0 0.0
  %6732 = vmatpush1.xpose.msra.mxu0 0.0
  %6733 = vmatprep.subr.mxu0 0.0
  %6734 = vmatpush1.xpose.msra.mxu0 0.0
  %6735 = vmatprep.subr.mxu0 0.0
  %6736 = vmatpush1.xpose.msra.mxu0 0.0
  %6737 = vmatprep.subr.mxu0 0.0
  %6738 = vmatpush1.xpose.msra.mxu0 0.0
  %6739 = vmatprep.subr.mxu0 0.0
  %6740 = vmatpush1.xpose.msra.mxu0 0.0
  %6741 = vmatprep.subr.mxu0 0.0
  %6742 = vmatpush1.xpose.msra.mxu0 0.0
  %6743 = vmatprep.subr.mxu0 0.0
  %6744 = vmatpush1.xpose.msra.mxu0 0.0
  %6745 = vmatprep.subr.mxu0 0.0
  %6746 = vmatpush1.xpose.msra.mxu0 0.0
  %6747 = vmatprep.mubr.f32.mxu0 0.0
  %6748 = vmatmul.mubr.f32.gmra.mrb[0].mxu0 %v6652
  %v6749 = vpop.f32.mrb[0].mxu0
  %v6750 = vadd.f32 0.0, %v6749
  %v6751 = vpop.f32.mrb[0].mxu0
  %6752 = vmatprep.mubr.f32.mxu0 0.0
  %6753 = vmatmul.mubr.f32.gmra.mrb[0].mxu0 %v6654
  %v6754 = vpop.f32.mrb[0].mxu0
  %v6755 = vadd.f32 0.0, %v6754
  %v6756 = vpop.f32.mrb[0].mxu0
  %6757 = vdwg.mxu0
  %v6758 = vcombine.low %v811, %v835
  %v6759 = vcombine.low %v849, %v857
  %v6760 = vcombine.low %v859, %v842
  %v6761 = vcombine.low %v856, %v858
  %v6763 = vunpack.c.l.s4 1966171168
  %v6764 = vunpack.c.0.s8 %v6763
  %v6765 = vlaneseq
  %v6766 = vshrl.u32 %v6765, 7
  %v6767 = vsub.s32 %v6764, %v6766
  %v6768 = vrot.slane %v6758, %v6767
  %v6770 = vunpack.c.l.s4 1966171168
  %v6771 = vunpack.c.0.s8 %v6770
  %v6772 = vlaneseq
  %v6773 = vshrl.u32 %v6772, 7
  %v6774 = vsub.s32 %v6771, %v6773
  %v6775 = vrot.slane %v6759, %v6774
  %v6777 = vunpack.c.l.s4 1966171168
  %v6778 = vunpack.c.0.s8 %v6777
  %v6779 = vlaneseq
  %v6780 = vshrl.u32 %v6779, 7
  %v6781 = vsub.s32 %v6778, %v6780
  %v6782 = vrot.slane %v6760, %v6781
  %v6784 = vunpack.c.l.s4 1966171168
  %v6785 = vunpack.c.0.s8 %v6784
  %v6786 = vlaneseq
  %v6787 = vshrl.u32 %v6786, 7
  %v6788 = vsub.s32 %v6785, %v6787
  %v6789 = vrot.slane %v6761, %v6788
  %v6790 = vcombine.low %v6768, %v6775
  %v6791 = vcombine.low %v6782, %v6789
  %v6793 = vunpack.c.l.s4 1966171168
  %v6794 = vunpack.c.0.s8 %v6793
  %v6795 = vlaneseq
  %v6796 = vshrl.u32 %v6795, 7
  %v6797 = vsub.s32 %v6794, %v6796
  %v6798 = vrot.slane %v6790, %v6797
  %v6800 = vunpack.c.l.s4 1966171168
  %v6801 = vunpack.c.0.s8 %v6800
  %v6802 = vlaneseq
  %v6803 = vshrl.u32 %v6802, 7
  %v6804 = vsub.s32 %v6801, %v6803
  %v6805 = vrot.slane %v6791, %v6804
  %v6806 = vcombine.low %v6798, %v6805
  %v6808 = vunpack.c.l.s4 1966171168
  %v6809 = vunpack.c.0.s8 %v6808
  %v6810 = vlaneseq
  %v6811 = vshrl.u32 %v6810, 7
  %v6812 = vsub.s32 %v6809, %v6811
  %v6813 = vrot.slane %v860, %v6812
  %v6815 = vunpack.c.l.s4 1966171168
  %v6816 = vunpack.c.0.s8 %v6815
  %v6817 = vlaneseq
  %v6818 = vshrl.u32 %v6817, 7
  %v6819 = vsub.s32 %v6816, %v6818
  %v6820 = vrot.slane %v6813, %v6819
  %v6821 = vsel %vm273, %v6806, 0
  %v6823 = vsel %vm273, %v6820, 0
  %v6826 = vsel %vm273, %v3722, 0
  %v6829 = vsel %vm273, %v3723, 0
  %v6832 = vsel %vm273, %v3724, 0
  %v6835 = vsel %vm273, %v3725, 0
  %v6838 = vsel %vm273, %v3726, 0
  %v6841 = vsel %vm273, %v3727, 0
  %v6844 = vsel %vm273, %v3728, 0
  %v6847 = vsel %vm273, %v3729, 0
  %v6850 = vsel %vm273, %v3730, 0
  %6852 = vmatprep.subr.mxu0 0.0
  %6853 = vmatpush1.xpose.msra.mxu0 %v6826
  %6854 = vmatprep.subr.mxu0 0.0
  %6855 = vmatpush1.xpose.msra.mxu0 %v6829
  %6856 = vmatprep.subr.mxu0 0.0
  %6857 = vmatpush1.xpose.msra.mxu0 %v6832
  %6858 = vmatprep.subr.mxu0 0.0
  %6859 = vmatpush1.xpose.msra.mxu0 %v6835
  %6860 = vmatprep.subr.mxu0 0.0
  %6861 = vmatpush1.xpose.msra.mxu0 %v6838
  %6862 = vmatprep.subr.mxu0 0.0
  %6863 = vmatpush1.xpose.msra.mxu0 %v6841
  %6864 = vmatprep.subr.mxu0 0.0
  %6865 = vmatpush1.xpose.msra.mxu0 %v6844
  %6866 = vmatprep.subr.mxu0 0.0
  %6867 = vmatpush1.xpose.msra.mxu0 %v6847
  %6868 = vmatprep.subr.mxu0 0.0
  %6869 = vmatpush1.xpose.msra.mxu0 %v6850
  %6870 = vmatprep.subr.mxu0 0.0
  %6871 = vmatpush1.xpose.msra.mxu0 0.0
  %6872 = vmatprep.subr.mxu0 0.0
  %6873 = vmatpush1.xpose.msra.mxu0 0.0
  %6874 = vmatprep.subr.mxu0 0.0
  %6875 = vmatpush1.xpose.msra.mxu0 0.0
  %6876 = vmatprep.subr.mxu0 0.0
  %6877 = vmatpush1.xpose.msra.mxu0 0.0
  %6878 = vmatprep.subr.mxu0 0.0
  %6879 = vmatpush1.xpose.msra.mxu0 0.0
  %6880 = vmatprep.subr.mxu0 0.0
  %6881 = vmatpush1.xpose.msra.mxu0 0.0
  %6882 = vmatprep.subr.mxu0 0.0
  %6883 = vmatpush1.xpose.msra.mxu0 0.0
  %6884 = vmatprep.subr.mxu0 0.0
  %6885 = vmatpush1.xpose.msra.mxu0 0.0
  %6886 = vmatprep.subr.mxu0 0.0
  %6887 = vmatpush1.xpose.msra.mxu0 0.0
  %6888 = vmatprep.subr.mxu0 0.0
  %6889 = vmatpush1.xpose.msra.mxu0 0.0
  %6890 = vmatprep.subr.mxu0 0.0
  %6891 = vmatpush1.xpose.msra.mxu0 0.0
  %6892 = vmatprep.subr.mxu0 0.0
  %6893 = vmatpush1.xpose.msra.mxu0 0.0
  %6894 = vmatprep.subr.mxu0 0.0
  %6895 = vmatpush1.xpose.msra.mxu0 0.0
  %6896 = vmatprep.subr.mxu0 0.0
  %6897 = vmatpush1.xpose.msra.mxu0 0.0
  %6898 = vmatprep.subr.mxu0 0.0
  %6899 = vmatpush1.xpose.msra.mxu0 0.0
  %6900 = vmatprep.subr.mxu0 0.0
  %6901 = vmatpush1.xpose.msra.mxu0 0.0
  %6902 = vmatprep.subr.mxu0 0.0
  %6903 = vmatpush1.xpose.msra.mxu0 0.0
  %6904 = vmatprep.subr.mxu0 0.0
  %6905 = vmatpush1.xpose.msra.mxu0 0.0
  %6906 = vmatprep.subr.mxu0 0.0
  %6907 = vmatpush1.xpose.msra.mxu0 0.0
  %6908 = vmatprep.subr.mxu0 0.0
  %6909 = vmatpush1.xpose.msra.mxu0 0.0
  %6910 = vmatprep.subr.mxu0 0.0
  %6911 = vmatpush1.xpose.msra.mxu0 0.0
  %6912 = vmatprep.subr.mxu0 0.0
  %6913 = vmatpush1.xpose.msra.mxu0 0.0
  %6914 = vmatprep.subr.mxu0 0.0
  %6915 = vmatpush1.xpose.msra.mxu0 0.0
  %6916 = vmatprep.mubr.f32.mxu0 0.0
  %6917 = vmatmul.mubr.f32.gmra.mrb[0].mxu0 %v6821
  %v6918 = vpop.f32.mrb[0].mxu0
  %v6919 = vadd.f32 0.0, %v6918
  %v6920 = vpop.f32.mrb[0].mxu0
  %6921 = vmatprep.mubr.f32.mxu0 0.0
  %6922 = vmatmul.mubr.f32.gmra.mrb[0].mxu0 %v6823
  %v6923 = vpop.f32.mrb[0].mxu0
  %v6924 = vadd.f32 0.0, %v6923
  %v6925 = vpop.f32.mrb[0].mxu0
  %6926 = vdwg.mxu0
  %v6927 = vmul.f32 %v5736, 0.35355338
  %v6928 = vmul.f32 %v5741, 0.35355338
  %v6929 = vmul.f32 %v5905, 0.35355338
  %v6930 = vmul.f32 %v5910, 0.35355338
  %v6931 = vmul.f32 %v6074, 0.35355338
  %v6932 = vmul.f32 %v6079, 0.35355338
  %v6933 = vmul.f32 %v6243, 0.35355338
  %v6934 = vmul.f32 %v6248, 0.35355338
  %v6935 = vmul.f32 %v6412, 0.35355338
  %v6936 = vmul.f32 %v6417, 0.35355338
  %v6937 = vmul.f32 %v6581, 0.35355338
  %v6938 = vmul.f32 %v6586, 0.35355338
  %v6939 = vmul.f32 %v6750, 0.35355338
  %v6940 = vmul.f32 %v6755, 0.35355338
  %v6941 = vmul.f32 %v6919, 0.35355338
  %v6942 = vmul.f32 %v6924, 0.35355338
  %vm6943 = vcmask 588800
  %v6944 = vsel %vm6943, %v6927, -inf
  %6945 = vmax.xlane.f32.xlu0 %v6944
  %v6946 = vpop.xlane.xlu0 %6945
  %vm6947 = vcmask 581632
  %v6948 = vsel %vm6947, %v6928, -inf
  %6949 = vmax.xlane.f32.xlu0 %v6948
  %v6950 = vpop.xlane.xlu0 %6949
  %v6951 = vsel %vm6943, %v6929, -inf
  %6952 = vmax.xlane.f32.xlu0 %v6951
  %v6953 = vpop.xlane.xlu0 %6952
  %v6954 = vsel %vm6947, %v6930, -inf
  %6955 = vmax.xlane.f32.xlu0 %v6954
  %v6956 = vpop.xlane.xlu0 %6955
  %v6957 = vsel %vm6943, %v6931, -inf
  %6958 = vmax.xlane.f32.xlu0 %v6957
  %v6959 = vpop.xlane.xlu0 %6958
  %v6960 = vsel %vm6947, %v6932, -inf
  %6961 = vmax.xlane.f32.xlu0 %v6960
  %v6962 = vpop.xlane.xlu0 %6961
  %v6963 = vsel %vm6943, %v6933, -inf
  %6964 = vmax.xlane.f32.xlu0 %v6963
  %v6965 = vpop.xlane.xlu0 %6964
  %v6966 = vsel %vm6947, %v6934, -inf
  %6967 = vmax.xlane.f32.xlu0 %v6966
  %v6968 = vpop.xlane.xlu0 %6967
  %v6969 = vsel %vm6943, %v6935, -inf
  %6970 = vmax.xlane.f32.xlu0 %v6969
  %v6971 = vpop.xlane.xlu0 %6970
  %v6972 = vsel %vm6947, %v6936, -inf
  %6973 = vmax.xlane.f32.xlu0 %v6972
  %v6974 = vpop.xlane.xlu0 %6973
  %v6975 = vsel %vm6943, %v6937, -inf
  %6976 = vmax.xlane.f32.xlu0 %v6975
  %v6977 = vpop.xlane.xlu0 %6976
  %v6978 = vsel %vm6947, %v6938, -inf
  %6979 = vmax.xlane.f32.xlu0 %v6978
  %v6980 = vpop.xlane.xlu0 %6979
  %v6981 = vsel %vm6943, %v6939, -inf
  %6982 = vmax.xlane.f32.xlu0 %v6981
  %v6983 = vpop.xlane.xlu0 %6982
  %v6984 = vsel %vm6947, %v6940, -inf
  %6985 = vmax.xlane.f32.xlu0 %v6984
  %v6986 = vpop.xlane.xlu0 %6985
  %v6987 = vsel %vm6943, %v6941, -inf
  %6988 = vmax.xlane.f32.xlu0 %v6987
  %v6989 = vpop.xlane.xlu0 %6988
  %v6990 = vsel %vm6947, %v6942, -inf
  %6991 = vmax.xlane.f32.xlu0 %v6990
  %v6992 = vpop.xlane.xlu0 %6991
  %v6993 = vsub.f32 %v6927, %v6946
  %v6994 = vsub.f32 %v6928, %v6950
  %v6995 = vsub.f32 %v6929, %v6953
  %v6996 = vsub.f32 %v6930, %v6956
  %v6997 = vsub.f32 %v6931, %v6959
  %v6998 = vsub.f32 %v6932, %v6962
  %v6999 = vsub.f32 %v6933, %v6965
  %v7000 = vsub.f32 %v6934, %v6968
  %v7001 = vsub.f32 %v6935, %v6971
  %v7002 = vsub.f32 %v6936, %v6974
  %v7003 = vsub.f32 %v6937, %v6977
  %v7004 = vsub.f32 %v6938, %v6980
  %v7005 = vsub.f32 %v6939, %v6983
  %v7006 = vsub.f32 %v6940, %v6986
  %v7007 = vsub.f32 %v6941, %v6989
  %v7008 = vsub.f32 %v6942, %v6992
  %v7009 = vmul.f32 %v6993, 1.442695
  %v7010 = vpow.pop %v7009
  %v7011 = vmul.f32 %v6994, 1.442695
  %v7012 = vpow.pop %v7011
  %v7013 = vmul.f32 %v6995, 1.442695
  %v7014 = vpow.pop %v7013
  %v7015 = vmul.f32 %v6996, 1.442695
  %v7016 = vpow.pop %v7015
  %v7017 = vmul.f32 %v6997, 1.442695
  %v7018 = vpow.pop %v7017
  %v7019 = vmul.f32 %v6998, 1.442695
  %v7020 = vpow.pop %v7019
  %v7021 = vmul.f32 %v6999, 1.442695
  %v7022 = vpow.pop %v7021
  %v7023 = vmul.f32 %v7000, 1.442695
  %v7024 = vpow.pop %v7023
  %v7025 = vmul.f32 %v7001, 1.442695
  %v7026 = vpow.pop %v7025
  %v7027 = vmul.f32 %v7002, 1.442695
  %v7028 = vpow.pop %v7027
  %v7029 = vmul.f32 %v7003, 1.442695
  %v7030 = vpow.pop %v7029
  %v7031 = vmul.f32 %v7004, 1.442695
  %v7032 = vpow.pop %v7031
  %v7033 = vmul.f32 %v7005, 1.442695
  %v7034 = vpow.pop %v7033
  %v7035 = vmul.f32 %v7006, 1.442695
  %v7036 = vpow.pop %v7035
  %v7037 = vmul.f32 %v7007, 1.442695
  %v7038 = vpow.pop %v7037
  %v7039 = vmul.f32 %v7008, 1.442695
  %v7040 = vpow.pop %v7039
  %v7042 = vsel %vm6943, %v7010, 0
  %v7045 = vsel %vm6943, %v7012, 0
  %7047 = vmatprep.subr.mxu0 0.0
  %7048 = vmatpush1.msra.mxu0 %v5503
  %7049 = vmatprep.subr.mxu0 0.0
  %7050 = vmatpush1.msra.mxu0 %v5504
  %7051 = vmatprep.subr.mxu0 0.0
  %7052 = vmatpush1.msra.mxu0 %v5505
  %7053 = vmatprep.subr.mxu0 0.0
  %7054 = vmatpush1.msra.mxu0 %v5506
  %7055 = vmatprep.subr.mxu0 0.0
  %7056 = vmatpush1.msra.mxu0 %v5507
  %7057 = vmatprep.subr.mxu0 0.0
  %7058 = vmatpush1.msra.mxu0 %v5508
  %7059 = vmatprep.subr.mxu0 0.0
  %7060 = vmatpush1.msra.mxu0 %v5509
  %7061 = vmatprep.subr.mxu0 0.0
  %7062 = vmatpush1.msra.mxu0 %v5510
  %7063 = vmatprep.subr.mxu0 0.0
  %7064 = vmatpush1.msra.mxu0 %v5511
  %7065 = vmatprep.subr.mxu0 0.0
  %7066 = vmatpush1.msra.mxu0 0.0
  %7067 = vmatprep.subr.mxu0 0.0
  %7068 = vmatpush1.msra.mxu0 0.0
  %7069 = vmatprep.subr.mxu0 0.0
  %7070 = vmatpush1.msra.mxu0 0.0
  %7071 = vmatprep.subr.mxu0 0.0
  %7072 = vmatpush1.msra.mxu0 0.0
  %7073 = vmatprep.subr.mxu0 0.0
  %7074 = vmatpush1.msra.mxu0 0.0
  %7075 = vmatprep.subr.mxu0 0.0
  %7076 = vmatpush1.msra.mxu0 0.0
  %7077 = vmatprep.subr.mxu0 0.0
  %7078 = vmatpush1.msra.mxu0 0.0
  %7079 = vmatprep.subr.mxu0 0.0
  %7080 = vmatpush1.msra.mxu0 0.0
  %7081 = vmatprep.subr.mxu0 0.0
  %7082 = vmatpush1.msra.mxu0 0.0
  %7083 = vmatprep.subr.mxu0 0.0
  %7084 = vmatpush1.msra.mxu0 0.0
  %7085 = vmatprep.subr.mxu0 0.0
  %7086 = vmatpush1.msra.mxu0 0.0
  %7087 = vmatprep.subr.mxu0 0.0
  %7088 = vmatpush1.msra.mxu0 0.0
  %7089 = vmatprep.subr.mxu0 0.0
  %7090 = vmatpush1.msra.mxu0 0.0
  %7091 = vmatprep.subr.mxu0 0.0
  %7092 = vmatpush1.msra.mxu0 0.0
  %7093 = vmatprep.subr.mxu0 0.0
  %7094 = vmatpush1.msra.mxu0 0.0
  %7095 = vmatprep.subr.mxu0 0.0
  %7096 = vmatpush1.msra.mxu0 0.0
  %7097 = vmatprep.subr.mxu0 0.0
  %7098 = vmatpush1.msra.mxu0 0.0
  %7099 = vmatprep.subr.mxu0 0.0
  %7100 = vmatpush1.msra.mxu0 0.0
  %7101 = vmatprep.subr.mxu0 0.0
  %7102 = vmatpush1.msra.mxu0 0.0
  %7103 = vmatprep.subr.mxu0 0.0
  %7104 = vmatpush1.msra.mxu0 0.0
  %7105 = vmatprep.subr.mxu0 0.0
  %7106 = vmatpush1.msra.mxu0 0.0
  %7107 = vmatprep.subr.mxu0 0.0
  %7108 = vmatpush1.msra.mxu0 0.0
  %7109 = vmatprep.subr.mxu0 0.0
  %7110 = vmatpush1.msra.mxu0 0.0
  %7111 = vmatprep.mubr.f32.mxu0 0.0
  %7112 = vmatmul.mubr.f32.gmra.mrb[0].mxu0 %v7042
  %v7113 = vpop.f32.mrb[0].mxu0
  %v7114 = vadd.f32 0.0, %v7113
  %v7115 = vpop.f32.mrb[0].mxu0
  %7116 = vmatprep.mubr.f32.mxu0 0.0
  %7117 = vmatmul.mubr.f32.gmra.mrb[0].mxu0 %v7045
  %v7118 = vpop.f32.mrb[0].mxu0
  %v7119 = vadd.f32 0.0, %v7118
  %v7120 = vpop.f32.mrb[0].mxu0
  %7121 = vdwg.mxu0
  %v7123 = vsel %vm6943, %v7014, 0
  %v7126 = vsel %vm6943, %v7016, 0
  %7128 = vmatprep.subr.mxu0 0.0
  %7129 = vmatpush1.msra.mxu0 %v5512
  %7130 = vmatprep.subr.mxu0 0.0
  %7131 = vmatpush1.msra.mxu0 %v5513
  %7132 = vmatprep.subr.mxu0 0.0
  %7133 = vmatpush1.msra.mxu0 %v5514
  %7134 = vmatprep.subr.mxu0 0.0
  %7135 = vmatpush1.msra.mxu0 %v5515
  %7136 = vmatprep.subr.mxu0 0.0
  %7137 = vmatpush1.msra.mxu0 %v5516
  %7138 = vmatprep.subr.mxu0 0.0
  %7139 = vmatpush1.msra.mxu0 %v5517
  %7140 = vmatprep.subr.mxu0 0.0
  %7141 = vmatpush1.msra.mxu0 %v5518
  %7142 = vmatprep.subr.mxu0 0.0
  %7143 = vmatpush1.msra.mxu0 %v5519
  %7144 = vmatprep.subr.mxu0 0.0
  %7145 = vmatpush1.msra.mxu0 %v5520
  %7146 = vmatprep.subr.mxu0 0.0
  %7147 = vmatpush1.msra.mxu0 0.0
  %7148 = vmatprep.subr.mxu0 0.0
  %7149 = vmatpush1.msra.mxu0 0.0
  %7150 = vmatprep.subr.mxu0 0.0
  %7151 = vmatpush1.msra.mxu0 0.0
  %7152 = vmatprep.subr.mxu0 0.0
  %7153 = vmatpush1.msra.mxu0 0.0
  %7154 = vmatprep.subr.mxu0 0.0
  %7155 = vmatpush1.msra.mxu0 0.0
  %7156 = vmatprep.subr.mxu0 0.0
  %7157 = vmatpush1.msra.mxu0 0.0
  %7158 = vmatprep.subr.mxu0 0.0
  %7159 = vmatpush1.msra.mxu0 0.0
  %7160 = vmatprep.subr.mxu0 0.0
  %7161 = vmatpush1.msra.mxu0 0.0
  %7162 = vmatprep.subr.mxu0 0.0
  %7163 = vmatpush1.msra.mxu0 0.0
  %7164 = vmatprep.subr.mxu0 0.0
  %7165 = vmatpush1.msra.mxu0 0.0
  %7166 = vmatprep.subr.mxu0 0.0
  %7167 = vmatpush1.msra.mxu0 0.0
  %7168 = vmatprep.subr.mxu0 0.0
  %7169 = vmatpush1.msra.mxu0 0.0
  %7170 = vmatprep.subr.mxu0 0.0
  %7171 = vmatpush1.msra.mxu0 0.0
  %7172 = vmatprep.subr.mxu0 0.0
  %7173 = vmatpush1.msra.mxu0 0.0
  %7174 = vmatprep.subr.mxu0 0.0
  %7175 = vmatpush1.msra.mxu0 0.0
  %7176 = vmatprep.subr.mxu0 0.0
  %7177 = vmatpush1.msra.mxu0 0.0
  %7178 = vmatprep.subr.mxu0 0.0
  %7179 = vmatpush1.msra.mxu0 0.0
  %7180 = vmatprep.subr.mxu0 0.0
  %7181 = vmatpush1.msra.mxu0 0.0
  %7182 = vmatprep.subr.mxu0 0.0
  %7183 = vmatpush1.msra.mxu0 0.0
  %7184 = vmatprep.subr.mxu0 0.0
  %7185 = vmatpush1.msra.mxu0 0.0
  %7186 = vmatprep.subr.mxu0 0.0
  %7187 = vmatpush1.msra.mxu0 0.0
  %7188 = vmatprep.subr.mxu0 0.0
  %7189 = vmatpush1.msra.mxu0 0.0
  %7190 = vmatprep.subr.mxu0 0.0
  %7191 = vmatpush1.msra.mxu0 0.0
  %7192 = vmatprep.mubr.f32.mxu0 0.0
  %7193 = vmatmul.mubr.f32.gmra.mrb[0].mxu0 %v7123
  %v7194 = vpop.f32.mrb[0].mxu0
  %v7195 = vadd.f32 0.0, %v7194
  %v7196 = vpop.f32.mrb[0].mxu0
  %7197 = vmatprep.mubr.f32.mxu0 0.0
  %7198 = vmatmul.mubr.f32.gmra.mrb[0].mxu0 %v7126
  %v7199 = vpop.f32.mrb[0].mxu0
  %v7200 = vadd.f32 0.0, %v7199
  %v7201 = vpop.f32.mrb[0].mxu0
  %7202 = vdwg.mxu0
  %v7204 = vsel %vm6943, %v7018, 0
  %v7207 = vsel %vm6943, %v7020, 0
  %7209 = vmatprep.subr.mxu0 0.0
  %7210 = vmatpush1.msra.mxu0 %v5521
  %7211 = vmatprep.subr.mxu0 0.0
  %7212 = vmatpush1.msra.mxu0 %v5522
  %7213 = vmatprep.subr.mxu0 0.0
  %7214 = vmatpush1.msra.mxu0 %v5523
  %7215 = vmatprep.subr.mxu0 0.0
  %7216 = vmatpush1.msra.mxu0 %v5524
  %7217 = vmatprep.subr.mxu0 0.0
  %7218 = vmatpush1.msra.mxu0 %v5525
  %7219 = vmatprep.subr.mxu0 0.0
  %7220 = vmatpush1.msra.mxu0 %v5526
  %7221 = vmatprep.subr.mxu0 0.0
  %7222 = vmatpush1.msra.mxu0 %v5527
  %7223 = vmatprep.subr.mxu0 0.0
  %7224 = vmatpush1.msra.mxu0 %v5528
  %7225 = vmatprep.subr.mxu0 0.0
  %7226 = vmatpush1.msra.mxu0 %v5529
  %7227 = vmatprep.subr.mxu0 0.0
  %7228 = vmatpush1.msra.mxu0 0.0
  %7229 = vmatprep.subr.mxu0 0.0
  %7230 = vmatpush1.msra.mxu0 0.0
  %7231 = vmatprep.subr.mxu0 0.0
  %7232 = vmatpush1.msra.mxu0 0.0
  %7233 = vmatprep.subr.mxu0 0.0
  %7234 = vmatpush1.msra.mxu0 0.0
  %7235 = vmatprep.subr.mxu0 0.0
  %7236 = vmatpush1.msra.mxu0 0.0
  %7237 = vmatprep.subr.mxu0 0.0
  %7238 = vmatpush1.msra.mxu0 0.0
  %7239 = vmatprep.subr.mxu0 0.0
  %7240 = vmatpush1.msra.mxu0 0.0
  %7241 = vmatprep.subr.mxu0 0.0
  %7242 = vmatpush1.msra.mxu0 0.0
  %7243 = vmatprep.subr.mxu0 0.0
  %7244 = vmatpush1.msra.mxu0 0.0
  %7245 = vmatprep.subr.mxu0 0.0
  %7246 = vmatpush1.msra.mxu0 0.0
  %7247 = vmatprep.subr.mxu0 0.0
  %7248 = vmatpush1.msra.mxu0 0.0
  %7249 = vmatprep.subr.mxu0 0.0
  %7250 = vmatpush1.msra.mxu0 0.0
  %7251 = vmatprep.subr.mxu0 0.0
  %7252 = vmatpush1.msra.mxu0 0.0
  %7253 = vmatprep.subr.mxu0 0.0
  %7254 = vmatpush1.msra.mxu0 0.0
  %7255 = vmatprep.subr.mxu0 0.0
  %7256 = vmatpush1.msra.mxu0 0.0
  %7257 = vmatprep.subr.mxu0 0.0
  %7258 = vmatpush1.msra.mxu0 0.0
  %7259 = vmatprep.subr.mxu0 0.0
  %7260 = vmatpush1.msra.mxu0 0.0
  %7261 = vmatprep.subr.mxu0 0.0
  %7262 = vmatpush1.msra.mxu0 0.0
  %7263 = vmatprep.subr.mxu0 0.0
  %7264 = vmatpush1.msra.mxu0 0.0
  %7265 = vmatprep.subr.mxu0 0.0
  %7266 = vmatpush1.msra.mxu0 0.0
  %7267 = vmatprep.subr.mxu0 0.0
  %7268 = vmatpush1.msra.mxu0 0.0
  %7269 = vmatprep.subr.mxu0 0.0
  %7270 = vmatpush1.msra.mxu0 0.0
  %7271 = vmatprep.subr.mxu0 0.0
  %7272 = vmatpush1.msra.mxu0 0.0
  %7273 = vmatprep.mubr.f32.mxu0 0.0
  %7274 = vmatmul.mubr.f32.gmra.mrb[0].mxu0 %v7204
  %v7275 = vpop.f32.mrb[0].mxu0
  %v7276 = vadd.f32 0.0, %v7275
  %v7277 = vpop.f32.mrb[0].mxu0
  %7278 = vmatprep.mubr.f32.mxu0 0.0
  %7279 = vmatmul.mubr.f32.gmra.mrb[0].mxu0 %v7207
  %v7280 = vpop.f32.mrb[0].mxu0
  %v7281 = vadd.f32 0.0, %v7280
  %v7282 = vpop.f32.mrb[0].mxu0
  %7283 = vdwg.mxu0
  %v7285 = vsel %vm6943, %v7022, 0
  %v7288 = vsel %vm6943, %v7024, 0
  %7290 = vmatprep.subr.mxu0 0.0
  %7291 = vmatpush1.msra.mxu0 %v5530
  %7292 = vmatprep.subr.mxu0 0.0
  %7293 = vmatpush1.msra.mxu0 %v5531
  %7294 = vmatprep.subr.mxu0 0.0
  %7295 = vmatpush1.msra.mxu0 %v5532
  %7296 = vmatprep.subr.mxu0 0.0
  %7297 = vmatpush1.msra.mxu0 %v5533
  %7298 = vmatprep.subr.mxu0 0.0
  %7299 = vmatpush1.msra.mxu0 %v5534
  %7300 = vmatprep.subr.mxu0 0.0
  %7301 = vmatpush1.msra.mxu0 %v5535
  %7302 = vmatprep.subr.mxu0 0.0
  %7303 = vmatpush1.msra.mxu0 %v5536
  %7304 = vmatprep.subr.mxu0 0.0
  %7305 = vmatpush1.msra.mxu0 %v5537
  %7306 = vmatprep.subr.mxu0 0.0
  %7307 = vmatpush1.msra.mxu0 %v5538
  %7308 = vmatprep.subr.mxu0 0.0
  %7309 = vmatpush1.msra.mxu0 0.0
  %7310 = vmatprep.subr.mxu0 0.0
  %7311 = vmatpush1.msra.mxu0 0.0
  %7312 = vmatprep.subr.mxu0 0.0
  %7313 = vmatpush1.msra.mxu0 0.0
  %7314 = vmatprep.subr.mxu0 0.0
  %7315 = vmatpush1.msra.mxu0 0.0
  %7316 = vmatprep.subr.mxu0 0.0
  %7317 = vmatpush1.msra.mxu0 0.0
  %7318 = vmatprep.subr.mxu0 0.0
  %7319 = vmatpush1.msra.mxu0 0.0
  %7320 = vmatprep.subr.mxu0 0.0
  %7321 = vmatpush1.msra.mxu0 0.0
  %7322 = vmatprep.subr.mxu0 0.0
  %7323 = vmatpush1.msra.mxu0 0.0
  %7324 = vmatprep.subr.mxu0 0.0
  %7325 = vmatpush1.msra.mxu0 0.0
  %7326 = vmatprep.subr.mxu0 0.0
  %7327 = vmatpush1.msra.mxu0 0.0
  %7328 = vmatprep.subr.mxu0 0.0
  %7329 = vmatpush1.msra.mxu0 0.0
  %7330 = vmatprep.subr.mxu0 0.0
  %7331 = vmatpush1.msra.mxu0 0.0
  %7332 = vmatprep.subr.mxu0 0.0
  %7333 = vmatpush1.msra.mxu0 0.0
  %7334 = vmatprep.subr.mxu0 0.0
  %7335 = vmatpush1.msra.mxu0 0.0
  %7336 = vmatprep.subr.mxu0 0.0
  %7337 = vmatpush1.msra.mxu0 0.0
  %7338 = vmatprep.subr.mxu0 0.0
  %7339 = vmatpush1.msra.mxu0 0.0
  %7340 = vmatprep.subr.mxu0 0.0
  %7341 = vmatpush1.msra.mxu0 0.0
  %7342 = vmatprep.subr.mxu0 0.0
  %7343 = vmatpush1.msra.mxu0 0.0
  %7344 = vmatprep.subr.mxu0 0.0
  %7345 = vmatpush1.msra.mxu0 0.0
  %7346 = vmatprep.subr.mxu0 0.0
  %7347 = vmatpush1.msra.mxu0 0.0
  %7348 = vmatprep.subr.mxu0 0.0
  %7349 = vmatpush1.msra.mxu0 0.0
  %7350 = vmatprep.subr.mxu0 0.0
  %7351 = vmatpush1.msra.mxu0 0.0
  %7352 = vmatprep.subr.mxu0 0.0
  %7353 = vmatpush1.msra.mxu0 0.0
  %7354 = vmatprep.mubr.f32.mxu0 0.0
  %7355 = vmatmul.mubr.f32.gmra.mrb[0].mxu0 %v7285
  %v7356 = vpop.f32.mrb[0].mxu0
  %v7357 = vadd.f32 0.0, %v7356
  %v7358 = vpop.f32.mrb[0].mxu0
  %7359 = vmatprep.mubr.f32.mxu0 0.0
  %7360 = vmatmul.mubr.f32.gmra.mrb[0].mxu0 %v7288
  %v7361 = vpop.f32.mrb[0].mxu0
  %v7362 = vadd.f32 0.0, %v7361
  %v7363 = vpop.f32.mrb[0].mxu0
  %7364 = vdwg.mxu0
  %v7366 = vsel %vm6943, %v7026, 0
  %v7369 = vsel %vm6943, %v7028, 0
  %7371 = vmatprep.subr.mxu0 0.0
  %7372 = vmatpush1.msra.mxu0 %v5539
  %7373 = vmatprep.subr.mxu0 0.0
  %7374 = vmatpush1.msra.mxu0 %v5540
  %7375 = vmatprep.subr.mxu0 0.0
  %7376 = vmatpush1.msra.mxu0 %v5541
  %7377 = vmatprep.subr.mxu0 0.0
  %7378 = vmatpush1.msra.mxu0 %v5542
  %7379 = vmatprep.subr.mxu0 0.0
  %7380 = vmatpush1.msra.mxu0 %v5543
  %7381 = vmatprep.subr.mxu0 0.0
  %7382 = vmatpush1.msra.mxu0 %v5544
  %7383 = vmatprep.subr.mxu0 0.0
  %7384 = vmatpush1.msra.mxu0 %v5545
  %7385 = vmatprep.subr.mxu0 0.0
  %7386 = vmatpush1.msra.mxu0 %v5546
  %7387 = vmatprep.subr.mxu0 0.0
  %7388 = vmatpush1.msra.mxu0 %v5547
  %7389 = vmatprep.subr.mxu0 0.0
  %7390 = vmatpush1.msra.mxu0 0.0
  %7391 = vmatprep.subr.mxu0 0.0
  %7392 = vmatpush1.msra.mxu0 0.0
  %7393 = vmatprep.subr.mxu0 0.0
  %7394 = vmatpush1.msra.mxu0 0.0
  %7395 = vmatprep.subr.mxu0 0.0
  %7396 = vmatpush1.msra.mxu0 0.0
  %7397 = vmatprep.subr.mxu0 0.0
  %7398 = vmatpush1.msra.mxu0 0.0
  %7399 = vmatprep.subr.mxu0 0.0
  %7400 = vmatpush1.msra.mxu0 0.0
  %7401 = vmatprep.subr.mxu0 0.0
  %7402 = vmatpush1.msra.mxu0 0.0
  %7403 = vmatprep.subr.mxu0 0.0
  %7404 = vmatpush1.msra.mxu0 0.0
  %7405 = vmatprep.subr.mxu0 0.0
  %7406 = vmatpush1.msra.mxu0 0.0
  %7407 = vmatprep.subr.mxu0 0.0
  %7408 = vmatpush1.msra.mxu0 0.0
  %7409 = vmatprep.subr.mxu0 0.0
  %7410 = vmatpush1.msra.mxu0 0.0
  %7411 = vmatprep.subr.mxu0 0.0
  %7412 = vmatpush1.msra.mxu0 0.0
  %7413 = vmatprep.subr.mxu0 0.0
  %7414 = vmatpush1.msra.mxu0 0.0
  %7415 = vmatprep.subr.mxu0 0.0
  %7416 = vmatpush1.msra.mxu0 0.0
  %7417 = vmatprep.subr.mxu0 0.0
  %7418 = vmatpush1.msra.mxu0 0.0
  %7419 = vmatprep.subr.mxu0 0.0
  %7420 = vmatpush1.msra.mxu0 0.0
  %7421 = vmatprep.subr.mxu0 0.0
  %7422 = vmatpush1.msra.mxu0 0.0
  %7423 = vmatprep.subr.mxu0 0.0
  %7424 = vmatpush1.msra.mxu0 0.0
  %7425 = vmatprep.subr.mxu0 0.0
  %7426 = vmatpush1.msra.mxu0 0.0
  %7427 = vmatprep.subr.mxu0 0.0
  %7428 = vmatpush1.msra.mxu0 0.0
  %7429 = vmatprep.subr.mxu0 0.0
  %7430 = vmatpush1.msra.mxu0 0.0
  %7431 = vmatprep.subr.mxu0 0.0
  %7432 = vmatpush1.msra.mxu0 0.0
  %7433 = vmatprep.subr.mxu0 0.0
  %7434 = vmatpush1.msra.mxu0 0.0
  %7435 = vmatprep.mubr.f32.mxu0 0.0
  %7436 = vmatmul.mubr.f32.gmra.mrb[0].mxu0 %v7366
  %v7437 = vpop.f32.mrb[0].mxu0
  %v7438 = vadd.f32 0.0, %v7437
  %v7439 = vpop.f32.mrb[0].mxu0
  %7440 = vmatprep.mubr.f32.mxu0 0.0
  %7441 = vmatmul.mubr.f32.gmra.mrb[0].mxu0 %v7369
  %v7442 = vpop.f32.mrb[0].mxu0
  %v7443 = vadd.f32 0.0, %v7442
  %v7444 = vpop.f32.mrb[0].mxu0
  %7445 = vdwg.mxu0
  %v7447 = vsel %vm6943, %v7030, 0
  %v7450 = vsel %vm6943, %v7032, 0
  %7452 = vmatprep.subr.mxu0 0.0
  %7453 = vmatpush1.msra.mxu0 %v5548
  %7454 = vmatprep.subr.mxu0 0.0
  %7455 = vmatpush1.msra.mxu0 %v5549
  %7456 = vmatprep.subr.mxu0 0.0
  %7457 = vmatpush1.msra.mxu0 %v5550
  %7458 = vmatprep.subr.mxu0 0.0
  %7459 = vmatpush1.msra.mxu0 %v5551
  %7460 = vmatprep.subr.mxu0 0.0
  %7461 = vmatpush1.msra.mxu0 %v5552
  %7462 = vmatprep.subr.mxu0 0.0
  %7463 = vmatpush1.msra.mxu0 %v5553
  %7464 = vmatprep.subr.mxu0 0.0
  %7465 = vmatpush1.msra.mxu0 %v5554
  %7466 = vmatprep.subr.mxu0 0.0
  %7467 = vmatpush1.msra.mxu0 %v5555
  %7468 = vmatprep.subr.mxu0 0.0
  %7469 = vmatpush1.msra.mxu0 %v5556
  %7470 = vmatprep.subr.mxu0 0.0
  %7471 = vmatpush1.msra.mxu0 0.0
  %7472 = vmatprep.subr.mxu0 0.0
  %7473 = vmatpush1.msra.mxu0 0.0
  %7474 = vmatprep.subr.mxu0 0.0
  %7475 = vmatpush1.msra.mxu0 0.0
  %7476 = vmatprep.subr.mxu0 0.0
  %7477 = vmatpush1.msra.mxu0 0.0
  %7478 = vmatprep.subr.mxu0 0.0
  %7479 = vmatpush1.msra.mxu0 0.0
  %7480 = vmatprep.subr.mxu0 0.0
  %7481 = vmatpush1.msra.mxu0 0.0
  %7482 = vmatprep.subr.mxu0 0.0
  %7483 = vmatpush1.msra.mxu0 0.0
  %7484 = vmatprep.subr.mxu0 0.0
  %7485 = vmatpush1.msra.mxu0 0.0
  %7486 = vmatprep.subr.mxu0 0.0
  %7487 = vmatpush1.msra.mxu0 0.0
  %7488 = vmatprep.subr.mxu0 0.0
  %7489 = vmatpush1.msra.mxu0 0.0
  %7490 = vmatprep.subr.mxu0 0.0
  %7491 = vmatpush1.msra.mxu0 0.0
  %7492 = vmatprep.subr.mxu0 0.0
  %7493 = vmatpush1.msra.mxu0 0.0
  %7494 = vmatprep.subr.mxu0 0.0
  %7495 = vmatpush1.msra.mxu0 0.0
  %7496 = vmatprep.subr.mxu0 0.0
  %7497 = vmatpush1.msra.mxu0 0.0
  %7498 = vmatprep.subr.mxu0 0.0
  %7499 = vmatpush1.msra.mxu0 0.0
  %7500 = vmatprep.subr.mxu0 0.0
  %7501 = vmatpush1.msra.mxu0 0.0
  %7502 = vmatprep.subr.mxu0 0.0
  %7503 = vmatpush1.msra.mxu0 0.0
  %7504 = vmatprep.subr.mxu0 0.0
  %7505 = vmatpush1.msra.mxu0 0.0
  %7506 = vmatprep.subr.mxu0 0.0
  %7507 = vmatpush1.msra.mxu0 0.0
  %7508 = vmatprep.subr.mxu0 0.0
  %7509 = vmatpush1.msra.mxu0 0.0
  %7510 = vmatprep.subr.mxu0 0.0
  %7511 = vmatpush1.msra.mxu0 0.0
  %7512 = vmatprep.subr.mxu0 0.0
  %7513 = vmatpush1.msra.mxu0 0.0
  %7514 = vmatprep.subr.mxu0 0.0
  %7515 = vmatpush1.msra.mxu0 0.0
  %7516 = vmatprep.mubr.f32.mxu0 0.0
  %7517 = vmatmul.mubr.f32.gmra.mrb[0].mxu0 %v7447
  %v7518 = vpop.f32.mrb[0].mxu0
  %v7519 = vadd.f32 0.0, %v7518
  %v7520 = vpop.f32.mrb[0].mxu0
  %7521 = vmatprep.mubr.f32.mxu0 0.0
  %7522 = vmatmul.mubr.f32.gmra.mrb[0].mxu0 %v7450
  %v7523 = vpop.f32.mrb[0].mxu0
  %v7524 = vadd.f32 0.0, %v7523
  %v7525 = vpop.f32.mrb[0].mxu0
  %7526 = vdwg.mxu0
  %v7528 = vsel %vm6943, %v7034, 0
  %v7531 = vsel %vm6943, %v7036, 0
  %7533 = vmatprep.subr.mxu0 0.0
  %7534 = vmatpush1.msra.mxu0 %v5557
  %7535 = vmatprep.subr.mxu0 0.0
  %7536 = vmatpush1.msra.mxu0 %v5558
  %7537 = vmatprep.subr.mxu0 0.0
  %7538 = vmatpush1.msra.mxu0 %v5559
  %7539 = vmatprep.subr.mxu0 0.0
  %7540 = vmatpush1.msra.mxu0 %v5560
  %7541 = vmatprep.subr.mxu0 0.0
  %7542 = vmatpush1.msra.mxu0 %v5561
  %7543 = vmatprep.subr.mxu0 0.0
  %7544 = vmatpush1.msra.mxu0 %v5562
  %7545 = vmatprep.subr.mxu0 0.0
  %7546 = vmatpush1.msra.mxu0 %v5563
  %7547 = vmatprep.subr.mxu0 0.0
  %7548 = vmatpush1.msra.mxu0 %v5564
  %7549 = vmatprep.subr.mxu0 0.0
  %7550 = vmatpush1.msra.mxu0 %v5565
  %7551 = vmatprep.subr.mxu0 0.0
  %7552 = vmatpush1.msra.mxu0 0.0
  %7553 = vmatprep.subr.mxu0 0.0
  %7554 = vmatpush1.msra.mxu0 0.0
  %7555 = vmatprep.subr.mxu0 0.0
  %7556 = vmatpush1.msra.mxu0 0.0
  %7557 = vmatprep.subr.mxu0 0.0
  %7558 = vmatpush1.msra.mxu0 0.0
  %7559 = vmatprep.subr.mxu0 0.0
  %7560 = vmatpush1.msra.mxu0 0.0
  %7561 = vmatprep.subr.mxu0 0.0
  %7562 = vmatpush1.msra.mxu0 0.0
  %7563 = vmatprep.subr.mxu0 0.0
  %7564 = vmatpush1.msra.mxu0 0.0
  %7565 = vmatprep.subr.mxu0 0.0
  %7566 = vmatpush1.msra.mxu0 0.0
  %7567 = vmatprep.subr.mxu0 0.0
  %7568 = vmatpush1.msra.mxu0 0.0
  %7569 = vmatprep.subr.mxu0 0.0
  %7570 = vmatpush1.msra.mxu0 0.0
  %7571 = vmatprep.subr.mxu0 0.0
  %7572 = vmatpush1.msra.mxu0 0.0
  %7573 = vmatprep.subr.mxu0 0.0
  %7574 = vmatpush1.msra.mxu0 0.0
  %7575 = vmatprep.subr.mxu0 0.0
  %7576 = vmatpush1.msra.mxu0 0.0
  %7577 = vmatprep.subr.mxu0 0.0
  %7578 = vmatpush1.msra.mxu0 0.0
  %7579 = vmatprep.subr.mxu0 0.0
  %7580 = vmatpush1.msra.mxu0 0.0
  %7581 = vmatprep.subr.mxu0 0.0
  %7582 = vmatpush1.msra.mxu0 0.0
  %7583 = vmatprep.subr.mxu0 0.0
  %7584 = vmatpush1.msra.mxu0 0.0
  %7585 = vmatprep.subr.mxu0 0.0
  %7586 = vmatpush1.msra.mxu0 0.0
  %7587 = vmatprep.subr.mxu0 0.0
  %7588 = vmatpush1.msra.mxu0 0.0
  %7589 = vmatprep.subr.mxu0 0.0
  %7590 = vmatpush1.msra.mxu0 0.0
  %7591 = vmatprep.subr.mxu0 0.0
  %7592 = vmatpush1.msra.mxu0 0.0
  %7593 = vmatprep.subr.mxu0 0.0
  %7594 = vmatpush1.msra.mxu0 0.0
  %7595 = vmatprep.subr.mxu0 0.0
  %7596 = vmatpush1.msra.mxu0 0.0
  %7597 = vmatprep.mubr.f32.mxu0 0.0
  %7598 = vmatmul.mubr.f32.gmra.mrb[0].mxu0 %v7528
  %v7599 = vpop.f32.mrb[0].mxu0
  %v7600 = vadd.f32 0.0, %v7599
  %v7601 = vpop.f32.mrb[0].mxu0
  %7602 = vmatprep.mubr.f32.mxu0 0.0
  %7603 = vmatmul.mubr.f32.gmra.mrb[0].mxu0 %v7531
  %v7604 = vpop.f32.mrb[0].mxu0
  %v7605 = vadd.f32 0.0, %v7604
  %v7606 = vpop.f32.mrb[0].mxu0
  %7607 = vdwg.mxu0
  %v7609 = vsel %vm6943, %v7038, 0
  %v7612 = vsel %vm6943, %v7040, 0
  %7614 = vmatprep.subr.mxu0 0.0
  %7615 = vmatpush1.msra.mxu0 %v5566
  %7616 = vmatprep.subr.mxu0 0.0
  %7617 = vmatpush1.msra.mxu0 %v5567
  %7618 = vmatprep.subr.mxu0 0.0
  %7619 = vmatpush1.msra.mxu0 %v5568
  %7620 = vmatprep.subr.mxu0 0.0
  %7621 = vmatpush1.msra.mxu0 %v5569
  %7622 = vmatprep.subr.mxu0 0.0
  %7623 = vmatpush1.msra.mxu0 %v5570
  %7624 = vmatprep.subr.mxu0 0.0
  %7625 = vmatpush1.msra.mxu0 %v5571
  %7626 = vmatprep.subr.mxu0 0.0
  %7627 = vmatpush1.msra.mxu0 %v5572
  %7628 = vmatprep.subr.mxu0 0.0
  %7629 = vmatpush1.msra.mxu0 %v5573
  %7630 = vmatprep.subr.mxu0 0.0
  %7631 = vmatpush1.msra.mxu0 %v5574
  %7632 = vmatprep.subr.mxu0 0.0
  %7633 = vmatpush1.msra.mxu0 0.0
  %7634 = vmatprep.subr.mxu0 0.0
  %7635 = vmatpush1.msra.mxu0 0.0
  %7636 = vmatprep.subr.mxu0 0.0
  %7637 = vmatpush1.msra.mxu0 0.0
  %7638 = vmatprep.subr.mxu0 0.0
  %7639 = vmatpush1.msra.mxu0 0.0
  %7640 = vmatprep.subr.mxu0 0.0
  %7641 = vmatpush1.msra.mxu0 0.0
  %7642 = vmatprep.subr.mxu0 0.0
  %7643 = vmatpush1.msra.mxu0 0.0
  %7644 = vmatprep.subr.mxu0 0.0
  %7645 = vmatpush1.msra.mxu0 0.0
  %7646 = vmatprep.subr.mxu0 0.0
  %7647 = vmatpush1.msra.mxu0 0.0
  %7648 = vmatprep.subr.mxu0 0.0
  %7649 = vmatpush1.msra.mxu0 0.0
  %7650 = vmatprep.subr.mxu0 0.0
  %7651 = vmatpush1.msra.mxu0 0.0
  %7652 = vmatprep.subr.mxu0 0.0
  %7653 = vmatpush1.msra.mxu0 0.0
  %7654 = vmatprep.subr.mxu0 0.0
  %7655 = vmatpush1.msra.mxu0 0.0
  %7656 = vmatprep.subr.mxu0 0.0
  %7657 = vmatpush1.msra.mxu0 0.0
  %7658 = vmatprep.subr.mxu0 0.0
  %7659 = vmatpush1.msra.mxu0 0.0
  %7660 = vmatprep.subr.mxu0 0.0
  %7661 = vmatpush1.msra.mxu0 0.0
  %7662 = vmatprep.subr.mxu0 0.0
  %7663 = vmatpush1.msra.mxu0 0.0
  %7664 = vmatprep.subr.mxu0 0.0
  %7665 = vmatpush1.msra.mxu0 0.0
  %7666 = vmatprep.subr.mxu0 0.0
  %7667 = vmatpush1.msra.mxu0 0.0
  %7668 = vmatprep.subr.mxu0 0.0
  %7669 = vmatpush1.msra.mxu0 0.0
  %7670 = vmatprep.subr.mxu0 0.0
  %7671 = vmatpush1.msra.mxu0 0.0
  %7672 = vmatprep.subr.mxu0 0.0
  %7673 = vmatpush1.msra.mxu0 0.0
  %7674 = vmatprep.subr.mxu0 0.0
  %7675 = vmatpush1.msra.mxu0 0.0
  %7676 = vmatprep.subr.mxu0 0.0
  %7677 = vmatpush1.msra.mxu0 0.0
  %7678 = vmatprep.mubr.f32.mxu0 0.0
  %7679 = vmatmul.mubr.f32.gmra.mrb[0].mxu0 %v7609
  %v7680 = vpop.f32.mrb[0].mxu0
  %v7681 = vadd.f32 0.0, %v7680
  %v7682 = vpop.f32.mrb[0].mxu0
  %7683 = vmatprep.mubr.f32.mxu0 0.0
  %7684 = vmatmul.mubr.f32.gmra.mrb[0].mxu0 %v7612
  %v7685 = vpop.f32.mrb[0].mxu0
  %v7686 = vadd.f32 0.0, %v7685
  %v7687 = vpop.f32.mrb[0].mxu0
  %7688 = vdwg.mxu0
  %v7689 = vmax.f32 %v7114, 1e-30
  %v7690 = vmax.f32 %v7119, 1e-30
  %v7691 = vmax.f32 %v7195, 1e-30
  %v7692 = vmax.f32 %v7200, 1e-30
  %v7693 = vmax.f32 %v7276, 1e-30
  %v7694 = vmax.f32 %v7281, 1e-30
  %v7695 = vmax.f32 %v7357, 1e-30
  %v7696 = vmax.f32 %v7362, 1e-30
  %v7697 = vmax.f32 %v7438, 1e-30
  %v7698 = vmax.f32 %v7443, 1e-30
  %v7699 = vmax.f32 %v7519, 1e-30
  %v7700 = vmax.f32 %v7524, 1e-30
  %v7701 = vmax.f32 %v7600, 1e-30
  %v7702 = vmax.f32 %v7605, 1e-30
  %v7703 = vmax.f32 %v7681, 1e-30
  %v7704 = vmax.f32 %v7686, 1e-30
  %7721 = vrot.lane.b32.xlu0 %v7689, 64
  %v7722 = vpop.permute.xlu0 %7721
  %7723 = vrot.lane.b32.xlu0 %v7690, 64
  %v7724 = vpop.permute.xlu0 %7723
  %7725 = vrot.lane.b32.xlu0 %v7691, 64
  %v7726 = vpop.permute.xlu0 %7725
  %7727 = vrot.lane.b32.xlu0 %v7692, 64
  %v7728 = vpop.permute.xlu0 %7727
  %7729 = vrot.lane.b32.xlu0 %v7693, 64
  %v7730 = vpop.permute.xlu0 %7729
  %7731 = vrot.lane.b32.xlu0 %v7694, 64
  %v7732 = vpop.permute.xlu0 %7731
  %7733 = vrot.lane.b32.xlu0 %v7695, 64
  %v7734 = vpop.permute.xlu0 %7733
  %7735 = vrot.lane.b32.xlu0 %v7696, 64
  %v7736 = vpop.permute.xlu0 %7735
  %7737 = vrot.lane.b32.xlu0 %v7697, 64
  %v7738 = vpop.permute.xlu0 %7737
  %7739 = vrot.lane.b32.xlu0 %v7698, 64
  %v7740 = vpop.permute.xlu0 %7739
  %7741 = vrot.lane.b32.xlu0 %v7699, 64
  %v7742 = vpop.permute.xlu0 %7741
  %7743 = vrot.lane.b32.xlu0 %v7700, 64
  %v7744 = vpop.permute.xlu0 %7743
  %7745 = vrot.lane.b32.xlu0 %v7701, 64
  %v7746 = vpop.permute.xlu0 %7745
  %7747 = vrot.lane.b32.xlu0 %v7702, 64
  %v7748 = vpop.permute.xlu0 %7747
  %7749 = vrot.lane.b32.xlu0 %v7703, 64
  %v7750 = vpop.permute.xlu0 %7749
  %7751 = vrot.lane.b32.xlu0 %v7704, 64
  %v7752 = vpop.permute.xlu0 %7751
  %v7769 = vrcp.pop %v7722
  %v7770 = vmul.f32 %v7114, %v7769
  %v7771 = vrcp.pop %v7724
  %v7772 = vmul.f32 %v7119, %v7771
  %v7773 = vrcp.pop %v7726
  %v7774 = vmul.f32 %v7195, %v7773
  %v7775 = vrcp.pop %v7728
  %v7776 = vmul.f32 %v7200, %v7775
  %v7777 = vrcp.pop %v7730
  %v7778 = vmul.f32 %v7276, %v7777
  %v7779 = vrcp.pop %v7732
  %v7780 = vmul.f32 %v7281, %v7779
  %v7781 = vrcp.pop %v7734
  %v7782 = vmul.f32 %v7357, %v7781
  %v7783 = vrcp.pop %v7736
  %v7784 = vmul.f32 %v7362, %v7783
  %v7785 = vrcp.pop %v7738
  %v7786 = vmul.f32 %v7438, %v7785
  %v7787 = vrcp.pop %v7740
  %v7788 = vmul.f32 %v7443, %v7787
  %v7789 = vrcp.pop %v7742
  %v7790 = vmul.f32 %v7519, %v7789
  %v7791 = vrcp.pop %v7744
  %v7792 = vmul.f32 %v7524, %v7791
  %v7793 = vrcp.pop %v7746
  %v7794 = vmul.f32 %v7600, %v7793
  %v7795 = vrcp.pop %v7748
  %v7796 = vmul.f32 %v7605, %v7795
  %v7797 = vrcp.pop %v7750
  %v7798 = vmul.f32 %v7681, %v7797
  %v7799 = vrcp.pop %v7752
  %v7800 = vmul.f32 %v7686, %v7799
  %v7817 = vcombine.high %v7770, %v7770
  %v7819 = vunpack.c.l.s4 1966171168
  %v7820 = vunpack.c.0.s8 %v7819
  %v7821 = vlaneseq
  %v7822 = vshrl.u32 %v7821, 7
  %v7823 = vsub.s32 %v7820, %v7822
  %v7824 = vrot.slane %v7770, %v7823
  %v7826 = vunpack.c.l.s4 1966171168
  %v7827 = vunpack.c.0.s8 %v7826
  %v7828 = vlaneseq
  %v7829 = vshrl.u32 %v7828, 7
  %v7830 = vsub.s32 %v7827, %v7829
  %v7831 = vrot.slane %v7817, %v7830
  %v7832 = vcombine.high %v7824, %v7824
  %v7833 = vcombine.high %v7831, %v7831
  %v7835 = vunpack.c.l.s4 1966171168
  %v7836 = vunpack.c.0.s8 %v7835
  %v7837 = vlaneseq
  %v7838 = vshrl.u32 %v7837, 7
  %v7839 = vsub.s32 %v7836, %v7838
  %v7840 = vrot.slane %v7824, %v7839
  %v7842 = vunpack.c.l.s4 1966171168
  %v7843 = vunpack.c.0.s8 %v7842
  %v7844 = vlaneseq
  %v7845 = vshrl.u32 %v7844, 7
  %v7846 = vsub.s32 %v7843, %v7845
  %v7847 = vrot.slane %v7831, %v7846
  %v7849 = vunpack.c.l.s4 1966171168
  %v7850 = vunpack.c.0.s8 %v7849
  %v7851 = vlaneseq
  %v7852 = vshrl.u32 %v7851, 7
  %v7853 = vsub.s32 %v7850, %v7852
  %v7854 = vrot.slane %v7832, %v7853
  %v7856 = vunpack.c.l.s4 1966171168
  %v7857 = vunpack.c.0.s8 %v7856
  %v7858 = vlaneseq
  %v7859 = vshrl.u32 %v7858, 7
  %v7860 = vsub.s32 %v7857, %v7859
  %v7861 = vrot.slane %v7833, %v7860
  %v7862 = vcombine.high %v7840, %v7840
  %v7863 = vcombine.high %v7847, %v7847
  %v7864 = vcombine.high %v7854, %v7854
  %v7865 = vcombine.high %v7861, %v7861
  %v7867 = vunpack.c.l.s4 1966171168
  %v7868 = vunpack.c.0.s8 %v7867
  %v7869 = vlaneseq
  %v7870 = vshrl.u32 %v7869, 7
  %v7871 = vsub.s32 %v7868, %v7870
  %v7872 = vrot.slane %v7772, %v7871
  %v7874 = vunpack.c.l.s4 1966171168
  %v7875 = vunpack.c.0.s8 %v7874
  %v7876 = vlaneseq
  %v7877 = vshrl.u32 %v7876, 7
  %v7878 = vsub.s32 %v7875, %v7877
  %v7879 = vrot.slane %v7872, %v7878
  %v7880 = vcombine.high %v7774, %v7774
  %v7882 = vunpack.c.l.s4 1966171168
  %v7883 = vunpack.c.0.s8 %v7882
  %v7884 = vlaneseq
  %v7885 = vshrl.u32 %v7884, 7
  %v7886 = vsub.s32 %v7883, %v7885
  %v7887 = vrot.slane %v7774, %v7886
  %v7889 = vunpack.c.l.s4 1966171168
  %v7890 = vunpack.c.0.s8 %v7889
  %v7891 = vlaneseq
  %v7892 = vshrl.u32 %v7891, 7
  %v7893 = vsub.s32 %v7890, %v7892
  %v7894 = vrot.slane %v7880, %v7893
  %v7895 = vcombine.high %v7887, %v7887
  %v7896 = vcombine.high %v7894, %v7894
  %v7898 = vunpack.c.l.s4 1966171168
  %v7899 = vunpack.c.0.s8 %v7898
  %v7900 = vlaneseq
  %v7901 = vshrl.u32 %v7900, 7
  %v7902 = vsub.s32 %v7899, %v7901
  %v7903 = vrot.slane %v7887, %v7902
  %v7905 = vunpack.c.l.s4 1966171168
  %v7906 = vunpack.c.0.s8 %v7905
  %v7907 = vlaneseq
  %v7908 = vshrl.u32 %v7907, 7
  %v7909 = vsub.s32 %v7906, %v7908
  %v7910 = vrot.slane %v7894, %v7909
  %v7912 = vunpack.c.l.s4 1966171168
  %v7913 = vunpack.c.0.s8 %v7912
  %v7914 = vlaneseq
  %v7915 = vshrl.u32 %v7914, 7
  %v7916 = vsub.s32 %v7913, %v7915
  %v7917 = vrot.slane %v7895, %v7916
  %v7919 = vunpack.c.l.s4 1966171168
  %v7920 = vunpack.c.0.s8 %v7919
  %v7921 = vlaneseq
  %v7922 = vshrl.u32 %v7921, 7
  %v7923 = vsub.s32 %v7920, %v7922
  %v7924 = vrot.slane %v7896, %v7923
  %v7925 = vcombine.high %v7903, %v7903
  %v7926 = vcombine.high %v7910, %v7910
  %v7927 = vcombine.high %v7917, %v7917
  %v7928 = vcombine.high %v7924, %v7924
  %v7930 = vunpack.c.l.s4 1966171168
  %v7931 = vunpack.c.0.s8 %v7930
  %v7932 = vlaneseq
  %v7933 = vshrl.u32 %v7932, 7
  %v7934 = vsub.s32 %v7931, %v7933
  %v7935 = vrot.slane %v7776, %v7934
  %v7937 = vunpack.c.l.s4 1966171168
  %v7938 = vunpack.c.0.s8 %v7937
  %v7939 = vlaneseq
  %v7940 = vshrl.u32 %v7939, 7
  %v7941 = vsub.s32 %v7938, %v7940
  %v7942 = vrot.slane %v7935, %v7941
  %v7943 = vcombine.high %v7778, %v7778
  %v7945 = vunpack.c.l.s4 1966171168
  %v7946 = vunpack.c.0.s8 %v7945
  %v7947 = vlaneseq
  %v7948 = vshrl.u32 %v7947, 7
  %v7949 = vsub.s32 %v7946, %v7948
  %v7950 = vrot.slane %v7778, %v7949
  %v7952 = vunpack.c.l.s4 1966171168
  %v7953 = vunpack.c.0.s8 %v7952
  %v7954 = vlaneseq
  %v7955 = vshrl.u32 %v7954, 7
  %v7956 = vsub.s32 %v7953, %v7955
  %v7957 = vrot.slane %v7943, %v7956
  %v7958 = vcombine.high %v7950, %v7950
  %v7959 = vcombine.high %v7957, %v7957
  %v7961 = vunpack.c.l.s4 1966171168
  %v7962 = vunpack.c.0.s8 %v7961
  %v7963 = vlaneseq
  %v7964 = vshrl.u32 %v7963, 7
  %v7965 = vsub.s32 %v7962, %v7964
  %v7966 = vrot.slane %v7950, %v7965
  %v7968 = vunpack.c.l.s4 1966171168
  %v7969 = vunpack.c.0.s8 %v7968
  %v7970 = vlaneseq
  %v7971 = vshrl.u32 %v7970, 7
  %v7972 = vsub.s32 %v7969, %v7971
  %v7973 = vrot.slane %v7957, %v7972
  %v7975 = vunpack.c.l.s4 1966171168
  %v7976 = vunpack.c.0.s8 %v7975
  %v7977 = vlaneseq
  %v7978 = vshrl.u32 %v7977, 7
  %v7979 = vsub.s32 %v7976, %v7978
  %v7980 = vrot.slane %v7958, %v7979
  %v7982 = vunpack.c.l.s4 1966171168
  %v7983 = vunpack.c.0.s8 %v7982
  %v7984 = vlaneseq
  %v7985 = vshrl.u32 %v7984, 7
  %v7986 = vsub.s32 %v7983, %v7985
  %v7987 = vrot.slane %v7959, %v7986
  %v7988 = vcombine.high %v7966, %v7966
  %v7989 = vcombine.high %v7973, %v7973
  %v7990 = vcombine.high %v7980, %v7980
  %v7991 = vcombine.high %v7987, %v7987
  %v7993 = vunpack.c.l.s4 1966171168
  %v7994 = vunpack.c.0.s8 %v7993
  %v7995 = vlaneseq
  %v7996 = vshrl.u32 %v7995, 7
  %v7997 = vsub.s32 %v7994, %v7996
  %v7998 = vrot.slane %v7780, %v7997
  %v8000 = vunpack.c.l.s4 1966171168
  %v8001 = vunpack.c.0.s8 %v8000
  %v8002 = vlaneseq
  %v8003 = vshrl.u32 %v8002, 7
  %v8004 = vsub.s32 %v8001, %v8003
  %v8005 = vrot.slane %v7998, %v8004
  %v8006 = vcombine.high %v7782, %v7782
  %v8008 = vunpack.c.l.s4 1966171168
  %v8009 = vunpack.c.0.s8 %v8008
  %v8010 = vlaneseq
  %v8011 = vshrl.u32 %v8010, 7
  %v8012 = vsub.s32 %v8009, %v8011
  %v8013 = vrot.slane %v7782, %v8012
  %v8015 = vunpack.c.l.s4 1966171168
  %v8016 = vunpack.c.0.s8 %v8015
  %v8017 = vlaneseq
  %v8018 = vshrl.u32 %v8017, 7
  %v8019 = vsub.s32 %v8016, %v8018
  %v8020 = vrot.slane %v8006, %v8019
  %v8021 = vcombine.high %v8013, %v8013
  %v8022 = vcombine.high %v8020, %v8020
  %v8024 = vunpack.c.l.s4 1966171168
  %v8025 = vunpack.c.0.s8 %v8024
  %v8026 = vlaneseq
  %v8027 = vshrl.u32 %v8026, 7
  %v8028 = vsub.s32 %v8025, %v8027
  %v8029 = vrot.slane %v8013, %v8028
  %v8031 = vunpack.c.l.s4 1966171168
  %v8032 = vunpack.c.0.s8 %v8031
  %v8033 = vlaneseq
  %v8034 = vshrl.u32 %v8033, 7
  %v8035 = vsub.s32 %v8032, %v8034
  %v8036 = vrot.slane %v8020, %v8035
  %v8038 = vunpack.c.l.s4 1966171168
  %v8039 = vunpack.c.0.s8 %v8038
  %v8040 = vlaneseq
  %v8041 = vshrl.u32 %v8040, 7
  %v8042 = vsub.s32 %v8039, %v8041
  %v8043 = vrot.slane %v8021, %v8042
  %v8045 = vunpack.c.l.s4 1966171168
  %v8046 = vunpack.c.0.s8 %v8045
  %v8047 = vlaneseq
  %v8048 = vshrl.u32 %v8047, 7
  %v8049 = vsub.s32 %v8046, %v8048
  %v8050 = vrot.slane %v8022, %v8049
  %v8051 = vcombine.high %v8029, %v8029
  %v8052 = vcombine.high %v8036, %v8036
  %v8053 = vcombine.high %v8043, %v8043
  %v8054 = vcombine.high %v8050, %v8050
  %v8056 = vunpack.c.l.s4 1966171168
  %v8057 = vunpack.c.0.s8 %v8056
  %v8058 = vlaneseq
  %v8059 = vshrl.u32 %v8058, 7
  %v8060 = vsub.s32 %v8057, %v8059
  %v8061 = vrot.slane %v7784, %v8060
  %v8063 = vunpack.c.l.s4 1966171168
  %v8064 = vunpack.c.0.s8 %v8063
  %v8065 = vlaneseq
  %v8066 = vshrl.u32 %v8065, 7
  %v8067 = vsub.s32 %v8064, %v8066
  %v8068 = vrot.slane %v8061, %v8067
  %v8069 = vcombine.high %v7786, %v7786
  %v8071 = vunpack.c.l.s4 1966171168
  %v8072 = vunpack.c.0.s8 %v8071
  %v8073 = vlaneseq
  %v8074 = vshrl.u32 %v8073, 7
  %v8075 = vsub.s32 %v8072, %v8074
  %v8076 = vrot.slane %v7786, %v8075
  %v8078 = vunpack.c.l.s4 1966171168
  %v8079 = vunpack.c.0.s8 %v8078
  %v8080 = vlaneseq
  %v8081 = vshrl.u32 %v8080, 7
  %v8082 = vsub.s32 %v8079, %v8081
  %v8083 = vrot.slane %v8069, %v8082
  %v8084 = vcombine.high %v8076, %v8076
  %v8085 = vcombine.high %v8083, %v8083
  %v8087 = vunpack.c.l.s4 1966171168
  %v8088 = vunpack.c.0.s8 %v8087
  %v8089 = vlaneseq
  %v8090 = vshrl.u32 %v8089, 7
  %v8091 = vsub.s32 %v8088, %v8090
  %v8092 = vrot.slane %v8076, %v8091
  %v8094 = vunpack.c.l.s4 1966171168
  %v8095 = vunpack.c.0.s8 %v8094
  %v8096 = vlaneseq
  %v8097 = vshrl.u32 %v8096, 7
  %v8098 = vsub.s32 %v8095, %v8097
  %v8099 = vrot.slane %v8083, %v8098
  %v8101 = vunpack.c.l.s4 1966171168
  %v8102 = vunpack.c.0.s8 %v8101
  %v8103 = vlaneseq
  %v8104 = vshrl.u32 %v8103, 7
  %v8105 = vsub.s32 %v8102, %v8104
  %v8106 = vrot.slane %v8084, %v8105
  %v8108 = vunpack.c.l.s4 1966171168
  %v8109 = vunpack.c.0.s8 %v8108
  %v8110 = vlaneseq
  %v8111 = vshrl.u32 %v8110, 7
  %v8112 = vsub.s32 %v8109, %v8111
  %v8113 = vrot.slane %v8085, %v8112
  %v8114 = vcombine.high %v8092, %v8092
  %v8115 = vcombine.high %v8099, %v8099
  %v8116 = vcombine.high %v8106, %v8106
  %v8117 = vcombine.high %v8113, %v8113
  %v8119 = vunpack.c.l.s4 1966171168
  %v8120 = vunpack.c.0.s8 %v8119
  %v8121 = vlaneseq
  %v8122 = vshrl.u32 %v8121, 7
  %v8123 = vsub.s32 %v8120, %v8122
  %v8124 = vrot.slane %v7788, %v8123
  %v8126 = vunpack.c.l.s4 1966171168
  %v8127 = vunpack.c.0.s8 %v8126
  %v8128 = vlaneseq
  %v8129 = vshrl.u32 %v8128, 7
  %v8130 = vsub.s32 %v8127, %v8129
  %v8131 = vrot.slane %v8124, %v8130
  %v8132 = vcombine.high %v7790, %v7790
  %v8134 = vunpack.c.l.s4 1966171168
  %v8135 = vunpack.c.0.s8 %v8134
  %v8136 = vlaneseq
  %v8137 = vshrl.u32 %v8136, 7
  %v8138 = vsub.s32 %v8135, %v8137
  %v8139 = vrot.slane %v7790, %v8138
  %v8141 = vunpack.c.l.s4 1966171168
  %v8142 = vunpack.c.0.s8 %v8141
  %v8143 = vlaneseq
  %v8144 = vshrl.u32 %v8143, 7
  %v8145 = vsub.s32 %v8142, %v8144
  %v8146 = vrot.slane %v8132, %v8145
  %v8147 = vcombine.high %v8139, %v8139
  %v8148 = vcombine.high %v8146, %v8146
  %v8150 = vunpack.c.l.s4 1966171168
  %v8151 = vunpack.c.0.s8 %v8150
  %v8152 = vlaneseq
  %v8153 = vshrl.u32 %v8152, 7
  %v8154 = vsub.s32 %v8151, %v8153
  %v8155 = vrot.slane %v8139, %v8154
  %v8157 = vunpack.c.l.s4 1966171168
  %v8158 = vunpack.c.0.s8 %v8157
  %v8159 = vlaneseq
  %v8160 = vshrl.u32 %v8159, 7
  %v8161 = vsub.s32 %v8158, %v8160
  %v8162 = vrot.slane %v8146, %v8161
  %v8164 = vunpack.c.l.s4 1966171168
  %v8165 = vunpack.c.0.s8 %v8164
  %v8166 = vlaneseq
  %v8167 = vshrl.u32 %v8166, 7
  %v8168 = vsub.s32 %v8165, %v8167
  %v8169 = vrot.slane %v8147, %v8168
  %v8171 = vunpack.c.l.s4 1966171168
  %v8172 = vunpack.c.0.s8 %v8171
  %v8173 = vlaneseq
  %v8174 = vshrl.u32 %v8173, 7
  %v8175 = vsub.s32 %v8172, %v8174
  %v8176 = vrot.slane %v8148, %v8175
  %v8177 = vcombine.high %v8155, %v8155
  %v8178 = vcombine.high %v8162, %v8162
  %v8179 = vcombine.high %v8169, %v8169
  %v8180 = vcombine.high %v8176, %v8176
  %v8182 = vunpack.c.l.s4 1966171168
  %v8183 = vunpack.c.0.s8 %v8182
  %v8184 = vlaneseq
  %v8185 = vshrl.u32 %v8184, 7
  %v8186 = vsub.s32 %v8183, %v8185
  %v8187 = vrot.slane %v7792, %v8186
  %v8189 = vunpack.c.l.s4 1966171168
  %v8190 = vunpack.c.0.s8 %v8189
  %v8191 = vlaneseq
  %v8192 = vshrl.u32 %v8191, 7
  %v8193 = vsub.s32 %v8190, %v8192
  %v8194 = vrot.slane %v8187, %v8193
  %v8195 = vcombine.high %v7794, %v7794
  %v8197 = vunpack.c.l.s4 1966171168
  %v8198 = vunpack.c.0.s8 %v8197
  %v8199 = vlaneseq
  %v8200 = vshrl.u32 %v8199, 7
  %v8201 = vsub.s32 %v8198, %v8200
  %v8202 = vrot.slane %v7794, %v8201
  %v8204 = vunpack.c.l.s4 1966171168
  %v8205 = vunpack.c.0.s8 %v8204
  %v8206 = vlaneseq
  %v8207 = vshrl.u32 %v8206, 7
  %v8208 = vsub.s32 %v8205, %v8207
  %v8209 = vrot.slane %v8195, %v8208
  %v8210 = vcombine.high %v8202, %v8202
  %v8211 = vcombine.high %v8209, %v8209
  %v8213 = vunpack.c.l.s4 1966171168
  %v8214 = vunpack.c.0.s8 %v8213
  %v8215 = vlaneseq
  %v8216 = vshrl.u32 %v8215, 7
  %v8217 = vsub.s32 %v8214, %v8216
  %v8218 = vrot.slane %v8202, %v8217
  %v8220 = vunpack.c.l.s4 1966171168
  %v8221 = vunpack.c.0.s8 %v8220
  %v8222 = vlaneseq
  %v8223 = vshrl.u32 %v8222, 7
  %v8224 = vsub.s32 %v8221, %v8223
  %v8225 = vrot.slane %v8209, %v8224
  %v8227 = vunpack.c.l.s4 1966171168
  %v8228 = vunpack.c.0.s8 %v8227
  %v8229 = vlaneseq
  %v8230 = vshrl.u32 %v8229, 7
  %v8231 = vsub.s32 %v8228, %v8230
  %v8232 = vrot.slane %v8210, %v8231
  %v8234 = vunpack.c.l.s4 1966171168
  %v8235 = vunpack.c.0.s8 %v8234
  %v8236 = vlaneseq
  %v8237 = vshrl.u32 %v8236, 7
  %v8238 = vsub.s32 %v8235, %v8237
  %v8239 = vrot.slane %v8211, %v8238
  %v8240 = vcombine.high %v8218, %v8218
  %v8241 = vcombine.high %v8225, %v8225
  %v8242 = vcombine.high %v8232, %v8232
  %v8243 = vcombine.high %v8239, %v8239
  %v8245 = vunpack.c.l.s4 1966171168
  %v8246 = vunpack.c.0.s8 %v8245
  %v8247 = vlaneseq
  %v8248 = vshrl.u32 %v8247, 7
  %v8249 = vsub.s32 %v8246, %v8248
  %v8250 = vrot.slane %v7796, %v8249
  %v8252 = vunpack.c.l.s4 1966171168
  %v8253 = vunpack.c.0.s8 %v8252
  %v8254 = vlaneseq
  %v8255 = vshrl.u32 %v8254, 7
  %v8256 = vsub.s32 %v8253, %v8255
  %v8257 = vrot.slane %v8250, %v8256
  %v8258 = vcombine.high %v7798, %v7798
  %v8260 = vunpack.c.l.s4 1966171168
  %v8261 = vunpack.c.0.s8 %v8260
  %v8262 = vlaneseq
  %v8263 = vshrl.u32 %v8262, 7
  %v8264 = vsub.s32 %v8261, %v8263
  %v8265 = vrot.slane %v7798, %v8264
  %v8267 = vunpack.c.l.s4 1966171168
  %v8268 = vunpack.c.0.s8 %v8267
  %v8269 = vlaneseq
  %v8270 = vshrl.u32 %v8269, 7
  %v8271 = vsub.s32 %v8268, %v8270
  %v8272 = vrot.slane %v8258, %v8271
  %v8273 = vcombine.high %v8265, %v8265
  %v8274 = vcombine.high %v8272, %v8272
  %v8276 = vunpack.c.l.s4 1966171168
  %v8277 = vunpack.c.0.s8 %v8276
  %v8278 = vlaneseq
  %v8279 = vshrl.u32 %v8278, 7
  %v8280 = vsub.s32 %v8277, %v8279
  %v8281 = vrot.slane %v8265, %v8280
  %v8283 = vunpack.c.l.s4 1966171168
  %v8284 = vunpack.c.0.s8 %v8283
  %v8285 = vlaneseq
  %v8286 = vshrl.u32 %v8285, 7
  %v8287 = vsub.s32 %v8284, %v8286
  %v8288 = vrot.slane %v8272, %v8287
  %v8290 = vunpack.c.l.s4 1966171168
  %v8291 = vunpack.c.0.s8 %v8290
  %v8292 = vlaneseq
  %v8293 = vshrl.u32 %v8292, 7
  %v8294 = vsub.s32 %v8291, %v8293
  %v8295 = vrot.slane %v8273, %v8294
  %v8297 = vunpack.c.l.s4 1966171168
  %v8298 = vunpack.c.0.s8 %v8297
  %v8299 = vlaneseq
  %v8300 = vshrl.u32 %v8299, 7
  %v8301 = vsub.s32 %v8298, %v8300
  %v8302 = vrot.slane %v8274, %v8301
  %v8303 = vcombine.high %v8281, %v8281
  %v8304 = vcombine.high %v8288, %v8288
  %v8305 = vcombine.high %v8295, %v8295
  %v8306 = vcombine.high %v8302, %v8302
  %v8308 = vunpack.c.l.s4 1966171168
  %v8309 = vunpack.c.0.s8 %v8308
  %v8310 = vlaneseq
  %v8311 = vshrl.u32 %v8310, 7
  %v8312 = vsub.s32 %v8309, %v8311
  %v8313 = vrot.slane %v7800, %v8312
  %v8315 = vunpack.c.l.s4 1966171168
  %v8316 = vunpack.c.0.s8 %v8315
  %v8317 = vlaneseq
  %v8318 = vshrl.u32 %v8317, 7
  %v8319 = vsub.s32 %v8316, %v8318
  %v8320 = vrot.slane %v8313, %v8319
  %v8321 = vlaneseq
  %v8322 = vshrl.u32 %v8321, 7
  %v8323 = vsub.s32 5, %v8322
  %v8324 = vrot.slane %v116, %v8323
  %v8325 = vcombine.low %v7840, %v7854
  %v8326 = vcombine.low %v7862, %v7864
  %v8327 = vcombine.low %v7847, %v7861
  %v8328 = vcombine.low %v7863, %v7865
  %v8330 = vunpack.c.l.s4 1966171168
  %v8331 = vunpack.c.0.s8 %v8330
  %v8332 = vlaneseq
  %v8333 = vshrl.u32 %v8332, 7
  %v8334 = vsub.s32 %v8331, %v8333
  %v8335 = vrot.slane %v8325, %v8334
  %v8337 = vunpack.c.l.s4 1966171168
  %v8338 = vunpack.c.0.s8 %v8337
  %v8339 = vlaneseq
  %v8340 = vshrl.u32 %v8339, 7
  %v8341 = vsub.s32 %v8338, %v8340
  %v8342 = vrot.slane %v8326, %v8341
  %v8344 = vunpack.c.l.s4 1966171168
  %v8345 = vunpack.c.0.s8 %v8344
  %v8346 = vlaneseq
  %v8347 = vshrl.u32 %v8346, 7
  %v8348 = vsub.s32 %v8345, %v8347
  %v8349 = vrot.slane %v8327, %v8348
  %v8351 = vunpack.c.l.s4 1966171168
  %v8352 = vunpack.c.0.s8 %v8351
  %v8353 = vlaneseq
  %v8354 = vshrl.u32 %v8353, 7
  %v8355 = vsub.s32 %v8352, %v8354
  %v8356 = vrot.slane %v8328, %v8355
  %v8357 = vcombine.low %v8335, %v8342
  %v8358 = vcombine.low %v8349, %v8356
  %v8360 = vunpack.c.l.s4 1966171168
  %v8361 = vunpack.c.0.s8 %v8360
  %v8362 = vlaneseq
  %v8363 = vshrl.u32 %v8362, 7
  %v8364 = vsub.s32 %v8361, %v8363
  %v8365 = vrot.slane %v8357, %v8364
  %v8367 = vunpack.c.l.s4 1966171168
  %v8368 = vunpack.c.0.s8 %v8367
  %v8369 = vlaneseq
  %v8370 = vshrl.u32 %v8369, 7
  %v8371 = vsub.s32 %v8368, %v8370
  %v8372 = vrot.slane %v8358, %v8371
  %v8373 = vcombine.low %v8365, %v8372
  %v8374 = vcombine.low %v7879, %v7903
  %v8375 = vcombine.low %v7917, %v7925
  %v8376 = vcombine.low %v7927, %v7910
  %v8377 = vcombine.low %v7924, %v7926
  %v8379 = vunpack.c.l.s4 1966171168
  %v8380 = vunpack.c.0.s8 %v8379
  %v8381 = vlaneseq
  %v8382 = vshrl.u32 %v8381, 7
  %v8383 = vsub.s32 %v8380, %v8382
  %v8384 = vrot.slane %v8374, %v8383
  %v8386 = vunpack.c.l.s4 1966171168
  %v8387 = vunpack.c.0.s8 %v8386
  %v8388 = vlaneseq
  %v8389 = vshrl.u32 %v8388, 7
  %v8390 = vsub.s32 %v8387, %v8389
  %v8391 = vrot.slane %v8375, %v8390
  %v8393 = vunpack.c.l.s4 1966171168
  %v8394 = vunpack.c.0.s8 %v8393
  %v8395 = vlaneseq
  %v8396 = vshrl.u32 %v8395, 7
  %v8397 = vsub.s32 %v8394, %v8396
  %v8398 = vrot.slane %v8376, %v8397
  %v8400 = vunpack.c.l.s4 1966171168
  %v8401 = vunpack.c.0.s8 %v8400
  %v8402 = vlaneseq
  %v8403 = vshrl.u32 %v8402, 7
  %v8404 = vsub.s32 %v8401, %v8403
  %v8405 = vrot.slane %v8377, %v8404
  %v8406 = vcombine.low %v8384, %v8391
  %v8407 = vcombine.low %v8398, %v8405
  %v8409 = vunpack.c.l.s4 1966171168
  %v8410 = vunpack.c.0.s8 %v8409
  %v8411 = vlaneseq
  %v8412 = vshrl.u32 %v8411, 7
  %v8413 = vsub.s32 %v8410, %v8412
  %v8414 = vrot.slane %v8406, %v8413
  %v8416 = vunpack.c.l.s4 1966171168
  %v8417 = vunpack.c.0.s8 %v8416
  %v8418 = vlaneseq
  %v8419 = vshrl.u32 %v8418, 7
  %v8420 = vsub.s32 %v8417, %v8419
  %v8421 = vrot.slane %v8407, %v8420
  %v8422 = vcombine.low %v8414, %v8421
  %v8423 = vcombine.low %v7928, %v7942
  %v8424 = vcombine.low %v7966, %v7980
  %v8425 = vcombine.low %v7988, %v7990
  %v8426 = vcombine.low %v7973, %v7987
  %v8428 = vunpack.c.l.s4 1966171168
  %v8429 = vunpack.c.0.s8 %v8428
  %v8430 = vlaneseq
  %v8431 = vshrl.u32 %v8430, 7
  %v8432 = vsub.s32 %v8429, %v8431
  %v8433 = vrot.slane %v8423, %v8432
  %v8435 = vunpack.c.l.s4 1966171168
  %v8436 = vunpack.c.0.s8 %v8435
  %v8437 = vlaneseq
  %v8438 = vshrl.u32 %v8437, 7
  %v8439 = vsub.s32 %v8436, %v8438
  %v8440 = vrot.slane %v8424, %v8439
  %v8442 = vunpack.c.l.s4 1966171168
  %v8443 = vunpack.c.0.s8 %v8442
  %v8444 = vlaneseq
  %v8445 = vshrl.u32 %v8444, 7
  %v8446 = vsub.s32 %v8443, %v8445
  %v8447 = vrot.slane %v8425, %v8446
  %v8449 = vunpack.c.l.s4 1966171168
  %v8450 = vunpack.c.0.s8 %v8449
  %v8451 = vlaneseq
  %v8452 = vshrl.u32 %v8451, 7
  %v8453 = vsub.s32 %v8450, %v8452
  %v8454 = vrot.slane %v8426, %v8453
  %v8455 = vcombine.low %v8433, %v8440
  %v8456 = vcombine.low %v8447, %v8454
  %v8458 = vunpack.c.l.s4 1966171168
  %v8459 = vunpack.c.0.s8 %v8458
  %v8460 = vlaneseq
  %v8461 = vshrl.u32 %v8460, 7
  %v8462 = vsub.s32 %v8459, %v8461
  %v8463 = vrot.slane %v8455, %v8462
  %v8465 = vunpack.c.l.s4 1966171168
  %v8466 = vunpack.c.0.s8 %v8465
  %v8467 = vlaneseq
  %v8468 = vshrl.u32 %v8467, 7
  %v8469 = vsub.s32 %v8466, %v8468
  %v8470 = vrot.slane %v8456, %v8469
  %v8471 = vcombine.low %v8463, %v8470
  %v8472 = vcombine.low %v7989, %v7991
  %v8473 = vcombine.low %v8005, %v8029
  %v8474 = vcombine.low %v8043, %v8051
  %v8475 = vcombine.low %v8053, %v8036
  %v8477 = vunpack.c.l.s4 1966171168
  %v8478 = vunpack.c.0.s8 %v8477
  %v8479 = vlaneseq
  %v8480 = vshrl.u32 %v8479, 7
  %v8481 = vsub.s32 %v8478, %v8480
  %v8482 = vrot.slane %v8472, %v8481
  %v8484 = vunpack.c.l.s4 1966171168
  %v8485 = vunpack.c.0.s8 %v8484
  %v8486 = vlaneseq
  %v8487 = vshrl.u32 %v8486, 7
  %v8488 = vsub.s32 %v8485, %v8487
  %v8489 = vrot.slane %v8473, %v8488
  %v8491 = vunpack.c.l.s4 1966171168
  %v8492 = vunpack.c.0.s8 %v8491
  %v8493 = vlaneseq
  %v8494 = vshrl.u32 %v8493, 7
  %v8495 = vsub.s32 %v8492, %v8494
  %v8496 = vrot.slane %v8474, %v8495
  %v8498 = vunpack.c.l.s4 1966171168
  %v8499 = vunpack.c.0.s8 %v8498
  %v8500 = vlaneseq
  %v8501 = vshrl.u32 %v8500, 7
  %v8502 = vsub.s32 %v8499, %v8501
  %v8503 = vrot.slane %v8475, %v8502
  %v8504 = vcombine.low %v8482, %v8489
  %v8505 = vcombine.low %v8496, %v8503
  %v8507 = vunpack.c.l.s4 1966171168
  %v8508 = vunpack.c.0.s8 %v8507
  %v8509 = vlaneseq
  %v8510 = vshrl.u32 %v8509, 7
  %v8511 = vsub.s32 %v8508, %v8510
  %v8512 = vrot.slane %v8504, %v8511
  %v8514 = vunpack.c.l.s4 1966171168
  %v8515 = vunpack.c.0.s8 %v8514
  %v8516 = vlaneseq
  %v8517 = vshrl.u32 %v8516, 7
  %v8518 = vsub.s32 %v8515, %v8517
  %v8519 = vrot.slane %v8505, %v8518
  %v8520 = vcombine.low %v8512, %v8519
  %v8521 = vcombine.low %v8050, %v8052
  %v8522 = vcombine.low %v8054, %v8068
  %v8523 = vcombine.low %v8092, %v8106
  %v8524 = vcombine.low %v8114, %v8116
  %v8526 = vunpack.c.l.s4 1966171168
  %v8527 = vunpack.c.0.s8 %v8526
  %v8528 = vlaneseq
  %v8529 = vshrl.u32 %v8528, 7
  %v8530 = vsub.s32 %v8527, %v8529
  %v8531 = vrot.slane %v8521, %v8530
  %v8533 = vunpack.c.l.s4 1966171168
  %v8534 = vunpack.c.0.s8 %v8533
  %v8535 = vlaneseq
  %v8536 = vshrl.u32 %v8535, 7
  %v8537 = vsub.s32 %v8534, %v8536
  %v8538 = vrot.slane %v8522, %v8537
  %v8540 = vunpack.c.l.s4 1966171168
  %v8541 = vunpack.c.0.s8 %v8540
  %v8542 = vlaneseq
  %v8543 = vshrl.u32 %v8542, 7
  %v8544 = vsub.s32 %v8541, %v8543
  %v8545 = vrot.slane %v8523, %v8544
  %v8547 = vunpack.c.l.s4 1966171168
  %v8548 = vunpack.c.0.s8 %v8547
  %v8549 = vlaneseq
  %v8550 = vshrl.u32 %v8549, 7
  %v8551 = vsub.s32 %v8548, %v8550
  %v8552 = vrot.slane %v8524, %v8551
  %v8553 = vcombine.low %v8531, %v8538
  %v8554 = vcombine.low %v8545, %v8552
  %v8556 = vunpack.c.l.s4 1966171168
  %v8557 = vunpack.c.0.s8 %v8556
  %v8558 = vlaneseq
  %v8559 = vshrl.u32 %v8558, 7
  %v8560 = vsub.s32 %v8557, %v8559
  %v8561 = vrot.slane %v8553, %v8560
  %v8563 = vunpack.c.l.s4 1966171168
  %v8564 = vunpack.c.0.s8 %v8563
  %v8565 = vlaneseq
  %v8566 = vshrl.u32 %v8565, 7
  %v8567 = vsub.s32 %v8564, %v8566
  %v8568 = vrot.slane %v8554, %v8567
  %v8569 = vcombine.low %v8561, %v8568
  %v8570 = vcombine.low %v8099, %v8113
  %v8571 = vcombine.low %v8115, %v8117
  %v8572 = vcombine.low %v8131, %v8155
  %v8573 = vcombine.low %v8169, %v8177
  %v8575 = vunpack.c.l.s4 1966171168
  %v8576 = vunpack.c.0.s8 %v8575
  %v8577 = vlaneseq
  %v8578 = vshrl.u32 %v8577, 7
  %v8579 = vsub.s32 %v8576, %v8578
  %v8580 = vrot.slane %v8570, %v8579
  %v8582 = vunpack.c.l.s4 1966171168
  %v8583 = vunpack.c.0.s8 %v8582
  %v8584 = vlaneseq
  %v8585 = vshrl.u32 %v8584, 7
  %v8586 = vsub.s32 %v8583, %v8585
  %v8587 = vrot.slane %v8571, %v8586
  %v8589 = vunpack.c.l.s4 1966171168
  %v8590 = vunpack.c.0.s8 %v8589
  %v8591 = vlaneseq
  %v8592 = vshrl.u32 %v8591, 7
  %v8593 = vsub.s32 %v8590, %v8592
  %v8594 = vrot.slane %v8572, %v8593
  %v8596 = vunpack.c.l.s4 1966171168
  %v8597 = vunpack.c.0.s8 %v8596
  %v8598 = vlaneseq
  %v8599 = vshrl.u32 %v8598, 7
  %v8600 = vsub.s32 %v8597, %v8599
  %v8601 = vrot.slane %v8573, %v8600
  %v8602 = vcombine.low %v8580, %v8587
  %v8603 = vcombine.low %v8594, %v8601
  %v8605 = vunpack.c.l.s4 1966171168
  %v8606 = vunpack.c.0.s8 %v8605
  %v8607 = vlaneseq
  %v8608 = vshrl.u32 %v8607, 7
  %v8609 = vsub.s32 %v8606, %v8608
  %v8610 = vrot.slane %v8602, %v8609
  %v8612 = vunpack.c.l.s4 1966171168
  %v8613 = vunpack.c.0.s8 %v8612
  %v8614 = vlaneseq
  %v8615 = vshrl.u32 %v8614, 7
  %v8616 = vsub.s32 %v8613, %v8615
  %v8617 = vrot.slane %v8603, %v8616
  %v8618 = vcombine.low %v8610, %v8617
  %v8619 = vcombine.low %v8179, %v8162
  %v8620 = vcombine.low %v8176, %v8178
  %v8621 = vcombine.low %v8180, %v8194
  %v8622 = vcombine.low %v8218, %v8232
  %v8624 = vunpack.c.l.s4 1966171168
  %v8625 = vunpack.c.0.s8 %v8624
  %v8626 = vlaneseq
  %v8627 = vshrl.u32 %v8626, 7
  %v8628 = vsub.s32 %v8625, %v8627
  %v8629 = vrot.slane %v8619, %v8628
  %v8631 = vunpack.c.l.s4 1966171168
  %v8632 = vunpack.c.0.s8 %v8631
  %v8633 = vlaneseq
  %v8634 = vshrl.u32 %v8633, 7
  %v8635 = vsub.s32 %v8632, %v8634
  %v8636 = vrot.slane %v8620, %v8635
  %v8638 = vunpack.c.l.s4 1966171168
  %v8639 = vunpack.c.0.s8 %v8638
  %v8640 = vlaneseq
  %v8641 = vshrl.u32 %v8640, 7
  %v8642 = vsub.s32 %v8639, %v8641
  %v8643 = vrot.slane %v8621, %v8642
  %v8645 = vunpack.c.l.s4 1966171168
  %v8646 = vunpack.c.0.s8 %v8645
  %v8647 = vlaneseq
  %v8648 = vshrl.u32 %v8647, 7
  %v8649 = vsub.s32 %v8646, %v8648
  %v8650 = vrot.slane %v8622, %v8649
  %v8651 = vcombine.low %v8629, %v8636
  %v8652 = vcombine.low %v8643, %v8650
  %v8654 = vunpack.c.l.s4 1966171168
  %v8655 = vunpack.c.0.s8 %v8654
  %v8656 = vlaneseq
  %v8657 = vshrl.u32 %v8656, 7
  %v8658 = vsub.s32 %v8655, %v8657
  %v8659 = vrot.slane %v8651, %v8658
  %v8661 = vunpack.c.l.s4 1966171168
  %v8662 = vunpack.c.0.s8 %v8661
  %v8663 = vlaneseq
  %v8664 = vshrl.u32 %v8663, 7
  %v8665 = vsub.s32 %v8662, %v8664
  %v8666 = vrot.slane %v8652, %v8665
  %v8667 = vcombine.low %v8659, %v8666
  %v8668 = vcombine.low %v8240, %v8242
  %v8669 = vcombine.low %v8225, %v8239
  %v8670 = vcombine.low %v8241, %v8243
  %v8671 = vcombine.low %v8257, %v8281
  %v8673 = vunpack.c.l.s4 1966171168
  %v8674 = vunpack.c.0.s8 %v8673
  %v8675 = vlaneseq
  %v8676 = vshrl.u32 %v8675, 7
  %v8677 = vsub.s32 %v8674, %v8676
  %v8678 = vrot.slane %v8668, %v8677
  %v8680 = vunpack.c.l.s4 1966171168
  %v8681 = vunpack.c.0.s8 %v8680
  %v8682 = vlaneseq
  %v8683 = vshrl.u32 %v8682, 7
  %v8684 = vsub.s32 %v8681, %v8683
  %v8685 = vrot.slane %v8669, %v8684
  %v8687 = vunpack.c.l.s4 1966171168
  %v8688 = vunpack.c.0.s8 %v8687
  %v8689 = vlaneseq
  %v8690 = vshrl.u32 %v8689, 7
  %v8691 = vsub.s32 %v8688, %v8690
  %v8692 = vrot.slane %v8670, %v8691
  %v8694 = vunpack.c.l.s4 1966171168
  %v8695 = vunpack.c.0.s8 %v8694
  %v8696 = vlaneseq
  %v8697 = vshrl.u32 %v8696, 7
  %v8698 = vsub.s32 %v8695, %v8697
  %v8699 = vrot.slane %v8671, %v8698
  %v8700 = vcombine.low %v8678, %v8685
  %v8701 = vcombine.low %v8692, %v8699
  %v8703 = vunpack.c.l.s4 1966171168
  %v8704 = vunpack.c.0.s8 %v8703
  %v8705 = vlaneseq
  %v8706 = vshrl.u32 %v8705, 7
  %v8707 = vsub.s32 %v8704, %v8706
  %v8708 = vrot.slane %v8700, %v8707
  %v8710 = vunpack.c.l.s4 1966171168
  %v8711 = vunpack.c.0.s8 %v8710
  %v8712 = vlaneseq
  %v8713 = vshrl.u32 %v8712, 7
  %v8714 = vsub.s32 %v8711, %v8713
  %v8715 = vrot.slane %v8701, %v8714
  %v8716 = vcombine.low %v8708, %v8715
  %v8717 = vcombine.low %v8295, %v8303
  %v8718 = vcombine.low %v8305, %v8288
  %v8719 = vcombine.low %v8302, %v8304
  %v8720 = vcombine.low %v8306, %v8320
  %v8722 = vunpack.c.l.s4 1966171168
  %v8723 = vunpack.c.0.s8 %v8722
  %v8724 = vlaneseq
  %v8725 = vshrl.u32 %v8724, 7
  %v8726 = vsub.s32 %v8723, %v8725
  %v8727 = vrot.slane %v8717, %v8726
  %v8729 = vunpack.c.l.s4 1966171168
  %v8730 = vunpack.c.0.s8 %v8729
  %v8731 = vlaneseq
  %v8732 = vshrl.u32 %v8731, 7
  %v8733 = vsub.s32 %v8730, %v8732
  %v8734 = vrot.slane %v8718, %v8733
  %v8736 = vunpack.c.l.s4 1966171168
  %v8737 = vunpack.c.0.s8 %v8736
  %v8738 = vlaneseq
  %v8739 = vshrl.u32 %v8738, 7
  %v8740 = vsub.s32 %v8737, %v8739
  %v8741 = vrot.slane %v8719, %v8740
  %v8743 = vunpack.c.l.s4 1966171168
  %v8744 = vunpack.c.0.s8 %v8743
  %v8745 = vlaneseq
  %v8746 = vshrl.u32 %v8745, 7
  %v8747 = vsub.s32 %v8744, %v8746
  %v8748 = vrot.slane %v8720, %v8747
  %v8749 = vcombine.low %v8727, %v8734
  %v8750 = vcombine.low %v8741, %v8748
  %v8752 = vunpack.c.l.s4 1966171168
  %v8753 = vunpack.c.0.s8 %v8752
  %v8754 = vlaneseq
  %v8755 = vshrl.u32 %v8754, 7
  %v8756 = vsub.s32 %v8753, %v8755
  %v8757 = vrot.slane %v8749, %v8756
  %v8759 = vunpack.c.l.s4 1966171168
  %v8760 = vunpack.c.0.s8 %v8759
  %v8761 = vlaneseq
  %v8762 = vshrl.u32 %v8761, 7
  %v8763 = vsub.s32 %v8760, %v8762
  %v8764 = vrot.slane %v8750, %v8763
  %v8765 = vcombine.low %v8757, %v8764
  %v8766 = vsel %vm273, %v8373, 0
  %v8768 = vsel %vm273, %v8422, 0
  %v8770 = vsel %vm273, %v8471, 0
  %v8772 = vsel %vm273, %v8520, 0
  %v8774 = vsel %vm273, %v8569, 0
  %v8776 = vsel %vm273, %v8618, 0
  %v8778 = vsel %vm273, %v8667, 0
  %v8780 = vsel %vm273, %v8716, 0
  %v8782 = vsel %vm273, %v8765, 0
  %8784 = vmatprep.subr.mxu0 0.0
  %8785 = vmatpush1.msra.mxu0 %v41
  %8786 = vmatprep.subr.mxu0 0.0
  %8787 = vmatpush1.msra.mxu0 %v42
  %8788 = vmatprep.subr.mxu0 0.0
  %8789 = vmatpush1.msra.mxu0 %v43
  %8790 = vmatprep.subr.mxu0 0.0
  %8791 = vmatpush1.msra.mxu0 %v44
  %8792 = vmatprep.subr.mxu0 0.0
  %8793 = vmatpush1.msra.mxu0 %v45
  %8794 = vmatprep.subr.mxu0 0.0
  %8795 = vmatpush1.msra.mxu0 %v46
  %8796 = vmatprep.subr.mxu0 0.0
  %8797 = vmatpush1.msra.mxu0 %v47
  %8798 = vmatprep.subr.mxu0 0.0
  %8799 = vmatpush1.msra.mxu0 %v48
  %8800 = vmatprep.subr.mxu0 0.0
  %8801 = vmatpush1.msra.mxu0 0.0
  %8802 = vmatprep.subr.mxu0 0.0
  %8803 = vmatpush1.msra.mxu0 0.0
  %8804 = vmatprep.subr.mxu0 0.0
  %8805 = vmatpush1.msra.mxu0 0.0
  %8806 = vmatprep.subr.mxu0 0.0
  %8807 = vmatpush1.msra.mxu0 0.0
  %8808 = vmatprep.subr.mxu0 0.0
  %8809 = vmatpush1.msra.mxu0 0.0
  %8810 = vmatprep.subr.mxu0 0.0
  %8811 = vmatpush1.msra.mxu0 0.0
  %8812 = vmatprep.subr.mxu0 0.0
  %8813 = vmatpush1.msra.mxu0 0.0
  %8814 = vmatprep.subr.mxu0 0.0
  %8815 = vmatpush1.msra.mxu0 0.0
  %8816 = vmatprep.subr.mxu0 0.0
  %8817 = vmatpush1.msra.mxu0 0.0
  %8818 = vmatprep.subr.mxu0 0.0
  %8819 = vmatpush1.msra.mxu0 0.0
  %8820 = vmatprep.subr.mxu0 0.0
  %8821 = vmatpush1.msra.mxu0 0.0
  %8822 = vmatprep.subr.mxu0 0.0
  %8823 = vmatpush1.msra.mxu0 0.0
  %8824 = vmatprep.subr.mxu0 0.0
  %8825 = vmatpush1.msra.mxu0 0.0
  %8826 = vmatprep.subr.mxu0 0.0
  %8827 = vmatpush1.msra.mxu0 0.0
  %8828 = vmatprep.subr.mxu0 0.0
  %8829 = vmatpush1.msra.mxu0 0.0
  %8830 = vmatprep.subr.mxu0 0.0
  %8831 = vmatpush1.msra.mxu0 0.0
  %8832 = vmatprep.subr.mxu0 0.0
  %8833 = vmatpush1.msra.mxu0 0.0
  %8834 = vmatprep.subr.mxu0 0.0
  %8835 = vmatpush1.msra.mxu0 0.0
  %8836 = vmatprep.subr.mxu0 0.0
  %8837 = vmatpush1.msra.mxu0 0.0
  %8838 = vmatprep.subr.mxu0 0.0
  %8839 = vmatpush1.msra.mxu0 0.0
  %8840 = vmatprep.subr.mxu0 0.0
  %8841 = vmatpush1.msra.mxu0 0.0
  %8842 = vmatprep.subr.mxu0 0.0
  %8843 = vmatpush1.msra.mxu0 0.0
  %8844 = vmatprep.subr.mxu0 0.0
  %8845 = vmatpush1.msra.mxu0 0.0
  %8846 = vmatprep.subr.mxu0 0.0
  %8847 = vmatpush1.msra.mxu0 0.0
  %8848 = vmatprep.mubr.f32.mxu0 0.0
  %8849 = vmatmul.mubr.f32.gmra.mrb[0].mxu0 %v8766
  %v8850 = vpop.f32.mrb[0].mxu0
  %v8851 = vadd.f32 %v8324, %v8850
  %v8852 = vpop.f32.mrb[0].mxu0
  %8853 = vmatprep.mubr.f32.mxu0 0.0
  %8854 = vmatmul.mubr.f32.gmra.mrb[0].mxu0 %v8768
  %v8855 = vpop.f32.mrb[0].mxu0
  %v8856 = vadd.f32 %v8324, %v8855
  %v8857 = vpop.f32.mrb[0].mxu0
  %8858 = vmatprep.mubr.f32.mxu0 0.0
  %8859 = vmatmul.mubr.f32.gmra.mrb[0].mxu0 %v8770
  %v8860 = vpop.f32.mrb[0].mxu0
  %v8861 = vadd.f32 %v8324, %v8860
  %v8862 = vpop.f32.mrb[0].mxu0
  %8863 = vmatprep.mubr.f32.mxu0 0.0
  %8864 = vmatmul.mubr.f32.gmra.mrb[0].mxu0 %v8772
  %v8865 = vpop.f32.mrb[0].mxu0
  %v8866 = vadd.f32 %v8324, %v8865
  %v8867 = vpop.f32.mrb[0].mxu0
  %8868 = vmatprep.mubr.f32.mxu0 0.0
  %8869 = vmatmul.mubr.f32.gmra.mrb[0].mxu0 %v8774
  %v8870 = vpop.f32.mrb[0].mxu0
  %v8871 = vadd.f32 %v8324, %v8870
  %v8872 = vpop.f32.mrb[0].mxu0
  %8873 = vmatprep.mubr.f32.mxu0 0.0
  %8874 = vmatmul.mubr.f32.gmra.mrb[0].mxu0 %v8776
  %v8875 = vpop.f32.mrb[0].mxu0
  %v8876 = vadd.f32 %v8324, %v8875
  %v8877 = vpop.f32.mrb[0].mxu0
  %8878 = vmatprep.mubr.f32.mxu0 0.0
  %8879 = vmatmul.mubr.f32.gmra.mrb[0].mxu0 %v8778
  %v8880 = vpop.f32.mrb[0].mxu0
  %v8881 = vadd.f32 %v8324, %v8880
  %v8882 = vpop.f32.mrb[0].mxu0
  %8883 = vmatprep.mubr.f32.mxu0 0.0
  %8884 = vmatmul.mubr.f32.gmra.mrb[0].mxu0 %v8780
  %v8885 = vpop.f32.mrb[0].mxu0
  %v8886 = vadd.f32 %v8324, %v8885
  %v8887 = vpop.f32.mrb[0].mxu0
  %8888 = vmatprep.mubr.f32.mxu0 0.0
  %8889 = vmatmul.mubr.f32.gmra.mrb[0].mxu0 %v8782
  %v8890 = vpop.f32.mrb[0].mxu0
  %v8891 = vadd.f32 %v8324, %v8890
  %v8892 = vpop.f32.mrb[0].mxu0
  %8893 = vdwg.mxu0
  %v8894 = vlaneseq
  %v8895 = vshrl.u32 %v8894, 7
  %v8896 = vsub.s32 6, %v8895
  %v8897 = vrot.slane %v116, %v8896
  %v8899 = vsel %vm273, %v8851, 0
  %v8902 = vsel %vm273, %v8856, 0
  %v8905 = vsel %vm273, %v8861, 0
  %v8908 = vsel %vm273, %v8866, 0
  %v8911 = vsel %vm273, %v8871, 0
  %v8914 = vsel %vm273, %v8876, 0
  %v8917 = vsel %vm273, %v8881, 0
  %v8920 = vsel %vm273, %v8886, 0
  %v8923 = vsel %vm273, %v8891, 0
  %8925 = vmatprep.subr.mxu0 0.0
  %8926 = vmatpush1.msra.mxu0 %v49
  %8927 = vmatprep.subr.mxu0 0.0
  %8928 = vmatpush1.msra.mxu0 %v50
  %8929 = vmatprep.subr.mxu0 0.0
  %8930 = vmatpush1.msra.mxu0 %v51
  %8931 = vmatprep.subr.mxu0 0.0
  %8932 = vmatpush1.msra.mxu0 %v52
  %8933 = vmatprep.subr.mxu0 0.0
  %8934 = vmatpush1.msra.mxu0 %v53
  %8935 = vmatprep.subr.mxu0 0.0
  %8936 = vmatpush1.msra.mxu0 %v54
  %8937 = vmatprep.subr.mxu0 0.0
  %8938 = vmatpush1.msra.mxu0 %v55
  %8939 = vmatprep.subr.mxu0 0.0
  %8940 = vmatpush1.msra.mxu0 %v56
  %8941 = vmatprep.subr.mxu0 0.0
  %8942 = vmatpush1.msra.mxu0 0.0
  %8943 = vmatprep.subr.mxu0 0.0
  %8944 = vmatpush1.msra.mxu0 0.0
  %8945 = vmatprep.subr.mxu0 0.0
  %8946 = vmatpush1.msra.mxu0 0.0
  %8947 = vmatprep.subr.mxu0 0.0
  %8948 = vmatpush1.msra.mxu0 0.0
  %8949 = vmatprep.subr.mxu0 0.0
  %8950 = vmatpush1.msra.mxu0 0.0
  %8951 = vmatprep.subr.mxu0 0.0
  %8952 = vmatpush1.msra.mxu0 0.0
  %8953 = vmatprep.subr.mxu0 0.0
  %8954 = vmatpush1.msra.mxu0 0.0
  %8955 = vmatprep.subr.mxu0 0.0
  %8956 = vmatpush1.msra.mxu0 0.0
  %8957 = vmatprep.subr.mxu0 0.0
  %8958 = vmatpush1.msra.mxu0 0.0
  %8959 = vmatprep.subr.mxu0 0.0
  %8960 = vmatpush1.msra.mxu0 0.0
  %8961 = vmatprep.subr.mxu0 0.0
  %8962 = vmatpush1.msra.mxu0 0.0
  %8963 = vmatprep.subr.mxu0 0.0
  %8964 = vmatpush1.msra.mxu0 0.0
  %8965 = vmatprep.subr.mxu0 0.0
  %8966 = vmatpush1.msra.mxu0 0.0
  %8967 = vmatprep.subr.mxu0 0.0
  %8968 = vmatpush1.msra.mxu0 0.0
  %8969 = vmatprep.subr.mxu0 0.0
  %8970 = vmatpush1.msra.mxu0 0.0
  %8971 = vmatprep.subr.mxu0 0.0
  %8972 = vmatpush1.msra.mxu0 0.0
  %8973 = vmatprep.subr.mxu0 0.0
  %8974 = vmatpush1.msra.mxu0 0.0
  %8975 = vmatprep.subr.mxu0 0.0
  %8976 = vmatpush1.msra.mxu0 0.0
  %8977 = vmatprep.subr.mxu0 0.0
  %8978 = vmatpush1.msra.mxu0 0.0
  %8979 = vmatprep.subr.mxu0 0.0
  %8980 = vmatpush1.msra.mxu0 0.0
  %8981 = vmatprep.subr.mxu0 0.0
  %8982 = vmatpush1.msra.mxu0 0.0
  %8983 = vmatprep.subr.mxu0 0.0
  %8984 = vmatpush1.msra.mxu0 0.0
  %8985 = vmatprep.subr.mxu0 0.0
  %8986 = vmatpush1.msra.mxu0 0.0
  %8987 = vmatprep.subr.mxu0 0.0
  %8988 = vmatpush1.msra.mxu0 0.0
  %8989 = vmatprep.mubr.f32.mxu0 0.0
  %8990 = vmatmul.mubr.f32.gmra.mrb[0].mxu0 %v8899
  %v8991 = vpop.f32.mrb[0].mxu0
  %v8992 = vadd.f32 %v8897, %v8991
  %v8993 = vpop.f32.mrb[0].mxu0
  %8994 = vmatprep.mubr.f32.mxu0 0.0
  %8995 = vmatmul.mubr.f32.gmra.mrb[0].mxu0 %v8902
  %v8996 = vpop.f32.mrb[0].mxu0
  %v8997 = vadd.f32 %v8897, %v8996
  %v8998 = vpop.f32.mrb[0].mxu0
  %8999 = vmatprep.mubr.f32.mxu0 0.0
  %9000 = vmatmul.mubr.f32.gmra.mrb[0].mxu0 %v8905
  %v9001 = vpop.f32.mrb[0].mxu0
  %v9002 = vadd.f32 %v8897, %v9001
  %v9003 = vpop.f32.mrb[0].mxu0
  %9004 = vmatprep.mubr.f32.mxu0 0.0
  %9005 = vmatmul.mubr.f32.gmra.mrb[0].mxu0 %v8908
  %v9006 = vpop.f32.mrb[0].mxu0
  %v9007 = vadd.f32 %v8897, %v9006
  %v9008 = vpop.f32.mrb[0].mxu0
  %9009 = vmatprep.mubr.f32.mxu0 0.0
  %9010 = vmatmul.mubr.f32.gmra.mrb[0].mxu0 %v8911
  %v9011 = vpop.f32.mrb[0].mxu0
  %v9012 = vadd.f32 %v8897, %v9011
  %v9013 = vpop.f32.mrb[0].mxu0
  %9014 = vmatprep.mubr.f32.mxu0 0.0
  %9015 = vmatmul.mubr.f32.gmra.mrb[0].mxu0 %v8914
  %v9016 = vpop.f32.mrb[0].mxu0
  %v9017 = vadd.f32 %v8897, %v9016
  %v9018 = vpop.f32.mrb[0].mxu0
  %9019 = vmatprep.mubr.f32.mxu0 0.0
  %9020 = vmatmul.mubr.f32.gmra.mrb[0].mxu0 %v8917
  %v9021 = vpop.f32.mrb[0].mxu0
  %v9022 = vadd.f32 %v8897, %v9021
  %v9023 = vpop.f32.mrb[0].mxu0
  %9024 = vmatprep.mubr.f32.mxu0 0.0
  %9025 = vmatmul.mubr.f32.gmra.mrb[0].mxu0 %v8920
  %v9026 = vpop.f32.mrb[0].mxu0
  %v9027 = vadd.f32 %v8897, %v9026
  %v9028 = vpop.f32.mrb[0].mxu0
  %9029 = vmatprep.mubr.f32.mxu0 0.0
  %9030 = vmatmul.mubr.f32.gmra.mrb[0].mxu0 %v8923
  %v9031 = vpop.f32.mrb[0].mxu0
  %v9032 = vadd.f32 %v8897, %v9031
  %v9033 = vpop.f32.mrb[0].mxu0
  %9034 = vdwg.mxu0
  %v9035 = vmax.f32 %v8992, 0.0
  %v9036 = vmax.f32 %v8997, 0.0
  %v9037 = vmax.f32 %v9002, 0.0
  %v9038 = vmax.f32 %v9007, 0.0
  %v9039 = vmax.f32 %v9012, 0.0
  %v9040 = vmax.f32 %v9017, 0.0
  %v9041 = vmax.f32 %v9022, 0.0
  %v9042 = vmax.f32 %v9027, 0.0
  %v9043 = vmax.f32 %v9032, 0.0
  %v9044 = vlaneseq
  %v9045 = vshrl.u32 %v9044, 7
  %v9046 = vsub.s32 7, %v9045
  %v9047 = vrot.slane %v116, %v9046
  %v9049 = vsel %vm273, %v9035, 0
  %v9052 = vsel %vm273, %v9036, 0
  %v9055 = vsel %vm273, %v9037, 0
  %v9058 = vsel %vm273, %v9038, 0
  %v9061 = vsel %vm273, %v9039, 0
  %v9064 = vsel %vm273, %v9040, 0
  %v9067 = vsel %vm273, %v9041, 0
  %v9070 = vsel %vm273, %v9042, 0
  %v9073 = vsel %vm273, %v9043, 0
  %9075 = vmatprep.subr.mxu0 0.0
  %9076 = vmatpush1.msra.mxu0 %v57
  %9077 = vmatprep.subr.mxu0 0.0
  %9078 = vmatpush1.msra.mxu0 %v58
  %9079 = vmatprep.subr.mxu0 0.0
  %9080 = vmatpush1.msra.mxu0 %v59
  %9081 = vmatprep.subr.mxu0 0.0
  %9082 = vmatpush1.msra.mxu0 %v60
  %9083 = vmatprep.subr.mxu0 0.0
  %9084 = vmatpush1.msra.mxu0 %v61
  %9085 = vmatprep.subr.mxu0 0.0
  %9086 = vmatpush1.msra.mxu0 %v62
  %9087 = vmatprep.subr.mxu0 0.0
  %9088 = vmatpush1.msra.mxu0 %v63
  %9089 = vmatprep.subr.mxu0 0.0
  %9090 = vmatpush1.msra.mxu0 %v64
  %9091 = vmatprep.subr.mxu0 0.0
  %9092 = vmatpush1.msra.mxu0 0.0
  %9093 = vmatprep.subr.mxu0 0.0
  %9094 = vmatpush1.msra.mxu0 0.0
  %9095 = vmatprep.subr.mxu0 0.0
  %9096 = vmatpush1.msra.mxu0 0.0
  %9097 = vmatprep.subr.mxu0 0.0
  %9098 = vmatpush1.msra.mxu0 0.0
  %9099 = vmatprep.subr.mxu0 0.0
  %9100 = vmatpush1.msra.mxu0 0.0
  %9101 = vmatprep.subr.mxu0 0.0
  %9102 = vmatpush1.msra.mxu0 0.0
  %9103 = vmatprep.subr.mxu0 0.0
  %9104 = vmatpush1.msra.mxu0 0.0
  %9105 = vmatprep.subr.mxu0 0.0
  %9106 = vmatpush1.msra.mxu0 0.0
  %9107 = vmatprep.subr.mxu0 0.0
  %9108 = vmatpush1.msra.mxu0 0.0
  %9109 = vmatprep.subr.mxu0 0.0
  %9110 = vmatpush1.msra.mxu0 0.0
  %9111 = vmatprep.subr.mxu0 0.0
  %9112 = vmatpush1.msra.mxu0 0.0
  %9113 = vmatprep.subr.mxu0 0.0
  %9114 = vmatpush1.msra.mxu0 0.0
  %9115 = vmatprep.subr.mxu0 0.0
  %9116 = vmatpush1.msra.mxu0 0.0
  %9117 = vmatprep.subr.mxu0 0.0
  %9118 = vmatpush1.msra.mxu0 0.0
  %9119 = vmatprep.subr.mxu0 0.0
  %9120 = vmatpush1.msra.mxu0 0.0
  %9121 = vmatprep.subr.mxu0 0.0
  %9122 = vmatpush1.msra.mxu0 0.0
  %9123 = vmatprep.subr.mxu0 0.0
  %9124 = vmatpush1.msra.mxu0 0.0
  %9125 = vmatprep.subr.mxu0 0.0
  %9126 = vmatpush1.msra.mxu0 0.0
  %9127 = vmatprep.subr.mxu0 0.0
  %9128 = vmatpush1.msra.mxu0 0.0
  %9129 = vmatprep.subr.mxu0 0.0
  %9130 = vmatpush1.msra.mxu0 0.0
  %9131 = vmatprep.subr.mxu0 0.0
  %9132 = vmatpush1.msra.mxu0 0.0
  %9133 = vmatprep.subr.mxu0 0.0
  %9134 = vmatpush1.msra.mxu0 0.0
  %9135 = vmatprep.subr.mxu0 0.0
  %9136 = vmatpush1.msra.mxu0 0.0
  %9137 = vmatprep.subr.mxu0 0.0
  %9138 = vmatpush1.msra.mxu0 0.0
  %9139 = vmatprep.mubr.f32.mxu0 0.0
  %9140 = vmatmul.mubr.f32.gmra.mrb[0].mxu0 %v9049
  %v9141 = vpop.f32.mrb[0].mxu0
  %v9142 = vadd.f32 %v9047, %v9141
  %v9143 = vpop.f32.mrb[0].mxu0
  %9144 = vmatprep.mubr.f32.mxu0 0.0
  %9145 = vmatmul.mubr.f32.gmra.mrb[0].mxu0 %v9052
  %v9146 = vpop.f32.mrb[0].mxu0
  %v9147 = vadd.f32 %v9047, %v9146
  %v9148 = vpop.f32.mrb[0].mxu0
  %9149 = vmatprep.mubr.f32.mxu0 0.0
  %9150 = vmatmul.mubr.f32.gmra.mrb[0].mxu0 %v9055
  %v9151 = vpop.f32.mrb[0].mxu0
  %v9152 = vadd.f32 %v9047, %v9151
  %v9153 = vpop.f32.mrb[0].mxu0
  %9154 = vmatprep.mubr.f32.mxu0 0.0
  %9155 = vmatmul.mubr.f32.gmra.mrb[0].mxu0 %v9058
  %v9156 = vpop.f32.mrb[0].mxu0
  %v9157 = vadd.f32 %v9047, %v9156
  %v9158 = vpop.f32.mrb[0].mxu0
  %9159 = vmatprep.mubr.f32.mxu0 0.0
  %9160 = vmatmul.mubr.f32.gmra.mrb[0].mxu0 %v9061
  %v9161 = vpop.f32.mrb[0].mxu0
  %v9162 = vadd.f32 %v9047, %v9161
  %v9163 = vpop.f32.mrb[0].mxu0
  %9164 = vmatprep.mubr.f32.mxu0 0.0
  %9165 = vmatmul.mubr.f32.gmra.mrb[0].mxu0 %v9064
  %v9166 = vpop.f32.mrb[0].mxu0
  %v9167 = vadd.f32 %v9047, %v9166
  %v9168 = vpop.f32.mrb[0].mxu0
  %9169 = vmatprep.mubr.f32.mxu0 0.0
  %9170 = vmatmul.mubr.f32.gmra.mrb[0].mxu0 %v9067
  %v9171 = vpop.f32.mrb[0].mxu0
  %v9172 = vadd.f32 %v9047, %v9171
  %v9173 = vpop.f32.mrb[0].mxu0
  %9174 = vmatprep.mubr.f32.mxu0 0.0
  %9175 = vmatmul.mubr.f32.gmra.mrb[0].mxu0 %v9070
  %v9176 = vpop.f32.mrb[0].mxu0
  %v9177 = vadd.f32 %v9047, %v9176
  %v9178 = vpop.f32.mrb[0].mxu0
  %9179 = vmatprep.mubr.f32.mxu0 0.0
  %9180 = vmatmul.mubr.f32.gmra.mrb[0].mxu0 %v9073
  %v9181 = vpop.f32.mrb[0].mxu0
  %v9182 = vadd.f32 %v9047, %v9181
  %v9183 = vpop.f32.mrb[0].mxu0
  %9184 = vdwg.mxu0
  %v9185 = vlaneseq
  %v9186 = vshrl.u32 %v9185, 7
  %v9187 = vsub.s32 0, %v9186
  %v9188 = vrot.slane %v117, %v9187
  %9189 = vmatprep.subr.mxu0 0.0
  %9190 = vmatpush1.msra.mxu0 %v65
  %9191 = vmatprep.subr.mxu0 0.0
  %9192 = vmatpush1.msra.mxu0 %v66
  %9193 = vmatprep.subr.mxu0 0.0
  %9194 = vmatpush1.msra.mxu0 %v67
  %9195 = vmatprep.subr.mxu0 0.0
  %9196 = vmatpush1.msra.mxu0 %v68
  %9197 = vmatprep.subr.mxu0 0.0
  %9198 = vmatpush1.msra.mxu0 %v69
  %9199 = vmatprep.subr.mxu0 0.0
  %9200 = vmatpush1.msra.mxu0 %v70
  %9201 = vmatprep.subr.mxu0 0.0
  %9202 = vmatpush1.msra.mxu0 %v71
  %9203 = vmatprep.subr.mxu0 0.0
  %9204 = vmatpush1.msra.mxu0 %v72
  %9205 = vmatprep.subr.mxu0 0.0
  %9206 = vmatpush1.msra.mxu0 0.0
  %9207 = vmatprep.subr.mxu0 0.0
  %9208 = vmatpush1.msra.mxu0 0.0
  %9209 = vmatprep.subr.mxu0 0.0
  %9210 = vmatpush1.msra.mxu0 0.0
  %9211 = vmatprep.subr.mxu0 0.0
  %9212 = vmatpush1.msra.mxu0 0.0
  %9213 = vmatprep.subr.mxu0 0.0
  %9214 = vmatpush1.msra.mxu0 0.0
  %9215 = vmatprep.subr.mxu0 0.0
  %9216 = vmatpush1.msra.mxu0 0.0
  %9217 = vmatprep.subr.mxu0 0.0
  %9218 = vmatpush1.msra.mxu0 0.0
  %9219 = vmatprep.subr.mxu0 0.0
  %9220 = vmatpush1.msra.mxu0 0.0
  %9221 = vmatprep.subr.mxu0 0.0
  %9222 = vmatpush1.msra.mxu0 0.0
  %9223 = vmatprep.subr.mxu0 0.0
  %9224 = vmatpush1.msra.mxu0 0.0
  %9225 = vmatprep.subr.mxu0 0.0
  %9226 = vmatpush1.msra.mxu0 0.0
  %9227 = vmatprep.subr.mxu0 0.0
  %9228 = vmatpush1.msra.mxu0 0.0
  %9229 = vmatprep.subr.mxu0 0.0
  %9230 = vmatpush1.msra.mxu0 0.0
  %9231 = vmatprep.subr.mxu0 0.0
  %9232 = vmatpush1.msra.mxu0 0.0
  %9233 = vmatprep.subr.mxu0 0.0
  %9234 = vmatpush1.msra.mxu0 0.0
  %9235 = vmatprep.subr.mxu0 0.0
  %9236 = vmatpush1.msra.mxu0 0.0
  %9237 = vmatprep.subr.mxu0 0.0
  %9238 = vmatpush1.msra.mxu0 0.0
  %9239 = vmatprep.subr.mxu0 0.0
  %9240 = vmatpush1.msra.mxu0 0.0
  %9241 = vmatprep.subr.mxu0 0.0
  %9242 = vmatpush1.msra.mxu0 0.0
  %9243 = vmatprep.subr.mxu0 0.0
  %9244 = vmatpush1.msra.mxu0 0.0
  %9245 = vmatprep.subr.mxu0 0.0
  %9246 = vmatpush1.msra.mxu0 0.0
  %9247 = vmatprep.subr.mxu0 0.0
  %9248 = vmatpush1.msra.mxu0 0.0
  %9249 = vmatprep.subr.mxu0 0.0
  %9250 = vmatpush1.msra.mxu0 0.0
  %9251 = vmatprep.subr.mxu0 0.0
  %9252 = vmatpush1.msra.mxu0 0.0
  %9253 = vmatprep.mubr.f32.mxu0 0.0
  %9254 = vmatmul.mubr.f32.gmra.mrb[0].mxu0 %v8899
  %v9255 = vpop.f32.mrb[0].mxu0
  %v9256 = vadd.f32 %v9188, %v9255
  %v9257 = vpop.f32.mrb[0].mxu0
  %9258 = vmatprep.mubr.f32.mxu0 0.0
  %9259 = vmatmul.mubr.f32.gmra.mrb[0].mxu0 %v8902
  %v9260 = vpop.f32.mrb[0].mxu0
  %v9261 = vadd.f32 %v9188, %v9260
  %v9262 = vpop.f32.mrb[0].mxu0
  %9263 = vmatprep.mubr.f32.mxu0 0.0
  %9264 = vmatmul.mubr.f32.gmra.mrb[0].mxu0 %v8905
  %v9265 = vpop.f32.mrb[0].mxu0
  %v9266 = vadd.f32 %v9188, %v9265
  %v9267 = vpop.f32.mrb[0].mxu0
  %9268 = vmatprep.mubr.f32.mxu0 0.0
  %9269 = vmatmul.mubr.f32.gmra.mrb[0].mxu0 %v8908
  %v9270 = vpop.f32.mrb[0].mxu0
  %v9271 = vadd.f32 %v9188, %v9270
  %v9272 = vpop.f32.mrb[0].mxu0
  %9273 = vmatprep.mubr.f32.mxu0 0.0
  %9274 = vmatmul.mubr.f32.gmra.mrb[0].mxu0 %v8911
  %v9275 = vpop.f32.mrb[0].mxu0
  %v9276 = vadd.f32 %v9188, %v9275
  %v9277 = vpop.f32.mrb[0].mxu0
  %9278 = vmatprep.mubr.f32.mxu0 0.0
  %9279 = vmatmul.mubr.f32.gmra.mrb[0].mxu0 %v8914
  %v9280 = vpop.f32.mrb[0].mxu0
  %v9281 = vadd.f32 %v9188, %v9280
  %v9282 = vpop.f32.mrb[0].mxu0
  %9283 = vmatprep.mubr.f32.mxu0 0.0
  %9284 = vmatmul.mubr.f32.gmra.mrb[0].mxu0 %v8917
  %v9285 = vpop.f32.mrb[0].mxu0
  %v9286 = vadd.f32 %v9188, %v9285
  %v9287 = vpop.f32.mrb[0].mxu0
  %9288 = vmatprep.mubr.f32.mxu0 0.0
  %9289 = vmatmul.mubr.f32.gmra.mrb[0].mxu0 %v8920
  %v9290 = vpop.f32.mrb[0].mxu0
  %v9291 = vadd.f32 %v9188, %v9290
  %v9292 = vpop.f32.mrb[0].mxu0
  %9293 = vmatprep.mubr.f32.mxu0 0.0
  %9294 = vmatmul.mubr.f32.gmra.mrb[0].mxu0 %v8923
  %v9295 = vpop.f32.mrb[0].mxu0
  %v9296 = vadd.f32 %v9188, %v9295
  %v9297 = vpop.f32.mrb[0].mxu0
  %9298 = vdwg.mxu0
  %v9299 = vmax.f32 %v9256, 0.0
  %v9300 = vmax.f32 %v9261, 0.0
  %v9301 = vmax.f32 %v9266, 0.0
  %v9302 = vmax.f32 %v9271, 0.0
  %v9303 = vmax.f32 %v9276, 0.0
  %v9304 = vmax.f32 %v9281, 0.0
  %v9305 = vmax.f32 %v9286, 0.0
  %v9306 = vmax.f32 %v9291, 0.0
  %v9307 = vmax.f32 %v9296, 0.0
  %v9308 = vlaneseq
  %v9309 = vshrl.u32 %v9308, 7
  %v9310 = vsub.s32 1, %v9309
  %v9311 = vrot.slane %v117, %v9310
  %v9313 = vsel %vm273, %v9299, 0
  %v9316 = vsel %vm273, %v9300, 0
  %v9319 = vsel %vm273, %v9301, 0
  %v9322 = vsel %vm273, %v9302, 0
  %v9325 = vsel %vm273, %v9303, 0
  %v9328 = vsel %vm273, %v9304, 0
  %v9331 = vsel %vm273, %v9305, 0
  %v9334 = vsel %vm273, %v9306, 0
  %v9337 = vsel %vm273, %v9307, 0
  %9339 = vmatprep.subr.mxu0 0.0
  %9340 = vmatpush1.msra.mxu0 %v73
  %9341 = vmatprep.subr.mxu0 0.0
  %9342 = vmatpush1.msra.mxu0 %v74
  %9343 = vmatprep.subr.mxu0 0.0
  %9344 = vmatpush1.msra.mxu0 %v75
  %9345 = vmatprep.subr.mxu0 0.0
  %9346 = vmatpush1.msra.mxu0 %v76
  %9347 = vmatprep.subr.mxu0 0.0
  %9348 = vmatpush1.msra.mxu0 %v77
  %9349 = vmatprep.subr.mxu0 0.0
  %9350 = vmatpush1.msra.mxu0 %v78
  %9351 = vmatprep.subr.mxu0 0.0
  %9352 = vmatpush1.msra.mxu0 %v79
  %9353 = vmatprep.subr.mxu0 0.0
  %9354 = vmatpush1.msra.mxu0 %v80
  %9355 = vmatprep.subr.mxu0 0.0
  %9356 = vmatpush1.msra.mxu0 0.0
  %9357 = vmatprep.subr.mxu0 0.0
  %9358 = vmatpush1.msra.mxu0 0.0
  %9359 = vmatprep.subr.mxu0 0.0
  %9360 = vmatpush1.msra.mxu0 0.0
  %9361 = vmatprep.subr.mxu0 0.0
  %9362 = vmatpush1.msra.mxu0 0.0
  %9363 = vmatprep.subr.mxu0 0.0
  %9364 = vmatpush1.msra.mxu0 0.0
  %9365 = vmatprep.subr.mxu0 0.0
  %9366 = vmatpush1.msra.mxu0 0.0
  %9367 = vmatprep.subr.mxu0 0.0
  %9368 = vmatpush1.msra.mxu0 0.0
  %9369 = vmatprep.subr.mxu0 0.0
  %9370 = vmatpush1.msra.mxu0 0.0
  %9371 = vmatprep.subr.mxu0 0.0
  %9372 = vmatpush1.msra.mxu0 0.0
  %9373 = vmatprep.subr.mxu0 0.0
  %9374 = vmatpush1.msra.mxu0 0.0
  %9375 = vmatprep.subr.mxu0 0.0
  %9376 = vmatpush1.msra.mxu0 0.0
  %9377 = vmatprep.subr.mxu0 0.0
  %9378 = vmatpush1.msra.mxu0 0.0
  %9379 = vmatprep.subr.mxu0 0.0
  %9380 = vmatpush1.msra.mxu0 0.0
  %9381 = vmatprep.subr.mxu0 0.0
  %9382 = vmatpush1.msra.mxu0 0.0
  %9383 = vmatprep.subr.mxu0 0.0
  %9384 = vmatpush1.msra.mxu0 0.0
  %9385 = vmatprep.subr.mxu0 0.0
  %9386 = vmatpush1.msra.mxu0 0.0
  %9387 = vmatprep.subr.mxu0 0.0
  %9388 = vmatpush1.msra.mxu0 0.0
  %9389 = vmatprep.subr.mxu0 0.0
  %9390 = vmatpush1.msra.mxu0 0.0
  %9391 = vmatprep.subr.mxu0 0.0
  %9392 = vmatpush1.msra.mxu0 0.0
  %9393 = vmatprep.subr.mxu0 0.0
  %9394 = vmatpush1.msra.mxu0 0.0
  %9395 = vmatprep.subr.mxu0 0.0
  %9396 = vmatpush1.msra.mxu0 0.0
  %9397 = vmatprep.subr.mxu0 0.0
  %9398 = vmatpush1.msra.mxu0 0.0
  %9399 = vmatprep.subr.mxu0 0.0
  %9400 = vmatpush1.msra.mxu0 0.0
  %9401 = vmatprep.subr.mxu0 0.0
  %9402 = vmatpush1.msra.mxu0 0.0
  %9403 = vmatprep.mubr.f32.mxu0 0.0
  %9404 = vmatmul.mubr.f32.gmra.mrb[0].mxu0 %v9313
  %v9405 = vpop.f32.mrb[0].mxu0
  %v9406 = vadd.f32 %v9311, %v9405
  %v9407 = vpop.f32.mrb[0].mxu0
  %9408 = vmatprep.mubr.f32.mxu0 0.0
  %9409 = vmatmul.mubr.f32.gmra.mrb[0].mxu0 %v9316
  %v9410 = vpop.f32.mrb[0].mxu0
  %v9411 = vadd.f32 %v9311, %v9410
  %v9412 = vpop.f32.mrb[0].mxu0
  %9413 = vmatprep.mubr.f32.mxu0 0.0
  %9414 = vmatmul.mubr.f32.gmra.mrb[0].mxu0 %v9319
  %v9415 = vpop.f32.mrb[0].mxu0
  %v9416 = vadd.f32 %v9311, %v9415
  %v9417 = vpop.f32.mrb[0].mxu0
  %9418 = vmatprep.mubr.f32.mxu0 0.0
  %9419 = vmatmul.mubr.f32.gmra.mrb[0].mxu0 %v9322
  %v9420 = vpop.f32.mrb[0].mxu0
  %v9421 = vadd.f32 %v9311, %v9420
  %v9422 = vpop.f32.mrb[0].mxu0
  %9423 = vmatprep.mubr.f32.mxu0 0.0
  %9424 = vmatmul.mubr.f32.gmra.mrb[0].mxu0 %v9325
  %v9425 = vpop.f32.mrb[0].mxu0
  %v9426 = vadd.f32 %v9311, %v9425
  %v9427 = vpop.f32.mrb[0].mxu0
  %9428 = vmatprep.mubr.f32.mxu0 0.0
  %9429 = vmatmul.mubr.f32.gmra.mrb[0].mxu0 %v9328
  %v9430 = vpop.f32.mrb[0].mxu0
  %v9431 = vadd.f32 %v9311, %v9430
  %v9432 = vpop.f32.mrb[0].mxu0
  %9433 = vmatprep.mubr.f32.mxu0 0.0
  %9434 = vmatmul.mubr.f32.gmra.mrb[0].mxu0 %v9331
  %v9435 = vpop.f32.mrb[0].mxu0
  %v9436 = vadd.f32 %v9311, %v9435
  %v9437 = vpop.f32.mrb[0].mxu0
  %9438 = vmatprep.mubr.f32.mxu0 0.0
  %9439 = vmatmul.mubr.f32.gmra.mrb[0].mxu0 %v9334
  %v9440 = vpop.f32.mrb[0].mxu0
  %v9441 = vadd.f32 %v9311, %v9440
  %v9442 = vpop.f32.mrb[0].mxu0
  %9443 = vmatprep.mubr.f32.mxu0 0.0
  %9444 = vmatmul.mubr.f32.gmra.mrb[0].mxu0 %v9337
  %v9445 = vpop.f32.mrb[0].mxu0
  %v9446 = vadd.f32 %v9311, %v9445
  %v9447 = vpop.f32.mrb[0].mxu0
  %9448 = vdwg.mxu0
  %v9449 = vadd.f32 %v8851, %v9142
  %v9450 = vadd.f32 %v8856, %v9147
  %v9451 = vadd.f32 %v8861, %v9152
  %v9452 = vadd.f32 %v8866, %v9157
  %v9453 = vadd.f32 %v8871, %v9162
  %v9454 = vadd.f32 %v8876, %v9167
  %v9455 = vadd.f32 %v8881, %v9172
  %v9456 = vadd.f32 %v8886, %v9177
  %v9457 = vadd.f32 %v8891, %v9182
  %v9467 = vcombine.high %v9449, %v9449
  %v9469 = vunpack.c.l.s4 1966171168
  %v9470 = vunpack.c.0.s8 %v9469
  %v9471 = vlaneseq
  %v9472 = vshrl.u32 %v9471, 7
  %v9473 = vsub.s32 %v9470, %v9472
  %v9474 = vrot.slane %v9449, %v9473
  %v9476 = vunpack.c.l.s4 1966171168
  %v9477 = vunpack.c.0.s8 %v9476
  %v9478 = vlaneseq
  %v9479 = vshrl.u32 %v9478, 7
  %v9480 = vsub.s32 %v9477, %v9479
  %v9481 = vrot.slane %v9467, %v9480
  %v9482 = vcombine.high %v9474, %v9474
  %v9484 = vunpack.c.l.s4 1966171168
  %v9485 = vunpack.c.0.s8 %v9484
  %v9486 = vlaneseq
  %v9487 = vshrl.u32 %v9486, 7
  %v9488 = vsub.s32 %v9485, %v9487
  %v9489 = vrot.slane %v9474, %v9488
  %v9491 = vunpack.c.l.s4 1966171168
  %v9492 = vunpack.c.0.s8 %v9491
  %v9493 = vlaneseq
  %v9494 = vshrl.u32 %v9493, 7
  %v9495 = vsub.s32 %v9492, %v9494
  %v9496 = vrot.slane %v9481, %v9495
  %v9498 = vunpack.c.l.s4 1966171168
  %v9499 = vunpack.c.0.s8 %v9498
  %v9500 = vlaneseq
  %v9501 = vshrl.u32 %v9500, 7
  %v9502 = vsub.s32 %v9499, %v9501
  %v9503 = vrot.slane %v9482, %v9502
  %v9504 = vcombine.high %v9489, %v9489
  %v9505 = vcombine.high %v9503, %v9503
  %v9506 = vcombine.high %v9450, %v9450
  %v9508 = vunpack.c.l.s4 1966171168
  %v9509 = vunpack.c.0.s8 %v9508
  %v9510 = vlaneseq
  %v9511 = vshrl.u32 %v9510, 7
  %v9512 = vsub.s32 %v9509, %v9511
  %v9513 = vrot.slane %v9450, %v9512
  %v9515 = vunpack.c.l.s4 1966171168
  %v9516 = vunpack.c.0.s8 %v9515
  %v9517 = vlaneseq
  %v9518 = vshrl.u32 %v9517, 7
  %v9519 = vsub.s32 %v9516, %v9518
  %v9520 = vrot.slane %v9506, %v9519
  %v9521 = vcombine.high %v9513, %v9513
  %v9522 = vcombine.high %v9520, %v9520
  %v9524 = vunpack.c.l.s4 1966171168
  %v9525 = vunpack.c.0.s8 %v9524
  %v9526 = vlaneseq
  %v9527 = vshrl.u32 %v9526, 7
  %v9528 = vsub.s32 %v9525, %v9527
  %v9529 = vrot.slane %v9513, %v9528
  %v9531 = vunpack.c.l.s4 1966171168
  %v9532 = vunpack.c.0.s8 %v9531
  %v9533 = vlaneseq
  %v9534 = vshrl.u32 %v9533, 7
  %v9535 = vsub.s32 %v9532, %v9534
  %v9536 = vrot.slane %v9520, %v9535
  %v9538 = vunpack.c.l.s4 1966171168
  %v9539 = vunpack.c.0.s8 %v9538
  %v9540 = vlaneseq
  %v9541 = vshrl.u32 %v9540, 7
  %v9542 = vsub.s32 %v9539, %v9541
  %v9543 = vrot.slane %v9521, %v9542
  %v9545 = vunpack.c.l.s4 1966171168
  %v9546 = vunpack.c.0.s8 %v9545
  %v9547 = vlaneseq
  %v9548 = vshrl.u32 %v9547, 7
  %v9549 = vsub.s32 %v9546, %v9548
  %v9550 = vrot.slane %v9522, %v9549
  %v9551 = vcombine.high %v9529, %v9529
  %v9552 = vcombine.high %v9543, %v9543
  %v9553 = vcombine.high %v9451, %v9451
  %v9555 = vunpack.c.l.s4 1966171168
  %v9556 = vunpack.c.0.s8 %v9555
  %v9557 = vlaneseq
  %v9558 = vshrl.u32 %v9557, 7
  %v9559 = vsub.s32 %v9556, %v9558
  %v9560 = vrot.slane %v9451, %v9559
  %v9562 = vunpack.c.l.s4 1966171168
  %v9563 = vunpack.c.0.s8 %v9562
  %v9564 = vlaneseq
  %v9565 = vshrl.u32 %v9564, 7
  %v9566 = vsub.s32 %v9563, %v9565
  %v9567 = vrot.slane %v9553, %v9566
  %v9568 = vcombine.high %v9560, %v9560
  %v9569 = vcombine.high %v9567, %v9567
  %v9571 = vunpack.c.l.s4 1966171168
  %v9572 = vunpack.c.0.s8 %v9571
  %v9573 = vlaneseq
  %v9574 = vshrl.u32 %v9573, 7
  %v9575 = vsub.s32 %v9572, %v9574
  %v9576 = vrot.slane %v9567, %v9575
  %v9578 = vunpack.c.l.s4 1966171168
  %v9579 = vunpack.c.0.s8 %v9578
  %v9580 = vlaneseq
  %v9581 = vshrl.u32 %v9580, 7
  %v9582 = vsub.s32 %v9579, %v9581
  %v9583 = vrot.slane %v9568, %v9582
  %v9585 = vunpack.c.l.s4 1966171168
  %v9586 = vunpack.c.0.s8 %v9585
  %v9587 = vlaneseq
  %v9588 = vshrl.u32 %v9587, 7
  %v9589 = vsub.s32 %v9586, %v9588
  %v9590 = vrot.slane %v9569, %v9589
  %v9591 = vcombine.high %v9576, %v9576
  %v9592 = vcombine.high %v9583, %v9583
  %v9593 = vcombine.high %v9452, %v9452
  %v9595 = vunpack.c.l.s4 1966171168
  %v9596 = vunpack.c.0.s8 %v9595
  %v9597 = vlaneseq
  %v9598 = vshrl.u32 %v9597, 7
  %v9599 = vsub.s32 %v9596, %v9598
  %v9600 = vrot.slane %v9593, %v9599
  %v9601 = vcombine.high %v9600, %v9600
  %v9603 = vunpack.c.l.s4 1966171168
  %v9604 = vunpack.c.0.s8 %v9603
  %v9605 = vlaneseq
  %v9606 = vshrl.u32 %v9605, 7
  %v9607 = vsub.s32 %v9604, %v9606
  %v9608 = vrot.slane %v9600, %v9607
  %v9610 = vunpack.c.l.s4 1966171168
  %v9611 = vunpack.c.0.s8 %v9610
  %v9612 = vlaneseq
  %v9613 = vshrl.u32 %v9612, 7
  %v9614 = vsub.s32 %v9611, %v9613
  %v9615 = vrot.slane %v9601, %v9614
  %v9616 = vcombine.high %v9608, %v9608
  %v9617 = vcombine.high %v9615, %v9615
  %v9618 = vcombine.high %v9453, %v9453
  %v9620 = vunpack.c.l.s4 1966171168
  %v9621 = vunpack.c.0.s8 %v9620
  %v9622 = vlaneseq
  %v9623 = vshrl.u32 %v9622, 7
  %v9624 = vsub.s32 %v9621, %v9623
  %v9625 = vrot.slane %v9618, %v9624
  %v9626 = vcombine.high %v9625, %v9625
  %v9628 = vunpack.c.l.s4 1966171168
  %v9629 = vunpack.c.0.s8 %v9628
  %v9630 = vlaneseq
  %v9631 = vshrl.u32 %v9630, 7
  %v9632 = vsub.s32 %v9629, %v9631
  %v9633 = vrot.slane %v9625, %v9632
  %v9635 = vunpack.c.l.s4 1966171168
  %v9636 = vunpack.c.0.s8 %v9635
  %v9637 = vlaneseq
  %v9638 = vshrl.u32 %v9637, 7
  %v9639 = vsub.s32 %v9636, %v9638
  %v9640 = vrot.slane %v9626, %v9639
  %v9641 = vcombine.high %v9633, %v9633
  %v9642 = vcombine.high %v9640, %v9640
  %v9643 = vcombine.high %v9454, %v9454
  %v9645 = vunpack.c.l.s4 1966171168
  %v9646 = vunpack.c.0.s8 %v9645
  %v9647 = vlaneseq
  %v9648 = vshrl.u32 %v9647, 7
  %v9649 = vsub.s32 %v9646, %v9648
  %v9650 = vrot.slane %v9454, %v9649
  %v9652 = vunpack.c.l.s4 1966171168
  %v9653 = vunpack.c.0.s8 %v9652
  %v9654 = vlaneseq
  %v9655 = vshrl.u32 %v9654, 7
  %v9656 = vsub.s32 %v9653, %v9655
  %v9657 = vrot.slane %v9643, %v9656
  %v9658 = vcombine.high %v9657, %v9657
  %v9660 = vunpack.c.l.s4 1966171168
  %v9661 = vunpack.c.0.s8 %v9660
  %v9662 = vlaneseq
  %v9663 = vshrl.u32 %v9662, 7
  %v9664 = vsub.s32 %v9661, %v9663
  %v9665 = vrot.slane %v9650, %v9664
  %v9667 = vunpack.c.l.s4 1966171168
  %v9668 = vunpack.c.0.s8 %v9667
  %v9669 = vlaneseq
  %v9670 = vshrl.u32 %v9669, 7
  %v9671 = vsub.s32 %v9668, %v9670
  %v9672 = vrot.slane %v9657, %v9671
  %v9674 = vunpack.c.l.s4 1966171168
  %v9675 = vunpack.c.0.s8 %v9674
  %v9676 = vlaneseq
  %v9677 = vshrl.u32 %v9676, 7
  %v9678 = vsub.s32 %v9675, %v9677
  %v9679 = vrot.slane %v9658, %v9678
  %v9680 = vcombine.high %v9672, %v9672
  %v9681 = vcombine.high %v9679, %v9679
  %v9682 = vcombine.high %v9455, %v9455
  %v9684 = vunpack.c.l.s4 1966171168
  %v9685 = vunpack.c.0.s8 %v9684
  %v9686 = vlaneseq
  %v9687 = vshrl.u32 %v9686, 7
  %v9688 = vsub.s32 %v9685, %v9687
  %v9689 = vrot.slane %v9455, %v9688
  %v9691 = vunpack.c.l.s4 1966171168
  %v9692 = vunpack.c.0.s8 %v9691
  %v9693 = vlaneseq
  %v9694 = vshrl.u32 %v9693, 7
  %v9695 = vsub.s32 %v9692, %v9694
  %v9696 = vrot.slane %v9682, %v9695
  %v9697 = vcombine.high %v9689, %v9689
  %v9698 = vcombine.high %v9696, %v9696
  %v9700 = vunpack.c.l.s4 1966171168
  %v9701 = vunpack.c.0.s8 %v9700
  %v9702 = vlaneseq
  %v9703 = vshrl.u32 %v9702, 7
  %v9704 = vsub.s32 %v9701, %v9703
  %v9705 = vrot.slane %v9689, %v9704
  %v9707 = vunpack.c.l.s4 1966171168
  %v9708 = vunpack.c.0.s8 %v9707
  %v9709 = vlaneseq
  %v9710 = vshrl.u32 %v9709, 7
  %v9711 = vsub.s32 %v9708, %v9710
  %v9712 = vrot.slane %v9697, %v9711
  %v9714 = vunpack.c.l.s4 1966171168
  %v9715 = vunpack.c.0.s8 %v9714
  %v9716 = vlaneseq
  %v9717 = vshrl.u32 %v9716, 7
  %v9718 = vsub.s32 %v9715, %v9717
  %v9719 = vrot.slane %v9698, %v9718
  %v9720 = vcombine.high %v9719, %v9719
  %v9722 = vunpack.c.l.s4 1966171168
  %v9723 = vunpack.c.0.s8 %v9722
  %v9724 = vlaneseq
  %v9725 = vshrl.u32 %v9724, 7
  %v9726 = vsub.s32 %v9723, %v9725
  %v9727 = vrot.slane %v9456, %v9726
  %v9728 = vcombine.high %v9727, %v9727
  %v9730 = vunpack.c.l.s4 1966171168
  %v9731 = vunpack.c.0.s8 %v9730
  %v9732 = vlaneseq
  %v9733 = vshrl.u32 %v9732, 7
  %v9734 = vsub.s32 %v9731, %v9733
  %v9735 = vrot.slane %v9727, %v9734
  %v9737 = vunpack.c.l.s4 1966171168
  %v9738 = vunpack.c.0.s8 %v9737
  %v9739 = vlaneseq
  %v9740 = vshrl.u32 %v9739, 7
  %v9741 = vsub.s32 %v9738, %v9740
  %v9742 = vrot.slane %v9728, %v9741
  %v9743 = vcombine.high %v9735, %v9735
  %v9745 = vunpack.c.l.s4 1966171168
  %v9746 = vunpack.c.0.s8 %v9745
  %v9747 = vlaneseq
  %v9748 = vshrl.u32 %v9747, 7
  %v9749 = vsub.s32 %v9746, %v9748
  %v9750 = vrot.slane %v9457, %v9749
  %v9751 = vcombine.high %v9750, %v9750
  %v9753 = vunpack.c.l.s4 1966171168
  %v9754 = vunpack.c.0.s8 %v9753
  %v9755 = vlaneseq
  %v9756 = vshrl.u32 %v9755, 7
  %v9757 = vsub.s32 %v9754, %v9756
  %v9758 = vrot.slane %v9750, %v9757
  %v9760 = vunpack.c.l.s4 1966171168
  %v9761 = vunpack.c.0.s8 %v9760
  %v9762 = vlaneseq
  %v9763 = vshrl.u32 %v9762, 7
  %v9764 = vsub.s32 %v9761, %v9763
  %v9765 = vrot.slane %v9751, %v9764
  %v9766 = vcombine.high %v9758, %v9758
  %v9767 = vcombine.high %v9765, %v9765
  %v9768 = vadd.f32 %v8851, %v9406
  %v9769 = vadd.f32 %v8856, %v9411
  %v9770 = vadd.f32 %v8861, %v9416
  %v9771 = vadd.f32 %v8866, %v9421
  %v9772 = vadd.f32 %v8871, %v9426
  %v9773 = vadd.f32 %v8876, %v9431
  %v9774 = vadd.f32 %v8881, %v9436
  %v9775 = vadd.f32 %v8886, %v9441
  %v9776 = vadd.f32 %v8891, %v9446
  %v9786 = vcombine.high %v9768, %v9768
  %v9788 = vunpack.c.l.s4 1966171168
  %v9789 = vunpack.c.0.s8 %v9788
  %v9790 = vlaneseq
  %v9791 = vshrl.u32 %v9790, 7
  %v9792 = vsub.s32 %v9789, %v9791
  %v9793 = vrot.slane %v9768, %v9792
  %v9795 = vunpack.c.l.s4 1966171168
  %v9796 = vunpack.c.0.s8 %v9795
  %v9797 = vlaneseq
  %v9798 = vshrl.u32 %v9797, 7
  %v9799 = vsub.s32 %v9796, %v9798
  %v9800 = vrot.slane %v9786, %v9799
  %v9801 = vcombine.high %v9793, %v9793
  %v9803 = vunpack.c.l.s4 1966171168
  %v9804 = vunpack.c.0.s8 %v9803
  %v9805 = vlaneseq
  %v9806 = vshrl.u32 %v9805, 7
  %v9807 = vsub.s32 %v9804, %v9806
  %v9808 = vrot.slane %v9793, %v9807
  %v9810 = vunpack.c.l.s4 1966171168
  %v9811 = vunpack.c.0.s8 %v9810
  %v9812 = vlaneseq
  %v9813 = vshrl.u32 %v9812, 7
  %v9814 = vsub.s32 %v9811, %v9813
  %v9815 = vrot.slane %v9800, %v9814
  %v9817 = vunpack.c.l.s4 1966171168
  %v9818 = vunpack.c.0.s8 %v9817
  %v9819 = vlaneseq
  %v9820 = vshrl.u32 %v9819, 7
  %v9821 = vsub.s32 %v9818, %v9820
  %v9822 = vrot.slane %v9801, %v9821
  %v9823 = vcombine.high %v9808, %v9808
  %v9824 = vcombine.high %v9822, %v9822
  %v9825 = vcombine.high %v9769, %v9769
  %v9827 = vunpack.c.l.s4 1966171168
  %v9828 = vunpack.c.0.s8 %v9827
  %v9829 = vlaneseq
  %v9830 = vshrl.u32 %v9829, 7
  %v9831 = vsub.s32 %v9828, %v9830
  %v9832 = vrot.slane %v9769, %v9831
  %v9834 = vunpack.c.l.s4 1966171168
  %v9835 = vunpack.c.0.s8 %v9834
  %v9836 = vlaneseq
  %v9837 = vshrl.u32 %v9836, 7
  %v9838 = vsub.s32 %v9835, %v9837
  %v9839 = vrot.slane %v9825, %v9838
  %v9840 = vcombine.high %v9832, %v9832
  %v9841 = vcombine.high %v9839, %v9839
  %v9843 = vunpack.c.l.s4 1966171168
  %v9844 = vunpack.c.0.s8 %v9843
  %v9845 = vlaneseq
  %v9846 = vshrl.u32 %v9845, 7
  %v9847 = vsub.s32 %v9844, %v9846
  %v9848 = vrot.slane %v9832, %v9847
  %v9850 = vunpack.c.l.s4 1966171168
  %v9851 = vunpack.c.0.s8 %v9850
  %v9852 = vlaneseq
  %v9853 = vshrl.u32 %v9852, 7
  %v9854 = vsub.s32 %v9851, %v9853
  %v9855 = vrot.slane %v9839, %v9854
  %v9857 = vunpack.c.l.s4 1966171168
  %v9858 = vunpack.c.0.s8 %v9857
  %v9859 = vlaneseq
  %v9860 = vshrl.u32 %v9859, 7
  %v9861 = vsub.s32 %v9858, %v9860
  %v9862 = vrot.slane %v9840, %v9861
  %v9864 = vunpack.c.l.s4 1966171168
  %v9865 = vunpack.c.0.s8 %v9864
  %v9866 = vlaneseq
  %v9867 = vshrl.u32 %v9866, 7
  %v9868 = vsub.s32 %v9865, %v9867
  %v9869 = vrot.slane %v9841, %v9868
  %v9870 = vcombine.high %v9848, %v9848
  %v9871 = vcombine.high %v9862, %v9862
  %v9872 = vcombine.high %v9770, %v9770
  %v9874 = vunpack.c.l.s4 1966171168
  %v9875 = vunpack.c.0.s8 %v9874
  %v9876 = vlaneseq
  %v9877 = vshrl.u32 %v9876, 7
  %v9878 = vsub.s32 %v9875, %v9877
  %v9879 = vrot.slane %v9770, %v9878
  %v9881 = vunpack.c.l.s4 1966171168
  %v9882 = vunpack.c.0.s8 %v9881
  %v9883 = vlaneseq
  %v9884 = vshrl.u32 %v9883, 7
  %v9885 = vsub.s32 %v9882, %v9884
  %v9886 = vrot.slane %v9872, %v9885
  %v9887 = vcombine.high %v9879, %v9879
  %v9888 = vcombine.high %v9886, %v9886
  %v9890 = vunpack.c.l.s4 1966171168
  %v9891 = vunpack.c.0.s8 %v9890
  %v9892 = vlaneseq
  %v9893 = vshrl.u32 %v9892, 7
  %v9894 = vsub.s32 %v9891, %v9893
  %v9895 = vrot.slane %v9886, %v9894
  %v9897 = vunpack.c.l.s4 1966171168
  %v9898 = vunpack.c.0.s8 %v9897
  %v9899 = vlaneseq
  %v9900 = vshrl.u32 %v9899, 7
  %v9901 = vsub.s32 %v9898, %v9900
  %v9902 = vrot.slane %v9887, %v9901
  %v9904 = vunpack.c.l.s4 1966171168
  %v9905 = vunpack.c.0.s8 %v9904
  %v9906 = vlaneseq
  %v9907 = vshrl.u32 %v9906, 7
  %v9908 = vsub.s32 %v9905, %v9907
  %v9909 = vrot.slane %v9888, %v9908
  %v9910 = vcombine.high %v9895, %v9895
  %v9911 = vcombine.high %v9902, %v9902
  %v9912 = vcombine.high %v9771, %v9771
  %v9914 = vunpack.c.l.s4 1966171168
  %v9915 = vunpack.c.0.s8 %v9914
  %v9916 = vlaneseq
  %v9917 = vshrl.u32 %v9916, 7
  %v9918 = vsub.s32 %v9915, %v9917
  %v9919 = vrot.slane %v9912, %v9918
  %v9920 = vcombine.high %v9919, %v9919
  %v9922 = vunpack.c.l.s4 1966171168
  %v9923 = vunpack.c.0.s8 %v9922
  %v9924 = vlaneseq
  %v9925 = vshrl.u32 %v9924, 7
  %v9926 = vsub.s32 %v9923, %v9925
  %v9927 = vrot.slane %v9919, %v9926
  %v9929 = vunpack.c.l.s4 1966171168
  %v9930 = vunpack.c.0.s8 %v9929
  %v9931 = vlaneseq
  %v9932 = vshrl.u32 %v9931, 7
  %v9933 = vsub.s32 %v9930, %v9932
  %v9934 = vrot.slane %v9920, %v9933
  %v9935 = vcombine.high %v9927, %v9927
  %v9936 = vcombine.high %v9934, %v9934
  %v9937 = vcombine.high %v9772, %v9772
  %v9939 = vunpack.c.l.s4 1966171168
  %v9940 = vunpack.c.0.s8 %v9939
  %v9941 = vlaneseq
  %v9942 = vshrl.u32 %v9941, 7
  %v9943 = vsub.s32 %v9940, %v9942
  %v9944 = vrot.slane %v9937, %v9943
  %v9945 = vcombine.high %v9944, %v9944
  %v9947 = vunpack.c.l.s4 1966171168
  %v9948 = vunpack.c.0.s8 %v9947
  %v9949 = vlaneseq
  %v9950 = vshrl.u32 %v9949, 7
  %v9951 = vsub.s32 %v9948, %v9950
  %v9952 = vrot.slane %v9944, %v9951
  %v9954 = vunpack.c.l.s4 1966171168
  %v9955 = vunpack.c.0.s8 %v9954
  %v9956 = vlaneseq
  %v9957 = vshrl.u32 %v9956, 7
  %v9958 = vsub.s32 %v9955, %v9957
  %v9959 = vrot.slane %v9945, %v9958
  %v9960 = vcombine.high %v9952, %v9952
  %v9961 = vcombine.high %v9959, %v9959
  %v9962 = vcombine.high %v9773, %v9773
  %v9964 = vunpack.c.l.s4 1966171168
  %v9965 = vunpack.c.0.s8 %v9964
  %v9966 = vlaneseq
  %v9967 = vshrl.u32 %v9966, 7
  %v9968 = vsub.s32 %v9965, %v9967
  %v9969 = vrot.slane %v9773, %v9968
  %v9971 = vunpack.c.l.s4 1966171168
  %v9972 = vunpack.c.0.s8 %v9971
  %v9973 = vlaneseq
  %v9974 = vshrl.u32 %v9973, 7
  %v9975 = vsub.s32 %v9972, %v9974
  %v9976 = vrot.slane %v9962, %v9975
  %v9977 = vcombine.high %v9976, %v9976
  %v9979 = vunpack.c.l.s4 1966171168
  %v9980 = vunpack.c.0.s8 %v9979
  %v9981 = vlaneseq
  %v9982 = vshrl.u32 %v9981, 7
  %v9983 = vsub.s32 %v9980, %v9982
  %v9984 = vrot.slane %v9969, %v9983
  %v9986 = vunpack.c.l.s4 1966171168
  %v9987 = vunpack.c.0.s8 %v9986
  %v9988 = vlaneseq
  %v9989 = vshrl.u32 %v9988, 7
  %v9990 = vsub.s32 %v9987, %v9989
  %v9991 = vrot.slane %v9976, %v9990
  %v9993 = vunpack.c.l.s4 1966171168
  %v9994 = vunpack.c.0.s8 %v9993
  %v9995 = vlaneseq
  %v9996 = vshrl.u32 %v9995, 7
  %v9997 = vsub.s32 %v9994, %v9996
  %v9998 = vrot.slane %v9977, %v9997
  %v9999 = vcombine.high %v9991, %v9991
  %v10000 = vcombine.high %v9998, %v9998
  %v10001 = vcombine.high %v9774, %v9774
  %v10003 = vunpack.c.l.s4 1966171168
  %v10004 = vunpack.c.0.s8 %v10003
  %v10005 = vlaneseq
  %v10006 = vshrl.u32 %v10005, 7
  %v10007 = vsub.s32 %v10004, %v10006
  %v10008 = vrot.slane %v9774, %v10007
  %v10010 = vunpack.c.l.s4 1966171168
  %v10011 = vunpack.c.0.s8 %v10010
  %v10012 = vlaneseq
  %v10013 = vshrl.u32 %v10012, 7
  %v10014 = vsub.s32 %v10011, %v10013
  %v10015 = vrot.slane %v10001, %v10014
  %v10016 = vcombine.high %v10008, %v10008
  %v10017 = vcombine.high %v10015, %v10015
  %v10019 = vunpack.c.l.s4 1966171168
  %v10020 = vunpack.c.0.s8 %v10019
  %v10021 = vlaneseq
  %v10022 = vshrl.u32 %v10021, 7
  %v10023 = vsub.s32 %v10020, %v10022
  %v10024 = vrot.slane %v10008, %v10023
  %v10026 = vunpack.c.l.s4 1966171168
  %v10027 = vunpack.c.0.s8 %v10026
  %v10028 = vlaneseq
  %v10029 = vshrl.u32 %v10028, 7
  %v10030 = vsub.s32 %v10027, %v10029
  %v10031 = vrot.slane %v10016, %v10030
  %v10033 = vunpack.c.l.s4 1966171168
  %v10034 = vunpack.c.0.s8 %v10033
  %v10035 = vlaneseq
  %v10036 = vshrl.u32 %v10035, 7
  %v10037 = vsub.s32 %v10034, %v10036
  %v10038 = vrot.slane %v10017, %v10037
  %v10039 = vcombine.high %v10038, %v10038
  %v10041 = vunpack.c.l.s4 1966171168
  %v10042 = vunpack.c.0.s8 %v10041
  %v10043 = vlaneseq
  %v10044 = vshrl.u32 %v10043, 7
  %v10045 = vsub.s32 %v10042, %v10044
  %v10046 = vrot.slane %v9775, %v10045
  %v10047 = vcombine.high %v10046, %v10046
  %v10049 = vunpack.c.l.s4 1966171168
  %v10050 = vunpack.c.0.s8 %v10049
  %v10051 = vlaneseq
  %v10052 = vshrl.u32 %v10051, 7
  %v10053 = vsub.s32 %v10050, %v10052
  %v10054 = vrot.slane %v10046, %v10053
  %v10056 = vunpack.c.l.s4 1966171168
  %v10057 = vunpack.c.0.s8 %v10056
  %v10058 = vlaneseq
  %v10059 = vshrl.u32 %v10058, 7
  %v10060 = vsub.s32 %v10057, %v10059
  %v10061 = vrot.slane %v10047, %v10060
  %v10062 = vcombine.high %v10054, %v10054
  %v10064 = vunpack.c.l.s4 1966171168
  %v10065 = vunpack.c.0.s8 %v10064
  %v10066 = vlaneseq
  %v10067 = vshrl.u32 %v10066, 7
  %v10068 = vsub.s32 %v10065, %v10067
  %v10069 = vrot.slane %v9776, %v10068
  %v10070 = vcombine.high %v10069, %v10069
  %v10072 = vunpack.c.l.s4 1966171168
  %v10073 = vunpack.c.0.s8 %v10072
  %v10074 = vlaneseq
  %v10075 = vshrl.u32 %v10074, 7
  %v10076 = vsub.s32 %v10073, %v10075
  %v10077 = vrot.slane %v10069, %v10076
  %v10079 = vunpack.c.l.s4 1966171168
  %v10080 = vunpack.c.0.s8 %v10079
  %v10081 = vlaneseq
  %v10082 = vshrl.u32 %v10081, 7
  %v10083 = vsub.s32 %v10080, %v10082
  %v10084 = vrot.slane %v10070, %v10083
  %v10085 = vcombine.high %v10077, %v10077
  %v10086 = vcombine.high %v10084, %v10084
  %v10087 = vlaneseq
  %v10088 = vshrl.u32 %v10087, 7
  %v10089 = vsub.s32 2, %v10088
  %v10090 = vrot.slane %v117, %v10089
  %v10091 = vcombine.low %v9503, %v9504
  %v10092 = vcombine.low %v9505, %v9496
  %v10093 = vcombine.low %v9551, %v9552
  %v10094 = vcombine.low %v9536, %v9550
  %v10096 = vunpack.c.l.s4 1966171168
  %v10097 = vunpack.c.0.s8 %v10096
  %v10098 = vlaneseq
  %v10099 = vshrl.u32 %v10098, 7
  %v10100 = vsub.s32 %v10097, %v10099
  %v10101 = vrot.slane %v10091, %v10100
  %v10103 = vunpack.c.l.s4 1966171168
  %v10104 = vunpack.c.0.s8 %v10103
  %v10105 = vlaneseq
  %v10106 = vshrl.u32 %v10105, 7
  %v10107 = vsub.s32 %v10104, %v10106
  %v10108 = vrot.slane %v10092, %v10107
  %v10110 = vunpack.c.l.s4 1966171168
  %v10111 = vunpack.c.0.s8 %v10110
  %v10112 = vlaneseq
  %v10113 = vshrl.u32 %v10112, 7
  %v10114 = vsub.s32 %v10111, %v10113
  %v10115 = vrot.slane %v10093, %v10114
  %v10117 = vunpack.c.l.s4 1966171168
  %v10118 = vunpack.c.0.s8 %v10117
  %v10119 = vlaneseq
  %v10120 = vshrl.u32 %v10119, 7
  %v10121 = vsub.s32 %v10118, %v10120
  %v10122 = vrot.slane %v10094, %v10121
  %v10123 = vcombine.low %v10101, %v10108
  %v10124 = vcombine.low %v10115, %v10122
  %v10126 = vunpack.c.l.s4 1966171168
  %v10127 = vunpack.c.0.s8 %v10126
  %v10128 = vlaneseq
  %v10129 = vshrl.u32 %v10128, 7
  %v10130 = vsub.s32 %v10127, %v10129
  %v10131 = vrot.slane %v10123, %v10130
  %v10133 = vunpack.c.l.s4 1966171168
  %v10134 = vunpack.c.0.s8 %v10133
  %v10135 = vlaneseq
  %v10136 = vshrl.u32 %v10135, 7
  %v10137 = vsub.s32 %v10134, %v10136
  %v10138 = vrot.slane %v10124, %v10137
  %v10139 = vcombine.low %v10131, %v10138
  %v10140 = vcombine.low %v9592, %v9576
  %v10141 = vcombine.low %v9590, %v9591
  %v10142 = vcombine.low %v9608, %v9615
  %v10143 = vcombine.low %v9616, %v9617
  %v10145 = vunpack.c.l.s4 1966171168
  %v10146 = vunpack.c.0.s8 %v10145
  %v10147 = vlaneseq
  %v10148 = vshrl.u32 %v10147, 7
  %v10149 = vsub.s32 %v10146, %v10148
  %v10150 = vrot.slane %v10140, %v10149
  %v10152 = vunpack.c.l.s4 1966171168
  %v10153 = vunpack.c.0.s8 %v10152
  %v10154 = vlaneseq
  %v10155 = vshrl.u32 %v10154, 7
  %v10156 = vsub.s32 %v10153, %v10155
  %v10157 = vrot.slane %v10141, %v10156
  %v10159 = vunpack.c.l.s4 1966171168
  %v10160 = vunpack.c.0.s8 %v10159
  %v10161 = vlaneseq
  %v10162 = vshrl.u32 %v10161, 7
  %v10163 = vsub.s32 %v10160, %v10162
  %v10164 = vrot.slane %v10142, %v10163
  %v10166 = vunpack.c.l.s4 1966171168
  %v10167 = vunpack.c.0.s8 %v10166
  %v10168 = vlaneseq
  %v10169 = vshrl.u32 %v10168, 7
  %v10170 = vsub.s32 %v10167, %v10169
  %v10171 = vrot.slane %v10143, %v10170
  %v10172 = vcombine.low %v10150, %v10157
  %v10173 = vcombine.low %v10164, %v10171
  %v10175 = vunpack.c.l.s4 1966171168
  %v10176 = vunpack.c.0.s8 %v10175
  %v10177 = vlaneseq
  %v10178 = vshrl.u32 %v10177, 7
  %v10179 = vsub.s32 %v10176, %v10178
  %v10180 = vrot.slane %v10172, %v10179
  %v10182 = vunpack.c.l.s4 1966171168
  %v10183 = vunpack.c.0.s8 %v10182
  %v10184 = vlaneseq
  %v10185 = vshrl.u32 %v10184, 7
  %v10186 = vsub.s32 %v10183, %v10185
  %v10187 = vrot.slane %v10173, %v10186
  %v10188 = vcombine.low %v10180, %v10187
  %v10189 = vcombine.low %v9640, %v9641
  %v10190 = vcombine.low %v9642, %v9665
  %v10191 = vcombine.low %v9680, %v9681
  %v10192 = vcombine.low %v9705, %v9712
  %v10194 = vunpack.c.l.s4 1966171168
  %v10195 = vunpack.c.0.s8 %v10194
  %v10196 = vlaneseq
  %v10197 = vshrl.u32 %v10196, 7
  %v10198 = vsub.s32 %v10195, %v10197
  %v10199 = vrot.slane %v10189, %v10198
  %v10201 = vunpack.c.l.s4 1966171168
  %v10202 = vunpack.c.0.s8 %v10201
  %v10203 = vlaneseq
  %v10204 = vshrl.u32 %v10203, 7
  %v10205 = vsub.s32 %v10202, %v10204
  %v10206 = vrot.slane %v10190, %v10205
  %v10208 = vunpack.c.l.s4 1966171168
  %v10209 = vunpack.c.0.s8 %v10208
  %v10210 = vlaneseq
  %v10211 = vshrl.u32 %v10210, 7
  %v10212 = vsub.s32 %v10209, %v10211
  %v10213 = vrot.slane %v10191, %v10212
  %v10215 = vunpack.c.l.s4 1966171168
  %v10216 = vunpack.c.0.s8 %v10215
  %v10217 = vlaneseq
  %v10218 = vshrl.u32 %v10217, 7
  %v10219 = vsub.s32 %v10216, %v10218
  %v10220 = vrot.slane %v10192, %v10219
  %v10221 = vcombine.low %v10199, %v10206
  %v10222 = vcombine.low %v10213, %v10220
  %v10224 = vunpack.c.l.s4 1966171168
  %v10225 = vunpack.c.0.s8 %v10224
  %v10226 = vlaneseq
  %v10227 = vshrl.u32 %v10226, 7
  %v10228 = vsub.s32 %v10225, %v10227
  %v10229 = vrot.slane %v10221, %v10228
  %v10231 = vunpack.c.l.s4 1966171168
  %v10232 = vunpack.c.0.s8 %v10231
  %v10233 = vlaneseq
  %v10234 = vshrl.u32 %v10233, 7
  %v10235 = vsub.s32 %v10232, %v10234
  %v10236 = vrot.slane %v10222, %v10235
  %v10237 = vcombine.low %v10229, %v10236
  %v10238 = vcombine.low %v9720, %v9735
  %v10239 = vcombine.low %v9742, %v9743
  %v10240 = vcombine.low %v9758, %v9765
  %v10241 = vcombine.low %v9766, %v9767
  %v10243 = vunpack.c.l.s4 1966171168
  %v10244 = vunpack.c.0.s8 %v10243
  %v10245 = vlaneseq
  %v10246 = vshrl.u32 %v10245, 7
  %v10247 = vsub.s32 %v10244, %v10246
  %v10248 = vrot.slane %v10238, %v10247
  %v10250 = vunpack.c.l.s4 1966171168
  %v10251 = vunpack.c.0.s8 %v10250
  %v10252 = vlaneseq
  %v10253 = vshrl.u32 %v10252, 7
  %v10254 = vsub.s32 %v10251, %v10253
  %v10255 = vrot.slane %v10239, %v10254
  %v10257 = vunpack.c.l.s4 1966171168
  %v10258 = vunpack.c.0.s8 %v10257
  %v10259 = vlaneseq
  %v10260 = vshrl.u32 %v10259, 7
  %v10261 = vsub.s32 %v10258, %v10260
  %v10262 = vrot.slane %v10240, %v10261
  %v10264 = vunpack.c.l.s4 1966171168
  %v10265 = vunpack.c.0.s8 %v10264
  %v10266 = vlaneseq
  %v10267 = vshrl.u32 %v10266, 7
  %v10268 = vsub.s32 %v10265, %v10267
  %v10269 = vrot.slane %v10241, %v10268
  %v10270 = vcombine.low %v10248, %v10255
  %v10271 = vcombine.low %v10262, %v10269
  %v10273 = vunpack.c.l.s4 1966171168
  %v10274 = vunpack.c.0.s8 %v10273
  %v10275 = vlaneseq
  %v10276 = vshrl.u32 %v10275, 7
  %v10277 = vsub.s32 %v10274, %v10276
  %v10278 = vrot.slane %v10270, %v10277
  %v10280 = vunpack.c.l.s4 1966171168
  %v10281 = vunpack.c.0.s8 %v10280
  %v10282 = vlaneseq
  %v10283 = vshrl.u32 %v10282, 7
  %v10284 = vsub.s32 %v10281, %v10283
  %v10285 = vrot.slane %v10271, %v10284
  %v10286 = vcombine.low %v10278, %v10285
  %v10287 = vsel %vm273, %v10139, 0
  %v10289 = vsel %vm273, %v10188, 0
  %v10291 = vsel %vm273, %v10237, 0
  %v10293 = vsel %vm273, %v10286, 0
  %10295 = vmatprep.subr.mxu0 0.0
  %10296 = vmatpush1.msra.mxu0 %v81
  %10297 = vmatprep.subr.mxu0 0.0
  %10298 = vmatpush1.msra.mxu0 %v82
  %10299 = vmatprep.subr.mxu0 0.0
  %10300 = vmatpush1.msra.mxu0 %v83
  %10301 = vmatprep.subr.mxu0 0.0
  %10302 = vmatpush1.msra.mxu0 %v84
  %10303 = vmatprep.subr.mxu0 0.0
  %10304 = vmatpush1.msra.mxu0 %v85
  %10305 = vmatprep.subr.mxu0 0.0
  %10306 = vmatpush1.msra.mxu0 %v86
  %10307 = vmatprep.subr.mxu0 0.0
  %10308 = vmatpush1.msra.mxu0 %v87
  %10309 = vmatprep.subr.mxu0 0.0
  %10310 = vmatpush1.msra.mxu0 %v88
  %10311 = vmatprep.subr.mxu0 0.0
  %10312 = vmatpush1.msra.mxu0 0.0
  %10313 = vmatprep.subr.mxu0 0.0
  %10314 = vmatpush1.msra.mxu0 0.0
  %10315 = vmatprep.subr.mxu0 0.0
  %10316 = vmatpush1.msra.mxu0 0.0
  %10317 = vmatprep.subr.mxu0 0.0
  %10318 = vmatpush1.msra.mxu0 0.0
  %10319 = vmatprep.subr.mxu0 0.0
  %10320 = vmatpush1.msra.mxu0 0.0
  %10321 = vmatprep.subr.mxu0 0.0
  %10322 = vmatpush1.msra.mxu0 0.0
  %10323 = vmatprep.subr.mxu0 0.0
  %10324 = vmatpush1.msra.mxu0 0.0
  %10325 = vmatprep.subr.mxu0 0.0
  %10326 = vmatpush1.msra.mxu0 0.0
  %10327 = vmatprep.subr.mxu0 0.0
  %10328 = vmatpush1.msra.mxu0 0.0
  %10329 = vmatprep.subr.mxu0 0.0
  %10330 = vmatpush1.msra.mxu0 0.0
  %10331 = vmatprep.subr.mxu0 0.0
  %10332 = vmatpush1.msra.mxu0 0.0
  %10333 = vmatprep.subr.mxu0 0.0
  %10334 = vmatpush1.msra.mxu0 0.0
  %10335 = vmatprep.subr.mxu0 0.0
  %10336 = vmatpush1.msra.mxu0 0.0
  %10337 = vmatprep.subr.mxu0 0.0
  %10338 = vmatpush1.msra.mxu0 0.0
  %10339 = vmatprep.subr.mxu0 0.0
  %10340 = vmatpush1.msra.mxu0 0.0
  %10341 = vmatprep.subr.mxu0 0.0
  %10342 = vmatpush1.msra.mxu0 0.0
  %10343 = vmatprep.subr.mxu0 0.0
  %10344 = vmatpush1.msra.mxu0 0.0
  %10345 = vmatprep.subr.mxu0 0.0
  %10346 = vmatpush1.msra.mxu0 0.0
  %10347 = vmatprep.subr.mxu0 0.0
  %10348 = vmatpush1.msra.mxu0 0.0
  %10349 = vmatprep.subr.mxu0 0.0
  %10350 = vmatpush1.msra.mxu0 0.0
  %10351 = vmatprep.subr.mxu0 0.0
  %10352 = vmatpush1.msra.mxu0 0.0
  %10353 = vmatprep.subr.mxu0 0.0
  %10354 = vmatpush1.msra.mxu0 0.0
  %10355 = vmatprep.subr.mxu0 0.0
  %10356 = vmatpush1.msra.mxu0 0.0
  %10357 = vmatprep.subr.mxu0 0.0
  %10358 = vmatpush1.msra.mxu0 0.0
  %10359 = vmatprep.mubr.f32.mxu0 0.0
  %10360 = vmatmul.mubr.f32.gmra.mrb[0].mxu0 %v10287
  %v10361 = vpop.f32.mrb[0].mxu0
  %v10362 = vadd.f32 %v10090, %v10361
  %v10363 = vpop.f32.mrb[0].mxu0
  %10364 = vmatprep.mubr.f32.mxu0 0.0
  %10365 = vmatmul.mubr.f32.gmra.mrb[0].mxu0 %v10289
  %v10366 = vpop.f32.mrb[0].mxu0
  %v10367 = vadd.f32 %v10090, %v10366
  %v10368 = vpop.f32.mrb[0].mxu0
  %10369 = vmatprep.mubr.f32.mxu0 0.0
  %10370 = vmatmul.mubr.f32.gmra.mrb[0].mxu0 %v10291
  %v10371 = vpop.f32.mrb[0].mxu0
  %v10372 = vadd.f32 %v10090, %v10371
  %v10373 = vpop.f32.mrb[0].mxu0
  %10374 = vmatprep.mubr.f32.mxu0 0.0
  %10375 = vmatmul.mubr.f32.gmra.mrb[0].mxu0 %v10293
  %v10376 = vpop.f32.mrb[0].mxu0
  %v10377 = vadd.f32 %v10090, %v10376
  %v10378 = vpop.f32.mrb[0].mxu0
  %10379 = vdwg.mxu0
  %v10384 = vcombine.high %v10362, %v10362
  %v10385 = vcombine.high %v10367, %v10367
  %v10386 = vcombine.high %v10372, %v10372
  %v10387 = vcombine.high %v10377, %v10377
  %v10388 = vlaneseq
  %v10389 = vshrl.u32 %v10388, 7
  %v10390 = vsub.s32 3, %v10389
  %v10391 = vrot.slane %v117, %v10390
  %10392 = vmatprep.subr.mxu0 0.0
  %10393 = vmatpush1.msra.mxu0 %v89
  %10394 = vmatprep.subr.mxu0 0.0
  %10395 = vmatpush1.msra.mxu0 %v90
  %10396 = vmatprep.subr.mxu0 0.0
  %10397 = vmatpush1.msra.mxu0 %v91
  %10398 = vmatprep.subr.mxu0 0.0
  %10399 = vmatpush1.msra.mxu0 %v92
  %10400 = vmatprep.subr.mxu0 0.0
  %10401 = vmatpush1.msra.mxu0 %v93
  %10402 = vmatprep.subr.mxu0 0.0
  %10403 = vmatpush1.msra.mxu0 %v94
  %10404 = vmatprep.subr.mxu0 0.0
  %10405 = vmatpush1.msra.mxu0 %v95
  %10406 = vmatprep.subr.mxu0 0.0
  %10407 = vmatpush1.msra.mxu0 %v96
  %10408 = vmatprep.subr.mxu0 0.0
  %10409 = vmatpush1.msra.mxu0 0.0
  %10410 = vmatprep.subr.mxu0 0.0
  %10411 = vmatpush1.msra.mxu0 0.0
  %10412 = vmatprep.subr.mxu0 0.0
  %10413 = vmatpush1.msra.mxu0 0.0
  %10414 = vmatprep.subr.mxu0 0.0
  %10415 = vmatpush1.msra.mxu0 0.0
  %10416 = vmatprep.subr.mxu0 0.0
  %10417 = vmatpush1.msra.mxu0 0.0
  %10418 = vmatprep.subr.mxu0 0.0
  %10419 = vmatpush1.msra.mxu0 0.0
  %10420 = vmatprep.subr.mxu0 0.0
  %10421 = vmatpush1.msra.mxu0 0.0
  %10422 = vmatprep.subr.mxu0 0.0
  %10423 = vmatpush1.msra.mxu0 0.0
  %10424 = vmatprep.subr.mxu0 0.0
  %10425 = vmatpush1.msra.mxu0 0.0
  %10426 = vmatprep.subr.mxu0 0.0
  %10427 = vmatpush1.msra.mxu0 0.0
  %10428 = vmatprep.subr.mxu0 0.0
  %10429 = vmatpush1.msra.mxu0 0.0
  %10430 = vmatprep.subr.mxu0 0.0
  %10431 = vmatpush1.msra.mxu0 0.0
  %10432 = vmatprep.subr.mxu0 0.0
  %10433 = vmatpush1.msra.mxu0 0.0
  %10434 = vmatprep.subr.mxu0 0.0
  %10435 = vmatpush1.msra.mxu0 0.0
  %10436 = vmatprep.subr.mxu0 0.0
  %10437 = vmatpush1.msra.mxu0 0.0
  %10438 = vmatprep.subr.mxu0 0.0
  %10439 = vmatpush1.msra.mxu0 0.0
  %10440 = vmatprep.subr.mxu0 0.0
  %10441 = vmatpush1.msra.mxu0 0.0
  %10442 = vmatprep.subr.mxu0 0.0
  %10443 = vmatpush1.msra.mxu0 0.0
  %10444 = vmatprep.subr.mxu0 0.0
  %10445 = vmatpush1.msra.mxu0 0.0
  %10446 = vmatprep.subr.mxu0 0.0
  %10447 = vmatpush1.msra.mxu0 0.0
  %10448 = vmatprep.subr.mxu0 0.0
  %10449 = vmatpush1.msra.mxu0 0.0
  %10450 = vmatprep.subr.mxu0 0.0
  %10451 = vmatpush1.msra.mxu0 0.0
  %10452 = vmatprep.subr.mxu0 0.0
  %10453 = vmatpush1.msra.mxu0 0.0
  %10454 = vmatprep.subr.mxu0 0.0
  %10455 = vmatpush1.msra.mxu0 0.0
  %10456 = vmatprep.mubr.f32.mxu0 0.0
  %10457 = vmatmul.mubr.f32.gmra.mrb[0].mxu0 %v10287
  %v10458 = vpop.f32.mrb[0].mxu0
  %v10459 = vadd.f32 %v10391, %v10458
  %v10460 = vpop.f32.mrb[0].mxu0
  %10461 = vmatprep.mubr.f32.mxu0 0.0
  %10462 = vmatmul.mubr.f32.gmra.mrb[0].mxu0 %v10289
  %v10463 = vpop.f32.mrb[0].mxu0
  %v10464 = vadd.f32 %v10391, %v10463
  %v10465 = vpop.f32.mrb[0].mxu0
  %10466 = vmatprep.mubr.f32.mxu0 0.0
  %10467 = vmatmul.mubr.f32.gmra.mrb[0].mxu0 %v10291
  %v10468 = vpop.f32.mrb[0].mxu0
  %v10469 = vadd.f32 %v10391, %v10468
  %v10470 = vpop.f32.mrb[0].mxu0
  %10471 = vmatprep.mubr.f32.mxu0 0.0
  %10472 = vmatmul.mubr.f32.gmra.mrb[0].mxu0 %v10293
  %v10473 = vpop.f32.mrb[0].mxu0
  %v10474 = vadd.f32 %v10391, %v10473
  %v10475 = vpop.f32.mrb[0].mxu0
  %10476 = vdwg.mxu0
  %v10481 = vcombine.high %v10459, %v10459
  %v10482 = vcombine.high %v10464, %v10464
  %v10483 = vcombine.high %v10469, %v10469
  %v10484 = vcombine.high %v10474, %v10474
  %v10489 = vlaneseq
  %v10490 = vshrl.u32 %v10489, 7
  %v10491 = vsub.s32 5, %v10490
  %v10492 = vrot.slane %v117, %v10491
  %v10493 = vmul.f32 %v10459, %v10492
  %v10494 = vmul.f32 %v10481, %v10492
  %v10495 = vmul.f32 %v10464, %v10492
  %v10496 = vmul.f32 %v10482, %v10492
  %v10497 = vmul.f32 %v10469, %v10492
  %v10498 = vmul.f32 %v10483, %v10492
  %v10499 = vmul.f32 %v10474, %v10492
  %v10500 = vmul.f32 %v10484, %v10492
  %v10501 = vlaneseq
  %v10502 = vshrl.u32 %v10501, 7
  %v10503 = vsub.s32 6, %v10502
  %v10504 = vrot.slane %v117, %v10503
  %v10505 = vmul.f32 %v10459, %v10504
  %v10506 = vmul.f32 %v10481, %v10504
  %v10507 = vmul.f32 %v10464, %v10504
  %v10508 = vmul.f32 %v10482, %v10504
  %v10509 = vmul.f32 %v10469, %v10504
  %v10510 = vmul.f32 %v10483, %v10504
  %v10511 = vmul.f32 %v10474, %v10504
  %v10512 = vmul.f32 %v10484, %v10504
  %v10521 = vcombine.low %v10505, %v10505
  %v10522 = vcombine.low %v10506, %v10506
  %v10523 = vcombine.low %v10507, %v10507
  %v10524 = vcombine.low %v10508, %v10508
  %v10525 = vcombine.low %v10509, %v10509
  %v10526 = vcombine.low %v10510, %v10510
  %v10527 = vcombine.low %v10511, %v10511
  %v10528 = vcombine.low %v10512, %v10512
  %v10537 = vsel %vm3623, %v10493, %v10521
  %v10538 = vsel %vm3623, %v10494, %v10522
  %v10539 = vsel %vm3623, %v10495, %v10523
  %v10540 = vsel %vm3623, %v10496, %v10524
  %v10541 = vsel %vm3623, %v10497, %v10525
  %v10542 = vsel %vm3623, %v10498, %v10526
  %v10543 = vsel %vm3623, %v10499, %v10527
  %v10544 = vsel %vm3623, %v10500, %v10528
  %v10545 = vsel %vm273, %v10362, 0
  %v10548 = vsel %vm273, %v10537, 0
  %10550 = vmatprep.subr.mxu0 0.0
  %10551 = vmatpush1.xpose.msra.mxu0 %v10548
  %10552 = vmatprep.subr.mxu0 0.0
  %10553 = vmatpush1.xpose.msra.mxu0 0.0
  %10554 = vmatprep.subr.mxu0 0.0
  %10555 = vmatpush1.xpose.msra.mxu0 0.0
  %10556 = vmatprep.subr.mxu0 0.0
  %10557 = vmatpush1.xpose.msra.mxu0 0.0
  %10558 = vmatprep.subr.mxu0 0.0
  %10559 = vmatpush1.xpose.msra.mxu0 0.0
  %10560 = vmatprep.subr.mxu0 0.0
  %10561 = vmatpush1.xpose.msra.mxu0 0.0
  %10562 = vmatprep.subr.mxu0 0.0
  %10563 = vmatpush1.xpose.msra.mxu0 0.0
  %10564 = vmatprep.subr.mxu0 0.0
  %10565 = vmatpush1.xpose.msra.mxu0 0.0
  %10566 = vmatprep.subr.mxu0 0.0
  %10567 = vmatpush1.xpose.msra.mxu0 0.0
  %10568 = vmatprep.subr.mxu0 0.0
  %10569 = vmatpush1.xpose.msra.mxu0 0.0
  %10570 = vmatprep.subr.mxu0 0.0
  %10571 = vmatpush1.xpose.msra.mxu0 0.0
  %10572 = vmatprep.subr.mxu0 0.0
  %10573 = vmatpush1.xpose.msra.mxu0 0.0
  %10574 = vmatprep.subr.mxu0 0.0
  %10575 = vmatpush1.xpose.msra.mxu0 0.0
  %10576 = vmatprep.subr.mxu0 0.0
  %10577 = vmatpush1.xpose.msra.mxu0 0.0
  %10578 = vmatprep.subr.mxu0 0.0
  %10579 = vmatpush1.xpose.msra.mxu0 0.0
  %10580 = vmatprep.subr.mxu0 0.0
  %10581 = vmatpush1.xpose.msra.mxu0 0.0
  %10582 = vmatprep.subr.mxu0 0.0
  %10583 = vmatpush1.xpose.msra.mxu0 0.0
  %10584 = vmatprep.subr.mxu0 0.0
  %10585 = vmatpush1.xpose.msra.mxu0 0.0
  %10586 = vmatprep.subr.mxu0 0.0
  %10587 = vmatpush1.xpose.msra.mxu0 0.0
  %10588 = vmatprep.subr.mxu0 0.0
  %10589 = vmatpush1.xpose.msra.mxu0 0.0
  %10590 = vmatprep.subr.mxu0 0.0
  %10591 = vmatpush1.xpose.msra.mxu0 0.0
  %10592 = vmatprep.subr.mxu0 0.0
  %10593 = vmatpush1.xpose.msra.mxu0 0.0
  %10594 = vmatprep.subr.mxu0 0.0
  %10595 = vmatpush1.xpose.msra.mxu0 0.0
  %10596 = vmatprep.subr.mxu0 0.0
  %10597 = vmatpush1.xpose.msra.mxu0 0.0
  %10598 = vmatprep.subr.mxu0 0.0
  %10599 = vmatpush1.xpose.msra.mxu0 0.0
  %10600 = vmatprep.subr.mxu0 0.0
  %10601 = vmatpush1.xpose.msra.mxu0 0.0
  %10602 = vmatprep.subr.mxu0 0.0
  %10603 = vmatpush1.xpose.msra.mxu0 0.0
  %10604 = vmatprep.subr.mxu0 0.0
  %10605 = vmatpush1.xpose.msra.mxu0 0.0
  %10606 = vmatprep.subr.mxu0 0.0
  %10607 = vmatpush1.xpose.msra.mxu0 0.0
  %10608 = vmatprep.subr.mxu0 0.0
  %10609 = vmatpush1.xpose.msra.mxu0 0.0
  %10610 = vmatprep.subr.mxu0 0.0
  %10611 = vmatpush1.xpose.msra.mxu0 0.0
  %10612 = vmatprep.subr.mxu0 0.0
  %10613 = vmatpush1.xpose.msra.mxu0 0.0
  %10614 = vmatprep.mubr.f32.mxu0 0.0
  %10615 = vmatmul.mubr.f32.gmra.mrb[0].mxu0 %v10545
  %v10616 = vpop.f32.mrb[0].mxu0
  %v10617 = vadd.f32 0.0, %v10616
  %v10618 = vpop.f32.mrb[0].mxu0
  %10619 = vdwg.mxu0
  %v10620 = vsel %vm273, %v10384, 0
  %v10623 = vsel %vm273, %v10538, 0
  %10625 = vmatprep.subr.mxu0 0.0
  %10626 = vmatpush1.xpose.msra.mxu0 %v10623
  %10627 = vmatprep.subr.mxu0 0.0
  %10628 = vmatpush1.xpose.msra.mxu0 0.0
  %10629 = vmatprep.subr.mxu0 0.0
  %10630 = vmatpush1.xpose.msra.mxu0 0.0
  %10631 = vmatprep.subr.mxu0 0.0
  %10632 = vmatpush1.xpose.msra.mxu0 0.0
  %10633 = vmatprep.subr.mxu0 0.0
  %10634 = vmatpush1.xpose.msra.mxu0 0.0
  %10635 = vmatprep.subr.mxu0 0.0
  %10636 = vmatpush1.xpose.msra.mxu0 0.0
  %10637 = vmatprep.subr.mxu0 0.0
  %10638 = vmatpush1.xpose.msra.mxu0 0.0
  %10639 = vmatprep.subr.mxu0 0.0
  %10640 = vmatpush1.xpose.msra.mxu0 0.0
  %10641 = vmatprep.subr.mxu0 0.0
  %10642 = vmatpush1.xpose.msra.mxu0 0.0
  %10643 = vmatprep.subr.mxu0 0.0
  %10644 = vmatpush1.xpose.msra.mxu0 0.0
  %10645 = vmatprep.subr.mxu0 0.0
  %10646 = vmatpush1.xpose.msra.mxu0 0.0
  %10647 = vmatprep.subr.mxu0 0.0
  %10648 = vmatpush1.xpose.msra.mxu0 0.0
  %10649 = vmatprep.subr.mxu0 0.0
  %10650 = vmatpush1.xpose.msra.mxu0 0.0
  %10651 = vmatprep.subr.mxu0 0.0
  %10652 = vmatpush1.xpose.msra.mxu0 0.0
  %10653 = vmatprep.subr.mxu0 0.0
  %10654 = vmatpush1.xpose.msra.mxu0 0.0
  %10655 = vmatprep.subr.mxu0 0.0
  %10656 = vmatpush1.xpose.msra.mxu0 0.0
  %10657 = vmatprep.subr.mxu0 0.0
  %10658 = vmatpush1.xpose.msra.mxu0 0.0
  %10659 = vmatprep.subr.mxu0 0.0
  %10660 = vmatpush1.xpose.msra.mxu0 0.0
  %10661 = vmatprep.subr.mxu0 0.0
  %10662 = vmatpush1.xpose.msra.mxu0 0.0
  %10663 = vmatprep.subr.mxu0 0.0
  %10664 = vmatpush1.xpose.msra.mxu0 0.0
  %10665 = vmatprep.subr.mxu0 0.0
  %10666 = vmatpush1.xpose.msra.mxu0 0.0
  %10667 = vmatprep.subr.mxu0 0.0
  %10668 = vmatpush1.xpose.msra.mxu0 0.0
  %10669 = vmatprep.subr.mxu0 0.0
  %10670 = vmatpush1.xpose.msra.mxu0 0.0
  %10671 = vmatprep.subr.mxu0 0.0
  %10672 = vmatpush1.xpose.msra.mxu0 0.0
  %10673 = vmatprep.subr.mxu0 0.0
  %10674 = vmatpush1.xpose.msra.mxu0 0.0
  %10675 = vmatprep.subr.mxu0 0.0
  %10676 = vmatpush1.xpose.msra.mxu0 0.0
  %10677 = vmatprep.subr.mxu0 0.0
  %10678 = vmatpush1.xpose.msra.mxu0 0.0
  %10679 = vmatprep.subr.mxu0 0.0
  %10680 = vmatpush1.xpose.msra.mxu0 0.0
  %10681 = vmatprep.subr.mxu0 0.0
  %10682 = vmatpush1.xpose.msra.mxu0 0.0
  %10683 = vmatprep.subr.mxu0 0.0
  %10684 = vmatpush1.xpose.msra.mxu0 0.0
  %10685 = vmatprep.subr.mxu0 0.0
  %10686 = vmatpush1.xpose.msra.mxu0 0.0
  %10687 = vmatprep.subr.mxu0 0.0
  %10688 = vmatpush1.xpose.msra.mxu0 0.0
  %10689 = vmatprep.mubr.f32.mxu0 0.0
  %10690 = vmatmul.mubr.f32.gmra.mrb[0].mxu0 %v10620
  %v10691 = vpop.f32.mrb[0].mxu0
  %v10692 = vadd.f32 0.0, %v10691
  %v10693 = vpop.f32.mrb[0].mxu0
  %10694 = vdwg.mxu0
  %v10695 = vsel %vm273, %v10367, 0
  %v10698 = vsel %vm273, %v10539, 0
  %10700 = vmatprep.subr.mxu0 0.0
  %10701 = vmatpush1.xpose.msra.mxu0 %v10698
  %10702 = vmatprep.subr.mxu0 0.0
  %10703 = vmatpush1.xpose.msra.mxu0 0.0
  %10704 = vmatprep.subr.mxu0 0.0
  %10705 = vmatpush1.xpose.msra.mxu0 0.0
  %10706 = vmatprep.subr.mxu0 0.0
  %10707 = vmatpush1.xpose.msra.mxu0 0.0
  %10708 = vmatprep.subr.mxu0 0.0
  %10709 = vmatpush1.xpose.msra.mxu0 0.0
  %10710 = vmatprep.subr.mxu0 0.0
  %10711 = vmatpush1.xpose.msra.mxu0 0.0
  %10712 = vmatprep.subr.mxu0 0.0
  %10713 = vmatpush1.xpose.msra.mxu0 0.0
  %10714 = vmatprep.subr.mxu0 0.0
  %10715 = vmatpush1.xpose.msra.mxu0 0.0
  %10716 = vmatprep.subr.mxu0 0.0
  %10717 = vmatpush1.xpose.msra.mxu0 0.0
  %10718 = vmatprep.subr.mxu0 0.0
  %10719 = vmatpush1.xpose.msra.mxu0 0.0
  %10720 = vmatprep.subr.mxu0 0.0
  %10721 = vmatpush1.xpose.msra.mxu0 0.0
  %10722 = vmatprep.subr.mxu0 0.0
  %10723 = vmatpush1.xpose.msra.mxu0 0.0
  %10724 = vmatprep.subr.mxu0 0.0
  %10725 = vmatpush1.xpose.msra.mxu0 0.0
  %10726 = vmatprep.subr.mxu0 0.0
  %10727 = vmatpush1.xpose.msra.mxu0 0.0
  %10728 = vmatprep.subr.mxu0 0.0
  %10729 = vmatpush1.xpose.msra.mxu0 0.0
  %10730 = vmatprep.subr.mxu0 0.0
  %10731 = vmatpush1.xpose.msra.mxu0 0.0
  %10732 = vmatprep.subr.mxu0 0.0
  %10733 = vmatpush1.xpose.msra.mxu0 0.0
  %10734 = vmatprep.subr.mxu0 0.0
  %10735 = vmatpush1.xpose.msra.mxu0 0.0
  %10736 = vmatprep.subr.mxu0 0.0
  %10737 = vmatpush1.xpose.msra.mxu0 0.0
  %10738 = vmatprep.subr.mxu0 0.0
  %10739 = vmatpush1.xpose.msra.mxu0 0.0
  %10740 = vmatprep.subr.mxu0 0.0
  %10741 = vmatpush1.xpose.msra.mxu0 0.0
  %10742 = vmatprep.subr.mxu0 0.0
  %10743 = vmatpush1.xpose.msra.mxu0 0.0
  %10744 = vmatprep.subr.mxu0 0.0
  %10745 = vmatpush1.xpose.msra.mxu0 0.0
  %10746 = vmatprep.subr.mxu0 0.0
  %10747 = vmatpush1.xpose.msra.mxu0 0.0
  %10748 = vmatprep.subr.mxu0 0.0
  %10749 = vmatpush1.xpose.msra.mxu0 0.0
  %10750 = vmatprep.subr.mxu0 0.0
  %10751 = vmatpush1.xpose.msra.mxu0 0.0
  %10752 = vmatprep.subr.mxu0 0.0
  %10753 = vmatpush1.xpose.msra.mxu0 0.0
  %10754 = vmatprep.subr.mxu0 0.0
  %10755 = vmatpush1.xpose.msra.mxu0 0.0
  %10756 = vmatprep.subr.mxu0 0.0
  %10757 = vmatpush1.xpose.msra.mxu0 0.0
  %10758 = vmatprep.subr.mxu0 0.0
  %10759 = vmatpush1.xpose.msra.mxu0 0.0
  %10760 = vmatprep.subr.mxu0 0.0
  %10761 = vmatpush1.xpose.msra.mxu0 0.0
  %10762 = vmatprep.subr.mxu0 0.0
  %10763 = vmatpush1.xpose.msra.mxu0 0.0
  %10764 = vmatprep.mubr.f32.mxu0 0.0
  %10765 = vmatmul.mubr.f32.gmra.mrb[0].mxu0 %v10695
  %v10766 = vpop.f32.mrb[0].mxu0
  %v10767 = vadd.f32 0.0, %v10766
  %v10768 = vpop.f32.mrb[0].mxu0
  %10769 = vdwg.mxu0
  %v10770 = vsel %vm273, %v10385, 0
  %v10773 = vsel %vm273, %v10540, 0
  %10775 = vmatprep.subr.mxu0 0.0
  %10776 = vmatpush1.xpose.msra.mxu0 %v10773
  %10777 = vmatprep.subr.mxu0 0.0
  %10778 = vmatpush1.xpose.msra.mxu0 0.0
  %10779 = vmatprep.subr.mxu0 0.0
  %10780 = vmatpush1.xpose.msra.mxu0 0.0
  %10781 = vmatprep.subr.mxu0 0.0
  %10782 = vmatpush1.xpose.msra.mxu0 0.0
  %10783 = vmatprep.subr.mxu0 0.0
  %10784 = vmatpush1.xpose.msra.mxu0 0.0
  %10785 = vmatprep.subr.mxu0 0.0
  %10786 = vmatpush1.xpose.msra.mxu0 0.0
  %10787 = vmatprep.subr.mxu0 0.0
  %10788 = vmatpush1.xpose.msra.mxu0 0.0
  %10789 = vmatprep.subr.mxu0 0.0
  %10790 = vmatpush1.xpose.msra.mxu0 0.0
  %10791 = vmatprep.subr.mxu0 0.0
  %10792 = vmatpush1.xpose.msra.mxu0 0.0
  %10793 = vmatprep.subr.mxu0 0.0
  %10794 = vmatpush1.xpose.msra.mxu0 0.0
  %10795 = vmatprep.subr.mxu0 0.0
  %10796 = vmatpush1.xpose.msra.mxu0 0.0
  %10797 = vmatprep.subr.mxu0 0.0
  %10798 = vmatpush1.xpose.msra.mxu0 0.0
  %10799 = vmatprep.subr.mxu0 0.0
  %10800 = vmatpush1.xpose.msra.mxu0 0.0
  %10801 = vmatprep.subr.mxu0 0.0
  %10802 = vmatpush1.xpose.msra.mxu0 0.0
  %10803 = vmatprep.subr.mxu0 0.0
  %10804 = vmatpush1.xpose.msra.mxu0 0.0
  %10805 = vmatprep.subr.mxu0 0.0
  %10806 = vmatpush1.xpose.msra.mxu0 0.0
  %10807 = vmatprep.subr.mxu0 0.0
  %10808 = vmatpush1.xpose.msra.mxu0 0.0
  %10809 = vmatprep.subr.mxu0 0.0
  %10810 = vmatpush1.xpose.msra.mxu0 0.0
  %10811 = vmatprep.subr.mxu0 0.0
  %10812 = vmatpush1.xpose.msra.mxu0 0.0
  %10813 = vmatprep.subr.mxu0 0.0
  %10814 = vmatpush1.xpose.msra.mxu0 0.0
  %10815 = vmatprep.subr.mxu0 0.0
  %10816 = vmatpush1.xpose.msra.mxu0 0.0
  %10817 = vmatprep.subr.mxu0 0.0
  %10818 = vmatpush1.xpose.msra.mxu0 0.0
  %10819 = vmatprep.subr.mxu0 0.0
  %10820 = vmatpush1.xpose.msra.mxu0 0.0
  %10821 = vmatprep.subr.mxu0 0.0
  %10822 = vmatpush1.xpose.msra.mxu0 0.0
  %10823 = vmatprep.subr.mxu0 0.0
  %10824 = vmatpush1.xpose.msra.mxu0 0.0
  %10825 = vmatprep.subr.mxu0 0.0
  %10826 = vmatpush1.xpose.msra.mxu0 0.0
  %10827 = vmatprep.subr.mxu0 0.0
  %10828 = vmatpush1.xpose.msra.mxu0 0.0
  %10829 = vmatprep.subr.mxu0 0.0
  %10830 = vmatpush1.xpose.msra.mxu0 0.0
  %10831 = vmatprep.subr.mxu0 0.0
  %10832 = vmatpush1.xpose.msra.mxu0 0.0
  %10833 = vmatprep.subr.mxu0 0.0
  %10834 = vmatpush1.xpose.msra.mxu0 0.0
  %10835 = vmatprep.subr.mxu0 0.0
  %10836 = vmatpush1.xpose.msra.mxu0 0.0
  %10837 = vmatprep.subr.mxu0 0.0
  %10838 = vmatpush1.xpose.msra.mxu0 0.0
  %10839 = vmatprep.mubr.f32.mxu0 0.0
  %10840 = vmatmul.mubr.f32.gmra.mrb[0].mxu0 %v10770
  %v10841 = vpop.f32.mrb[0].mxu0
  %v10842 = vadd.f32 0.0, %v10841
  %v10843 = vpop.f32.mrb[0].mxu0
  %10844 = vdwg.mxu0
  %v10845 = vsel %vm273, %v10372, 0
  %v10848 = vsel %vm273, %v10541, 0
  %10850 = vmatprep.subr.mxu0 0.0
  %10851 = vmatpush1.xpose.msra.mxu0 %v10848
  %10852 = vmatprep.subr.mxu0 0.0
  %10853 = vmatpush1.xpose.msra.mxu0 0.0
  %10854 = vmatprep.subr.mxu0 0.0
  %10855 = vmatpush1.xpose.msra.mxu0 0.0
  %10856 = vmatprep.subr.mxu0 0.0
  %10857 = vmatpush1.xpose.msra.mxu0 0.0
  %10858 = vmatprep.subr.mxu0 0.0
  %10859 = vmatpush1.xpose.msra.mxu0 0.0
  %10860 = vmatprep.subr.mxu0 0.0
  %10861 = vmatpush1.xpose.msra.mxu0 0.0
  %10862 = vmatprep.subr.mxu0 0.0
  %10863 = vmatpush1.xpose.msra.mxu0 0.0
  %10864 = vmatprep.subr.mxu0 0.0
  %10865 = vmatpush1.xpose.msra.mxu0 0.0
  %10866 = vmatprep.subr.mxu0 0.0
  %10867 = vmatpush1.xpose.msra.mxu0 0.0
  %10868 = vmatprep.subr.mxu0 0.0
  %10869 = vmatpush1.xpose.msra.mxu0 0.0
  %10870 = vmatprep.subr.mxu0 0.0
  %10871 = vmatpush1.xpose.msra.mxu0 0.0
  %10872 = vmatprep.subr.mxu0 0.0
  %10873 = vmatpush1.xpose.msra.mxu0 0.0
  %10874 = vmatprep.subr.mxu0 0.0
  %10875 = vmatpush1.xpose.msra.mxu0 0.0
  %10876 = vmatprep.subr.mxu0 0.0
  %10877 = vmatpush1.xpose.msra.mxu0 0.0
  %10878 = vmatprep.subr.mxu0 0.0
  %10879 = vmatpush1.xpose.msra.mxu0 0.0
  %10880 = vmatprep.subr.mxu0 0.0
  %10881 = vmatpush1.xpose.msra.mxu0 0.0
  %10882 = vmatprep.subr.mxu0 0.0
  %10883 = vmatpush1.xpose.msra.mxu0 0.0
  %10884 = vmatprep.subr.mxu0 0.0
  %10885 = vmatpush1.xpose.msra.mxu0 0.0
  %10886 = vmatprep.subr.mxu0 0.0
  %10887 = vmatpush1.xpose.msra.mxu0 0.0
  %10888 = vmatprep.subr.mxu0 0.0
  %10889 = vmatpush1.xpose.msra.mxu0 0.0
  %10890 = vmatprep.subr.mxu0 0.0
  %10891 = vmatpush1.xpose.msra.mxu0 0.0
  %10892 = vmatprep.subr.mxu0 0.0
  %10893 = vmatpush1.xpose.msra.mxu0 0.0
  %10894 = vmatprep.subr.mxu0 0.0
  %10895 = vmatpush1.xpose.msra.mxu0 0.0
  %10896 = vmatprep.subr.mxu0 0.0
  %10897 = vmatpush1.xpose.msra.mxu0 0.0
  %10898 = vmatprep.subr.mxu0 0.0
  %10899 = vmatpush1.xpose.msra.mxu0 0.0
  %10900 = vmatprep.subr.mxu0 0.0
  %10901 = vmatpush1.xpose.msra.mxu0 0.0
  %10902 = vmatprep.subr.mxu0 0.0
  %10903 = vmatpush1.xpose.msra.mxu0 0.0
  %10904 = vmatprep.subr.mxu0 0.0
  %10905 = vmatpush1.xpose.msra.mxu0 0.0
  %10906 = vmatprep.subr.mxu0 0.0
  %10907 = vmatpush1.xpose.msra.mxu0 0.0
  %10908 = vmatprep.subr.mxu0 0.0
  %10909 = vmatpush1.xpose.msra.mxu0 0.0
  %10910 = vmatprep.subr.mxu0 0.0
  %10911 = vmatpush1.xpose.msra.mxu0 0.0
  %10912 = vmatprep.subr.mxu0 0.0
  %10913 = vmatpush1.xpose.msra.mxu0 0.0
  %10914 = vmatprep.mubr.f32.mxu0 0.0
  %10915 = vmatmul.mubr.f32.gmra.mrb[0].mxu0 %v10845
  %v10916 = vpop.f32.mrb[0].mxu0
  %v10917 = vadd.f32 0.0, %v10916
  %v10918 = vpop.f32.mrb[0].mxu0
  %10919 = vdwg.mxu0
  %v10920 = vsel %vm273, %v10386, 0
  %v10923 = vsel %vm273, %v10542, 0
  %10925 = vmatprep.subr.mxu0 0.0
  %10926 = vmatpush1.xpose.msra.mxu0 %v10923
  %10927 = vmatprep.subr.mxu0 0.0
  %10928 = vmatpush1.xpose.msra.mxu0 0.0
  %10929 = vmatprep.subr.mxu0 0.0
  %10930 = vmatpush1.xpose.msra.mxu0 0.0
  %10931 = vmatprep.subr.mxu0 0.0
  %10932 = vmatpush1.xpose.msra.mxu0 0.0
  %10933 = vmatprep.subr.mxu0 0.0
  %10934 = vmatpush1.xpose.msra.mxu0 0.0
  %10935 = vmatprep.subr.mxu0 0.0
  %10936 = vmatpush1.xpose.msra.mxu0 0.0
  %10937 = vmatprep.subr.mxu0 0.0
  %10938 = vmatpush1.xpose.msra.mxu0 0.0
  %10939 = vmatprep.subr.mxu0 0.0
  %10940 = vmatpush1.xpose.msra.mxu0 0.0
  %10941 = vmatprep.subr.mxu0 0.0
  %10942 = vmatpush1.xpose.msra.mxu0 0.0
  %10943 = vmatprep.subr.mxu0 0.0
  %10944 = vmatpush1.xpose.msra.mxu0 0.0
  %10945 = vmatprep.subr.mxu0 0.0
  %10946 = vmatpush1.xpose.msra.mxu0 0.0
  %10947 = vmatprep.subr.mxu0 0.0
  %10948 = vmatpush1.xpose.msra.mxu0 0.0
  %10949 = vmatprep.subr.mxu0 0.0
  %10950 = vmatpush1.xpose.msra.mxu0 0.0
  %10951 = vmatprep.subr.mxu0 0.0
  %10952 = vmatpush1.xpose.msra.mxu0 0.0
  %10953 = vmatprep.subr.mxu0 0.0
  %10954 = vmatpush1.xpose.msra.mxu0 0.0
  %10955 = vmatprep.subr.mxu0 0.0
  %10956 = vmatpush1.xpose.msra.mxu0 0.0
  %10957 = vmatprep.subr.mxu0 0.0
  %10958 = vmatpush1.xpose.msra.mxu0 0.0
  %10959 = vmatprep.subr.mxu0 0.0
  %10960 = vmatpush1.xpose.msra.mxu0 0.0
  %10961 = vmatprep.subr.mxu0 0.0
  %10962 = vmatpush1.xpose.msra.mxu0 0.0
  %10963 = vmatprep.subr.mxu0 0.0
  %10964 = vmatpush1.xpose.msra.mxu0 0.0
  %10965 = vmatprep.subr.mxu0 0.0
  %10966 = vmatpush1.xpose.msra.mxu0 0.0
  %10967 = vmatprep.subr.mxu0 0.0
  %10968 = vmatpush1.xpose.msra.mxu0 0.0
  %10969 = vmatprep.subr.mxu0 0.0
  %10970 = vmatpush1.xpose.msra.mxu0 0.0
  %10971 = vmatprep.subr.mxu0 0.0
  %10972 = vmatpush1.xpose.msra.mxu0 0.0
  %10973 = vmatprep.subr.mxu0 0.0
  %10974 = vmatpush1.xpose.msra.mxu0 0.0
  %10975 = vmatprep.subr.mxu0 0.0
  %10976 = vmatpush1.xpose.msra.mxu0 0.0
  %10977 = vmatprep.subr.mxu0 0.0
  %10978 = vmatpush1.xpose.msra.mxu0 0.0
  %10979 = vmatprep.subr.mxu0 0.0
  %10980 = vmatpush1.xpose.msra.mxu0 0.0
  %10981 = vmatprep.subr.mxu0 0.0
  %10982 = vmatpush1.xpose.msra.mxu0 0.0
  %10983 = vmatprep.subr.mxu0 0.0
  %10984 = vmatpush1.xpose.msra.mxu0 0.0
  %10985 = vmatprep.subr.mxu0 0.0
  %10986 = vmatpush1.xpose.msra.mxu0 0.0
  %10987 = vmatprep.subr.mxu0 0.0
  %10988 = vmatpush1.xpose.msra.mxu0 0.0
  %10989 = vmatprep.mubr.f32.mxu0 0.0
  %10990 = vmatmul.mubr.f32.gmra.mrb[0].mxu0 %v10920
  %v10991 = vpop.f32.mrb[0].mxu0
  %v10992 = vadd.f32 0.0, %v10991
  %v10993 = vpop.f32.mrb[0].mxu0
  %10994 = vdwg.mxu0
  %v10995 = vsel %vm273, %v10377, 0
  %v10998 = vsel %vm273, %v10543, 0
  %11000 = vmatprep.subr.mxu0 0.0
  %11001 = vmatpush1.xpose.msra.mxu0 %v10998
  %11002 = vmatprep.subr.mxu0 0.0
  %11003 = vmatpush1.xpose.msra.mxu0 0.0
  %11004 = vmatprep.subr.mxu0 0.0
  %11005 = vmatpush1.xpose.msra.mxu0 0.0
  %11006 = vmatprep.subr.mxu0 0.0
  %11007 = vmatpush1.xpose.msra.mxu0 0.0
  %11008 = vmatprep.subr.mxu0 0.0
  %11009 = vmatpush1.xpose.msra.mxu0 0.0
  %11010 = vmatprep.subr.mxu0 0.0
  %11011 = vmatpush1.xpose.msra.mxu0 0.0
  %11012 = vmatprep.subr.mxu0 0.0
  %11013 = vmatpush1.xpose.msra.mxu0 0.0
  %11014 = vmatprep.subr.mxu0 0.0
  %11015 = vmatpush1.xpose.msra.mxu0 0.0
  %11016 = vmatprep.subr.mxu0 0.0
  %11017 = vmatpush1.xpose.msra.mxu0 0.0
  %11018 = vmatprep.subr.mxu0 0.0
  %11019 = vmatpush1.xpose.msra.mxu0 0.0
  %11020 = vmatprep.subr.mxu0 0.0
  %11021 = vmatpush1.xpose.msra.mxu0 0.0
  %11022 = vmatprep.subr.mxu0 0.0
  %11023 = vmatpush1.xpose.msra.mxu0 0.0
  %11024 = vmatprep.subr.mxu0 0.0
  %11025 = vmatpush1.xpose.msra.mxu0 0.0
  %11026 = vmatprep.subr.mxu0 0.0
  %11027 = vmatpush1.xpose.msra.mxu0 0.0
  %11028 = vmatprep.subr.mxu0 0.0
  %11029 = vmatpush1.xpose.msra.mxu0 0.0
  %11030 = vmatprep.subr.mxu0 0.0
  %11031 = vmatpush1.xpose.msra.mxu0 0.0
  %11032 = vmatprep.subr.mxu0 0.0
  %11033 = vmatpush1.xpose.msra.mxu0 0.0
  %11034 = vmatprep.subr.mxu0 0.0
  %11035 = vmatpush1.xpose.msra.mxu0 0.0
  %11036 = vmatprep.subr.mxu0 0.0
  %11037 = vmatpush1.xpose.msra.mxu0 0.0
  %11038 = vmatprep.subr.mxu0 0.0
  %11039 = vmatpush1.xpose.msra.mxu0 0.0
  %11040 = vmatprep.subr.mxu0 0.0
  %11041 = vmatpush1.xpose.msra.mxu0 0.0
  %11042 = vmatprep.subr.mxu0 0.0
  %11043 = vmatpush1.xpose.msra.mxu0 0.0
  %11044 = vmatprep.subr.mxu0 0.0
  %11045 = vmatpush1.xpose.msra.mxu0 0.0
  %11046 = vmatprep.subr.mxu0 0.0
  %11047 = vmatpush1.xpose.msra.mxu0 0.0
  %11048 = vmatprep.subr.mxu0 0.0
  %11049 = vmatpush1.xpose.msra.mxu0 0.0
  %11050 = vmatprep.subr.mxu0 0.0
  %11051 = vmatpush1.xpose.msra.mxu0 0.0
  %11052 = vmatprep.subr.mxu0 0.0
  %11053 = vmatpush1.xpose.msra.mxu0 0.0
  %11054 = vmatprep.subr.mxu0 0.0
  %11055 = vmatpush1.xpose.msra.mxu0 0.0
  %11056 = vmatprep.subr.mxu0 0.0
  %11057 = vmatpush1.xpose.msra.mxu0 0.0
  %11058 = vmatprep.subr.mxu0 0.0
  %11059 = vmatpush1.xpose.msra.mxu0 0.0
  %11060 = vmatprep.subr.mxu0 0.0
  %11061 = vmatpush1.xpose.msra.mxu0 0.0
  %11062 = vmatprep.subr.mxu0 0.0
  %11063 = vmatpush1.xpose.msra.mxu0 0.0
  %11064 = vmatprep.mubr.f32.mxu0 0.0
  %11065 = vmatmul.mubr.f32.gmra.mrb[0].mxu0 %v10995
  %v11066 = vpop.f32.mrb[0].mxu0
  %v11067 = vadd.f32 0.0, %v11066
  %v11068 = vpop.f32.mrb[0].mxu0
  %11069 = vdwg.mxu0
  %v11070 = vsel %vm273, %v10387, 0
  %v11073 = vsel %vm273, %v10544, 0
  %11075 = vmatprep.subr.mxu0 0.0
  %11076 = vmatpush1.xpose.msra.mxu0 %v11073
  %11077 = vmatprep.subr.mxu0 0.0
  %11078 = vmatpush1.xpose.msra.mxu0 0.0
  %11079 = vmatprep.subr.mxu0 0.0
  %11080 = vmatpush1.xpose.msra.mxu0 0.0
  %11081 = vmatprep.subr.mxu0 0.0
  %11082 = vmatpush1.xpose.msra.mxu0 0.0
  %11083 = vmatprep.subr.mxu0 0.0
  %11084 = vmatpush1.xpose.msra.mxu0 0.0
  %11085 = vmatprep.subr.mxu0 0.0
  %11086 = vmatpush1.xpose.msra.mxu0 0.0
  %11087 = vmatprep.subr.mxu0 0.0
  %11088 = vmatpush1.xpose.msra.mxu0 0.0
  %11089 = vmatprep.subr.mxu0 0.0
  %11090 = vmatpush1.xpose.msra.mxu0 0.0
  %11091 = vmatprep.subr.mxu0 0.0
  %11092 = vmatpush1.xpose.msra.mxu0 0.0
  %11093 = vmatprep.subr.mxu0 0.0
  %11094 = vmatpush1.xpose.msra.mxu0 0.0
  %11095 = vmatprep.subr.mxu0 0.0
  %11096 = vmatpush1.xpose.msra.mxu0 0.0
  %11097 = vmatprep.subr.mxu0 0.0
  %11098 = vmatpush1.xpose.msra.mxu0 0.0
  %11099 = vmatprep.subr.mxu0 0.0
  %11100 = vmatpush1.xpose.msra.mxu0 0.0
  %11101 = vmatprep.subr.mxu0 0.0
  %11102 = vmatpush1.xpose.msra.mxu0 0.0
  %11103 = vmatprep.subr.mxu0 0.0
  %11104 = vmatpush1.xpose.msra.mxu0 0.0
  %11105 = vmatprep.subr.mxu0 0.0
  %11106 = vmatpush1.xpose.msra.mxu0 0.0
  %11107 = vmatprep.subr.mxu0 0.0
  %11108 = vmatpush1.xpose.msra.mxu0 0.0
  %11109 = vmatprep.subr.mxu0 0.0
  %11110 = vmatpush1.xpose.msra.mxu0 0.0
  %11111 = vmatprep.subr.mxu0 0.0
  %11112 = vmatpush1.xpose.msra.mxu0 0.0
  %11113 = vmatprep.subr.mxu0 0.0
  %11114 = vmatpush1.xpose.msra.mxu0 0.0
  %11115 = vmatprep.subr.mxu0 0.0
  %11116 = vmatpush1.xpose.msra.mxu0 0.0
  %11117 = vmatprep.subr.mxu0 0.0
  %11118 = vmatpush1.xpose.msra.mxu0 0.0
  %11119 = vmatprep.subr.mxu0 0.0
  %11120 = vmatpush1.xpose.msra.mxu0 0.0
  %11121 = vmatprep.subr.mxu0 0.0
  %11122 = vmatpush1.xpose.msra.mxu0 0.0
  %11123 = vmatprep.subr.mxu0 0.0
  %11124 = vmatpush1.xpose.msra.mxu0 0.0
  %11125 = vmatprep.subr.mxu0 0.0
  %11126 = vmatpush1.xpose.msra.mxu0 0.0
  %11127 = vmatprep.subr.mxu0 0.0
  %11128 = vmatpush1.xpose.msra.mxu0 0.0
  %11129 = vmatprep.subr.mxu0 0.0
  %11130 = vmatpush1.xpose.msra.mxu0 0.0
  %11131 = vmatprep.subr.mxu0 0.0
  %11132 = vmatpush1.xpose.msra.mxu0 0.0
  %11133 = vmatprep.subr.mxu0 0.0
  %11134 = vmatpush1.xpose.msra.mxu0 0.0
  %11135 = vmatprep.subr.mxu0 0.0
  %11136 = vmatpush1.xpose.msra.mxu0 0.0
  %11137 = vmatprep.subr.mxu0 0.0
  %11138 = vmatpush1.xpose.msra.mxu0 0.0
  %11139 = vmatprep.mubr.f32.mxu0 0.0
  %11140 = vmatmul.mubr.f32.gmra.mrb[0].mxu0 %v11070
  %v11141 = vpop.f32.mrb[0].mxu0
  %v11142 = vadd.f32 0.0, %v11141
  %v11143 = vpop.f32.mrb[0].mxu0
  %11144 = vdwg.mxu0
  %v11145 = vmul.f32 %v10617, 0.088388346
  %v11146 = vmul.f32 %v10692, 0.088388346
  %v11147 = vmul.f32 %v10767, 0.088388346
  %v11148 = vmul.f32 %v10842, 0.088388346
  %v11149 = vmul.f32 %v10917, 0.088388346
  %v11150 = vmul.f32 %v10992, 0.088388346
  %v11151 = vmul.f32 %v11067, 0.088388346
  %v11152 = vmul.f32 %v11142, 0.088388346
  %v11153 = vand.u32 2147483647, %v11145
  %v11154 = vand.u32 2147483647, %v11146
  %v11155 = vand.u32 2147483647, %v11147
  %v11156 = vand.u32 2147483647, %v11148
  %v11157 = vand.u32 2147483647, %v11149
  %v11158 = vand.u32 2147483647, %v11150
  %v11159 = vand.u32 2147483647, %v11151
  %v11160 = vand.u32 2147483647, %v11152
  %v11161 = vlaneseq
  %v11162 = vshrl.u32 %v11161, 7
  %v11163 = vsub.s32 4, %v11162
  %v11164 = vrot.slane %v117, %v11163
  %v11165 = vcombine.low %v9822, %v9823
  %v11166 = vcombine.low %v9824, %v9815
  %v11167 = vcombine.low %v9870, %v9871
  %v11168 = vcombine.low %v9855, %v9869
  %v11170 = vunpack.c.l.s4 1966171168
  %v11171 = vunpack.c.0.s8 %v11170
  %v11172 = vlaneseq
  %v11173 = vshrl.u32 %v11172, 7
  %v11174 = vsub.s32 %v11171, %v11173
  %v11175 = vrot.slane %v11165, %v11174
  %v11177 = vunpack.c.l.s4 1966171168
  %v11178 = vunpack.c.0.s8 %v11177
  %v11179 = vlaneseq
  %v11180 = vshrl.u32 %v11179, 7
  %v11181 = vsub.s32 %v11178, %v11180
  %v11182 = vrot.slane %v11166, %v11181
  %v11184 = vunpack.c.l.s4 1966171168
  %v11185 = vunpack.c.0.s8 %v11184
  %v11186 = vlaneseq
  %v11187 = vshrl.u32 %v11186, 7
  %v11188 = vsub.s32 %v11185, %v11187
  %v11189 = vrot.slane %v11167, %v11188
  %v11191 = vunpack.c.l.s4 1966171168
  %v11192 = vunpack.c.0.s8 %v11191
  %v11193 = vlaneseq
  %v11194 = vshrl.u32 %v11193, 7
  %v11195 = vsub.s32 %v11192, %v11194
  %v11196 = vrot.slane %v11168, %v11195
  %v11197 = vcombine.low %v11175, %v11182
  %v11198 = vcombine.low %v11189, %v11196
  %v11200 = vunpack.c.l.s4 1966171168
  %v11201 = vunpack.c.0.s8 %v11200
  %v11202 = vlaneseq
  %v11203 = vshrl.u32 %v11202, 7
  %v11204 = vsub.s32 %v11201, %v11203
  %v11205 = vrot.slane %v11197, %v11204
  %v11207 = vunpack.c.l.s4 1966171168
  %v11208 = vunpack.c.0.s8 %v11207
  %v11209 = vlaneseq
  %v11210 = vshrl.u32 %v11209, 7
  %v11211 = vsub.s32 %v11208, %v11210
  %v11212 = vrot.slane %v11198, %v11211
  %v11213 = vcombine.low %v11205, %v11212
  %v11214 = vcombine.low %v9911, %v9895
  %v11215 = vcombine.low %v9909, %v9910
  %v11216 = vcombine.low %v9927, %v9934
  %v11217 = vcombine.low %v9935, %v9936
  %v11219 = vunpack.c.l.s4 1966171168
  %v11220 = vunpack.c.0.s8 %v11219
  %v11221 = vlaneseq
  %v11222 = vshrl.u32 %v11221, 7
  %v11223 = vsub.s32 %v11220, %v11222
  %v11224 = vrot.slane %v11214, %v11223
  %v11226 = vunpack.c.l.s4 1966171168
  %v11227 = vunpack.c.0.s8 %v11226
  %v11228 = vlaneseq
  %v11229 = vshrl.u32 %v11228, 7
  %v11230 = vsub.s32 %v11227, %v11229
  %v11231 = vrot.slane %v11215, %v11230
  %v11233 = vunpack.c.l.s4 1966171168
  %v11234 = vunpack.c.0.s8 %v11233
  %v11235 = vlaneseq
  %v11236 = vshrl.u32 %v11235, 7
  %v11237 = vsub.s32 %v11234, %v11236
  %v11238 = vrot.slane %v11216, %v11237
  %v11240 = vunpack.c.l.s4 1966171168
  %v11241 = vunpack.c.0.s8 %v11240
  %v11242 = vlaneseq
  %v11243 = vshrl.u32 %v11242, 7
  %v11244 = vsub.s32 %v11241, %v11243
  %v11245 = vrot.slane %v11217, %v11244
  %v11246 = vcombine.low %v11224, %v11231
  %v11247 = vcombine.low %v11238, %v11245
  %v11249 = vunpack.c.l.s4 1966171168
  %v11250 = vunpack.c.0.s8 %v11249
  %v11251 = vlaneseq
  %v11252 = vshrl.u32 %v11251, 7
  %v11253 = vsub.s32 %v11250, %v11252
  %v11254 = vrot.slane %v11246, %v11253
  %v11256 = vunpack.c.l.s4 1966171168
  %v11257 = vunpack.c.0.s8 %v11256
  %v11258 = vlaneseq
  %v11259 = vshrl.u32 %v11258, 7
  %v11260 = vsub.s32 %v11257, %v11259
  %v11261 = vrot.slane %v11247, %v11260
  %v11262 = vcombine.low %v11254, %v11261
  %v11263 = vcombine.low %v9959, %v9960
  %v11264 = vcombine.low %v9961, %v9984
  %v11265 = vcombine.low %v9999, %v10000
  %v11266 = vcombine.low %v10024, %v10031
  %v11268 = vunpack.c.l.s4 1966171168
  %v11269 = vunpack.c.0.s8 %v11268
  %v11270 = vlaneseq
  %v11271 = vshrl.u32 %v11270, 7
  %v11272 = vsub.s32 %v11269, %v11271
  %v11273 = vrot.slane %v11263, %v11272
  %v11275 = vunpack.c.l.s4 1966171168
  %v11276 = vunpack.c.0.s8 %v11275
  %v11277 = vlaneseq
  %v11278 = vshrl.u32 %v11277, 7
  %v11279 = vsub.s32 %v11276, %v11278
  %v11280 = vrot.slane %v11264, %v11279
  %v11282 = vunpack.c.l.s4 1966171168
  %v11283 = vunpack.c.0.s8 %v11282
  %v11284 = vlaneseq
  %v11285 = vshrl.u32 %v11284, 7
  %v11286 = vsub.s32 %v11283, %v11285
  %v11287 = vrot.slane %v11265, %v11286
  %v11289 = vunpack.c.l.s4 1966171168
  %v11290 = vunpack.c.0.s8 %v11289
  %v11291 = vlaneseq
  %v11292 = vshrl.u32 %v11291, 7
  %v11293 = vsub.s32 %v11290, %v11292
  %v11294 = vrot.slane %v11266, %v11293
  %v11295 = vcombine.low %v11273, %v11280
  %v11296 = vcombine.low %v11287, %v11294
  %v11298 = vunpack.c.l.s4 1966171168
  %v11299 = vunpack.c.0.s8 %v11298
  %v11300 = vlaneseq
  %v11301 = vshrl.u32 %v11300, 7
  %v11302 = vsub.s32 %v11299, %v11301
  %v11303 = vrot.slane %v11295, %v11302
  %v11305 = vunpack.c.l.s4 1966171168
  %v11306 = vunpack.c.0.s8 %v11305
  %v11307 = vlaneseq
  %v11308 = vshrl.u32 %v11307, 7
  %v11309 = vsub.s32 %v11306, %v11308
  %v11310 = vrot.slane %v11296, %v11309
  %v11311 = vcombine.low %v11303, %v11310
  %v11312 = vcombine.low %v10039, %v10054
  %v11313 = vcombine.low %v10061, %v10062
  %v11314 = vcombine.low %v10077, %v10084
  %v11315 = vcombine.low %v10085, %v10086
  %v11317 = vunpack.c.l.s4 1966171168
  %v11318 = vunpack.c.0.s8 %v11317
  %v11319 = vlaneseq
  %v11320 = vshrl.u32 %v11319, 7
  %v11321 = vsub.s32 %v11318, %v11320
  %v11322 = vrot.slane %v11312, %v11321
  %v11324 = vunpack.c.l.s4 1966171168
  %v11325 = vunpack.c.0.s8 %v11324
  %v11326 = vlaneseq
  %v11327 = vshrl.u32 %v11326, 7
  %v11328 = vsub.s32 %v11325, %v11327
  %v11329 = vrot.slane %v11313, %v11328
  %v11331 = vunpack.c.l.s4 1966171168
  %v11332 = vunpack.c.0.s8 %v11331
  %v11333 = vlaneseq
  %v11334 = vshrl.u32 %v11333, 7
  %v11335 = vsub.s32 %v11332, %v11334
  %v11336 = vrot.slane %v11314, %v11335
  %v11338 = vunpack.c.l.s4 1966171168
  %v11339 = vunpack.c.0.s8 %v11338
  %v11340 = vlaneseq
  %v11341 = vshrl.u32 %v11340, 7
  %v11342 = vsub.s32 %v11339, %v11341
  %v11343 = vrot.slane %v11315, %v11342
  %v11344 = vcombine.low %v11322, %v11329
  %v11345 = vcombine.low %v11336, %v11343
  %v11347 = vunpack.c.l.s4 1966171168
  %v11348 = vunpack.c.0.s8 %v11347
  %v11349 = vlaneseq
  %v11350 = vshrl.u32 %v11349, 7
  %v11351 = vsub.s32 %v11348, %v11350
  %v11352 = vrot.slane %v11344, %v11351
  %v11354 = vunpack.c.l.s4 1966171168
  %v11355 = vunpack.c.0.s8 %v11354
  %v11356 = vlaneseq
  %v11357 = vshrl.u32 %v11356, 7
  %v11358 = vsub.s32 %v11355, %v11357
  %v11359 = vrot.slane %v11345, %v11358
  %v11360 = vcombine.low %v11352, %v11359
  %v11361 = vsel %vm273, %v11213, 0
  %v11363 = vsel %vm273, %v11262, 0
  %v11365 = vsel %vm273, %v11311, 0
  %v11367 = vsel %vm273, %v11360, 0
  %11369 = vmatprep.subr.mxu0 0.0
  %11370 = vmatpush1.msra.mxu0 %v97
  %11371 = vmatprep.subr.mxu0 0.0
  %11372 = vmatpush1.msra.mxu0 %v98
  %11373 = vmatprep.subr.mxu0 0.0
  %11374 = vmatpush1.msra.mxu0 %v99
  %11375 = vmatprep.subr.mxu0 0.0
  %11376 = vmatpush1.msra.mxu0 %v100
  %11377 = vmatprep.subr.mxu0 0.0
  %11378 = vmatpush1.msra.mxu0 %v101
  %11379 = vmatprep.subr.mxu0 0.0
  %11380 = vmatpush1.msra.mxu0 %v102
  %11381 = vmatprep.subr.mxu0 0.0
  %11382 = vmatpush1.msra.mxu0 %v103
  %11383 = vmatprep.subr.mxu0 0.0
  %11384 = vmatpush1.msra.mxu0 %v104
  %11385 = vmatprep.subr.mxu0 0.0
  %11386 = vmatpush1.msra.mxu0 0.0
  %11387 = vmatprep.subr.mxu0 0.0
  %11388 = vmatpush1.msra.mxu0 0.0
  %11389 = vmatprep.subr.mxu0 0.0
  %11390 = vmatpush1.msra.mxu0 0.0
  %11391 = vmatprep.subr.mxu0 0.0
  %11392 = vmatpush1.msra.mxu0 0.0
  %11393 = vmatprep.subr.mxu0 0.0
  %11394 = vmatpush1.msra.mxu0 0.0
  %11395 = vmatprep.subr.mxu0 0.0
  %11396 = vmatpush1.msra.mxu0 0.0
  %11397 = vmatprep.subr.mxu0 0.0
  %11398 = vmatpush1.msra.mxu0 0.0
  %11399 = vmatprep.subr.mxu0 0.0
  %11400 = vmatpush1.msra.mxu0 0.0
  %11401 = vmatprep.subr.mxu0 0.0
  %11402 = vmatpush1.msra.mxu0 0.0
  %11403 = vmatprep.subr.mxu0 0.0
  %11404 = vmatpush1.msra.mxu0 0.0
  %11405 = vmatprep.subr.mxu0 0.0
  %11406 = vmatpush1.msra.mxu0 0.0
  %11407 = vmatprep.subr.mxu0 0.0
  %11408 = vmatpush1.msra.mxu0 0.0
  %11409 = vmatprep.subr.mxu0 0.0
  %11410 = vmatpush1.msra.mxu0 0.0
  %11411 = vmatprep.subr.mxu0 0.0
  %11412 = vmatpush1.msra.mxu0 0.0
  %11413 = vmatprep.subr.mxu0 0.0
  %11414 = vmatpush1.msra.mxu0 0.0
  %11415 = vmatprep.subr.mxu0 0.0
  %11416 = vmatpush1.msra.mxu0 0.0
  %11417 = vmatprep.subr.mxu0 0.0
  %11418 = vmatpush1.msra.mxu0 0.0
  %11419 = vmatprep.subr.mxu0 0.0
  %11420 = vmatpush1.msra.mxu0 0.0
  %11421 = vmatprep.subr.mxu0 0.0
  %11422 = vmatpush1.msra.mxu0 0.0
  %11423 = vmatprep.subr.mxu0 0.0
  %11424 = vmatpush1.msra.mxu0 0.0
  %11425 = vmatprep.subr.mxu0 0.0
  %11426 = vmatpush1.msra.mxu0 0.0
  %11427 = vmatprep.subr.mxu0 0.0
  %11428 = vmatpush1.msra.mxu0 0.0
  %11429 = vmatprep.subr.mxu0 0.0
  %11430 = vmatpush1.msra.mxu0 0.0
  %11431 = vmatprep.subr.mxu0 0.0
  %11432 = vmatpush1.msra.mxu0 0.0
  %11433 = vmatprep.mubr.f32.mxu0 0.0
  %11434 = vmatmul.mubr.f32.gmra.mrb[0].mxu0 %v11361
  %v11435 = vpop.f32.mrb[0].mxu0
  %v11436 = vadd.f32 %v11164, %v11435
  %v11437 = vpop.f32.mrb[0].mxu0
  %11438 = vmatprep.mubr.f32.mxu0 0.0
  %11439 = vmatmul.mubr.f32.gmra.mrb[0].mxu0 %v11363
  %v11440 = vpop.f32.mrb[0].mxu0
  %v11441 = vadd.f32 %v11164, %v11440
  %v11442 = vpop.f32.mrb[0].mxu0
  %11443 = vmatprep.mubr.f32.mxu0 0.0
  %11444 = vmatmul.mubr.f32.gmra.mrb[0].mxu0 %v11365
  %v11445 = vpop.f32.mrb[0].mxu0
  %v11446 = vadd.f32 %v11164, %v11445
  %v11447 = vpop.f32.mrb[0].mxu0
  %11448 = vmatprep.mubr.f32.mxu0 0.0
  %11449 = vmatmul.mubr.f32.gmra.mrb[0].mxu0 %v11367
  %v11450 = vpop.f32.mrb[0].mxu0
  %v11451 = vadd.f32 %v11164, %v11450
  %v11452 = vpop.f32.mrb[0].mxu0
  %11453 = vdwg.mxu0
  %v11458 = vcombine.high %v11436, %v11436
  %v11459 = vcombine.high %v11441, %v11441
  %v11460 = vcombine.high %v11446, %v11446
  %v11461 = vcombine.high %v11451, %v11451
  %v11466 = vlaneseq
  %v11467 = vshrl.u32 %v11466, 7
  %v11468 = vsub.s32 7, %v11467
  %v11469 = vrot.slane %v117, %v11468
  %v11470 = vmul.f32 %v11436, %v11469
  %v11471 = vmul.f32 %v11458, %v11469
  %v11472 = vmul.f32 %v11441, %v11469
  %v11473 = vmul.f32 %v11459, %v11469
  %v11474 = vmul.f32 %v11446, %v11469
  %v11475 = vmul.f32 %v11460, %v11469
  %v11476 = vmul.f32 %v11451, %v11469
  %v11477 = vmul.f32 %v11461, %v11469
  %v11478 = vmul.f32 %v11470, %v10492
  %v11479 = vmul.f32 %v11471, %v10492
  %v11480 = vmul.f32 %v11472, %v10492
  %v11481 = vmul.f32 %v11473, %v10492
  %v11482 = vmul.f32 %v11474, %v10492
  %v11483 = vmul.f32 %v11475, %v10492
  %v11484 = vmul.f32 %v11476, %v10492
  %v11485 = vmul.f32 %v11477, %v10492
  %vm11486 = vcmask 519168
  %v11487 = vsel %vm11486, %v11478, 0.0
  %11488 = vadd.xlane.f32.xlu0 %v11487
  %v11489 = vpop.xlane.xlu0 %11488
  %v11490 = vsel %vm11486, %v11479, 0.0
  %11491 = vadd.xlane.f32.xlu0 %v11490
  %v11492 = vpop.xlane.xlu0 %11491
  %v11493 = vsel %vm11486, %v11480, 0.0
  %11494 = vadd.xlane.f32.xlu0 %v11493
  %v11495 = vpop.xlane.xlu0 %11494
  %v11496 = vsel %vm11486, %v11481, 0.0
  %11497 = vadd.xlane.f32.xlu0 %v11496
  %v11498 = vpop.xlane.xlu0 %11497
  %v11499 = vsel %vm11486, %v11482, 0.0
  %11500 = vadd.xlane.f32.xlu0 %v11499
  %v11501 = vpop.xlane.xlu0 %11500
  %v11502 = vsel %vm11486, %v11483, 0.0
  %11503 = vadd.xlane.f32.xlu0 %v11502
  %v11504 = vpop.xlane.xlu0 %11503
  %v11505 = vsel %vm11486, %v11484, 0.0
  %11506 = vadd.xlane.f32.xlu0 %v11505
  %v11507 = vpop.xlane.xlu0 %11506
  %v11508 = vsel %vm11486, %v11485, 0.0
  %11509 = vadd.xlane.f32.xlu0 %v11508
  %v11510 = vpop.xlane.xlu0 %11509
  %v11511 = vmul.f32 %v11489, 0.088388346
  %v11512 = vmul.f32 %v11492, 0.088388346
  %v11513 = vmul.f32 %v11495, 0.088388346
  %v11514 = vmul.f32 %v11498, 0.088388346
  %v11515 = vmul.f32 %v11501, 0.088388346
  %v11516 = vmul.f32 %v11504, 0.088388346
  %v11517 = vmul.f32 %v11507, 0.088388346
  %v11518 = vmul.f32 %v11510, 0.088388346
  %v11519 = vmul.f32 %v11470, %v10504
  %v11520 = vmul.f32 %v11471, %v10504
  %v11521 = vmul.f32 %v11472, %v10504
  %v11522 = vmul.f32 %v11473, %v10504
  %v11523 = vmul.f32 %v11474, %v10504
  %v11524 = vmul.f32 %v11475, %v10504
  %v11525 = vmul.f32 %v11476, %v10504
  %v11526 = vmul.f32 %v11477, %v10504
  %v11527 = vsel %vm11486, %v11519, 0.0
  %11528 = vadd.xlane.f32.xlu0 %v11527
  %v11529 = vpop.xlane.xlu0 %11528
  %v11530 = vsel %vm11486, %v11520, 0.0
  %11531 = vadd.xlane.f32.xlu0 %v11530
  %v11532 = vpop.xlane.xlu0 %11531
  %v11533 = vsel %vm11486, %v11521, 0.0
  %11534 = vadd.xlane.f32.xlu0 %v11533
  %v11535 = vpop.xlane.xlu0 %11534
  %v11536 = vsel %vm11486, %v11522, 0.0
  %11537 = vadd.xlane.f32.xlu0 %v11536
  %v11538 = vpop.xlane.xlu0 %11537
  %v11539 = vsel %vm11486, %v11523, 0.0
  %11540 = vadd.xlane.f32.xlu0 %v11539
  %v11541 = vpop.xlane.xlu0 %11540
  %v11542 = vsel %vm11486, %v11524, 0.0
  %11543 = vadd.xlane.f32.xlu0 %v11542
  %v11544 = vpop.xlane.xlu0 %11543
  %v11545 = vsel %vm11486, %v11525, 0.0
  %11546 = vadd.xlane.f32.xlu0 %v11545
  %v11547 = vpop.xlane.xlu0 %11546
  %v11548 = vsel %vm11486, %v11526, 0.0
  %11549 = vadd.xlane.f32.xlu0 %v11548
  %v11550 = vpop.xlane.xlu0 %11549
  %v11551 = vmul.f32 %v11529, 0.088388346
  %v11552 = vmul.f32 %v11532, 0.088388346
  %v11553 = vmul.f32 %v11535, 0.088388346
  %v11554 = vmul.f32 %v11538, 0.088388346
  %v11555 = vmul.f32 %v11541, 0.088388346
  %v11556 = vmul.f32 %v11544, 0.088388346
  %v11557 = vmul.f32 %v11547, 0.088388346
  %v11558 = vmul.f32 %v11550, 0.088388346
  %v11559 = vld [vmem:[%s0] sm:$0xff]
  %11561 = vset.pattern.permute.xlu0 0
  %11562 = vperm.xlu0 %11561, %v11559
  %v11563 = vpop.permute.xlu0 %11562
  %v11573 = vrot.slane %v11154, 7
  %vm11574 = vcmask 1041409
  %v11575 = vsel %vm11574, %v11573, %v11153
  %v11576 = vrot.slane %v11155, 6
  %vm11577 = vcmask 1042434
  %v11578 = vsel %vm11577, %v11576, %v11575
  %v11579 = vrot.slane %v11156, 5
  %vm11580 = vcmask 1043459
  %v11581 = vsel %vm11580, %v11579, %v11578
  %v11582 = vrot.slane %v11157, 4
  %vm11583 = vcmask 1044484
  %v11584 = vsel %vm11583, %v11582, %v11581
  %v11585 = vrot.slane %v11158, 3
  %vm11586 = vcmask 1045509
  %v11587 = vsel %vm11586, %v11585, %v11584
  %v11588 = vrot.slane %v11159, 2
  %vm11589 = vcmask 1046534
  %v11590 = vsel %vm11589, %v11588, %v11587
  %v11591 = vrot.slane %v11160, 1
  %vm11592 = vcmask 1047559
  %v11593 = vsel %vm11592, %v11591, %v11590
  %v11595 = vmul.f32 %v11563, %v11593
  %v11597 = vlaneseq
  %v11598 = vshrl.u32 %v11597, 7
  %v11599 = vsub.s32 0, %v11598
  %v11600 = vrot.slane %v11595, %v11599
  %11602 = vbcast.lane.b32.xlu0 %v11600, 256
  %v11603 = vpop.permute.xlu0 %11602
  %v11604 = vlaneseq
  %v11605 = vshrl.u32 %v11604, 7
  %v11606 = vsub.s32 1, %v11605
  %v11607 = vrot.slane %v11595, %v11606
  %11609 = vbcast.lane.b32.xlu0 %v11607, 256
  %v11610 = vpop.permute.xlu0 %11609
  %v11611 = vlaneseq
  %v11612 = vshrl.u32 %v11611, 7
  %v11613 = vsub.s32 2, %v11612
  %v11614 = vrot.slane %v11595, %v11613
  %11616 = vbcast.lane.b32.xlu0 %v11614, 256
  %v11617 = vpop.permute.xlu0 %11616
  %v11618 = vlaneseq
  %v11619 = vshrl.u32 %v11618, 7
  %v11620 = vsub.s32 3, %v11619
  %v11621 = vrot.slane %v11595, %v11620
  %11623 = vbcast.lane.b32.xlu0 %v11621, 256
  %v11624 = vpop.permute.xlu0 %11623
  %v11625 = vlaneseq
  %v11626 = vshrl.u32 %v11625, 7
  %v11627 = vsub.s32 4, %v11626
  %v11628 = vrot.slane %v11595, %v11627
  %11630 = vbcast.lane.b32.xlu0 %v11628, 256
  %v11631 = vpop.permute.xlu0 %11630
  %v11632 = vlaneseq
  %v11633 = vshrl.u32 %v11632, 7
  %v11634 = vsub.s32 5, %v11633
  %v11635 = vrot.slane %v11595, %v11634
  %11637 = vbcast.lane.b32.xlu0 %v11635, 256
  %v11638 = vpop.permute.xlu0 %11637
  %v11639 = vlaneseq
  %v11640 = vshrl.u32 %v11639, 7
  %v11641 = vsub.s32 6, %v11640
  %v11642 = vrot.slane %v11595, %v11641
  %11644 = vbcast.lane.b32.xlu0 %v11642, 256
  %v11645 = vpop.permute.xlu0 %11644
  %v11646 = vlaneseq
  %v11647 = vshrl.u32 %v11646, 7
  %v11648 = vsub.s32 7, %v11647
  %v11649 = vrot.slane %v11595, %v11648
  %11651 = vbcast.lane.b32.xlu0 %v11649, 256
  %v11652 = vpop.permute.xlu0 %11651
  %v11661 = vadd.f32 %v11511, %v11603
  %v11662 = vadd.f32 %v11512, %v11610
  %v11663 = vadd.f32 %v11513, %v11617
  %v11664 = vadd.f32 %v11514, %v11624
  %v11665 = vadd.f32 %v11515, %v11631
  %v11666 = vadd.f32 %v11516, %v11638
  %v11667 = vadd.f32 %v11517, %v11645
  %v11668 = vadd.f32 %v11518, %v11652
  %11669 = vset.pattern.permute.xlu0 1
  %11670 = vperm.xlu0 %11669, %v11559
  %v11671 = vpop.permute.xlu0 %11670
  %v11673 = vrot.slane %v11153, 1
  %v11674 = vsel %vm11574, %v11154, %v11673
  %v11675 = vrot.slane %v11155, 7
  %v11676 = vsel %vm11577, %v11675, %v11674
  %v11677 = vrot.slane %v11156, 6
  %v11678 = vsel %vm11580, %v11677, %v11676
  %v11679 = vrot.slane %v11157, 5
  %v11680 = vsel %vm11583, %v11679, %v11678
  %v11681 = vrot.slane %v11158, 4
  %v11682 = vsel %vm11586, %v11681, %v11680
  %v11683 = vrot.slane %v11159, 3
  %v11684 = vsel %vm11589, %v11683, %v11682
  %v11685 = vrot.slane %v11160, 2
  %v11686 = vsel %vm11592, %v11685, %v11684
  %v11688 = vmul.f32 %v11671, %v11686
  %v11690 = vlaneseq
  %v11691 = vshrl.u32 %v11690, 7
  %v11692 = vsub.s32 0, %v11691
  %v11693 = vrot.slane %v11688, %v11692
  %11695 = vbcast.lane.b32.xlu0 %v11693, 256
  %v11696 = vpop.permute.xlu0 %11695
  %v11697 = vlaneseq
  %v11698 = vshrl.u32 %v11697, 7
  %v11699 = vsub.s32 1, %v11698
  %v11700 = vrot.slane %v11688, %v11699
  %11702 = vbcast.lane.b32.xlu0 %v11700, 256
  %v11703 = vpop.permute.xlu0 %11702
  %v11704 = vlaneseq
  %v11705 = vshrl.u32 %v11704, 7
  %v11706 = vsub.s32 2, %v11705
  %v11707 = vrot.slane %v11688, %v11706
  %11709 = vbcast.lane.b32.xlu0 %v11707, 256
  %v11710 = vpop.permute.xlu0 %11709
  %v11711 = vlaneseq
  %v11712 = vshrl.u32 %v11711, 7
  %v11713 = vsub.s32 3, %v11712
  %v11714 = vrot.slane %v11688, %v11713
  %11716 = vbcast.lane.b32.xlu0 %v11714, 256
  %v11717 = vpop.permute.xlu0 %11716
  %v11718 = vlaneseq
  %v11719 = vshrl.u32 %v11718, 7
  %v11720 = vsub.s32 4, %v11719
  %v11721 = vrot.slane %v11688, %v11720
  %11723 = vbcast.lane.b32.xlu0 %v11721, 256
  %v11724 = vpop.permute.xlu0 %11723
  %v11725 = vlaneseq
  %v11726 = vshrl.u32 %v11725, 7
  %v11727 = vsub.s32 5, %v11726
  %v11728 = vrot.slane %v11688, %v11727
  %11730 = vbcast.lane.b32.xlu0 %v11728, 256
  %v11731 = vpop.permute.xlu0 %11730
  %v11732 = vlaneseq
  %v11733 = vshrl.u32 %v11732, 7
  %v11734 = vsub.s32 6, %v11733
  %v11735 = vrot.slane %v11688, %v11734
  %11737 = vbcast.lane.b32.xlu0 %v11735, 256
  %v11738 = vpop.permute.xlu0 %11737
  %v11739 = vlaneseq
  %v11740 = vshrl.u32 %v11739, 7
  %v11741 = vsub.s32 7, %v11740
  %v11742 = vrot.slane %v11688, %v11741
  %11744 = vbcast.lane.b32.xlu0 %v11742, 256
  %v11745 = vpop.permute.xlu0 %11744
  %v11754 = vadd.f32 %v11661, %v11696
  %v11755 = vadd.f32 %v11662, %v11703
  %v11756 = vadd.f32 %v11663, %v11710
  %v11757 = vadd.f32 %v11664, %v11717
  %v11758 = vadd.f32 %v11665, %v11724
  %v11759 = vadd.f32 %v11666, %v11731
  %v11760 = vadd.f32 %v11667, %v11738
  %v11761 = vadd.f32 %v11668, %v11745
  %11762 = vset.pattern.permute.xlu0 2
  %11763 = vperm.xlu0 %11762, %v11559
  %v11764 = vpop.permute.xlu0 %11763
  %v11766 = vrot.slane %v11153, 2
  %v11767 = vrot.slane %v11154, 1
  %v11768 = vsel %vm11574, %v11767, %v11766
  %v11769 = vsel %vm11577, %v11155, %v11768
  %v11770 = vrot.slane %v11156, 7
  %v11771 = vsel %vm11580, %v11770, %v11769
  %v11772 = vrot.slane %v11157, 6
  %v11773 = vsel %vm11583, %v11772, %v11771
  %v11774 = vrot.slane %v11158, 5
  %v11775 = vsel %vm11586, %v11774, %v11773
  %v11776 = vrot.slane %v11159, 4
  %v11777 = vsel %vm11589, %v11776, %v11775
  %v11778 = vrot.slane %v11160, 3
  %v11779 = vsel %vm11592, %v11778, %v11777
  %v11781 = vmul.f32 %v11764, %v11779
  %v11783 = vlaneseq
  %v11784 = vshrl.u32 %v11783, 7
  %v11785 = vsub.s32 0, %v11784
  %v11786 = vrot.slane %v11781, %v11785
  %11788 = vbcast.lane.b32.xlu0 %v11786, 256
  %v11789 = vpop.permute.xlu0 %11788
  %v11790 = vlaneseq
  %v11791 = vshrl.u32 %v11790, 7
  %v11792 = vsub.s32 1, %v11791
  %v11793 = vrot.slane %v11781, %v11792
  %11795 = vbcast.lane.b32.xlu0 %v11793, 256
  %v11796 = vpop.permute.xlu0 %11795
  %v11797 = vlaneseq
  %v11798 = vshrl.u32 %v11797, 7
  %v11799 = vsub.s32 2, %v11798
  %v11800 = vrot.slane %v11781, %v11799
  %11802 = vbcast.lane.b32.xlu0 %v11800, 256
  %v11803 = vpop.permute.xlu0 %11802
  %v11804 = vlaneseq
  %v11805 = vshrl.u32 %v11804, 7
  %v11806 = vsub.s32 3, %v11805
  %v11807 = vrot.slane %v11781, %v11806
  %11809 = vbcast.lane.b32.xlu0 %v11807, 256
  %v11810 = vpop.permute.xlu0 %11809
  %v11811 = vlaneseq
  %v11812 = vshrl.u32 %v11811, 7
  %v11813 = vsub.s32 4, %v11812
  %v11814 = vrot.slane %v11781, %v11813
  %11816 = vbcast.lane.b32.xlu0 %v11814, 256
  %v11817 = vpop.permute.xlu0 %11816
  %v11818 = vlaneseq
  %v11819 = vshrl.u32 %v11818, 7
  %v11820 = vsub.s32 5, %v11819
  %v11821 = vrot.slane %v11781, %v11820
  %11823 = vbcast.lane.b32.xlu0 %v11821, 256
  %v11824 = vpop.permute.xlu0 %11823
  %v11825 = vlaneseq
  %v11826 = vshrl.u32 %v11825, 7
  %v11827 = vsub.s32 6, %v11826
  %v11828 = vrot.slane %v11781, %v11827
  %11830 = vbcast.lane.b32.xlu0 %v11828, 256
  %v11831 = vpop.permute.xlu0 %11830
  %v11832 = vlaneseq
  %v11833 = vshrl.u32 %v11832, 7
  %v11834 = vsub.s32 7, %v11833
  %v11835 = vrot.slane %v11781, %v11834
  %11837 = vbcast.lane.b32.xlu0 %v11835, 256
  %v11838 = vpop.permute.xlu0 %11837
  %v11847 = vadd.f32 %v11754, %v11789
  %v11848 = vadd.f32 %v11755, %v11796
  %v11849 = vadd.f32 %v11756, %v11803
  %v11850 = vadd.f32 %v11757, %v11810
  %v11851 = vadd.f32 %v11758, %v11817
  %v11852 = vadd.f32 %v11759, %v11824
  %v11853 = vadd.f32 %v11760, %v11831
  %v11854 = vadd.f32 %v11761, %v11838
  %11855 = vset.pattern.permute.xlu0 3
  %11856 = vperm.xlu0 %11855, %v11559
  %v11857 = vpop.permute.xlu0 %11856
  %v11859 = vrot.slane %v11153, 3
  %v11860 = vrot.slane %v11154, 2
  %v11861 = vsel %vm11574, %v11860, %v11859
  %v11862 = vrot.slane %v11155, 1
  %v11863 = vsel %vm11577, %v11862, %v11861
  %v11864 = vsel %vm11580, %v11156, %v11863
  %v11865 = vrot.slane %v11157, 7
  %v11866 = vsel %vm11583, %v11865, %v11864
  %v11867 = vrot.slane %v11158, 6
  %v11868 = vsel %vm11586, %v11867, %v11866
  %v11869 = vrot.slane %v11159, 5
  %v11870 = vsel %vm11589, %v11869, %v11868
  %v11871 = vrot.slane %v11160, 4
  %v11872 = vsel %vm11592, %v11871, %v11870
  %v11874 = vmul.f32 %v11857, %v11872
  %v11876 = vlaneseq
  %v11877 = vshrl.u32 %v11876, 7
  %v11878 = vsub.s32 0, %v11877
  %v11879 = vrot.slane %v11874, %v11878
  %11881 = vbcast.lane.b32.xlu0 %v11879, 256
  %v11882 = vpop.permute.xlu0 %11881
  %v11883 = vlaneseq
  %v11884 = vshrl.u32 %v11883, 7
  %v11885 = vsub.s32 1, %v11884
  %v11886 = vrot.slane %v11874, %v11885
  %11888 = vbcast.lane.b32.xlu0 %v11886, 256
  %v11889 = vpop.permute.xlu0 %11888
  %v11890 = vlaneseq
  %v11891 = vshrl.u32 %v11890, 7
  %v11892 = vsub.s32 2, %v11891
  %v11893 = vrot.slane %v11874, %v11892
  %11895 = vbcast.lane.b32.xlu0 %v11893, 256
  %v11896 = vpop.permute.xlu0 %11895
  %v11897 = vlaneseq
  %v11898 = vshrl.u32 %v11897, 7
  %v11899 = vsub.s32 3, %v11898
  %v11900 = vrot.slane %v11874, %v11899
  %11902 = vbcast.lane.b32.xlu0 %v11900, 256
  %v11903 = vpop.permute.xlu0 %11902
  %v11904 = vlaneseq
  %v11905 = vshrl.u32 %v11904, 7
  %v11906 = vsub.s32 4, %v11905
  %v11907 = vrot.slane %v11874, %v11906
  %11909 = vbcast.lane.b32.xlu0 %v11907, 256
  %v11910 = vpop.permute.xlu0 %11909
  %v11911 = vlaneseq
  %v11912 = vshrl.u32 %v11911, 7
  %v11913 = vsub.s32 5, %v11912
  %v11914 = vrot.slane %v11874, %v11913
  %11916 = vbcast.lane.b32.xlu0 %v11914, 256
  %v11917 = vpop.permute.xlu0 %11916
  %v11918 = vlaneseq
  %v11919 = vshrl.u32 %v11918, 7
  %v11920 = vsub.s32 6, %v11919
  %v11921 = vrot.slane %v11874, %v11920
  %11923 = vbcast.lane.b32.xlu0 %v11921, 256
  %v11924 = vpop.permute.xlu0 %11923
  %v11925 = vlaneseq
  %v11926 = vshrl.u32 %v11925, 7
  %v11927 = vsub.s32 7, %v11926
  %v11928 = vrot.slane %v11874, %v11927
  %11930 = vbcast.lane.b32.xlu0 %v11928, 256
  %v11931 = vpop.permute.xlu0 %11930
  %v11940 = vadd.f32 %v11847, %v11882
  %v11941 = vadd.f32 %v11848, %v11889
  %v11942 = vadd.f32 %v11849, %v11896
  %v11943 = vadd.f32 %v11850, %v11903
  %v11944 = vadd.f32 %v11851, %v11910
  %v11945 = vadd.f32 %v11852, %v11917
  %v11946 = vadd.f32 %v11853, %v11924
  %v11947 = vadd.f32 %v11854, %v11931
  %vm11948 = vcmp.gt.f32.partialorder %v11940, 0.0
  %vm11949 = vcmp.gt.f32.partialorder %v11941, 0.0
  %vm11950 = vcmp.gt.f32.partialorder %v11942, 0.0
  %vm11951 = vcmp.gt.f32.partialorder %v11943, 0.0
  %vm11952 = vcmp.gt.f32.partialorder %v11944, 0.0
  %vm11953 = vcmp.gt.f32.partialorder %v11945, 0.0
  %vm11954 = vcmp.gt.f32.partialorder %v11946, 0.0
  %vm11955 = vcmp.gt.f32.partialorder %v11947, 0.0
  %v11956 = vmin.f32 %v11940, 0.0
  %v11957 = vmin.f32 %v11941, 0.0
  %v11958 = vmin.f32 %v11942, 0.0
  %v11959 = vmin.f32 %v11943, 0.0
  %v11960 = vmin.f32 %v11944, 0.0
  %v11961 = vmin.f32 %v11945, 0.0
  %v11962 = vmin.f32 %v11946, 0.0
  %v11963 = vmin.f32 %v11947, 0.0
  %v11964 = vmul.f32 %v11956, 1.442695
  %v11965 = vpow.pop %v11964
  %v11966 = vmul.f32 %v11957, 1.442695
  %v11967 = vpow.pop %v11966
  %v11968 = vmul.f32 %v11958, 1.442695
  %v11969 = vpow.pop %v11968
  %v11970 = vmul.f32 %v11959, 1.442695
  %v11971 = vpow.pop %v11970
  %v11972 = vmul.f32 %v11960, 1.442695
  %v11973 = vpow.pop %v11972
  %v11974 = vmul.f32 %v11961, 1.442695
  %v11975 = vpow.pop %v11974
  %v11976 = vmul.f32 %v11962, 1.442695
  %v11977 = vpow.pop %v11976
  %v11978 = vmul.f32 %v11963, 1.442695
  %v11979 = vpow.pop %v11978
  %v11980 = vsub.f32 %v11965, 1.0
  %v11981 = vsub.f32 %v11967, 1.0
  %v11982 = vsub.f32 %v11969, 1.0
  %v11983 = vsub.f32 %v11971, 1.0
  %v11984 = vsub.f32 %v11973, 1.0
  %v11985 = vsub.f32 %v11975, 1.0
  %v11986 = vsub.f32 %v11977, 1.0
  %v11987 = vsub.f32 %v11979, 1.0
  %v11988 = vsel %vm11948, %v11940, %v11980
  %v11989 = vsel %vm11949, %v11941, %v11981
  %v11990 = vsel %vm11950, %v11942, %v11982
  %v11991 = vsel %vm11951, %v11943, %v11983
  %v11992 = vsel %vm11952, %v11944, %v11984
  %v11993 = vsel %vm11953, %v11945, %v11985
  %v11994 = vsel %vm11954, %v11946, %v11986
  %v11995 = vsel %vm11955, %v11947, %v11987
  %v11996 = vlaneseq
  %v11997 = vshrl.u32 %v11996, 7
  %v11998 = vsub.s32 0, %v11997
  %v11999 = vrot.slane %v11988, %v11998
  %v12000 = vlaneseq
  %v12001 = vshrl.u32 %v12000, 7
  %v12002 = vsub.s32 0, %v12001
  %v12003 = vrot.slane %v11989, %v12002
  %v12004 = vlaneseq
  %v12005 = vshrl.u32 %v12004, 7
  %v12006 = vsub.s32 0, %v12005
  %v12007 = vrot.slane %v11990, %v12006
  %v12008 = vlaneseq
  %v12009 = vshrl.u32 %v12008, 7
  %v12010 = vsub.s32 0, %v12009
  %v12011 = vrot.slane %v11991, %v12010
  %v12012 = vlaneseq
  %v12013 = vshrl.u32 %v12012, 7
  %v12014 = vsub.s32 0, %v12013
  %v12015 = vrot.slane %v11992, %v12014
  %v12016 = vlaneseq
  %v12017 = vshrl.u32 %v12016, 7
  %v12018 = vsub.s32 0, %v12017
  %v12019 = vrot.slane %v11993, %v12018
  %v12020 = vlaneseq
  %v12021 = vshrl.u32 %v12020, 7
  %v12022 = vsub.s32 0, %v12021
  %v12023 = vrot.slane %v11994, %v12022
  %v12024 = vlaneseq
  %v12025 = vshrl.u32 %v12024, 7
  %v12026 = vsub.s32 0, %v12025
  %v12027 = vrot.slane %v11995, %v12026
  %v12028 = vlaneseq
  %v12029 = vshrl.u32 %v12028, 7
  %v12030 = vsub.s32 0, %v12029
  %v12031 = vrot.slane %v11153, %v12030
  %s12033 = sor.u32 256, 4
  %12034 = vbcast.lane.b32.xlu0 %v12031, %s12033
  %v12035 = vpop.permute.xlu0 %12034
  %v12036 = vlaneseq
  %v12037 = vshrl.u32 %v12036, 7
  %v12038 = vsub.s32 0, %v12037
  %v12039 = vrot.slane %v11154, %v12038
  %s12041 = sor.u32 256, 4
  %12042 = vbcast.lane.b32.xlu0 %v12039, %s12041
  %v12043 = vpop.permute.xlu0 %12042
  %v12044 = vlaneseq
  %v12045 = vshrl.u32 %v12044, 7
  %v12046 = vsub.s32 0, %v12045
  %v12047 = vrot.slane %v11155, %v12046
  %s12049 = sor.u32 256, 4
  %12050 = vbcast.lane.b32.xlu0 %v12047, %s12049
  %v12051 = vpop.permute.xlu0 %12050
  %v12052 = vlaneseq
  %v12053 = vshrl.u32 %v12052, 7
  %v12054 = vsub.s32 0, %v12053
  %v12055 = vrot.slane %v11156, %v12054
  %s12057 = sor.u32 256, 4
  %12058 = vbcast.lane.b32.xlu0 %v12055, %s12057
  %v12059 = vpop.permute.xlu0 %12058
  %v12060 = vlaneseq
  %v12061 = vshrl.u32 %v12060, 7
  %v12062 = vsub.s32 0, %v12061
  %v12063 = vrot.slane %v11157, %v12062
  %s12065 = sor.u32 256, 4
  %12066 = vbcast.lane.b32.xlu0 %v12063, %s12065
  %v12067 = vpop.permute.xlu0 %12066
  %v12068 = vlaneseq
  %v12069 = vshrl.u32 %v12068, 7
  %v12070 = vsub.s32 0, %v12069
  %v12071 = vrot.slane %v11158, %v12070
  %s12073 = sor.u32 256, 4
  %12074 = vbcast.lane.b32.xlu0 %v12071, %s12073
  %v12075 = vpop.permute.xlu0 %12074
  %v12076 = vlaneseq
  %v12077 = vshrl.u32 %v12076, 7
  %v12078 = vsub.s32 0, %v12077
  %v12079 = vrot.slane %v11159, %v12078
  %s12081 = sor.u32 256, 4
  %12082 = vbcast.lane.b32.xlu0 %v12079, %s12081
  %v12083 = vpop.permute.xlu0 %12082
  %v12084 = vlaneseq
  %v12085 = vshrl.u32 %v12084, 7
  %v12086 = vsub.s32 0, %v12085
  %v12087 = vrot.slane %v11160, %v12086
  %s12089 = sor.u32 256, 4
  %12090 = vbcast.lane.b32.xlu0 %v12087, %s12089
  %v12091 = vpop.permute.xlu0 %12090
  %v12100 = vmul.f32 %v11999, %v12035
  %v12101 = vmul.f32 %v12003, %v12043
  %v12102 = vmul.f32 %v12007, %v12051
  %v12103 = vmul.f32 %v12011, %v12059
  %v12104 = vmul.f32 %v12015, %v12067
  %v12105 = vmul.f32 %v12019, %v12075
  %v12106 = vmul.f32 %v12023, %v12083
  %v12107 = vmul.f32 %v12027, %v12091
  %v12108 = vadd.f32 %v11551, %v12100
  %v12109 = vadd.f32 %v11552, %v12101
  %v12110 = vadd.f32 %v11553, %v12102
  %v12111 = vadd.f32 %v11554, %v12103
  %v12112 = vadd.f32 %v11555, %v12104
  %v12113 = vadd.f32 %v11556, %v12105
  %v12114 = vadd.f32 %v11557, %v12106
  %v12115 = vadd.f32 %v11558, %v12107
  %v12116 = vlaneseq
  %v12117 = vshrl.u32 %v12116, 7
  %v12118 = vsub.s32 1, %v12117
  %v12119 = vrot.slane %v11988, %v12118
  %v12120 = vlaneseq
  %v12121 = vshrl.u32 %v12120, 7
  %v12122 = vsub.s32 1, %v12121
  %v12123 = vrot.slane %v11989, %v12122
  %v12124 = vlaneseq
  %v12125 = vshrl.u32 %v12124, 7
  %v12126 = vsub.s32 1, %v12125
  %v12127 = vrot.slane %v11990, %v12126
  %v12128 = vlaneseq
  %v12129 = vshrl.u32 %v12128, 7
  %v12130 = vsub.s32 1, %v12129
  %v12131 = vrot.slane %v11991, %v12130
  %v12132 = vlaneseq
  %v12133 = vshrl.u32 %v12132, 7
  %v12134 = vsub.s32 1, %v12133
  %v12135 = vrot.slane %v11992, %v12134
  %v12136 = vlaneseq
  %v12137 = vshrl.u32 %v12136, 7
  %v12138 = vsub.s32 1, %v12137
  %v12139 = vrot.slane %v11993, %v12138
  %v12140 = vlaneseq
  %v12141 = vshrl.u32 %v12140, 7
  %v12142 = vsub.s32 1, %v12141
  %v12143 = vrot.slane %v11994, %v12142
  %v12144 = vlaneseq
  %v12145 = vshrl.u32 %v12144, 7
  %v12146 = vsub.s32 1, %v12145
  %v12147 = vrot.slane %v11995, %v12146
  %v12148 = vlaneseq
  %v12149 = vshrl.u32 %v12148, 7
  %v12150 = vsub.s32 1, %v12149
  %v12151 = vrot.slane %v11153, %v12150
  %s12153 = sor.u32 256, 4
  %12154 = vbcast.lane.b32.xlu0 %v12151, %s12153
  %v12155 = vpop.permute.xlu0 %12154
  %v12156 = vlaneseq
  %v12157 = vshrl.u32 %v12156, 7
  %v12158 = vsub.s32 1, %v12157
  %v12159 = vrot.slane %v11154, %v12158
  %s12161 = sor.u32 256, 4
  %12162 = vbcast.lane.b32.xlu0 %v12159, %s12161
  %v12163 = vpop.permute.xlu0 %12162
  %v12164 = vlaneseq
  %v12165 = vshrl.u32 %v12164, 7
  %v12166 = vsub.s32 1, %v12165
  %v12167 = vrot.slane %v11155, %v12166
  %s12169 = sor.u32 256, 4
  %12170 = vbcast.lane.b32.xlu0 %v12167, %s12169
  %v12171 = vpop.permute.xlu0 %12170
  %v12172 = vlaneseq
  %v12173 = vshrl.u32 %v12172, 7
  %v12174 = vsub.s32 1, %v12173
  %v12175 = vrot.slane %v11156, %v12174
  %s12177 = sor.u32 256, 4
  %12178 = vbcast.lane.b32.xlu0 %v12175, %s12177
  %v12179 = vpop.permute.xlu0 %12178
  %v12180 = vlaneseq
  %v12181 = vshrl.u32 %v12180, 7
  %v12182 = vsub.s32 1, %v12181
  %v12183 = vrot.slane %v11157, %v12182
  %s12185 = sor.u32 256, 4
  %12186 = vbcast.lane.b32.xlu0 %v12183, %s12185
  %v12187 = vpop.permute.xlu0 %12186
  %v12188 = vlaneseq
  %v12189 = vshrl.u32 %v12188, 7
  %v12190 = vsub.s32 1, %v12189
  %v12191 = vrot.slane %v11158, %v12190
  %s12193 = sor.u32 256, 4
  %12194 = vbcast.lane.b32.xlu0 %v12191, %s12193
  %v12195 = vpop.permute.xlu0 %12194
  %v12196 = vlaneseq
  %v12197 = vshrl.u32 %v12196, 7
  %v12198 = vsub.s32 1, %v12197
  %v12199 = vrot.slane %v11159, %v12198
  %s12201 = sor.u32 256, 4
  %12202 = vbcast.lane.b32.xlu0 %v12199, %s12201
  %v12203 = vpop.permute.xlu0 %12202
  %v12204 = vlaneseq
  %v12205 = vshrl.u32 %v12204, 7
  %v12206 = vsub.s32 1, %v12205
  %v12207 = vrot.slane %v11160, %v12206
  %s12209 = sor.u32 256, 4
  %12210 = vbcast.lane.b32.xlu0 %v12207, %s12209
  %v12211 = vpop.permute.xlu0 %12210
  %v12220 = vmul.f32 %v12119, %v12155
  %v12221 = vmul.f32 %v12123, %v12163
  %v12222 = vmul.f32 %v12127, %v12171
  %v12223 = vmul.f32 %v12131, %v12179
  %v12224 = vmul.f32 %v12135, %v12187
  %v12225 = vmul.f32 %v12139, %v12195
  %v12226 = vmul.f32 %v12143, %v12203
  %v12227 = vmul.f32 %v12147, %v12211
  %v12228 = vadd.f32 %v12108, %v12220
  %v12229 = vadd.f32 %v12109, %v12221
  %v12230 = vadd.f32 %v12110, %v12222
  %v12231 = vadd.f32 %v12111, %v12223
  %v12232 = vadd.f32 %v12112, %v12224
  %v12233 = vadd.f32 %v12113, %v12225
  %v12234 = vadd.f32 %v12114, %v12226
  %v12235 = vadd.f32 %v12115, %v12227
  %v12236 = vlaneseq
  %v12237 = vshrl.u32 %v12236, 7
  %v12238 = vsub.s32 2, %v12237
  %v12239 = vrot.slane %v11988, %v12238
  %v12240 = vlaneseq
  %v12241 = vshrl.u32 %v12240, 7
  %v12242 = vsub.s32 2, %v12241
  %v12243 = vrot.slane %v11989, %v12242
  %v12244 = vlaneseq
  %v12245 = vshrl.u32 %v12244, 7
  %v12246 = vsub.s32 2, %v12245
  %v12247 = vrot.slane %v11990, %v12246
  %v12248 = vlaneseq
  %v12249 = vshrl.u32 %v12248, 7
  %v12250 = vsub.s32 2, %v12249
  %v12251 = vrot.slane %v11991, %v12250
  %v12252 = vlaneseq
  %v12253 = vshrl.u32 %v12252, 7
  %v12254 = vsub.s32 2, %v12253
  %v12255 = vrot.slane %v11992, %v12254
  %v12256 = vlaneseq
  %v12257 = vshrl.u32 %v12256, 7
  %v12258 = vsub.s32 2, %v12257
  %v12259 = vrot.slane %v11993, %v12258
  %v12260 = vlaneseq
  %v12261 = vshrl.u32 %v12260, 7
  %v12262 = vsub.s32 2, %v12261
  %v12263 = vrot.slane %v11994, %v12262
  %v12264 = vlaneseq
  %v12265 = vshrl.u32 %v12264, 7
  %v12266 = vsub.s32 2, %v12265
  %v12267 = vrot.slane %v11995, %v12266
  %v12268 = vlaneseq
  %v12269 = vshrl.u32 %v12268, 7
  %v12270 = vsub.s32 2, %v12269
  %v12271 = vrot.slane %v11153, %v12270
  %s12273 = sor.u32 256, 4
  %12274 = vbcast.lane.b32.xlu0 %v12271, %s12273
  %v12275 = vpop.permute.xlu0 %12274
  %v12276 = vlaneseq
  %v12277 = vshrl.u32 %v12276, 7
  %v12278 = vsub.s32 2, %v12277
  %v12279 = vrot.slane %v11154, %v12278
  %s12281 = sor.u32 256, 4
  %12282 = vbcast.lane.b32.xlu0 %v12279, %s12281
  %v12283 = vpop.permute.xlu0 %12282
  %v12284 = vlaneseq
  %v12285 = vshrl.u32 %v12284, 7
  %v12286 = vsub.s32 2, %v12285
  %v12287 = vrot.slane %v11155, %v12286
  %s12289 = sor.u32 256, 4
  %12290 = vbcast.lane.b32.xlu0 %v12287, %s12289
  %v12291 = vpop.permute.xlu0 %12290
  %v12292 = vlaneseq
  %v12293 = vshrl.u32 %v12292, 7
  %v12294 = vsub.s32 2, %v12293
  %v12295 = vrot.slane %v11156, %v12294
  %s12297 = sor.u32 256, 4
  %12298 = vbcast.lane.b32.xlu0 %v12295, %s12297
  %v12299 = vpop.permute.xlu0 %12298
  %v12300 = vlaneseq
  %v12301 = vshrl.u32 %v12300, 7
  %v12302 = vsub.s32 2, %v12301
  %v12303 = vrot.slane %v11157, %v12302
  %s12305 = sor.u32 256, 4
  %12306 = vbcast.lane.b32.xlu0 %v12303, %s12305
  %v12307 = vpop.permute.xlu0 %12306
  %v12308 = vlaneseq
  %v12309 = vshrl.u32 %v12308, 7
  %v12310 = vsub.s32 2, %v12309
  %v12311 = vrot.slane %v11158, %v12310
  %s12313 = sor.u32 256, 4
  %12314 = vbcast.lane.b32.xlu0 %v12311, %s12313
  %v12315 = vpop.permute.xlu0 %12314
  %v12316 = vlaneseq
  %v12317 = vshrl.u32 %v12316, 7
  %v12318 = vsub.s32 2, %v12317
  %v12319 = vrot.slane %v11159, %v12318
  %s12321 = sor.u32 256, 4
  %12322 = vbcast.lane.b32.xlu0 %v12319, %s12321
  %v12323 = vpop.permute.xlu0 %12322
  %v12324 = vlaneseq
  %v12325 = vshrl.u32 %v12324, 7
  %v12326 = vsub.s32 2, %v12325
  %v12327 = vrot.slane %v11160, %v12326
  %s12329 = sor.u32 256, 4
  %12330 = vbcast.lane.b32.xlu0 %v12327, %s12329
  %v12331 = vpop.permute.xlu0 %12330
  %v12340 = vmul.f32 %v12239, %v12275
  %v12341 = vmul.f32 %v12243, %v12283
  %v12342 = vmul.f32 %v12247, %v12291
  %v12343 = vmul.f32 %v12251, %v12299
  %v12344 = vmul.f32 %v12255, %v12307
  %v12345 = vmul.f32 %v12259, %v12315
  %v12346 = vmul.f32 %v12263, %v12323
  %v12347 = vmul.f32 %v12267, %v12331
  %v12348 = vadd.f32 %v12228, %v12340
  %v12349 = vadd.f32 %v12229, %v12341
  %v12350 = vadd.f32 %v12230, %v12342
  %v12351 = vadd.f32 %v12231, %v12343
  %v12352 = vadd.f32 %v12232, %v12344
  %v12353 = vadd.f32 %v12233, %v12345
  %v12354 = vadd.f32 %v12234, %v12346
  %v12355 = vadd.f32 %v12235, %v12347
  %v12356 = vlaneseq
  %v12357 = vshrl.u32 %v12356, 7
  %v12358 = vsub.s32 3, %v12357
  %v12359 = vrot.slane %v11988, %v12358
  %v12360 = vlaneseq
  %v12361 = vshrl.u32 %v12360, 7
  %v12362 = vsub.s32 3, %v12361
  %v12363 = vrot.slane %v11989, %v12362
  %v12364 = vlaneseq
  %v12365 = vshrl.u32 %v12364, 7
  %v12366 = vsub.s32 3, %v12365
  %v12367 = vrot.slane %v11990, %v12366
  %v12368 = vlaneseq
  %v12369 = vshrl.u32 %v12368, 7
  %v12370 = vsub.s32 3, %v12369
  %v12371 = vrot.slane %v11991, %v12370
  %v12372 = vlaneseq
  %v12373 = vshrl.u32 %v12372, 7
  %v12374 = vsub.s32 3, %v12373
  %v12375 = vrot.slane %v11992, %v12374
  %v12376 = vlaneseq
  %v12377 = vshrl.u32 %v12376, 7
  %v12378 = vsub.s32 3, %v12377
  %v12379 = vrot.slane %v11993, %v12378
  %v12380 = vlaneseq
  %v12381 = vshrl.u32 %v12380, 7
  %v12382 = vsub.s32 3, %v12381
  %v12383 = vrot.slane %v11994, %v12382
  %v12384 = vlaneseq
  %v12385 = vshrl.u32 %v12384, 7
  %v12386 = vsub.s32 3, %v12385
  %v12387 = vrot.slane %v11995, %v12386
  %v12388 = vlaneseq
  %v12389 = vshrl.u32 %v12388, 7
  %v12390 = vsub.s32 3, %v12389
  %v12391 = vrot.slane %v11153, %v12390
  %s12393 = sor.u32 256, 4
  %12394 = vbcast.lane.b32.xlu0 %v12391, %s12393
  %v12395 = vpop.permute.xlu0 %12394
  %v12396 = vlaneseq
  %v12397 = vshrl.u32 %v12396, 7
  %v12398 = vsub.s32 3, %v12397
  %v12399 = vrot.slane %v11154, %v12398
  %s12401 = sor.u32 256, 4
  %12402 = vbcast.lane.b32.xlu0 %v12399, %s12401
  %v12403 = vpop.permute.xlu0 %12402
  %v12404 = vlaneseq
  %v12405 = vshrl.u32 %v12404, 7
  %v12406 = vsub.s32 3, %v12405
  %v12407 = vrot.slane %v11155, %v12406
  %s12409 = sor.u32 256, 4
  %12410 = vbcast.lane.b32.xlu0 %v12407, %s12409
  %v12411 = vpop.permute.xlu0 %12410
  %v12412 = vlaneseq
  %v12413 = vshrl.u32 %v12412, 7
  %v12414 = vsub.s32 3, %v12413
  %v12415 = vrot.slane %v11156, %v12414
  %s12417 = sor.u32 256, 4
  %12418 = vbcast.lane.b32.xlu0 %v12415, %s12417
  %v12419 = vpop.permute.xlu0 %12418
  %v12420 = vlaneseq
  %v12421 = vshrl.u32 %v12420, 7
  %v12422 = vsub.s32 3, %v12421
  %v12423 = vrot.slane %v11157, %v12422
  %s12425 = sor.u32 256, 4
  %12426 = vbcast.lane.b32.xlu0 %v12423, %s12425
  %v12427 = vpop.permute.xlu0 %12426
  %v12428 = vlaneseq
  %v12429 = vshrl.u32 %v12428, 7
  %v12430 = vsub.s32 3, %v12429
  %v12431 = vrot.slane %v11158, %v12430
  %s12433 = sor.u32 256, 4
  %12434 = vbcast.lane.b32.xlu0 %v12431, %s12433
  %v12435 = vpop.permute.xlu0 %12434
  %v12436 = vlaneseq
  %v12437 = vshrl.u32 %v12436, 7
  %v12438 = vsub.s32 3, %v12437
  %v12439 = vrot.slane %v11159, %v12438
  %s12441 = sor.u32 256, 4
  %12442 = vbcast.lane.b32.xlu0 %v12439, %s12441
  %v12443 = vpop.permute.xlu0 %12442
  %v12444 = vlaneseq
  %v12445 = vshrl.u32 %v12444, 7
  %v12446 = vsub.s32 3, %v12445
  %v12447 = vrot.slane %v11160, %v12446
  %s12449 = sor.u32 256, 4
  %12450 = vbcast.lane.b32.xlu0 %v12447, %s12449
  %v12451 = vpop.permute.xlu0 %12450
  %v12460 = vmul.f32 %v12359, %v12395
  %v12461 = vmul.f32 %v12363, %v12403
  %v12462 = vmul.f32 %v12367, %v12411
  %v12463 = vmul.f32 %v12371, %v12419
  %v12464 = vmul.f32 %v12375, %v12427
  %v12465 = vmul.f32 %v12379, %v12435
  %v12466 = vmul.f32 %v12383, %v12443
  %v12467 = vmul.f32 %v12387, %v12451
  %v12468 = vadd.f32 %v12348, %v12460
  %v12469 = vadd.f32 %v12349, %v12461
  %v12470 = vadd.f32 %v12350, %v12462
  %v12471 = vadd.f32 %v12351, %v12463
  %v12472 = vadd.f32 %v12352, %v12464
  %v12473 = vadd.f32 %v12353, %v12465
  %v12474 = vadd.f32 %v12354, %v12466
  %v12475 = vadd.f32 %v12355, %v12467
  %12484 = vset.pattern.permute.xlu0 0
  %12485 = vperm.xlu0 %12484, %v12468
  %v12486 = vpop.permute.xlu0 %12485
  %12487 = vset.pattern.permute.xlu0 0
  %12488 = vperm.xlu0 %12487, %v12469
  %v12489 = vpop.permute.xlu0 %12488
  %12490 = vset.pattern.permute.xlu0 0
  %12491 = vperm.xlu0 %12490, %v12470
  %v12492 = vpop.permute.xlu0 %12491
  %12493 = vset.pattern.permute.xlu0 0
  %12494 = vperm.xlu0 %12493, %v12471
  %v12495 = vpop.permute.xlu0 %12494
  %12496 = vset.pattern.permute.xlu0 0
  %12497 = vperm.xlu0 %12496, %v12472
  %v12498 = vpop.permute.xlu0 %12497
  %12499 = vset.pattern.permute.xlu0 0
  %12500 = vperm.xlu0 %12499, %v12473
  %v12501 = vpop.permute.xlu0 %12500
  %12502 = vset.pattern.permute.xlu0 0
  %12503 = vperm.xlu0 %12502, %v12474
  %v12504 = vpop.permute.xlu0 %12503
  %12505 = vset.pattern.permute.xlu0 0
  %12506 = vperm.xlu0 %12505, %v12475
  %v12507 = vpop.permute.xlu0 %12506
  %v12508 = vlaneseq
  %v12509 = vand.u32 %v12508, 127
  %v12510 = vlaneseq
  %v12511 = vshrl.u32 %v12510, 7
  %v12512 = vsub.s32 %v12509, %v12511
  %v12513 = vrot.slane %v12486, %v12512
  %v12514 = vlaneseq
  %v12515 = vshrl.u32 %v12514, 7
  %v12516 = vsub.s32 %v12509, %v12515
  %v12517 = vrot.slane %v12489, %v12516
  %v12518 = vlaneseq
  %v12519 = vshrl.u32 %v12518, 7
  %v12520 = vsub.s32 %v12509, %v12519
  %v12521 = vrot.slane %v12492, %v12520
  %v12522 = vlaneseq
  %v12523 = vshrl.u32 %v12522, 7
  %v12524 = vsub.s32 %v12509, %v12523
  %v12525 = vrot.slane %v12495, %v12524
  %v12526 = vlaneseq
  %v12527 = vshrl.u32 %v12526, 7
  %v12528 = vsub.s32 %v12509, %v12527
  %v12529 = vrot.slane %v12498, %v12528
  %v12530 = vlaneseq
  %v12531 = vshrl.u32 %v12530, 7
  %v12532 = vsub.s32 %v12509, %v12531
  %v12533 = vrot.slane %v12501, %v12532
  %v12534 = vlaneseq
  %v12535 = vshrl.u32 %v12534, 7
  %v12536 = vsub.s32 %v12509, %v12535
  %v12537 = vrot.slane %v12504, %v12536
  %v12538 = vlaneseq
  %v12539 = vshrl.u32 %v12538, 7
  %v12540 = vsub.s32 %v12509, %v12539
  %v12541 = vrot.slane %v12507, %v12540
  %v12542 = vsel %vm11574, %v12517, %v12513
  %v12543 = vsel %vm11577, %v12521, %v12542
  %v12544 = vsel %vm11580, %v12525, %v12543
  %v12545 = vsel %vm11583, %v12529, %v12544
  %v12546 = vsel %vm11586, %v12533, %v12545
  %v12547 = vsel %vm11589, %v12537, %v12546
  %v12548 = vsel %vm11592, %v12541, %v12547
  %vm12550 = vcmask 31744
  %12551 = vst.msk [vmem:[%s4] sm:$0xff] %vm12550, %v12548
  // Predicated region
  $region18: #{spectra_mixer.1} parent=0 // pred_check
    _
  $region19: #{spectra_mixer.1} parent=0 // pred_check_branch
    %12553 = sbr.rel (0) target = $region21
  $region20: #{spectra_mixer.1} parent=0 // pred_region
    _
  $region21: #{spectra_mixer.1} parent=0 // pred_fallthru
    _
  // Predicated region
  $region22: #{spectra_mixer.1} parent=0 // pred_check
    _
  $region23: #{spectra_mixer.1} parent=0 // pred_check_branch
    %12555 = sbr.rel (0) target = $region25
  $region24: #{spectra_mixer.1} parent=0 // pred_region
    _
  $region25: #{spectra_mixer.1} parent=0 // pred_fallthru
    _

</llo_original>
